<compile_context>
chip_gen: v5e
topology: v5e:2x2
jax: 0.10.0
libtpu: 0.0.40
codegen_flags: <defaults>
</compile_context>

<pallas_src>
import functools

import jax
import jax.numpy as jnp
from jax.experimental import pallas as pl
from jax.experimental.pallas import tpu as pltpu


def _fused_layer_kernel(x_ref, w_ref, b_ref, o_ref, *, apply_relu: bool):
    # x_ref: (B, K)  w_ref: (K, TN)  b_ref: (1, TN)  o_ref: (B, TN)
    y = jnp.dot(x_ref[...], w_ref[...], preferred_element_type=jnp.float32)
    y = y + b_ref[...]
    if apply_relu:
        y = jnp.maximum(y, 0.0)
    o_ref[...] = y.astype(o_ref.dtype)


def _pick_tn(n: int) -> int:
    """Lane-dense output tile: cap at 512, keep >=2 grid steps when possible."""
    if n % 1024 == 0:
        return 512          # N=2048 -> 4 steps, N=1024 -> 2 steps
    if n % 512 == 0:
        return 256          # N=512  -> 2 steps
    if n % 256 == 0:
        return 128          # N=256  -> 2 steps
    return n                # tiny / ragged N: single full-width tile


def fused_linear_relu(x, w, b2, *, apply_relu: bool):
    """x: (B, K) f32, w: (K, N) f32, b2: (1, N) f32 -> (B, N) f32."""
    B, K = x.shape
    K2, N = w.shape
    assert K == K2
    assert B % 8 == 0, "batch must be a multiple of 8 (sublane tiling)"

    tn = _pick_tn(N)
    grid = (N // tn,)

    kernel = functools.partial(_fused_layer_kernel, apply_relu=apply_relu)

    return pl.pallas_call(
        kernel,
        out_shape=jax.ShapeDtypeStruct((B, N), jnp.float32),
        grid_spec=pltpu.PrefetchScalarGridSpec(
            num_scalar_prefetch=0,
            grid=grid,
            in_specs=[
                pl.BlockSpec((B, K), lambda j: (0, 0)),   # x: full, reused per tile
                pl.BlockSpec((K, tn), lambda j: (0, j)),  # fused weight column tile
                pl.BlockSpec((1, tn), lambda j: (0, j)),  # fused bias
            ],
            out_specs=pl.BlockSpec((B, tn), lambda j: (0, j)),
        ),
        compiler_params=pltpu.CompilerParams(
            dimension_semantics=("parallel",),
        ),
    )(x, w, b2)


def init_params(key, input_dim, output_dim):
    """Build (w_fused, b_fused) per layer, mirroring the PyTorch module.

    BatchNorm (eval mode, fresh running stats: mean=0, var=1) is folded into
    the Linear weights here, one time, so the kernel only does matmul+bias(+relu).
    """
    dims = [input_dim, 2048, 2048, 1024, 512, 256, output_dim]
    eps = 1e-5
    params = []
    for li in range(len(dims) - 1):
        fan_in, fan_out = dims[li], dims[li + 1]
        key, kw, kb = jax.random.split(key, 3)
        bound = 1.0 / jnp.sqrt(fan_in)
        # stored as (in, out) = transpose of PyTorch's (out, in) weight
        w = jax.random.uniform(kw, (fan_in, fan_out), jnp.float32, -bound, bound)
        b = jax.random.uniform(kb, (fan_out,), jnp.float32, -bound, bound)
        is_last = li == len(dims) - 2
        if is_last:
            w_fused, b_fused = w, b
        else:
            gamma = jnp.ones((fan_out,), jnp.float32)
            beta = jnp.zeros((fan_out,), jnp.float32)
            running_mean = jnp.zeros((fan_out,), jnp.float32)
            running_var = jnp.ones((fan_out,), jnp.float32)
            scale = gamma / jnp.sqrt(running_var + eps)
            shift = beta - running_mean * scale
            w_fused = w * scale[None, :]
            b_fused = b * scale + shift
        # bias stored pre-reshaped to (1, N) so no per-call reshape op
        params.append((w_fused, b_fused.reshape(1, fan_out)))
    return params


def feedforward_net_gptj(x, params):
    n_layers = len(params)  # static under jit (pytree structure)
    h = x
    for i, (w, b2) in enumerate(params):
        h = fused_linear_relu(h, w, b2, apply_relu=(i < n_layers - 1))
    return h


if __name__ == "__main__":
    key = jax.random.PRNGKey(0)
    batch, input_dim, output_dim = 8, 32, 16

    kx, kp = jax.random.split(key)
    x = jax.random.normal(kx, (batch, input_dim), jnp.float32)
    params = init_params(kp, input_dim, output_dim)

    forward = jax.jit(feedforward_net_gptj)
    out = forward(x, params)
    out = jax.block_until_ready(out)
    assert out.shape == (batch, output_dim), out.shape

    # quick reference check against plain JAX (same fused-parameter math)
    ref = x
    n_layers = len(params)
    for i, (w, b2) in enumerate(params):
        ref = ref @ w + b2
        if i < n_layers - 1:
            ref = jnp.maximum(ref, 0.0)
    assert jnp.allclose(out, ref, atol=1e-3, rtol=1e-3)

    print("KERNEL_OK")
</pallas_src>

<mosaic_0001>
module attributes {stable_mosaic.version = 11 : i64} {
  func.func @_fused_layer_kernel(%arg0: i32, %arg1: memref<8x2048xf32, #tpu.memory_space<vmem>>, %arg2: memref<2048x512xf32, #tpu.memory_space<vmem>>, %arg3: memref<1x512xf32, #tpu.memory_space<vmem>>, %arg4: memref<8x512xf32, #tpu.memory_space<vmem>>) attributes {dimension_semantics = [#tpu.dimension_semantics<parallel>], iteration_bounds = array<i64: 2>, scalar_prefetch = 0 : i64, scratch_operands = 0 : i64, tpu.core_type = #tpu.core_type<tc>, window_params = [{pipeline_mode = #tpu.pipeline_mode<synchronous>, transform_indices = @transform_0, window_bounds = array<i64: 8, 2048>}, {transform_indices = @transform_1, window_bounds = array<i64: 2048, 512>}, {transform_indices = @transform_2, window_bounds = array<i64: 1, 512>}, {transform_indices = @transform_3, window_bounds = array<i64: 8, 512>}]} {
    %c0 = arith.constant 0 : index
    %c0_0 = arith.constant 0 : index
    %0 = vector.load %arg1[%c0, %c0_0] : memref<8x2048xf32, #tpu.memory_space<vmem>>, vector<8x2048xf32>
    %c0_1 = arith.constant 0 : index
    %c0_2 = arith.constant 0 : index
    %1 = vector.load %arg2[%c0_1, %c0_2] : memref<2048x512xf32, #tpu.memory_space<vmem>>, vector<2048x512xf32>
    %cst = arith.constant dense<0.000000e+00> : vector<8x512xf32>
    %2 = tpu.matmul %0, %1, %cst {dimension_numbers = #tpu.dot_dimension_numbers<[1], [0], [0], [1], [0, 0, 1, 1], [], []>} : vector<8x2048xf32>, vector<2048x512xf32>, vector<8x512xf32> -> vector<8x512xf32>
    %c0_3 = arith.constant 0 : index
    %c0_4 = arith.constant 0 : index
    %3 = vector.load %arg3[%c0_3, %c0_4] : memref<1x512xf32, #tpu.memory_space<vmem>>, vector<1x512xf32>
    %4 = vector.broadcast %3 : vector<1x512xf32> to vector<8x512xf32>
    %5 = arith.addf %2, %4 : vector<8x512xf32>
    %cst_5 = arith.constant 0.000000e+00 : f32
    %6 = vector.broadcast %cst_5 : f32 to vector<8x512xf32>
    %7 = arith.maximumf %5, %6 : vector<8x512xf32>
    %c0_6 = arith.constant 0 : index
    %c0_7 = arith.constant 0 : index
    %8 = vector.load %arg4[%c0_6, %c0_7] : memref<8x512xf32, #tpu.memory_space<vmem>>, vector<8x512xf32>
    tpu.vector_store %arg4[%c0_6, %c0_7], %7 {strides = array<i32>} : memref<8x512xf32, #tpu.memory_space<vmem>>, vector<8x512xf32>,
    return
  }
  func.func @transform_0(%arg0: i32) -> (i32, i32) {
    %c0_i32 = arith.constant 0 : i32
    %c0_i32_0 = arith.constant 0 : i32
    %c0_i32_1 = arith.constant 0 : i32
    return %c0_i32, %c0_i32_0 : i32, i32
  }
  func.func @transform_1(%arg0: i32) -> (i32, i32) {
    %c0_i32 = arith.constant 0 : i32
    %c0_i32_0 = arith.constant 0 : i32
    return %c0_i32, %arg0 : i32, i32
  }
  func.func @transform_2(%arg0: i32) -> (i32, i32) {
    %c0_i32 = arith.constant 0 : i32
    %c0_i32_0 = arith.constant 0 : i32
    return %c0_i32, %arg0 : i32, i32
  }
  func.func @transform_3(%arg0: i32) -> (i32, i32) {
    %c0_i32 = arith.constant 0 : i32
    %c0_i32_0 = arith.constant 0 : i32
    return %c0_i32, %arg0 : i32, i32
  }
}

module attributes {stable_mosaic.version = 11 : i64} {
  func.func @_fused_layer_kernel(%arg0: i32, %arg1: memref<8x32xf32, #tpu.memory_space<vmem>>, %arg2: memref<32x512xf32, #tpu.memory_space<vmem>>, %arg3: memref<1x512xf32, #tpu.memory_space<vmem>>, %arg4: memref<8x512xf32, #tpu.memory_space<vmem>>) attributes {dimension_semantics = [#tpu.dimension_semantics<parallel>], iteration_bounds = array<i64: 4>, scalar_prefetch = 0 : i64, scratch_operands = 0 : i64, tpu.core_type = #tpu.core_type<tc>, window_params = [{pipeline_mode = #tpu.pipeline_mode<synchronous>, transform_indices = @transform_0, window_bounds = array<i64: 8, 32>}, {transform_indices = @transform_1, window_bounds = array<i64: 32, 512>}, {transform_indices = @transform_2, window_bounds = array<i64: 1, 512>}, {transform_indices = @transform_3, window_bounds = array<i64: 8, 512>}]} {
    %c0 = arith.constant 0 : index
    %c0_0 = arith.constant 0 : index
    %0 = vector.load %arg1[%c0, %c0_0] : memref<8x32xf32, #tpu.memory_space<vmem>>, vector<8x32xf32>
    %c0_1 = arith.constant 0 : index
    %c0_2 = arith.constant 0 : index
    %1 = vector.load %arg2[%c0_1, %c0_2] : memref<32x512xf32, #tpu.memory_space<vmem>>, vector<32x512xf32>
    %cst = arith.constant dense<0.000000e+00> : vector<8x512xf32>
    %2 = tpu.matmul %0, %1, %cst {dimension_numbers = #tpu.dot_dimension_numbers<[1], [0], [0], [1], [0, 0, 1, 1], [], []>} : vector<8x32xf32>, vector<32x512xf32>, vector<8x512xf32> -> vector<8x512xf32>
    %c0_3 = arith.constant 0 : index
    %c0_4 = arith.constant 0 : index
    %3 = vector.load %arg3[%c0_3, %c0_4] : memref<1x512xf32, #tpu.memory_space<vmem>>, vector<1x512xf32>
    %4 = vector.broadcast %3 : vector<1x512xf32> to vector<8x512xf32>
    %5 = arith.addf %2, %4 : vector<8x512xf32>
    %cst_5 = arith.constant 0.000000e+00 : f32
    %6 = vector.broadcast %cst_5 : f32 to vector<8x512xf32>
    %7 = arith.maximumf %5, %6 : vector<8x512xf32>
    %c0_6 = arith.constant 0 : index
    %c0_7 = arith.constant 0 : index
    %8 = vector.load %arg4[%c0_6, %c0_7] : memref<8x512xf32, #tpu.memory_space<vmem>>, vector<8x512xf32>
    tpu.vector_store %arg4[%c0_6, %c0_7], %7 {strides = array<i32>} : memref<8x512xf32, #tpu.memory_space<vmem>>, vector<8x512xf32>,
    return
  }
  func.func @transform_0(%arg0: i32) -> (i32, i32) {
    %c0_i32 = arith.constant 0 : i32
    %c0_i32_0 = arith.constant 0 : i32
    %c0_i32_1 = arith.constant 0 : i32
    return %c0_i32, %c0_i32_0 : i32, i32
  }
  func.func @transform_1(%arg0: i32) -> (i32, i32) {
    %c0_i32 = arith.constant 0 : i32
    %c0_i32_0 = arith.constant 0 : i32
    return %c0_i32, %arg0 : i32, i32
  }
  func.func @transform_2(%arg0: i32) -> (i32, i32) {
    %c0_i32 = arith.constant 0 : i32
    %c0_i32_0 = arith.constant 0 : i32
    return %c0_i32, %arg0 : i32, i32
  }
  func.func @transform_3(%arg0: i32) -> (i32, i32) {
    %c0_i32 = arith.constant 0 : i32
    %c0_i32_0 = arith.constant 0 : i32
    return %c0_i32, %arg0 : i32, i32
  }
}

module attributes {stable_mosaic.version = 11 : i64} {
  func.func @_fused_layer_kernel(%arg0: i32, %arg1: memref<8x1024xf32, #tpu.memory_space<vmem>>, %arg2: memref<1024x256xf32, #tpu.memory_space<vmem>>, %arg3: memref<1x256xf32, #tpu.memory_space<vmem>>, %arg4: memref<8x256xf32, #tpu.memory_space<vmem>>) attributes {dimension_semantics = [#tpu.dimension_semantics<parallel>], iteration_bounds = array<i64: 2>, scalar_prefetch = 0 : i64, scratch_operands = 0 : i64, tpu.core_type = #tpu.core_type<tc>, window_params = [{pipeline_mode = #tpu.pipeline_mode<synchronous>, transform_indices = @transform_0, window_bounds = array<i64: 8, 1024>}, {transform_indices = @transform_1, window_bounds = array<i64: 1024, 256>}, {transform_indices = @transform_2, window_bounds = array<i64: 1, 256>}, {transform_indices = @transform_3, window_bounds = array<i64: 8, 256>}]} {
    %c0 = arith.constant 0 : index
    %c0_0 = arith.constant 0 : index
    %0 = vector.load %arg1[%c0, %c0_0] : memref<8x1024xf32, #tpu.memory_space<vmem>>, vector<8x1024xf32>
    %c0_1 = arith.constant 0 : index
    %c0_2 = arith.constant 0 : index
    %1 = vector.load %arg2[%c0_1, %c0_2] : memref<1024x256xf32, #tpu.memory_space<vmem>>, vector<1024x256xf32>
    %cst = arith.constant dense<0.000000e+00> : vector<8x256xf32>
    %2 = tpu.matmul %0, %1, %cst {dimension_numbers = #tpu.dot_dimension_numbers<[1], [0], [0], [1], [0, 0, 1, 1], [], []>} : vector<8x1024xf32>, vector<1024x256xf32>, vector<8x256xf32> -> vector<8x256xf32>
    %c0_3 = arith.constant 0 : index
    %c0_4 = arith.constant 0 : index
    %3 = vector.load %arg3[%c0_3, %c0_4] : memref<1x256xf32, #tpu.memory_space<vmem>>, vector<1x256xf32>
    %4 = vector.broadcast %3 : vector<1x256xf32> to vector<8x256xf32>
    %5 = arith.addf %2, %4 : vector<8x256xf32>
    %cst_5 = arith.constant 0.000000e+00 : f32
    %6 = vector.broadcast %cst_5 : f32 to vector<8x256xf32>
    %7 = arith.maximumf %5, %6 : vector<8x256xf32>
    %c0_6 = arith.constant 0 : index
    %c0_7 = arith.constant 0 : index
    %8 = vector.load %arg4[%c0_6, %c0_7] : memref<8x256xf32, #tpu.memory_space<vmem>>, vector<8x256xf32>
    tpu.vector_store %arg4[%c0_6, %c0_7], %7 {strides = array<i32>} : memref<8x256xf32, #tpu.memory_space<vmem>>, vector<8x256xf32>,
    return
  }
  func.func @transform_0(%arg0: i32) -> (i32, i32) {
    %c0_i32 = arith.constant 0 : i32
    %c0_i32_0 = arith.constant 0 : i32
    %c0_i32_1 = arith.constant 0 : i32
    return %c0_i32, %c0_i32_0 : i32, i32
  }
  func.func @transform_1(%arg0: i32) -> (i32, i32) {
    %c0_i32 = arith.constant 0 : i32
    %c0_i32_0 = arith.constant 0 : i32
    return %c0_i32, %arg0 : i32, i32
  }
  func.func @transform_2(%arg0: i32) -> (i32, i32) {
    %c0_i32 = arith.constant 0 : i32
    %c0_i32_0 = arith.constant 0 : i32
    return %c0_i32, %arg0 : i32, i32
  }
  func.func @transform_3(%arg0: i32) -> (i32, i32) {
    %c0_i32 = arith.constant 0 : i32
    %c0_i32_0 = arith.constant 0 : i32
    return %c0_i32, %arg0 : i32, i32
  }
}

module attributes {stable_mosaic.version = 11 : i64} {
  func.func @_fused_layer_kernel(%arg0: i32, %arg1: memref<8x2048xf32, #tpu.memory_space<vmem>>, %arg2: memref<2048x512xf32, #tpu.memory_space<vmem>>, %arg3: memref<1x512xf32, #tpu.memory_space<vmem>>, %arg4: memref<8x512xf32, #tpu.memory_space<vmem>>) attributes {dimension_semantics = [#tpu.dimension_semantics<parallel>], iteration_bounds = array<i64: 4>, scalar_prefetch = 0 : i64, scratch_operands = 0 : i64, tpu.core_type = #tpu.core_type<tc>, window_params = [{pipeline_mode = #tpu.pipeline_mode<synchronous>, transform_indices = @transform_0, window_bounds = array<i64: 8, 2048>}, {transform_indices = @transform_1, window_bounds = array<i64: 2048, 512>}, {transform_indices = @transform_2, window_bounds = array<i64: 1, 512>}, {transform_indices = @transform_3, window_bounds = array<i64: 8, 512>}]} {
    %c0 = arith.constant 0 : index
    %c0_0 = arith.constant 0 : index
    %0 = vector.load %arg1[%c0, %c0_0] : memref<8x2048xf32, #tpu.memory_space<vmem>>, vector<8x2048xf32>
    %c0_1 = arith.constant 0 : index
    %c0_2 = arith.constant 0 : index
    %1 = vector.load %arg2[%c0_1, %c0_2] : memref<2048x512xf32, #tpu.memory_space<vmem>>, vector<2048x512xf32>
    %cst = arith.constant dense<0.000000e+00> : vector<8x512xf32>
    %2 = tpu.matmul %0, %1, %cst {dimension_numbers = #tpu.dot_dimension_numbers<[1], [0], [0], [1], [0, 0, 1, 1], [], []>} : vector<8x2048xf32>, vector<2048x512xf32>, vector<8x512xf32> -> vector<8x512xf32>
    %c0_3 = arith.constant 0 : index
    %c0_4 = arith.constant 0 : index
    %3 = vector.load %arg3[%c0_3, %c0_4] : memref<1x512xf32, #tpu.memory_space<vmem>>, vector<1x512xf32>
    %4 = vector.broadcast %3 : vector<1x512xf32> to vector<8x512xf32>
    %5 = arith.addf %2, %4 : vector<8x512xf32>
    %cst_5 = arith.constant 0.000000e+00 : f32
    %6 = vector.broadcast %cst_5 : f32 to vector<8x512xf32>
    %7 = arith.maximumf %5, %6 : vector<8x512xf32>
    %c0_6 = arith.constant 0 : index
    %c0_7 = arith.constant 0 : index
    %8 = vector.load %arg4[%c0_6, %c0_7] : memref<8x512xf32, #tpu.memory_space<vmem>>, vector<8x512xf32>
    tpu.vector_store %arg4[%c0_6, %c0_7], %7 {strides = array<i32>} : memref<8x512xf32, #tpu.memory_space<vmem>>, vector<8x512xf32>,
    return
  }
  func.func @transform_0(%arg0: i32) -> (i32, i32) {
    %c0_i32 = arith.constant 0 : i32
    %c0_i32_0 = arith.constant 0 : i32
    %c0_i32_1 = arith.constant 0 : i32
    return %c0_i32, %c0_i32_0 : i32, i32
  }
  func.func @transform_1(%arg0: i32) -> (i32, i32) {
    %c0_i32 = arith.constant 0 : i32
    %c0_i32_0 = arith.constant 0 : i32
    return %c0_i32, %arg0 : i32, i32
  }
  func.func @transform_2(%arg0: i32) -> (i32, i32) {
    %c0_i32 = arith.constant 0 : i32
    %c0_i32_0 = arith.constant 0 : i32
    return %c0_i32, %arg0 : i32, i32
  }
  func.func @transform_3(%arg0: i32) -> (i32, i32) {
    %c0_i32 = arith.constant 0 : i32
    %c0_i32_0 = arith.constant 0 : i32
    return %c0_i32, %arg0 : i32, i32
  }
}

module attributes {stable_mosaic.version = 11 : i64} {
  func.func @_fused_layer_kernel(%arg0: i32, %arg1: memref<8x512xf32, #tpu.memory_space<vmem>>, %arg2: memref<512x128xf32, #tpu.memory_space<vmem>>, %arg3: memref<1x128xf32, #tpu.memory_space<vmem>>, %arg4: memref<8x128xf32, #tpu.memory_space<vmem>>) attributes {dimension_semantics = [#tpu.dimension_semantics<parallel>], iteration_bounds = array<i64: 2>, scalar_prefetch = 0 : i64, scratch_operands = 0 : i64, tpu.core_type = #tpu.core_type<tc>, window_params = [{pipeline_mode = #tpu.pipeline_mode<synchronous>, transform_indices = @transform_0, window_bounds = array<i64: 8, 512>}, {transform_indices = @transform_1, window_bounds = array<i64: 512, 128>}, {transform_indices = @transform_2, window_bounds = array<i64: 1, 128>}, {transform_indices = @transform_3, window_bounds = array<i64: 8, 128>}]} {
    %c0 = arith.constant 0 : index
    %c0_0 = arith.constant 0 : index
    %0 = vector.load %arg1[%c0, %c0_0] : memref<8x512xf32, #tpu.memory_space<vmem>>, vector<8x512xf32>
    %c0_1 = arith.constant 0 : index
    %c0_2 = arith.constant 0 : index
    %1 = vector.load %arg2[%c0_1, %c0_2] : memref<512x128xf32, #tpu.memory_space<vmem>>, vector<512x128xf32>
    %cst = arith.constant dense<0.000000e+00> : vector<8x128xf32>
    %2 = tpu.matmul %0, %1, %cst {dimension_numbers = #tpu.dot_dimension_numbers<[1], [0], [0], [1], [0, 0, 1, 1], [], []>} : vector<8x512xf32>, vector<512x128xf32>, vector<8x128xf32> -> vector<8x128xf32>
    %c0_3 = arith.constant 0 : index
    %c0_4 = arith.constant 0 : index
    %3 = vector.load %arg3[%c0_3, %c0_4] : memref<1x128xf32, #tpu.memory_space<vmem>>, vector<1x128xf32>
    %4 = vector.broadcast %3 : vector<1x128xf32> to vector<8x128xf32>
    %5 = arith.addf %2, %4 : vector<8x128xf32>
    %cst_5 = arith.constant 0.000000e+00 : f32
    %6 = vector.broadcast %cst_5 : f32 to vector<8x128xf32>
    %7 = arith.maximumf %5, %6 : vector<8x128xf32>
    %c0_6 = arith.constant 0 : index
    %c0_7 = arith.constant 0 : index
    %8 = vector.load %arg4[%c0_6, %c0_7] : memref<8x128xf32, #tpu.memory_space<vmem>>, vector<8x128xf32>
    tpu.vector_store %arg4[%c0_6, %c0_7], %7 {strides = array<i32>} : memref<8x128xf32, #tpu.memory_space<vmem>>, vector<8x128xf32>,
    return
  }
  func.func @transform_0(%arg0: i32) -> (i32, i32) {
    %c0_i32 = arith.constant 0 : i32
    %c0_i32_0 = arith.constant 0 : i32
    %c0_i32_1 = arith.constant 0 : i32
    return %c0_i32, %c0_i32_0 : i32, i32
  }
  func.func @transform_1(%arg0: i32) -> (i32, i32) {
    %c0_i32 = arith.constant 0 : i32
    %c0_i32_0 = arith.constant 0 : i32
    return %c0_i32, %arg0 : i32, i32
  }
  func.func @transform_2(%arg0: i32) -> (i32, i32) {
    %c0_i32 = arith.constant 0 : i32
    %c0_i32_0 = arith.constant 0 : i32
    return %c0_i32, %arg0 : i32, i32
  }
  func.func @transform_3(%arg0: i32) -> (i32, i32) {
    %c0_i32 = arith.constant 0 : i32
    %c0_i32_0 = arith.constant 0 : i32
    return %c0_i32, %arg0 : i32, i32
  }
}

module attributes {stable_mosaic.version = 11 : i64} {
  func.func @_fused_layer_kernel(%arg0: i32, %arg1: memref<8x256xf32, #tpu.memory_space<vmem>>, %arg2: memref<256x16xf32, #tpu.memory_space<vmem>>, %arg3: memref<1x16xf32, #tpu.memory_space<vmem>>, %arg4: memref<8x16xf32, #tpu.memory_space<vmem>>) attributes {dimension_semantics = [#tpu.dimension_semantics<parallel>], iteration_bounds = array<i64: 1>, scalar_prefetch = 0 : i64, scratch_operands = 0 : i64, tpu.core_type = #tpu.core_type<tc>, window_params = [{pipeline_mode = #tpu.pipeline_mode<synchronous>, transform_indices = @transform_0, window_bounds = array<i64: 8, 256>}, {transform_indices = @transform_1, window_bounds = array<i64: 256, 16>}, {transform_indices = @transform_2, window_bounds = array<i64: 1, 16>}, {transform_indices = @transform_3, window_bounds = array<i64: 8, 16>}]} {
    %c0 = arith.constant 0 : index
    %c0_0 = arith.constant 0 : index
    %0 = vector.load %arg1[%c0, %c0_0] : memref<8x256xf32, #tpu.memory_space<vmem>>, vector<8x256xf32>
    %c0_1 = arith.constant 0 : index
    %c0_2 = arith.constant 0 : index
    %1 = vector.load %arg2[%c0_1, %c0_2] : memref<256x16xf32, #tpu.memory_space<vmem>>, vector<256x16xf32>
    %cst = arith.constant dense<0.000000e+00> : vector<8x16xf32>
    %2 = tpu.matmul %0, %1, %cst {dimension_numbers = #tpu.dot_dimension_numbers<[1], [0], [0], [1], [0, 0, 1, 1], [], []>} : vector<8x256xf32>, vector<256x16xf32>, vector<8x16xf32> -> vector<8x16xf32>
    %c0_3 = arith.constant 0 : index
    %c0_4 = arith.constant 0 : index
    %3 = vector.load %arg3[%c0_3, %c0_4] : memref<1x16xf32, #tpu.memory_space<vmem>>, vector<1x16xf32>
    %4 = vector.broadcast %3 : vector<1x16xf32> to vector<8x16xf32>
    %5 = arith.addf %2, %4 : vector<8x16xf32>
    %c0_5 = arith.constant 0 : index
    %c0_6 = arith.constant 0 : index
    %6 = vector.load %arg4[%c0_5, %c0_6] : memref<8x16xf32, #tpu.memory_space<vmem>>, vector<8x16xf32>
    tpu.vector_store %arg4[%c0_5, %c0_6], %5 {strides = array<i32>} : memref<8x16xf32, #tpu.memory_space<vmem>>, vector<8x16xf32>,
    return
  }
  func.func @transform_0(%arg0: i32) -> (i32, i32) {
    %c0_i32 = arith.constant 0 : i32
    %c0_i32_0 = arith.constant 0 : i32
    %c0_i32_1 = arith.constant 0 : i32
    return %c0_i32, %c0_i32_0 : i32, i32
  }
  func.func @transform_1(%arg0: i32) -> (i32, i32) {
    %c0_i32 = arith.constant 0 : i32
    %c0_i32_0 = arith.constant 0 : i32
    return %c0_i32, %arg0 : i32, i32
  }
  func.func @transform_2(%arg0: i32) -> (i32, i32) {
    %c0_i32 = arith.constant 0 : i32
    %c0_i32_0 = arith.constant 0 : i32
    return %c0_i32, %arg0 : i32, i32
  }
  func.func @transform_3(%arg0: i32) -> (i32, i32) {
    %c0_i32 = arith.constant 0 : i32
    %c0_i32_0 = arith.constant 0 : i32
    return %c0_i32, %arg0 : i32, i32
  }
}

</mosaic_0001>

<llo_original>
// kernel: feedforward_net_gptj.6
$region0: #{feedforward_net_gptj.6}
  #allocation0 [shape = 'u32[]', space=smem, size = 0x4, offset = 0x4, fixed_abs, tag = 'smem constant byte address 0x4 - core index']
  #allocation1 [shape = 'u32[72,128]{1,0:T(1,128)}', space=vmem, size = 0x9000, scoped, tag = 'internal scratch']
  %s0 = inlined_call_operand.hbm [shape: f32[8,32], index: 0, kind: input, shape index: {}]
  %s1 = inlined_call_operand.hbm [shape: f32[32,2048], index: 1, kind: input, shape index: {}]
  %s2 = inlined_call_operand.hbm [shape: f32[1,2048], index: 2, kind: input, shape index: {}]
  %s3 = inlined_call_operand.vmem [shape: f32[8,2048], index: 3, kind: output, shape index: {}]
  %s4 = sld [smem:[#allocation0]]
  $region57: #{feedforward_net_gptj.6} parent=0
    _
  %s6 = ssub.s32 1, %s4
  %s7 = scalar_select 0, %s6, %s4
  $region1: #{feedforward_net_gptj.6} parent=0
    #allocation2 [shape = 'u8[4096]{0}', space=vmem, size = 0x1000, scoped, tag = 'input window, operand 0, single buffered']
    #allocation3 [shape = 's32[2]{0}', space=sflag, size = 0x8, scoped, tag = 'scoped memory for feedforward_net_gptj.6']
    #allocation4 [shape = 'u8[131072]{0}', space=vmem, size = 0x20000, scoped, tag = 'input window, operand 1']
    #allocation5 [shape = 's32[2]{0}', space=sflag, size = 0x8, scoped, tag = 'scoped memory for feedforward_net_gptj.6']
    #allocation6 [shape = 'u8[4096]{0}', space=vmem, size = 0x1000, scoped, tag = 'input window, operand 2']
    %8 = vsyncpa [#allocation3], 0
    %9 = vsyncpa [#allocation5], 0
    %s10 = scalar_lea.sflag [#allocation5], 1
    %11 = vsyncpa %s10, 0
    loop: start=0, step=1, limit=6
    $region2: #{feedforward_net_gptj.6} parent=1 // loop_pre_header
      _
    $region3: #{feedforward_net_gptj.6} parent=1 // loop_header
      %s13 = sphi 0, %s17
      %p14 = scmp.ge.s32.totalorder %s13, 6
      %s21 = sphi 0, %s21
      %s23 = sphi 0, %s21
      %s24 = sphi 0, %s23
      %s38 = sphi 0, %s24
      %s44 = sphi 0, %s46
      %s47 = sphi 0, %s44
      %s48 = sphi 0, %s47
      %s64 = sphi 0, %s48
      %s70 = sphi 0, %s72
      %s73 = sphi 0, %s70
      %s74 = sphi 0, %s73
      %s90 = sphi 0, %s74
      %s96 = sphi 0, %s98
      %s99 = sphi 0, %s96
      %s100 = sphi 0, %s99
      %s116 = sphi 0, %s100
    $region4: #{feedforward_net_gptj.6} parent=1 // loop_header_branch
      %16 = sbr.rel (%p14) target = $region8
    $region5: #{feedforward_net_gptj.6} parent=1 // loop_body
      %s18 = ssub.s32 %s13, 1
      %s19 = ssub.s32 %s13, 2
      %s20 = sadd.s32 %s13, 1
      %s22 = sadd.s32 %s21, 1
      %p25 = scmp.eq.s32.totalorder %s13, 3
      %p26 = scmp.ne.s32.totalorder %s21, %s23
      %p27 = scmp.eq.s32.totalorder %s13, 0
      %p28 = por %p26, %p27
      %p29 = scmp.ne.s32.totalorder %s21, %s23
      %p30 = scmp.eq.s32.totalorder %s18, 3
      %p31 = por %p29, %p30
      %p32 = scmp.ne.s32.totalorder %s23, %s24
      %p33 = scmp.eq.s32.totalorder %s18, 0
      %p34 = por %p32, %p33
      %p35 = scmp.ne.s32.totalorder %s23, %s24
      %p36 = scmp.eq.s32.totalorder %s19, 3
      %p37 = por %p35, %p36
      %p39 = scmp.ne.s32.totalorder %s24, %s38
      %p40 = scmp.eq.s32.totalorder %s19, 0
      %p41 = por %p39, %p40
      %s42 = ssub.s32 %s13, %s20
      %p43 = scmp.eq.s32.totalorder %s42, 0
      %s45 = sadd.s32 %s44, 1
      %s46 = scalar_select %p43, %s44, %s45
      %p49 = pneg %p43
      %p50 = scmp.eq.s32.totalorder %s13, 3
      %p51 = por %p49, %p50
      %p52 = scmp.ne.s32.totalorder %s44, %s47
      %p53 = scmp.eq.s32.totalorder %s13, 0
      %p54 = por %p52, %p53
      %p55 = scmp.ne.s32.totalorder %s44, %s47
      %p56 = scmp.eq.s32.totalorder %s18, 3
      %p57 = por %p55, %p56
      %p58 = scmp.ne.s32.totalorder %s47, %s48
      %p59 = scmp.eq.s32.totalorder %s18, 0
      %p60 = por %p58, %p59
      %p61 = scmp.ne.s32.totalorder %s47, %s48
      %p62 = scmp.eq.s32.totalorder %s19, 3
      %p63 = por %p61, %p62
      %p65 = scmp.ne.s32.totalorder %s48, %s64
      %p66 = scmp.eq.s32.totalorder %s19, 0
      %p67 = por %p65, %p66
      %s68 = ssub.s32 %s13, %s20
      %p69 = scmp.eq.s32.totalorder %s68, 0
      %s71 = sadd.s32 %s70, 1
      %s72 = scalar_select %p69, %s70, %s71
      %p75 = pneg %p69
      %p76 = scmp.eq.s32.totalorder %s13, 3
      %p77 = por %p75, %p76
      %p78 = scmp.ne.s32.totalorder %s70, %s73
      %p79 = scmp.eq.s32.totalorder %s13, 0
      %p80 = por %p78, %p79
      %p81 = scmp.ne.s32.totalorder %s70, %s73
      %p82 = scmp.eq.s32.totalorder %s18, 3
      %p83 = por %p81, %p82
      %p84 = scmp.ne.s32.totalorder %s73, %s74
      %p85 = scmp.eq.s32.totalorder %s18, 0
      %p86 = por %p84, %p85
      %p87 = scmp.ne.s32.totalorder %s73, %s74
      %p88 = scmp.eq.s32.totalorder %s19, 3
      %p89 = por %p87, %p88
      %p91 = scmp.ne.s32.totalorder %s74, %s90
      %p92 = scmp.eq.s32.totalorder %s19, 0
      %p93 = por %p91, %p92
      %s94 = ssub.s32 %s13, %s20
      %p95 = scmp.eq.s32.totalorder %s94, 0
      %s97 = sadd.s32 %s96, 1
      %s98 = scalar_select %p95, %s96, %s97
      %p101 = pneg %p95
      %p102 = scmp.eq.s32.totalorder %s13, 3
      %p103 = por %p101, %p102
      %p104 = scmp.ne.s32.totalorder %s96, %s99
      %p105 = scmp.eq.s32.totalorder %s13, 0
      %p106 = por %p104, %p105
      %p107 = scmp.ne.s32.totalorder %s96, %s99
      %p108 = scmp.eq.s32.totalorder %s18, 3
      %p109 = por %p107, %p108
      %p110 = scmp.ne.s32.totalorder %s99, %s100
      %p111 = scmp.eq.s32.totalorder %s18, 0
      %p112 = por %p110, %p111
      %p113 = scmp.ne.s32.totalorder %s99, %s100
      %p114 = scmp.eq.s32.totalorder %s19, 3
      %p115 = por %p113, %p114
      %p117 = scmp.ne.s32.totalorder %s100, %s116
      %p118 = scmp.eq.s32.totalorder %s19, 0
      %p119 = por %p117, %p118
      %p120 = scmp.le.s32.totalorder 1, %s13
      %p121 = scmp.lt.s32.totalorder %s13, 5
      %p122 = pnand %p120, %p121
      %p123 = pneg %p122
      // Predicated region
      $region9: #{feedforward_net_gptj.6} parent=5 // pred_check
        _
      $region10: #{feedforward_net_gptj.6} parent=5 // pred_check_branch
        %125 = sbr.rel (%p122) target = $region12
      $region11: #{feedforward_net_gptj.6} parent=5 // pred_region
        %s126 = ssub.s32 %s13, 1
        // Predicated region
        $region13: #{feedforward_net_gptj.6} parent=11 // pred_check
          %p127 = pneg %p34
        $region14: #{feedforward_net_gptj.6} parent=11 // pred_check_branch
          %129 = sbr.rel (%p127) target = $region16
        $region15: #{feedforward_net_gptj.6} parent=11 // pred_region
          %131 = vsyncadd [#allocation3], 0
          %s133 = sshll.u32 %s0, 4
          %s134 = int_to_ptr.hbm [resolvable:$true] %s133
          %s135 = sshll.u32 [#allocation2], 4
          %s136 = int_to_ptr.vmem [resolvable:$true] %s135
          %138 = dma.hbm_to_vmem [thread:$0]  %s134, 128, %s136, [#allocation3]
        $region16: #{feedforward_net_gptj.6} parent=11 // pred_fallthru
          _
      $region12: #{feedforward_net_gptj.6} parent=5 // pred_fallthru
        _
      %p139 = scmp.lt.s32.totalorder %s13, 4
      // Predicated region
      $region17: #{feedforward_net_gptj.6} parent=5 // pred_check
        %p140 = pneg %p139
      $region18: #{feedforward_net_gptj.6} parent=5 // pred_check_branch
        %142 = sbr.rel (%p140) target = $region20
      $region19: #{feedforward_net_gptj.6} parent=5 // pred_region
        // Predicated region
        $region21: #{feedforward_net_gptj.6} parent=19 // pred_check
          %p143 = pneg %p54
        $region22: #{feedforward_net_gptj.6} parent=19 // pred_check_branch
          %145 = sbr.rel (%p143) target = $region24
        $region23: #{feedforward_net_gptj.6} parent=19 // pred_region
          %s146 = sand.u32 %s13, 1
          %s147 = scalar_lea.sflag [#allocation5], %s146
          %s148 = sand.u32 %s44, 1
          %s149 = smul.addr %s148, 128
          %s150 = scalar_lea.vmem [#allocation4], %s149
          %s151 = smul.u32 4, %s13
          %153 = vsyncadd %s147, 0
          %s154 = smul.addr %s151, 8
          %s155 = scalar_lea.hbm %s1, %s154
          %s156 = sshll.u32 %s155, 4
          %s157 = int_to_ptr.hbm [resolvable:$true] %s156
          %s158 = sshll.u32 %s150, 4
          %s159 = int_to_ptr.vmem [resolvable:$true] %s158
          %164 = dma.hbm_to_vmem [thread:$0]  %s157, 2048, %s159, %s147, 2048, 512, 32
        $region24: #{feedforward_net_gptj.6} parent=19 // pred_fallthru
          _
        // Predicated region
        $region25: #{feedforward_net_gptj.6} parent=19 // pred_check
          %p165 = pneg %p80
        $region26: #{feedforward_net_gptj.6} parent=19 // pred_check_branch
          %167 = sbr.rel (%p165) target = $region28
        $region27: #{feedforward_net_gptj.6} parent=19 // pred_region
          %s168 = sand.u32 %s13, 1
          %s169 = scalar_lea.sflag [#allocation5], %s168
          %s170 = sand.u32 %s70, 1
          %s171 = smul.addr %s170, 4
          %s172 = scalar_lea.vmem [#allocation6], %s171
          %s173 = smul.u32 4, %s13
          %175 = vsyncadd %s169, 0
          %s176 = scalar_lea.hbm %s2, %s173
          %s178 = sshll.u32 %s176, 4
          %s179 = int_to_ptr.hbm [resolvable:$true] %s178
          %s180 = sshll.u32 %s172, 4
          %s181 = int_to_ptr.vmem [resolvable:$true] %s180
          %183 = dma.hbm_to_vmem [thread:$0]  %s179, 64, %s181, %s169
        $region28: #{feedforward_net_gptj.6} parent=19 // pred_fallthru
          _
      $region20: #{feedforward_net_gptj.6} parent=5 // pred_fallthru
        _
      %p184 = scmp.le.s32.totalorder 1, %s13
      %p185 = scmp.lt.s32.totalorder %s13, 5
      %p186 = pnand %p184, %p185
      %p187 = pneg %p186
      // Predicated region
      $region29: #{feedforward_net_gptj.6} parent=5 // pred_check
        _
      $region30: #{feedforward_net_gptj.6} parent=5 // pred_check_branch
        %189 = sbr.rel (%p186) target = $region32
      $region31: #{feedforward_net_gptj.6} parent=5 // pred_region
        %s190 = ssub.s32 %s13, 1
        // Predicated region
        $region33: #{feedforward_net_gptj.6} parent=31 // pred_check
          %p191 = pneg %p34
        $region34: #{feedforward_net_gptj.6} parent=31 // pred_check_branch
          %193 = sbr.rel (%p191) target = $region36
        $region35: #{feedforward_net_gptj.6} parent=31 // pred_region
          %195 = dma.done [#allocation3], 128
        $region36: #{feedforward_net_gptj.6} parent=31 // pred_fallthru
          _
        %s196 = sand.u32 %s18, 1
        %s197 = scalar_lea.sflag [#allocation5], %s196
        %s198 = sand.u32 %s47, 1
        %s199 = smul.addr %s198, 128
        %s200 = scalar_lea.vmem [#allocation4], %s199
        // Predicated region
        $region37: #{feedforward_net_gptj.6} parent=31 // pred_check
          %p201 = pneg %p60
        $region38: #{feedforward_net_gptj.6} parent=31 // pred_check_branch
          %203 = sbr.rel (%p201) target = $region40
        $region39: #{feedforward_net_gptj.6} parent=31 // pred_region
          %205 = dma.done %s197, 2048
        $region40: #{feedforward_net_gptj.6} parent=31 // pred_fallthru
          _
        %s206 = sand.u32 %s18, 1
        %s207 = scalar_lea.sflag [#allocation5], %s206
        %s208 = sand.u32 %s73, 1
        %s209 = smul.addr %s208, 4
        %s210 = scalar_lea.vmem [#allocation6], %s209
        // Predicated region
        $region41: #{feedforward_net_gptj.6} parent=31 // pred_check
          %p211 = pneg %p86
        $region42: #{feedforward_net_gptj.6} parent=31 // pred_check_branch
          %213 = sbr.rel (%p211) target = $region44
        $region43: #{feedforward_net_gptj.6} parent=31 // pred_region
          %215 = dma.done %s207, 64
        $region44: #{feedforward_net_gptj.6} parent=31 // pred_fallthru
          _
        %p216 = pneg %p34
        %p217 = pneg %p31
        %s218 = sand.u32 %s18, 1
        %s219 = scalar_lea.sflag [#allocation5], %s218
        %s220 = sand.u32 %s47, 1
        %s221 = smul.addr %s220, 128
        %s222 = scalar_lea.vmem [#allocation4], %s221
        %p223 = pneg %p60
        %p224 = pneg %p57
        %s225 = sand.u32 %s18, 1
        %s226 = scalar_lea.sflag [#allocation5], %s225
        %s227 = sand.u32 %s73, 1
        %s228 = smul.addr %s227, 4
        %s229 = scalar_lea.vmem [#allocation6], %s228
        %p230 = pneg %p86
        %p231 = pneg %p83
        %p232 = pneg %p112
        %p233 = pneg %p109
        %s234 = smul.u32 4, %s18
        %p235 = scmp.lt.s32.totalorder %s234, 15
        %s236 = scalar_select %p235, %s234, 15
        %s237 = smul.addr %s236, 8
        %s238 = scalar_lea.vmem %s3, %s237
        %s239 = smul.u32 4, %s18
        %s240 = smul.u32 4, %s18
        %s241 = smul.u32 4, %s18
        %p242 = scmp.lt.s32.totalorder %s241, 15
        %s243 = scalar_select %p242, %s241, 15
        %s244 = smul.addr %s243, 8
        %s245 = scalar_lea.vmem %s3, %s244
        %s246 = smul.u32 4, %s18
        %v247 = vld [vmem:[#allocation2] sm:$0xff]
        %v248 = vld [vmem:[%s200] sm:$0xff]
        %v249 = vld [vmem:[%s200 + $0x8] sm:$0xff]
        %v250 = vld [vmem:[%s200 + $0x10] sm:$0xff]
        %v251 = vld [vmem:[%s200 + $0x18] sm:$0xff]
        %v252 = vld [vmem:[%s200 + $0x20] sm:$0xff]
        %v253 = vld [vmem:[%s200 + $0x28] sm:$0xff]
        %v254 = vld [vmem:[%s200 + $0x30] sm:$0xff]
        %v255 = vld [vmem:[%s200 + $0x38] sm:$0xff]
        %v256 = vld [vmem:[%s200 + $0x40] sm:$0xff]
        %v257 = vld [vmem:[%s200 + $0x48] sm:$0xff]
        %v258 = vld [vmem:[%s200 + $0x50] sm:$0xff]
        %v259 = vld [vmem:[%s200 + $0x58] sm:$0xff]
        %v260 = vld [vmem:[%s200 + $0x60] sm:$0xff]
        %v261 = vld [vmem:[%s200 + $0x68] sm:$0xff]
        %v262 = vld [vmem:[%s200 + $0x70] sm:$0xff]
        %v263 = vld [vmem:[%s200 + $0x78] sm:$0xff]
        %v264 = vld [vmem:[%s210] sm:$0xf]
        %v266 = vperm.slane %v264, 0
        %v267 = vperm.slane %v264, 1
        %v268 = vperm.slane %v264, 2
        %v269 = vperm.slane %v264, 3
        %vm274 = vcmask 261120
        %v276 = vsel %vm274, %v247, 0
        %278 = vmatpush.msra.mxu0 0.0
        %279 = vmatpush.msra.mxu0 0.0
        %280 = vmatpush.msra.mxu0 0.0
        %281 = vmatpush.msra.mxu0 0.0
        %282 = vmatpush.msra.mxu0 0.0
        %283 = vmatpush.msra.mxu0 0.0
        %284 = vmatpush.msra.mxu0 0.0
        %285 = vmatpush.msra.mxu0 0.0
        %286 = vmatpush.msra.mxu0 0.0
        %287 = vmatpush.msra.mxu0 0.0
        %288 = vmatpush.msra.mxu0 0.0
        %289 = vmatpush.msra.mxu0 0.0
        %290 = vmatpush.msra.mxu0 %v260
        %291 = vmatpush.msra.mxu0 %v256
        %292 = vmatpush.msra.mxu0 %v252
        %293 = vmatpush.msra.mxu0 %v248
        %294 = vmatmul.f32.gmra.mxu0 %v276
        %v295 = vpop.f32.mrf.mxu0
        %v296 = vadd.f32 %v266, %v295
        %297 = vdwg.mxu0
        %298 = vmatpush.msra.mxu0 0.0
        %299 = vmatpush.msra.mxu0 0.0
        %300 = vmatpush.msra.mxu0 0.0
        %301 = vmatpush.msra.mxu0 0.0
        %302 = vmatpush.msra.mxu0 0.0
        %303 = vmatpush.msra.mxu0 0.0
        %304 = vmatpush.msra.mxu0 0.0
        %305 = vmatpush.msra.mxu0 0.0
        %306 = vmatpush.msra.mxu0 0.0
        %307 = vmatpush.msra.mxu0 0.0
        %308 = vmatpush.msra.mxu0 0.0
        %309 = vmatpush.msra.mxu0 0.0
        %310 = vmatpush.msra.mxu0 %v261
        %311 = vmatpush.msra.mxu0 %v257
        %312 = vmatpush.msra.mxu0 %v253
        %313 = vmatpush.msra.mxu0 %v249
        %314 = vmatmul.f32.gmra.mxu0 %v276
        %v315 = vpop.f32.mrf.mxu0
        %v316 = vadd.f32 %v267, %v315
        %317 = vdwg.mxu0
        %318 = vmatpush.msra.mxu0 0.0
        %319 = vmatpush.msra.mxu0 0.0
        %320 = vmatpush.msra.mxu0 0.0
        %321 = vmatpush.msra.mxu0 0.0
        %322 = vmatpush.msra.mxu0 0.0
        %323 = vmatpush.msra.mxu0 0.0
        %324 = vmatpush.msra.mxu0 0.0
        %325 = vmatpush.msra.mxu0 0.0
        %326 = vmatpush.msra.mxu0 0.0
        %327 = vmatpush.msra.mxu0 0.0
        %328 = vmatpush.msra.mxu0 0.0
        %329 = vmatpush.msra.mxu0 0.0
        %330 = vmatpush.msra.mxu0 %v262
        %331 = vmatpush.msra.mxu0 %v258
        %332 = vmatpush.msra.mxu0 %v254
        %333 = vmatpush.msra.mxu0 %v250
        %334 = vmatmul.f32.gmra.mxu0 %v276
        %v335 = vpop.f32.mrf.mxu0
        %v336 = vadd.f32 %v268, %v335
        %337 = vdwg.mxu0
        %338 = vmatpush.msra.mxu0 0.0
        %339 = vmatpush.msra.mxu0 0.0
        %340 = vmatpush.msra.mxu0 0.0
        %341 = vmatpush.msra.mxu0 0.0
        %342 = vmatpush.msra.mxu0 0.0
        %343 = vmatpush.msra.mxu0 0.0
        %344 = vmatpush.msra.mxu0 0.0
        %345 = vmatpush.msra.mxu0 0.0
        %346 = vmatpush.msra.mxu0 0.0
        %347 = vmatpush.msra.mxu0 0.0
        %348 = vmatpush.msra.mxu0 0.0
        %349 = vmatpush.msra.mxu0 0.0
        %350 = vmatpush.msra.mxu0 %v263
        %351 = vmatpush.msra.mxu0 %v259
        %352 = vmatpush.msra.mxu0 %v255
        %353 = vmatpush.msra.mxu0 %v251
        %354 = vmatmul.f32.gmra.mxu0 %v276
        %v355 = vpop.f32.mrf.mxu0
        %v356 = vadd.f32 %v269, %v355
        %357 = vdwg.mxu0
        %v358 = vmax.f32 %v296, 0.0
        %v359 = vmax.f32 %v316, 0.0
        %v360 = vmax.f32 %v336, 0.0
        %v361 = vmax.f32 %v356, 0.0
        %362 = vst [vmem:[%s245] sm:$0xff] %v358
        %363 = vst [vmem:[%s245 + $0x8] sm:$0xff] %v359
        %364 = vst [vmem:[%s245 + $0x10] sm:$0xff] %v360
        %365 = vst [vmem:[%s245 + $0x18] sm:$0xff] %v361
        %s366 = smul.u32 4, %s18
        %p367 = scmp.lt.s32.totalorder %s366, 15
        %s368 = scalar_select %p367, %s366, 15
        %s369 = smul.addr %s368, 8
        %s370 = scalar_lea.vmem %s3, %s369
        // Predicated region
        $region45: #{feedforward_net_gptj.6} parent=31 // pred_check
          %p371 = pneg %p109
        $region46: #{feedforward_net_gptj.6} parent=31 // pred_check_branch
          %373 = sbr.rel (%p371) target = $region48
        $region47: #{feedforward_net_gptj.6} parent=31 // pred_region
          %s374 = smul.u32 4, %s18
        $region48: #{feedforward_net_gptj.6} parent=31 // pred_fallthru
          _
      $region32: #{feedforward_net_gptj.6} parent=5 // pred_fallthru
        _
      %p375 = scmp.le.s32.totalorder 2, %s13
      // Predicated region
      $region49: #{feedforward_net_gptj.6} parent=5 // pred_check
        %p376 = pneg %p375
      $region50: #{feedforward_net_gptj.6} parent=5 // pred_check_branch
        %378 = sbr.rel (%p376) target = $region52
      $region51: #{feedforward_net_gptj.6} parent=5 // pred_region
        %s379 = ssub.s32 %s13, 2
        // Predicated region
        $region53: #{feedforward_net_gptj.6} parent=51 // pred_check
          %p380 = pneg %p115
        $region54: #{feedforward_net_gptj.6} parent=51 // pred_check_branch
          %382 = sbr.rel (%p380) target = $region56
        $region55: #{feedforward_net_gptj.6} parent=51 // pred_region
          %s383 = smul.u32 4, %s19
          %p384 = scmp.lt.s32.totalorder %s383, 15
          %s385 = scalar_select %p384, %s383, 15
          %s386 = smul.addr %s385, 8
          %s387 = scalar_lea.vmem %s3, %s386
        $region56: #{feedforward_net_gptj.6} parent=51 // pred_fallthru
          _
      $region52: #{feedforward_net_gptj.6} parent=5 // pred_fallthru
        _
    $region6: #{feedforward_net_gptj.6} parent=1 // loop_footer
      %s17 = sadd.s32 1, %s13
    $region7: #{feedforward_net_gptj.6} parent=1 // loop_footer_branch
      %12 = sbr.rel target = $region3
    $region8: #{feedforward_net_gptj.6} parent=1 // loop_exit
      _
    %388 = vsyncpa [#allocation3], 1
    %s389 = scalar_lea.sflag [#allocation3], 1
    %390 = vsyncpa %s389, 1
    %391 = vsyncpa [#allocation5], 1
    %s392 = scalar_lea.sflag [#allocation5], 1
    %393 = vsyncpa %s392, 1

// kernel: feedforward_net_gptj.9
$region0: #{feedforward_net_gptj.9}
  #allocation0 [shape = 'u32[]', space=smem, size = 0x4, offset = 0x4, fixed_abs, tag = 'smem constant byte address 0x4 - core index']
  #allocation1 [shape = 'u32[72,128]{1,0:T(1,128)}', space=vmem, size = 0x9000, scoped, tag = 'internal scratch']
  %s0 = inlined_call_operand.vmem [shape: f32[8,1024], index: 0, kind: input, shape index: {}]
  %s1 = inlined_call_operand.hbm [shape: f32[1024,512], index: 1, kind: input, shape index: {}]
  %s2 = inlined_call_operand.hbm [shape: f32[1,512], index: 2, kind: input, shape index: {}]
  %s3 = inlined_call_operand.vmem [shape: f32[8,512], index: 3, kind: output, shape index: {}]
  %s4 = sld [smem:[#allocation0]]
  $region53: #{feedforward_net_gptj.9} parent=0
    _
  %s6 = ssub.s32 1, %s4
  %s7 = scalar_select 0, %s6, %s4
  $region1: #{feedforward_net_gptj.9} parent=0
    #allocation2 [shape = 'u8[2097152]{0}', space=vmem, size = 0x200000, scoped, tag = 'input window, operand 1']
    #allocation3 [shape = 's32[2]{0}', space=sflag, size = 0x8, scoped, tag = 'scoped memory for feedforward_net_gptj.9']
    #allocation4 [shape = 'u8[2048]{0}', space=vmem, size = 0x800, scoped, tag = 'input window, operand 2']
    #allocation5 [shape = 's32[2]{0}', space=sflag, size = 0x8, scoped, tag = 'scoped memory for feedforward_net_gptj.9']
    %8 = vsyncpa [#allocation3], 0
    %s9 = scalar_lea.sflag [#allocation3], 1
    %10 = vsyncpa %s9, 0
    %11 = vsyncpa [#allocation5], 0
    %s12 = scalar_lea.sflag [#allocation5], 1
    %13 = vsyncpa %s12, 0
    loop: start=0, step=1, limit=4
    $region2: #{feedforward_net_gptj.9} parent=1 // loop_pre_header
      _
    $region3: #{feedforward_net_gptj.9} parent=1 // loop_header
      %s15 = sphi 0, %s19
      %p16 = scmp.ge.s32.totalorder %s15, 4
      %s23 = sphi 0, %s23
      %s25 = sphi 0, %s23
      %s26 = sphi 0, %s25
      %s40 = sphi 0, %s26
      %s46 = sphi 0, %s48
      %s49 = sphi 0, %s46
      %s50 = sphi 0, %s49
      %s66 = sphi 0, %s50
      %s72 = sphi 0, %s74
      %s75 = sphi 0, %s72
      %s76 = sphi 0, %s75
      %s92 = sphi 0, %s76
      %s98 = sphi 0, %s100
      %s101 = sphi 0, %s98
      %s102 = sphi 0, %s101
      %s118 = sphi 0, %s102
    $region4: #{feedforward_net_gptj.9} parent=1 // loop_header_branch
      %18 = sbr.rel (%p16) target = $region8
    $region5: #{feedforward_net_gptj.9} parent=1 // loop_body
      %s20 = ssub.s32 %s15, 1
      %s21 = ssub.s32 %s15, 2
      %s22 = sadd.s32 %s15, 1
      %s24 = sadd.s32 %s23, 1
      %p27 = scmp.eq.s32.totalorder %s15, 1
      %p28 = scmp.ne.s32.totalorder %s23, %s25
      %p29 = scmp.eq.s32.totalorder %s15, 0
      %p30 = por %p28, %p29
      %p31 = scmp.ne.s32.totalorder %s23, %s25
      %p32 = scmp.eq.s32.totalorder %s20, 1
      %p33 = por %p31, %p32
      %p34 = scmp.ne.s32.totalorder %s25, %s26
      %p35 = scmp.eq.s32.totalorder %s20, 0
      %p36 = por %p34, %p35
      %p37 = scmp.ne.s32.totalorder %s25, %s26
      %p38 = scmp.eq.s32.totalorder %s21, 1
      %p39 = por %p37, %p38
      %p41 = scmp.ne.s32.totalorder %s26, %s40
      %p42 = scmp.eq.s32.totalorder %s21, 0
      %p43 = por %p41, %p42
      %s44 = ssub.s32 %s15, %s22
      %p45 = scmp.eq.s32.totalorder %s44, 0
      %s47 = sadd.s32 %s46, 1
      %s48 = scalar_select %p45, %s46, %s47
      %p51 = pneg %p45
      %p52 = scmp.eq.s32.totalorder %s15, 1
      %p53 = por %p51, %p52
      %p54 = scmp.ne.s32.totalorder %s46, %s49
      %p55 = scmp.eq.s32.totalorder %s15, 0
      %p56 = por %p54, %p55
      %p57 = scmp.ne.s32.totalorder %s46, %s49
      %p58 = scmp.eq.s32.totalorder %s20, 1
      %p59 = por %p57, %p58
      %p60 = scmp.ne.s32.totalorder %s49, %s50
      %p61 = scmp.eq.s32.totalorder %s20, 0
      %p62 = por %p60, %p61
      %p63 = scmp.ne.s32.totalorder %s49, %s50
      %p64 = scmp.eq.s32.totalorder %s21, 1
      %p65 = por %p63, %p64
      %p67 = scmp.ne.s32.totalorder %s50, %s66
      %p68 = scmp.eq.s32.totalorder %s21, 0
      %p69 = por %p67, %p68
      %s70 = ssub.s32 %s15, %s22
      %p71 = scmp.eq.s32.totalorder %s70, 0
      %s73 = sadd.s32 %s72, 1
      %s74 = scalar_select %p71, %s72, %s73
      %p77 = pneg %p71
      %p78 = scmp.eq.s32.totalorder %s15, 1
      %p79 = por %p77, %p78
      %p80 = scmp.ne.s32.totalorder %s72, %s75
      %p81 = scmp.eq.s32.totalorder %s15, 0
      %p82 = por %p80, %p81
      %p83 = scmp.ne.s32.totalorder %s72, %s75
      %p84 = scmp.eq.s32.totalorder %s20, 1
      %p85 = por %p83, %p84
      %p86 = scmp.ne.s32.totalorder %s75, %s76
      %p87 = scmp.eq.s32.totalorder %s20, 0
      %p88 = por %p86, %p87
      %p89 = scmp.ne.s32.totalorder %s75, %s76
      %p90 = scmp.eq.s32.totalorder %s21, 1
      %p91 = por %p89, %p90
      %p93 = scmp.ne.s32.totalorder %s76, %s92
      %p94 = scmp.eq.s32.totalorder %s21, 0
      %p95 = por %p93, %p94
      %s96 = ssub.s32 %s15, %s22
      %p97 = scmp.eq.s32.totalorder %s96, 0
      %s99 = sadd.s32 %s98, 1
      %s100 = scalar_select %p97, %s98, %s99
      %p103 = pneg %p97
      %p104 = scmp.eq.s32.totalorder %s15, 1
      %p105 = por %p103, %p104
      %p106 = scmp.ne.s32.totalorder %s98, %s101
      %p107 = scmp.eq.s32.totalorder %s15, 0
      %p108 = por %p106, %p107
      %p109 = scmp.ne.s32.totalorder %s98, %s101
      %p110 = scmp.eq.s32.totalorder %s20, 1
      %p111 = por %p109, %p110
      %p112 = scmp.ne.s32.totalorder %s101, %s102
      %p113 = scmp.eq.s32.totalorder %s20, 0
      %p114 = por %p112, %p113
      %p115 = scmp.ne.s32.totalorder %s101, %s102
      %p116 = scmp.eq.s32.totalorder %s21, 1
      %p117 = por %p115, %p116
      %p119 = scmp.ne.s32.totalorder %s102, %s118
      %p120 = scmp.eq.s32.totalorder %s21, 0
      %p121 = por %p119, %p120
      %p122 = scmp.le.s32.totalorder 1, %s15
      %p123 = scmp.lt.s32.totalorder %s15, 3
      %p124 = pnand %p122, %p123
      %p125 = pneg %p124
      // Predicated region
      $region9: #{feedforward_net_gptj.9} parent=5 // pred_check
        _
      $region10: #{feedforward_net_gptj.9} parent=5 // pred_check_branch
        %127 = sbr.rel (%p124) target = $region12
      $region11: #{feedforward_net_gptj.9} parent=5 // pred_region
        %s128 = ssub.s32 %s15, 1
        // Predicated region
        $region13: #{feedforward_net_gptj.9} parent=11 // pred_check
          %p129 = pneg %p36
        $region14: #{feedforward_net_gptj.9} parent=11 // pred_check_branch
          %131 = sbr.rel (%p129) target = $region16
        $region15: #{feedforward_net_gptj.9} parent=11 // pred_region
          _
        $region16: #{feedforward_net_gptj.9} parent=11 // pred_fallthru
          _
      $region12: #{feedforward_net_gptj.9} parent=5 // pred_fallthru
        _
      %p132 = scmp.lt.s32.totalorder %s15, 2
      // Predicated region
      $region17: #{feedforward_net_gptj.9} parent=5 // pred_check
        %p133 = pneg %p132
      $region18: #{feedforward_net_gptj.9} parent=5 // pred_check_branch
        %135 = sbr.rel (%p133) target = $region20
      $region19: #{feedforward_net_gptj.9} parent=5 // pred_region
        // Predicated region
        $region21: #{feedforward_net_gptj.9} parent=19 // pred_check
          %p136 = pneg %p56
        $region22: #{feedforward_net_gptj.9} parent=19 // pred_check_branch
          %138 = sbr.rel (%p136) target = $region24
        $region23: #{feedforward_net_gptj.9} parent=19 // pred_region
          %s139 = sand.u32 %s46, 1
          %s140 = scalar_lea.sflag [#allocation3], %s139
          %s141 = sand.u32 %s46, 1
          %s142 = smul.addr %s141, 2048
          %s143 = scalar_lea.vmem [#allocation2], %s142
          %s144 = smul.u32 2, %s15
          %146 = vsyncadd %s140, 0
          %s147 = smul.addr %s144, 8
          %s148 = scalar_lea.hbm %s1, %s147
          %s149 = sshll.u32 %s148, 4
          %s150 = int_to_ptr.hbm [resolvable:$true] %s149
          %s151 = sshll.u32 %s143, 4
          %s152 = int_to_ptr.vmem [resolvable:$true] %s151
          %157 = dma.hbm_to_vmem [thread:$0]  %s150, 32768, %s152, %s140, 512, 256, 16
        $region24: #{feedforward_net_gptj.9} parent=19 // pred_fallthru
          _
        // Predicated region
        $region25: #{feedforward_net_gptj.9} parent=19 // pred_check
          %p158 = pneg %p82
        $region26: #{feedforward_net_gptj.9} parent=19 // pred_check_branch
          %160 = sbr.rel (%p158) target = $region28
        $region27: #{feedforward_net_gptj.9} parent=19 // pred_region
          %s161 = sand.u32 %s72, 1
          %s162 = scalar_lea.sflag [#allocation5], %s161
          %s163 = sand.u32 %s72, 1
          %s164 = smul.addr %s163, 2
          %s165 = scalar_lea.vmem [#allocation4], %s164
          %s166 = smul.u32 2, %s15
          %168 = vsyncadd %s162, 0
          %s169 = scalar_lea.hbm %s2, %s166
          %s171 = sshll.u32 %s169, 4
          %s172 = int_to_ptr.hbm [resolvable:$true] %s171
          %s173 = sshll.u32 %s165, 4
          %s174 = int_to_ptr.vmem [resolvable:$true] %s173
          %176 = dma.hbm_to_vmem [thread:$0]  %s172, 32, %s174, %s162
        $region28: #{feedforward_net_gptj.9} parent=19 // pred_fallthru
          _
      $region20: #{feedforward_net_gptj.9} parent=5 // pred_fallthru
        _
      %p177 = scmp.le.s32.totalorder 1, %s15
      %p178 = scmp.lt.s32.totalorder %s15, 3
      %p179 = pnand %p177, %p178
      %p180 = pneg %p179
      // Predicated region
      $region29: #{feedforward_net_gptj.9} parent=5 // pred_check
        _
      $region30: #{feedforward_net_gptj.9} parent=5 // pred_check_branch
        %182 = sbr.rel (%p179) target = $region32
      $region31: #{feedforward_net_gptj.9} parent=5 // pred_region
        %s183 = ssub.s32 %s15, 1
        %s184 = sand.u32 %s49, 1
        %s185 = scalar_lea.sflag [#allocation3], %s184
        %s186 = sand.u32 %s49, 1
        %s187 = smul.addr %s186, 2048
        %s188 = scalar_lea.vmem [#allocation2], %s187
        // Predicated region
        $region33: #{feedforward_net_gptj.9} parent=31 // pred_check
          %p189 = pneg %p62
        $region34: #{feedforward_net_gptj.9} parent=31 // pred_check_branch
          %191 = sbr.rel (%p189) target = $region36
        $region35: #{feedforward_net_gptj.9} parent=31 // pred_region
          %193 = dma.done %s185, 32768
        $region36: #{feedforward_net_gptj.9} parent=31 // pred_fallthru
          _
        %s194 = sand.u32 %s75, 1
        %s195 = scalar_lea.sflag [#allocation5], %s194
        %s196 = sand.u32 %s75, 1
        %s197 = smul.addr %s196, 2
        %s198 = scalar_lea.vmem [#allocation4], %s197
        // Predicated region
        $region37: #{feedforward_net_gptj.9} parent=31 // pred_check
          %p199 = pneg %p88
        $region38: #{feedforward_net_gptj.9} parent=31 // pred_check_branch
          %201 = sbr.rel (%p199) target = $region40
        $region39: #{feedforward_net_gptj.9} parent=31 // pred_region
          %203 = dma.done %s195, 32
        $region40: #{feedforward_net_gptj.9} parent=31 // pred_fallthru
          _
        %p204 = pneg %p36
        %p205 = pneg %p33
        %s206 = sand.u32 %s49, 1
        %s207 = scalar_lea.sflag [#allocation3], %s206
        %s208 = sand.u32 %s49, 1
        %s209 = smul.addr %s208, 2048
        %s210 = scalar_lea.vmem [#allocation2], %s209
        %p211 = pneg %p62
        %p212 = pneg %p59
        %s213 = sand.u32 %s75, 1
        %s214 = scalar_lea.sflag [#allocation5], %s213
        %s215 = sand.u32 %s75, 1
        %s216 = smul.addr %s215, 2
        %s217 = scalar_lea.vmem [#allocation4], %s216
        %p218 = pneg %p88
        %p219 = pneg %p85
        %p220 = pneg %p114
        %p221 = pneg %p111
        %s222 = smul.u32 2, %s20
        %p223 = scmp.lt.s32.totalorder %s222, 3
        %s224 = scalar_select %p223, %s222, 3
        %s225 = smul.addr %s224, 8
        %s226 = scalar_lea.vmem %s3, %s225
        %s227 = smul.u32 2, %s20
        %s228 = smul.u32 2, %s20
        %s229 = smul.u32 2, %s20
        %p230 = scmp.lt.s32.totalorder %s229, 3
        %s231 = scalar_select %p230, %s229, 3
        %s232 = smul.addr %s231, 8
        %s233 = scalar_lea.vmem %s3, %s232
        %s234 = smul.u32 2, %s20
        %v235 = vld [vmem:[%s0] sm:$0xff]
        %v236 = vld [vmem:[%s0 + $0x8] sm:$0xff]
        %v237 = vld [vmem:[%s0 + $0x10] sm:$0xff]
        %v238 = vld [vmem:[%s0 + $0x18] sm:$0xff]
        %v239 = vld [vmem:[%s0 + $0x20] sm:$0xff]
        %v240 = vld [vmem:[%s0 + $0x28] sm:$0xff]
        %v241 = vld [vmem:[%s0 + $0x30] sm:$0xff]
        %v242 = vld [vmem:[%s0 + $0x38] sm:$0xff]
        %v243 = vld [vmem:[%s188] sm:$0xff]
        %v244 = vld [vmem:[%s188 + $0x8] sm:$0xff]
        %v245 = vld [vmem:[%s188 + $0x10] sm:$0xff]
        %v246 = vld [vmem:[%s188 + $0x18] sm:$0xff]
        %v247 = vld [vmem:[%s188 + $0x20] sm:$0xff]
        %v248 = vld [vmem:[%s188 + $0x28] sm:$0xff]
        %v249 = vld [vmem:[%s188 + $0x30] sm:$0xff]
        %v250 = vld [vmem:[%s188 + $0x38] sm:$0xff]
        %v251 = vld [vmem:[%s188 + $0x40] sm:$0xff]
        %v252 = vld [vmem:[%s188 + $0x48] sm:$0xff]
        %v253 = vld [vmem:[%s188 + $0x50] sm:$0xff]
        %v254 = vld [vmem:[%s188 + $0x58] sm:$0xff]
        %v255 = vld [vmem:[%s188 + $0x60] sm:$0xff]
        %v256 = vld [vmem:[%s188 + $0x68] sm:$0xff]
        %v257 = vld [vmem:[%s188 + $0x70] sm:$0xff]
        %v258 = vld [vmem:[%s188 + $0x78] sm:$0xff]
        %v259 = vld [vmem:[%s188 + $0x80] sm:$0xff]
        %v260 = vld [vmem:[%s188 + $0x88] sm:$0xff]
        %v261 = vld [vmem:[%s188 + $0x90] sm:$0xff]
        %v262 = vld [vmem:[%s188 + $0x98] sm:$0xff]
        %v263 = vld [vmem:[%s188 + $0xa0] sm:$0xff]
        %v264 = vld [vmem:[%s188 + $0xa8] sm:$0xff]
        %v265 = vld [vmem:[%s188 + $0xb0] sm:$0xff]
        %v266 = vld [vmem:[%s188 + $0xb8] sm:$0xff]
        %v267 = vld [vmem:[%s188 + $0xc0] sm:$0xff]
        %v268 = vld [vmem:[%s188 + $0xc8] sm:$0xff]
        %v269 = vld [vmem:[%s188 + $0xd0] sm:$0xff]
        %v270 = vld [vmem:[%s188 + $0xd8] sm:$0xff]
        %v271 = vld [vmem:[%s188 + $0xe0] sm:$0xff]
        %v272 = vld [vmem:[%s188 + $0xe8] sm:$0xff]
        %v273 = vld [vmem:[%s188 + $0xf0] sm:$0xff]
        %v274 = vld [vmem:[%s188 + $0xf8] sm:$0xff]
        %v275 = vld [vmem:[%s188 + $0x100] sm:$0xff]
        %v276 = vld [vmem:[%s188 + $0x108] sm:$0xff]
        %v277 = vld [vmem:[%s188 + $0x110] sm:$0xff]
        %v278 = vld [vmem:[%s188 + $0x118] sm:$0xff]
        %v279 = vld [vmem:[%s188 + $0x120] sm:$0xff]
        %v280 = vld [vmem:[%s188 + $0x128] sm:$0xff]
        %v281 = vld [vmem:[%s188 + $0x130] sm:$0xff]
        %v282 = vld [vmem:[%s188 + $0x138] sm:$0xff]
        %v283 = vld [vmem:[%s188 + $0x140] sm:$0xff]
        %v284 = vld [vmem:[%s188 + $0x148] sm:$0xff]
        %v285 = vld [vmem:[%s188 + $0x150] sm:$0xff]
        %v286 = vld [vmem:[%s188 + $0x158] sm:$0xff]
        %v287 = vld [vmem:[%s188 + $0x160] sm:$0xff]
        %v288 = vld [vmem:[%s188 + $0x168] sm:$0xff]
        %v289 = vld [vmem:[%s188 + $0x170] sm:$0xff]
        %v290 = vld [vmem:[%s188 + $0x178] sm:$0xff]
        %v291 = vld [vmem:[%s188 + $0x180] sm:$0xff]
        %v292 = vld [vmem:[%s188 + $0x188] sm:$0xff]
        %v293 = vld [vmem:[%s188 + $0x190] sm:$0xff]
        %v294 = vld [vmem:[%s188 + $0x198] sm:$0xff]
        %v295 = vld [vmem:[%s188 + $0x1a0] sm:$0xff]
        %v296 = vld [vmem:[%s188 + $0x1a8] sm:$0xff]
        %v297 = vld [vmem:[%s188 + $0x1b0] sm:$0xff]
        %v298 = vld [vmem:[%s188 + $0x1b8] sm:$0xff]
        %v299 = vld [vmem:[%s188 + $0x1c0] sm:$0xff]
        %v300 = vld [vmem:[%s188 + $0x1c8] sm:$0xff]
        %v301 = vld [vmem:[%s188 + $0x1d0] sm:$0xff]
        %v302 = vld [vmem:[%s188 + $0x1d8] sm:$0xff]
        %v303 = vld [vmem:[%s188 + $0x1e0] sm:$0xff]
        %v304 = vld [vmem:[%s188 + $0x1e8] sm:$0xff]
        %v305 = vld [vmem:[%s188 + $0x1f0] sm:$0xff]
        %v306 = vld [vmem:[%s188 + $0x1f8] sm:$0xff]
        %v307 = vld [vmem:[%s188 + $0x200] sm:$0xff]
        %v308 = vld [vmem:[%s188 + $0x208] sm:$0xff]
        %v309 = vld [vmem:[%s188 + $0x210] sm:$0xff]
        %v310 = vld [vmem:[%s188 + $0x218] sm:$0xff]
        %v311 = vld [vmem:[%s188 + $0x220] sm:$0xff]
        %v312 = vld [vmem:[%s188 + $0x228] sm:$0xff]
        %v313 = vld [vmem:[%s188 + $0x230] sm:$0xff]
        %v314 = vld [vmem:[%s188 + $0x238] sm:$0xff]
        %v315 = vld [vmem:[%s188 + $0x240] sm:$0xff]
        %v316 = vld [vmem:[%s188 + $0x248] sm:$0xff]
        %v317 = vld [vmem:[%s188 + $0x250] sm:$0xff]
        %v318 = vld [vmem:[%s188 + $0x258] sm:$0xff]
        %v319 = vld [vmem:[%s188 + $0x260] sm:$0xff]
        %v320 = vld [vmem:[%s188 + $0x268] sm:$0xff]
        %v321 = vld [vmem:[%s188 + $0x270] sm:$0xff]
        %v322 = vld [vmem:[%s188 + $0x278] sm:$0xff]
        %v323 = vld [vmem:[%s188 + $0x280] sm:$0xff]
        %v324 = vld [vmem:[%s188 + $0x288] sm:$0xff]
        %v325 = vld [vmem:[%s188 + $0x290] sm:$0xff]
        %v326 = vld [vmem:[%s188 + $0x298] sm:$0xff]
        %v327 = vld [vmem:[%s188 + $0x2a0] sm:$0xff]
        %v328 = vld [vmem:[%s188 + $0x2a8] sm:$0xff]
        %v329 = vld [vmem:[%s188 + $0x2b0] sm:$0xff]
        %v330 = vld [vmem:[%s188 + $0x2b8] sm:$0xff]
        %v331 = vld [vmem:[%s188 + $0x2c0] sm:$0xff]
        %v332 = vld [vmem:[%s188 + $0x2c8] sm:$0xff]
        %v333 = vld [vmem:[%s188 + $0x2d0] sm:$0xff]
        %v334 = vld [vmem:[%s188 + $0x2d8] sm:$0xff]
        %v335 = vld [vmem:[%s188 + $0x2e0] sm:$0xff]
        %v336 = vld [vmem:[%s188 + $0x2e8] sm:$0xff]
        %v337 = vld [vmem:[%s188 + $0x2f0] sm:$0xff]
        %v338 = vld [vmem:[%s188 + $0x2f8] sm:$0xff]
        %v339 = vld [vmem:[%s188 + $0x300] sm:$0xff]
        %v340 = vld [vmem:[%s188 + $0x308] sm:$0xff]
        %v341 = vld [vmem:[%s188 + $0x310] sm:$0xff]
        %v342 = vld [vmem:[%s188 + $0x318] sm:$0xff]
        %v343 = vld [vmem:[%s188 + $0x320] sm:$0xff]
        %v344 = vld [vmem:[%s188 + $0x328] sm:$0xff]
        %v345 = vld [vmem:[%s188 + $0x330] sm:$0xff]
        %v346 = vld [vmem:[%s188 + $0x338] sm:$0xff]
        %v347 = vld [vmem:[%s188 + $0x340] sm:$0xff]
        %v348 = vld [vmem:[%s188 + $0x348] sm:$0xff]
        %v349 = vld [vmem:[%s188 + $0x350] sm:$0xff]
        %v350 = vld [vmem:[%s188 + $0x358] sm:$0xff]
        %v351 = vld [vmem:[%s188 + $0x360] sm:$0xff]
        %v352 = vld [vmem:[%s188 + $0x368] sm:$0xff]
        %v353 = vld [vmem:[%s188 + $0x370] sm:$0xff]
        %v354 = vld [vmem:[%s188 + $0x378] sm:$0xff]
        %v355 = vld [vmem:[%s188 + $0x380] sm:$0xff]
        %v356 = vld [vmem:[%s188 + $0x388] sm:$0xff]
        %v357 = vld [vmem:[%s188 + $0x390] sm:$0xff]
        %v358 = vld [vmem:[%s188 + $0x398] sm:$0xff]
        %v359 = vld [vmem:[%s188 + $0x3a0] sm:$0xff]
        %v360 = vld [vmem:[%s188 + $0x3a8] sm:$0xff]
        %v361 = vld [vmem:[%s188 + $0x3b0] sm:$0xff]
        %v362 = vld [vmem:[%s188 + $0x3b8] sm:$0xff]
        %v363 = vld [vmem:[%s188 + $0x3c0] sm:$0xff]
        %v364 = vld [vmem:[%s188 + $0x3c8] sm:$0xff]
        %v365 = vld [vmem:[%s188 + $0x3d0] sm:$0xff]
        %v366 = vld [vmem:[%s188 + $0x3d8] sm:$0xff]
        %v367 = vld [vmem:[%s188 + $0x3e0] sm:$0xff]
        %v368 = vld [vmem:[%s188 + $0x3e8] sm:$0xff]
        %v369 = vld [vmem:[%s188 + $0x3f0] sm:$0xff]
        %v370 = vld [vmem:[%s188 + $0x3f8] sm:$0xff]
        %v371 = vld [vmem:[%s188 + $0x400] sm:$0xff]
        %v372 = vld [vmem:[%s188 + $0x408] sm:$0xff]
        %v373 = vld [vmem:[%s188 + $0x410] sm:$0xff]
        %v374 = vld [vmem:[%s188 + $0x418] sm:$0xff]
        %v375 = vld [vmem:[%s188 + $0x420] sm:$0xff]
        %v376 = vld [vmem:[%s188 + $0x428] sm:$0xff]
        %v377 = vld [vmem:[%s188 + $0x430] sm:$0xff]
        %v378 = vld [vmem:[%s188 + $0x438] sm:$0xff]
        %v379 = vld [vmem:[%s188 + $0x440] sm:$0xff]
        %v380 = vld [vmem:[%s188 + $0x448] sm:$0xff]
        %v381 = vld [vmem:[%s188 + $0x450] sm:$0xff]
        %v382 = vld [vmem:[%s188 + $0x458] sm:$0xff]
        %v383 = vld [vmem:[%s188 + $0x460] sm:$0xff]
        %v384 = vld [vmem:[%s188 + $0x468] sm:$0xff]
        %v385 = vld [vmem:[%s188 + $0x470] sm:$0xff]
        %v386 = vld [vmem:[%s188 + $0x478] sm:$0xff]
        %v387 = vld [vmem:[%s188 + $0x480] sm:$0xff]
        %v388 = vld [vmem:[%s188 + $0x488] sm:$0xff]
        %v389 = vld [vmem:[%s188 + $0x490] sm:$0xff]
        %v390 = vld [vmem:[%s188 + $0x498] sm:$0xff]
        %v391 = vld [vmem:[%s188 + $0x4a0] sm:$0xff]
        %v392 = vld [vmem:[%s188 + $0x4a8] sm:$0xff]
        %v393 = vld [vmem:[%s188 + $0x4b0] sm:$0xff]
        %v394 = vld [vmem:[%s188 + $0x4b8] sm:$0xff]
        %v395 = vld [vmem:[%s188 + $0x4c0] sm:$0xff]
        %v396 = vld [vmem:[%s188 + $0x4c8] sm:$0xff]
        %v397 = vld [vmem:[%s188 + $0x4d0] sm:$0xff]
        %v398 = vld [vmem:[%s188 + $0x4d8] sm:$0xff]
        %v399 = vld [vmem:[%s188 + $0x4e0] sm:$0xff]
        %v400 = vld [vmem:[%s188 + $0x4e8] sm:$0xff]
        %v401 = vld [vmem:[%s188 + $0x4f0] sm:$0xff]
        %v402 = vld [vmem:[%s188 + $0x4f8] sm:$0xff]
        %v403 = vld [vmem:[%s188 + $0x500] sm:$0xff]
        %v404 = vld [vmem:[%s188 + $0x508] sm:$0xff]
        %v405 = vld [vmem:[%s188 + $0x510] sm:$0xff]
        %v406 = vld [vmem:[%s188 + $0x518] sm:$0xff]
        %v407 = vld [vmem:[%s188 + $0x520] sm:$0xff]
        %v408 = vld [vmem:[%s188 + $0x528] sm:$0xff]
        %v409 = vld [vmem:[%s188 + $0x530] sm:$0xff]
        %v410 = vld [vmem:[%s188 + $0x538] sm:$0xff]
        %v411 = vld [vmem:[%s188 + $0x540] sm:$0xff]
        %v412 = vld [vmem:[%s188 + $0x548] sm:$0xff]
        %v413 = vld [vmem:[%s188 + $0x550] sm:$0xff]
        %v414 = vld [vmem:[%s188 + $0x558] sm:$0xff]
        %v415 = vld [vmem:[%s188 + $0x560] sm:$0xff]
        %v416 = vld [vmem:[%s188 + $0x568] sm:$0xff]
        %v417 = vld [vmem:[%s188 + $0x570] sm:$0xff]
        %v418 = vld [vmem:[%s188 + $0x578] sm:$0xff]
        %v419 = vld [vmem:[%s188 + $0x580] sm:$0xff]
        %v420 = vld [vmem:[%s188 + $0x588] sm:$0xff]
        %v421 = vld [vmem:[%s188 + $0x590] sm:$0xff]
        %v422 = vld [vmem:[%s188 + $0x598] sm:$0xff]
        %v423 = vld [vmem:[%s188 + $0x5a0] sm:$0xff]
        %v424 = vld [vmem:[%s188 + $0x5a8] sm:$0xff]
        %v425 = vld [vmem:[%s188 + $0x5b0] sm:$0xff]
        %v426 = vld [vmem:[%s188 + $0x5b8] sm:$0xff]
        %v427 = vld [vmem:[%s188 + $0x5c0] sm:$0xff]
        %v428 = vld [vmem:[%s188 + $0x5c8] sm:$0xff]
        %v429 = vld [vmem:[%s188 + $0x5d0] sm:$0xff]
        %v430 = vld [vmem:[%s188 + $0x5d8] sm:$0xff]
        %v431 = vld [vmem:[%s188 + $0x5e0] sm:$0xff]
        %v432 = vld [vmem:[%s188 + $0x5e8] sm:$0xff]
        %v433 = vld [vmem:[%s188 + $0x5f0] sm:$0xff]
        %v434 = vld [vmem:[%s188 + $0x5f8] sm:$0xff]
        %v435 = vld [vmem:[%s188 + $0x600] sm:$0xff]
        %v436 = vld [vmem:[%s188 + $0x608] sm:$0xff]
        %v437 = vld [vmem:[%s188 + $0x610] sm:$0xff]
        %v438 = vld [vmem:[%s188 + $0x618] sm:$0xff]
        %v439 = vld [vmem:[%s188 + $0x620] sm:$0xff]
        %v440 = vld [vmem:[%s188 + $0x628] sm:$0xff]
        %v441 = vld [vmem:[%s188 + $0x630] sm:$0xff]
        %v442 = vld [vmem:[%s188 + $0x638] sm:$0xff]
        %v443 = vld [vmem:[%s188 + $0x640] sm:$0xff]
        %v444 = vld [vmem:[%s188 + $0x648] sm:$0xff]
        %v445 = vld [vmem:[%s188 + $0x650] sm:$0xff]
        %v446 = vld [vmem:[%s188 + $0x658] sm:$0xff]
        %v447 = vld [vmem:[%s188 + $0x660] sm:$0xff]
        %v448 = vld [vmem:[%s188 + $0x668] sm:$0xff]
        %v449 = vld [vmem:[%s188 + $0x670] sm:$0xff]
        %v450 = vld [vmem:[%s188 + $0x678] sm:$0xff]
        %v451 = vld [vmem:[%s188 + $0x680] sm:$0xff]
        %v452 = vld [vmem:[%s188 + $0x688] sm:$0xff]
        %v453 = vld [vmem:[%s188 + $0x690] sm:$0xff]
        %v454 = vld [vmem:[%s188 + $0x698] sm:$0xff]
        %v455 = vld [vmem:[%s188 + $0x6a0] sm:$0xff]
        %v456 = vld [vmem:[%s188 + $0x6a8] sm:$0xff]
        %v457 = vld [vmem:[%s188 + $0x6b0] sm:$0xff]
        %v458 = vld [vmem:[%s188 + $0x6b8] sm:$0xff]
        %v459 = vld [vmem:[%s188 + $0x6c0] sm:$0xff]
        %v460 = vld [vmem:[%s188 + $0x6c8] sm:$0xff]
        %v461 = vld [vmem:[%s188 + $0x6d0] sm:$0xff]
        %v462 = vld [vmem:[%s188 + $0x6d8] sm:$0xff]
        %v463 = vld [vmem:[%s188 + $0x6e0] sm:$0xff]
        %v464 = vld [vmem:[%s188 + $0x6e8] sm:$0xff]
        %v465 = vld [vmem:[%s188 + $0x6f0] sm:$0xff]
        %v466 = vld [vmem:[%s188 + $0x6f8] sm:$0xff]
        %v467 = vld [vmem:[%s188 + $0x700] sm:$0xff]
        %v468 = vld [vmem:[%s188 + $0x708] sm:$0xff]
        %v469 = vld [vmem:[%s188 + $0x710] sm:$0xff]
        %v470 = vld [vmem:[%s188 + $0x718] sm:$0xff]
        %v471 = vld [vmem:[%s188 + $0x720] sm:$0xff]
        %v472 = vld [vmem:[%s188 + $0x728] sm:$0xff]
        %v473 = vld [vmem:[%s188 + $0x730] sm:$0xff]
        %v474 = vld [vmem:[%s188 + $0x738] sm:$0xff]
        %v475 = vld [vmem:[%s188 + $0x740] sm:$0xff]
        %v476 = vld [vmem:[%s188 + $0x748] sm:$0xff]
        %v477 = vld [vmem:[%s188 + $0x750] sm:$0xff]
        %v478 = vld [vmem:[%s188 + $0x758] sm:$0xff]
        %v479 = vld [vmem:[%s188 + $0x760] sm:$0xff]
        %v480 = vld [vmem:[%s188 + $0x768] sm:$0xff]
        %v481 = vld [vmem:[%s188 + $0x770] sm:$0xff]
        %v482 = vld [vmem:[%s188 + $0x778] sm:$0xff]
        %v483 = vld [vmem:[%s188 + $0x780] sm:$0xff]
        %v484 = vld [vmem:[%s188 + $0x788] sm:$0xff]
        %v485 = vld [vmem:[%s188 + $0x790] sm:$0xff]
        %v486 = vld [vmem:[%s188 + $0x798] sm:$0xff]
        %v487 = vld [vmem:[%s188 + $0x7a0] sm:$0xff]
        %v488 = vld [vmem:[%s188 + $0x7a8] sm:$0xff]
        %v489 = vld [vmem:[%s188 + $0x7b0] sm:$0xff]
        %v490 = vld [vmem:[%s188 + $0x7b8] sm:$0xff]
        %v491 = vld [vmem:[%s188 + $0x7c0] sm:$0xff]
        %v492 = vld [vmem:[%s188 + $0x7c8] sm:$0xff]
        %v493 = vld [vmem:[%s188 + $0x7d0] sm:$0xff]
        %v494 = vld [vmem:[%s188 + $0x7d8] sm:$0xff]
        %v495 = vld [vmem:[%s188 + $0x7e0] sm:$0xff]
        %v496 = vld [vmem:[%s188 + $0x7e8] sm:$0xff]
        %v497 = vld [vmem:[%s188 + $0x7f0] sm:$0xff]
        %v498 = vld [vmem:[%s188 + $0x7f8] sm:$0xff]
        %v499 = vld [vmem:[%s198] sm:$0x3]
        %v501 = vperm.slane %v499, 0
        %v502 = vperm.slane %v499, 1
        %505 = vmatpush.msra.mxu0 %v273
        %506 = vmatpush.msra.mxu0 %v271
        %507 = vmatpush.msra.mxu0 %v269
        %508 = vmatpush.msra.mxu0 %v267
        %509 = vmatpush.msra.mxu0 %v265
        %510 = vmatpush.msra.mxu0 %v263
        %511 = vmatpush.msra.mxu0 %v261
        %512 = vmatpush.msra.mxu0 %v259
        %513 = vmatpush.msra.mxu0 %v257
        %514 = vmatpush.msra.mxu0 %v255
        %515 = vmatpush.msra.mxu0 %v253
        %516 = vmatpush.msra.mxu0 %v251
        %517 = vmatpush.msra.mxu0 %v249
        %518 = vmatpush.msra.mxu0 %v247
        %519 = vmatpush.msra.mxu0 %v245
        %520 = vmatpush.msra.mxu0 %v243
        %521 = vmatmul.f32.gmra.mxu0 %v235
        %v522 = vpop.f32.mrf.mxu0
        %v523 = vadd.f32 %v501, %v522
        %524 = vdwg.mxu0
        %525 = vmatpush.msra.mxu0 %v305
        %526 = vmatpush.msra.mxu0 %v303
        %527 = vmatpush.msra.mxu0 %v301
        %528 = vmatpush.msra.mxu0 %v299
        %529 = vmatpush.msra.mxu0 %v297
        %530 = vmatpush.msra.mxu0 %v295
        %531 = vmatpush.msra.mxu0 %v293
        %532 = vmatpush.msra.mxu0 %v291
        %533 = vmatpush.msra.mxu0 %v289
        %534 = vmatpush.msra.mxu0 %v287
        %535 = vmatpush.msra.mxu0 %v285
        %536 = vmatpush.msra.mxu0 %v283
        %537 = vmatpush.msra.mxu0 %v281
        %538 = vmatpush.msra.mxu0 %v279
        %539 = vmatpush.msra.mxu0 %v277
        %540 = vmatpush.msra.mxu0 %v275
        %541 = vmatmul.f32.gmra.mxu0 %v236
        %v542 = vpop.f32.mrf.mxu0
        %v543 = vadd.f32 %v523, %v542
        %544 = vdwg.mxu0
        %545 = vmatpush.msra.mxu0 %v337
        %546 = vmatpush.msra.mxu0 %v335
        %547 = vmatpush.msra.mxu0 %v333
        %548 = vmatpush.msra.mxu0 %v331
        %549 = vmatpush.msra.mxu0 %v329
        %550 = vmatpush.msra.mxu0 %v327
        %551 = vmatpush.msra.mxu0 %v325
        %552 = vmatpush.msra.mxu0 %v323
        %553 = vmatpush.msra.mxu0 %v321
        %554 = vmatpush.msra.mxu0 %v319
        %555 = vmatpush.msra.mxu0 %v317
        %556 = vmatpush.msra.mxu0 %v315
        %557 = vmatpush.msra.mxu0 %v313
        %558 = vmatpush.msra.mxu0 %v311
        %559 = vmatpush.msra.mxu0 %v309
        %560 = vmatpush.msra.mxu0 %v307
        %561 = vmatmul.f32.gmra.mxu0 %v237
        %v562 = vpop.f32.mrf.mxu0
        %v563 = vadd.f32 %v543, %v562
        %564 = vdwg.mxu0
        %565 = vmatpush.msra.mxu0 %v369
        %566 = vmatpush.msra.mxu0 %v367
        %567 = vmatpush.msra.mxu0 %v365
        %568 = vmatpush.msra.mxu0 %v363
        %569 = vmatpush.msra.mxu0 %v361
        %570 = vmatpush.msra.mxu0 %v359
        %571 = vmatpush.msra.mxu0 %v357
        %572 = vmatpush.msra.mxu0 %v355
        %573 = vmatpush.msra.mxu0 %v353
        %574 = vmatpush.msra.mxu0 %v351
        %575 = vmatpush.msra.mxu0 %v349
        %576 = vmatpush.msra.mxu0 %v347
        %577 = vmatpush.msra.mxu0 %v345
        %578 = vmatpush.msra.mxu0 %v343
        %579 = vmatpush.msra.mxu0 %v341
        %580 = vmatpush.msra.mxu0 %v339
        %581 = vmatmul.f32.gmra.mxu0 %v238
        %v582 = vpop.f32.mrf.mxu0
        %v583 = vadd.f32 %v563, %v582
        %584 = vdwg.mxu0
        %585 = vmatpush.msra.mxu0 %v401
        %586 = vmatpush.msra.mxu0 %v399
        %587 = vmatpush.msra.mxu0 %v397
        %588 = vmatpush.msra.mxu0 %v395
        %589 = vmatpush.msra.mxu0 %v393
        %590 = vmatpush.msra.mxu0 %v391
        %591 = vmatpush.msra.mxu0 %v389
        %592 = vmatpush.msra.mxu0 %v387
        %593 = vmatpush.msra.mxu0 %v385
        %594 = vmatpush.msra.mxu0 %v383
        %595 = vmatpush.msra.mxu0 %v381
        %596 = vmatpush.msra.mxu0 %v379
        %597 = vmatpush.msra.mxu0 %v377
        %598 = vmatpush.msra.mxu0 %v375
        %599 = vmatpush.msra.mxu0 %v373
        %600 = vmatpush.msra.mxu0 %v371
        %601 = vmatmul.f32.gmra.mxu0 %v239
        %v602 = vpop.f32.mrf.mxu0
        %v603 = vadd.f32 %v583, %v602
        %604 = vdwg.mxu0
        %605 = vmatpush.msra.mxu0 %v433
        %606 = vmatpush.msra.mxu0 %v431
        %607 = vmatpush.msra.mxu0 %v429
        %608 = vmatpush.msra.mxu0 %v427
        %609 = vmatpush.msra.mxu0 %v425
        %610 = vmatpush.msra.mxu0 %v423
        %611 = vmatpush.msra.mxu0 %v421
        %612 = vmatpush.msra.mxu0 %v419
        %613 = vmatpush.msra.mxu0 %v417
        %614 = vmatpush.msra.mxu0 %v415
        %615 = vmatpush.msra.mxu0 %v413
        %616 = vmatpush.msra.mxu0 %v411
        %617 = vmatpush.msra.mxu0 %v409
        %618 = vmatpush.msra.mxu0 %v407
        %619 = vmatpush.msra.mxu0 %v405
        %620 = vmatpush.msra.mxu0 %v403
        %621 = vmatmul.f32.gmra.mxu0 %v240
        %v622 = vpop.f32.mrf.mxu0
        %v623 = vadd.f32 %v603, %v622
        %624 = vdwg.mxu0
        %625 = vmatpush.msra.mxu0 %v465
        %626 = vmatpush.msra.mxu0 %v463
        %627 = vmatpush.msra.mxu0 %v461
        %628 = vmatpush.msra.mxu0 %v459
        %629 = vmatpush.msra.mxu0 %v457
        %630 = vmatpush.msra.mxu0 %v455
        %631 = vmatpush.msra.mxu0 %v453
        %632 = vmatpush.msra.mxu0 %v451
        %633 = vmatpush.msra.mxu0 %v449
        %634 = vmatpush.msra.mxu0 %v447
        %635 = vmatpush.msra.mxu0 %v445
        %636 = vmatpush.msra.mxu0 %v443
        %637 = vmatpush.msra.mxu0 %v441
        %638 = vmatpush.msra.mxu0 %v439
        %639 = vmatpush.msra.mxu0 %v437
        %640 = vmatpush.msra.mxu0 %v435
        %641 = vmatmul.f32.gmra.mxu0 %v241
        %v642 = vpop.f32.mrf.mxu0
        %v643 = vadd.f32 %v623, %v642
        %644 = vdwg.mxu0
        %645 = vmatpush.msra.mxu0 %v497
        %646 = vmatpush.msra.mxu0 %v495
        %647 = vmatpush.msra.mxu0 %v493
        %648 = vmatpush.msra.mxu0 %v491
        %649 = vmatpush.msra.mxu0 %v489
        %650 = vmatpush.msra.mxu0 %v487
        %651 = vmatpush.msra.mxu0 %v485
        %652 = vmatpush.msra.mxu0 %v483
        %653 = vmatpush.msra.mxu0 %v481
        %654 = vmatpush.msra.mxu0 %v479
        %655 = vmatpush.msra.mxu0 %v477
        %656 = vmatpush.msra.mxu0 %v475
        %657 = vmatpush.msra.mxu0 %v473
        %658 = vmatpush.msra.mxu0 %v471
        %659 = vmatpush.msra.mxu0 %v469
        %660 = vmatpush.msra.mxu0 %v467
        %661 = vmatmul.f32.gmra.mxu0 %v242
        %v662 = vpop.f32.mrf.mxu0
        %v663 = vadd.f32 %v643, %v662
        %664 = vdwg.mxu0
        %665 = vmatpush.msra.mxu0 %v274
        %666 = vmatpush.msra.mxu0 %v272
        %667 = vmatpush.msra.mxu0 %v270
        %668 = vmatpush.msra.mxu0 %v268
        %669 = vmatpush.msra.mxu0 %v266
        %670 = vmatpush.msra.mxu0 %v264
        %671 = vmatpush.msra.mxu0 %v262
        %672 = vmatpush.msra.mxu0 %v260
        %673 = vmatpush.msra.mxu0 %v258
        %674 = vmatpush.msra.mxu0 %v256
        %675 = vmatpush.msra.mxu0 %v254
        %676 = vmatpush.msra.mxu0 %v252
        %677 = vmatpush.msra.mxu0 %v250
        %678 = vmatpush.msra.mxu0 %v248
        %679 = vmatpush.msra.mxu0 %v246
        %680 = vmatpush.msra.mxu0 %v244
        %681 = vmatmul.f32.gmra.mxu0 %v235
        %v682 = vpop.f32.mrf.mxu0
        %v683 = vadd.f32 %v502, %v682
        %684 = vdwg.mxu0
        %685 = vmatpush.msra.mxu0 %v306
        %686 = vmatpush.msra.mxu0 %v304
        %687 = vmatpush.msra.mxu0 %v302
        %688 = vmatpush.msra.mxu0 %v300
        %689 = vmatpush.msra.mxu0 %v298
        %690 = vmatpush.msra.mxu0 %v296
        %691 = vmatpush.msra.mxu0 %v294
        %692 = vmatpush.msra.mxu0 %v292
        %693 = vmatpush.msra.mxu0 %v290
        %694 = vmatpush.msra.mxu0 %v288
        %695 = vmatpush.msra.mxu0 %v286
        %696 = vmatpush.msra.mxu0 %v284
        %697 = vmatpush.msra.mxu0 %v282
        %698 = vmatpush.msra.mxu0 %v280
        %699 = vmatpush.msra.mxu0 %v278
        %700 = vmatpush.msra.mxu0 %v276
        %701 = vmatmul.f32.gmra.mxu0 %v236
        %v702 = vpop.f32.mrf.mxu0
        %v703 = vadd.f32 %v683, %v702
        %704 = vdwg.mxu0
        %705 = vmatpush.msra.mxu0 %v338
        %706 = vmatpush.msra.mxu0 %v336
        %707 = vmatpush.msra.mxu0 %v334
        %708 = vmatpush.msra.mxu0 %v332
        %709 = vmatpush.msra.mxu0 %v330
        %710 = vmatpush.msra.mxu0 %v328
        %711 = vmatpush.msra.mxu0 %v326
        %712 = vmatpush.msra.mxu0 %v324
        %713 = vmatpush.msra.mxu0 %v322
        %714 = vmatpush.msra.mxu0 %v320
        %715 = vmatpush.msra.mxu0 %v318
        %716 = vmatpush.msra.mxu0 %v316
        %717 = vmatpush.msra.mxu0 %v314
        %718 = vmatpush.msra.mxu0 %v312
        %719 = vmatpush.msra.mxu0 %v310
        %720 = vmatpush.msra.mxu0 %v308
        %721 = vmatmul.f32.gmra.mxu0 %v237
        %v722 = vpop.f32.mrf.mxu0
        %v723 = vadd.f32 %v703, %v722
        %724 = vdwg.mxu0
        %725 = vmatpush.msra.mxu0 %v370
        %726 = vmatpush.msra.mxu0 %v368
        %727 = vmatpush.msra.mxu0 %v366
        %728 = vmatpush.msra.mxu0 %v364
        %729 = vmatpush.msra.mxu0 %v362
        %730 = vmatpush.msra.mxu0 %v360
        %731 = vmatpush.msra.mxu0 %v358
        %732 = vmatpush.msra.mxu0 %v356
        %733 = vmatpush.msra.mxu0 %v354
        %734 = vmatpush.msra.mxu0 %v352
        %735 = vmatpush.msra.mxu0 %v350
        %736 = vmatpush.msra.mxu0 %v348
        %737 = vmatpush.msra.mxu0 %v346
        %738 = vmatpush.msra.mxu0 %v344
        %739 = vmatpush.msra.mxu0 %v342
        %740 = vmatpush.msra.mxu0 %v340
        %741 = vmatmul.f32.gmra.mxu0 %v238
        %v742 = vpop.f32.mrf.mxu0
        %v743 = vadd.f32 %v723, %v742
        %744 = vdwg.mxu0
        %745 = vmatpush.msra.mxu0 %v402
        %746 = vmatpush.msra.mxu0 %v400
        %747 = vmatpush.msra.mxu0 %v398
        %748 = vmatpush.msra.mxu0 %v396
        %749 = vmatpush.msra.mxu0 %v394
        %750 = vmatpush.msra.mxu0 %v392
        %751 = vmatpush.msra.mxu0 %v390
        %752 = vmatpush.msra.mxu0 %v388
        %753 = vmatpush.msra.mxu0 %v386
        %754 = vmatpush.msra.mxu0 %v384
        %755 = vmatpush.msra.mxu0 %v382
        %756 = vmatpush.msra.mxu0 %v380
        %757 = vmatpush.msra.mxu0 %v378
        %758 = vmatpush.msra.mxu0 %v376
        %759 = vmatpush.msra.mxu0 %v374
        %760 = vmatpush.msra.mxu0 %v372
        %761 = vmatmul.f32.gmra.mxu0 %v239
        %v762 = vpop.f32.mrf.mxu0
        %v763 = vadd.f32 %v743, %v762
        %764 = vdwg.mxu0
        %765 = vmatpush.msra.mxu0 %v434
        %766 = vmatpush.msra.mxu0 %v432
        %767 = vmatpush.msra.mxu0 %v430
        %768 = vmatpush.msra.mxu0 %v428
        %769 = vmatpush.msra.mxu0 %v426
        %770 = vmatpush.msra.mxu0 %v424
        %771 = vmatpush.msra.mxu0 %v422
        %772 = vmatpush.msra.mxu0 %v420
        %773 = vmatpush.msra.mxu0 %v418
        %774 = vmatpush.msra.mxu0 %v416
        %775 = vmatpush.msra.mxu0 %v414
        %776 = vmatpush.msra.mxu0 %v412
        %777 = vmatpush.msra.mxu0 %v410
        %778 = vmatpush.msra.mxu0 %v408
        %779 = vmatpush.msra.mxu0 %v406
        %780 = vmatpush.msra.mxu0 %v404
        %781 = vmatmul.f32.gmra.mxu0 %v240
        %v782 = vpop.f32.mrf.mxu0
        %v783 = vadd.f32 %v763, %v782
        %784 = vdwg.mxu0
        %785 = vmatpush.msra.mxu0 %v466
        %786 = vmatpush.msra.mxu0 %v464
        %787 = vmatpush.msra.mxu0 %v462
        %788 = vmatpush.msra.mxu0 %v460
        %789 = vmatpush.msra.mxu0 %v458
        %790 = vmatpush.msra.mxu0 %v456
        %791 = vmatpush.msra.mxu0 %v454
        %792 = vmatpush.msra.mxu0 %v452
        %793 = vmatpush.msra.mxu0 %v450
        %794 = vmatpush.msra.mxu0 %v448
        %795 = vmatpush.msra.mxu0 %v446
        %796 = vmatpush.msra.mxu0 %v444
        %797 = vmatpush.msra.mxu0 %v442
        %798 = vmatpush.msra.mxu0 %v440
        %799 = vmatpush.msra.mxu0 %v438
        %800 = vmatpush.msra.mxu0 %v436
        %801 = vmatmul.f32.gmra.mxu0 %v241
        %v802 = vpop.f32.mrf.mxu0
        %v803 = vadd.f32 %v783, %v802
        %804 = vdwg.mxu0
        %805 = vmatpush.msra.mxu0 %v498
        %806 = vmatpush.msra.mxu0 %v496
        %807 = vmatpush.msra.mxu0 %v494
        %808 = vmatpush.msra.mxu0 %v492
        %809 = vmatpush.msra.mxu0 %v490
        %810 = vmatpush.msra.mxu0 %v488
        %811 = vmatpush.msra.mxu0 %v486
        %812 = vmatpush.msra.mxu0 %v484
        %813 = vmatpush.msra.mxu0 %v482
        %814 = vmatpush.msra.mxu0 %v480
        %815 = vmatpush.msra.mxu0 %v478
        %816 = vmatpush.msra.mxu0 %v476
        %817 = vmatpush.msra.mxu0 %v474
        %818 = vmatpush.msra.mxu0 %v472
        %819 = vmatpush.msra.mxu0 %v470
        %820 = vmatpush.msra.mxu0 %v468
        %821 = vmatmul.f32.gmra.mxu0 %v242
        %v822 = vpop.f32.mrf.mxu0
        %v823 = vadd.f32 %v803, %v822
        %824 = vdwg.mxu0
        %v825 = vmax.f32 %v663, 0.0
        %v826 = vmax.f32 %v823, 0.0
        %827 = vst [vmem:[%s233] sm:$0xff] %v825
        %828 = vst [vmem:[%s233 + $0x8] sm:$0xff] %v826
        %s829 = smul.u32 2, %s20
        %p830 = scmp.lt.s32.totalorder %s829, 3
        %s831 = scalar_select %p830, %s829, 3
        %s832 = smul.addr %s831, 8
        %s833 = scalar_lea.vmem %s3, %s832
        // Predicated region
        $region41: #{feedforward_net_gptj.9} parent=31 // pred_check
          %p834 = pneg %p111
        $region42: #{feedforward_net_gptj.9} parent=31 // pred_check_branch
          %836 = sbr.rel (%p834) target = $region44
        $region43: #{feedforward_net_gptj.9} parent=31 // pred_region
          %s837 = smul.u32 2, %s20
        $region44: #{feedforward_net_gptj.9} parent=31 // pred_fallthru
          _
      $region32: #{feedforward_net_gptj.9} parent=5 // pred_fallthru
        _
      %p838 = scmp.le.s32.totalorder 2, %s15
      // Predicated region
      $region45: #{feedforward_net_gptj.9} parent=5 // pred_check
        %p839 = pneg %p838
      $region46: #{feedforward_net_gptj.9} parent=5 // pred_check_branch
        %841 = sbr.rel (%p839) target = $region48
      $region47: #{feedforward_net_gptj.9} parent=5 // pred_region
        %s842 = ssub.s32 %s15, 2
        // Predicated region
        $region49: #{feedforward_net_gptj.9} parent=47 // pred_check
          %p843 = pneg %p117
        $region50: #{feedforward_net_gptj.9} parent=47 // pred_check_branch
          %845 = sbr.rel (%p843) target = $region52
        $region51: #{feedforward_net_gptj.9} parent=47 // pred_region
          %s846 = smul.u32 2, %s21
          %p847 = scmp.lt.s32.totalorder %s846, 3
          %s848 = scalar_select %p847, %s846, 3
          %s849 = smul.addr %s848, 8
          %s850 = scalar_lea.vmem %s3, %s849
        $region52: #{feedforward_net_gptj.9} parent=47 // pred_fallthru
          _
      $region48: #{feedforward_net_gptj.9} parent=5 // pred_fallthru
        _
    $region6: #{feedforward_net_gptj.9} parent=1 // loop_footer
      %s19 = sadd.s32 1, %s15
    $region7: #{feedforward_net_gptj.9} parent=1 // loop_footer_branch
      %14 = sbr.rel target = $region3
    $region8: #{feedforward_net_gptj.9} parent=1 // loop_exit
      _
    %851 = vsyncpa [#allocation3], 1
    %s852 = scalar_lea.sflag [#allocation3], 1
    %853 = vsyncpa %s852, 1
    %854 = vsyncpa [#allocation5], 1
    %s855 = scalar_lea.sflag [#allocation5], 1
    %856 = vsyncpa %s855, 1

// kernel: feedforward_net_gptj.10
$region0: #{feedforward_net_gptj.10}
  #allocation0 [shape = 'u32[]', space=smem, size = 0x4, offset = 0x4, fixed_abs, tag = 'smem constant byte address 0x4 - core index']
  #allocation1 [shape = 'u32[72,128]{1,0:T(1,128)}', space=vmem, size = 0x9000, scoped, tag = 'internal scratch']
  %s0 = inlined_call_operand.vmem [shape: f32[8,512], index: 0, kind: input, shape index: {}]
  %s1 = inlined_call_operand.hbm [shape: f32[512,256], index: 1, kind: input, shape index: {}]
  %s2 = inlined_call_operand.hbm [shape: f32[1,256], index: 2, kind: input, shape index: {}]
  %s3 = inlined_call_operand.vmem [shape: f32[8,256], index: 3, kind: output, shape index: {}]
  %s4 = sld [smem:[#allocation0]]
  $region53: #{feedforward_net_gptj.10} parent=0
    _
  %s6 = ssub.s32 1, %s4
  %s7 = scalar_select 0, %s6, %s4
  $region1: #{feedforward_net_gptj.10} parent=0
    #allocation2 [shape = 'u8[524288]{0}', space=vmem, size = 0x80000, scoped, tag = 'input window, operand 1']
    #allocation3 [shape = 's32[2]{0}', space=sflag, size = 0x8, scoped, tag = 'scoped memory for feedforward_net_gptj.10']
    #allocation4 [shape = 'u8[1024]{0}', space=vmem, size = 0x400, scoped, tag = 'input window, operand 2']
    #allocation5 [shape = 's32[2]{0}', space=sflag, size = 0x8, scoped, tag = 'scoped memory for feedforward_net_gptj.10']
    %8 = vsyncpa [#allocation3], 0
    %s9 = scalar_lea.sflag [#allocation3], 1
    %10 = vsyncpa %s9, 0
    %11 = vsyncpa [#allocation5], 0
    %s12 = scalar_lea.sflag [#allocation5], 1
    %13 = vsyncpa %s12, 0
    loop: start=0, step=1, limit=4
    $region2: #{feedforward_net_gptj.10} parent=1 // loop_pre_header
      _
    $region3: #{feedforward_net_gptj.10} parent=1 // loop_header
      %s15 = sphi 0, %s19
      %p16 = scmp.ge.s32.totalorder %s15, 4
      %s23 = sphi 0, %s23
      %s25 = sphi 0, %s23
      %s26 = sphi 0, %s25
      %s40 = sphi 0, %s26
      %s46 = sphi 0, %s48
      %s49 = sphi 0, %s46
      %s50 = sphi 0, %s49
      %s66 = sphi 0, %s50
      %s72 = sphi 0, %s74
      %s75 = sphi 0, %s72
      %s76 = sphi 0, %s75
      %s92 = sphi 0, %s76
      %s98 = sphi 0, %s100
      %s101 = sphi 0, %s98
      %s102 = sphi 0, %s101
      %s118 = sphi 0, %s102
    $region4: #{feedforward_net_gptj.10} parent=1 // loop_header_branch
      %18 = sbr.rel (%p16) target = $region8
    $region5: #{feedforward_net_gptj.10} parent=1 // loop_body
      %s20 = ssub.s32 %s15, 1
      %s21 = ssub.s32 %s15, 2
      %s22 = sadd.s32 %s15, 1
      %s24 = sadd.s32 %s23, 1
      %p27 = scmp.eq.s32.totalorder %s15, 1
      %p28 = scmp.ne.s32.totalorder %s23, %s25
      %p29 = scmp.eq.s32.totalorder %s15, 0
      %p30 = por %p28, %p29
      %p31 = scmp.ne.s32.totalorder %s23, %s25
      %p32 = scmp.eq.s32.totalorder %s20, 1
      %p33 = por %p31, %p32
      %p34 = scmp.ne.s32.totalorder %s25, %s26
      %p35 = scmp.eq.s32.totalorder %s20, 0
      %p36 = por %p34, %p35
      %p37 = scmp.ne.s32.totalorder %s25, %s26
      %p38 = scmp.eq.s32.totalorder %s21, 1
      %p39 = por %p37, %p38
      %p41 = scmp.ne.s32.totalorder %s26, %s40
      %p42 = scmp.eq.s32.totalorder %s21, 0
      %p43 = por %p41, %p42
      %s44 = ssub.s32 %s15, %s22
      %p45 = scmp.eq.s32.totalorder %s44, 0
      %s47 = sadd.s32 %s46, 1
      %s48 = scalar_select %p45, %s46, %s47
      %p51 = pneg %p45
      %p52 = scmp.eq.s32.totalorder %s15, 1
      %p53 = por %p51, %p52
      %p54 = scmp.ne.s32.totalorder %s46, %s49
      %p55 = scmp.eq.s32.totalorder %s15, 0
      %p56 = por %p54, %p55
      %p57 = scmp.ne.s32.totalorder %s46, %s49
      %p58 = scmp.eq.s32.totalorder %s20, 1
      %p59 = por %p57, %p58
      %p60 = scmp.ne.s32.totalorder %s49, %s50
      %p61 = scmp.eq.s32.totalorder %s20, 0
      %p62 = por %p60, %p61
      %p63 = scmp.ne.s32.totalorder %s49, %s50
      %p64 = scmp.eq.s32.totalorder %s21, 1
      %p65 = por %p63, %p64
      %p67 = scmp.ne.s32.totalorder %s50, %s66
      %p68 = scmp.eq.s32.totalorder %s21, 0
      %p69 = por %p67, %p68
      %s70 = ssub.s32 %s15, %s22
      %p71 = scmp.eq.s32.totalorder %s70, 0
      %s73 = sadd.s32 %s72, 1
      %s74 = scalar_select %p71, %s72, %s73
      %p77 = pneg %p71
      %p78 = scmp.eq.s32.totalorder %s15, 1
      %p79 = por %p77, %p78
      %p80 = scmp.ne.s32.totalorder %s72, %s75
      %p81 = scmp.eq.s32.totalorder %s15, 0
      %p82 = por %p80, %p81
      %p83 = scmp.ne.s32.totalorder %s72, %s75
      %p84 = scmp.eq.s32.totalorder %s20, 1
      %p85 = por %p83, %p84
      %p86 = scmp.ne.s32.totalorder %s75, %s76
      %p87 = scmp.eq.s32.totalorder %s20, 0
      %p88 = por %p86, %p87
      %p89 = scmp.ne.s32.totalorder %s75, %s76
      %p90 = scmp.eq.s32.totalorder %s21, 1
      %p91 = por %p89, %p90
      %p93 = scmp.ne.s32.totalorder %s76, %s92
      %p94 = scmp.eq.s32.totalorder %s21, 0
      %p95 = por %p93, %p94
      %s96 = ssub.s32 %s15, %s22
      %p97 = scmp.eq.s32.totalorder %s96, 0
      %s99 = sadd.s32 %s98, 1
      %s100 = scalar_select %p97, %s98, %s99
      %p103 = pneg %p97
      %p104 = scmp.eq.s32.totalorder %s15, 1
      %p105 = por %p103, %p104
      %p106 = scmp.ne.s32.totalorder %s98, %s101
      %p107 = scmp.eq.s32.totalorder %s15, 0
      %p108 = por %p106, %p107
      %p109 = scmp.ne.s32.totalorder %s98, %s101
      %p110 = scmp.eq.s32.totalorder %s20, 1
      %p111 = por %p109, %p110
      %p112 = scmp.ne.s32.totalorder %s101, %s102
      %p113 = scmp.eq.s32.totalorder %s20, 0
      %p114 = por %p112, %p113
      %p115 = scmp.ne.s32.totalorder %s101, %s102
      %p116 = scmp.eq.s32.totalorder %s21, 1
      %p117 = por %p115, %p116
      %p119 = scmp.ne.s32.totalorder %s102, %s118
      %p120 = scmp.eq.s32.totalorder %s21, 0
      %p121 = por %p119, %p120
      %p122 = scmp.le.s32.totalorder 1, %s15
      %p123 = scmp.lt.s32.totalorder %s15, 3
      %p124 = pnand %p122, %p123
      %p125 = pneg %p124
      // Predicated region
      $region9: #{feedforward_net_gptj.10} parent=5 // pred_check
        _
      $region10: #{feedforward_net_gptj.10} parent=5 // pred_check_branch
        %127 = sbr.rel (%p124) target = $region12
      $region11: #{feedforward_net_gptj.10} parent=5 // pred_region
        %s128 = ssub.s32 %s15, 1
        // Predicated region
        $region13: #{feedforward_net_gptj.10} parent=11 // pred_check
          %p129 = pneg %p36
        $region14: #{feedforward_net_gptj.10} parent=11 // pred_check_branch
          %131 = sbr.rel (%p129) target = $region16
        $region15: #{feedforward_net_gptj.10} parent=11 // pred_region
          _
        $region16: #{feedforward_net_gptj.10} parent=11 // pred_fallthru
          _
      $region12: #{feedforward_net_gptj.10} parent=5 // pred_fallthru
        _
      %p132 = scmp.lt.s32.totalorder %s15, 2
      // Predicated region
      $region17: #{feedforward_net_gptj.10} parent=5 // pred_check
        %p133 = pneg %p132
      $region18: #{feedforward_net_gptj.10} parent=5 // pred_check_branch
        %135 = sbr.rel (%p133) target = $region20
      $region19: #{feedforward_net_gptj.10} parent=5 // pred_region
        // Predicated region
        $region21: #{feedforward_net_gptj.10} parent=19 // pred_check
          %p136 = pneg %p56
        $region22: #{feedforward_net_gptj.10} parent=19 // pred_check_branch
          %138 = sbr.rel (%p136) target = $region24
        $region23: #{feedforward_net_gptj.10} parent=19 // pred_region
          %s139 = sand.u32 %s46, 1
          %s140 = scalar_lea.sflag [#allocation3], %s139
          %s141 = sand.u32 %s46, 1
          %s142 = smul.addr %s141, 512
          %s143 = scalar_lea.vmem [#allocation2], %s142
          %145 = vsyncadd %s140, 0
          %s146 = smul.addr %s15, 8
          %s147 = scalar_lea.hbm %s1, %s146
          %s148 = sshll.u32 %s147, 4
          %s149 = int_to_ptr.hbm [resolvable:$true] %s148
          %s150 = sshll.u32 %s143, 4
          %s151 = int_to_ptr.vmem [resolvable:$true] %s150
          %156 = dma.hbm_to_vmem [thread:$0]  %s149, 8192, %s151, %s140, 256, 128, 8
        $region24: #{feedforward_net_gptj.10} parent=19 // pred_fallthru
          _
        // Predicated region
        $region25: #{feedforward_net_gptj.10} parent=19 // pred_check
          %p157 = pneg %p82
        $region26: #{feedforward_net_gptj.10} parent=19 // pred_check_branch
          %159 = sbr.rel (%p157) target = $region28
        $region27: #{feedforward_net_gptj.10} parent=19 // pred_region
          %s160 = sand.u32 %s72, 1
          %s161 = scalar_lea.sflag [#allocation5], %s160
          %s162 = sand.u32 %s72, 1
          %s163 = scalar_lea.vmem [#allocation4], %s162
          %165 = vsyncadd %s161, 0
          %s166 = scalar_lea.hbm %s2, %s15
          %s168 = sshll.u32 %s166, 4
          %s169 = int_to_ptr.hbm [resolvable:$true] %s168
          %s170 = sshll.u32 %s163, 4
          %s171 = int_to_ptr.vmem [resolvable:$true] %s170
          %173 = dma.hbm_to_vmem [thread:$0]  %s169, 16, %s171, %s161
        $region28: #{feedforward_net_gptj.10} parent=19 // pred_fallthru
          _
      $region20: #{feedforward_net_gptj.10} parent=5 // pred_fallthru
        _
      %p174 = scmp.le.s32.totalorder 1, %s15
      %p175 = scmp.lt.s32.totalorder %s15, 3
      %p176 = pnand %p174, %p175
      %p177 = pneg %p176
      // Predicated region
      $region29: #{feedforward_net_gptj.10} parent=5 // pred_check
        _
      $region30: #{feedforward_net_gptj.10} parent=5 // pred_check_branch
        %179 = sbr.rel (%p176) target = $region32
      $region31: #{feedforward_net_gptj.10} parent=5 // pred_region
        %s180 = ssub.s32 %s15, 1
        %s181 = sand.u32 %s49, 1
        %s182 = scalar_lea.sflag [#allocation3], %s181
        %s183 = sand.u32 %s49, 1
        %s184 = smul.addr %s183, 512
        %s185 = scalar_lea.vmem [#allocation2], %s184
        // Predicated region
        $region33: #{feedforward_net_gptj.10} parent=31 // pred_check
          %p186 = pneg %p62
        $region34: #{feedforward_net_gptj.10} parent=31 // pred_check_branch
          %188 = sbr.rel (%p186) target = $region36
        $region35: #{feedforward_net_gptj.10} parent=31 // pred_region
          %190 = dma.done %s182, 8192
        $region36: #{feedforward_net_gptj.10} parent=31 // pred_fallthru
          _
        %s191 = sand.u32 %s75, 1
        %s192 = scalar_lea.sflag [#allocation5], %s191
        %s193 = sand.u32 %s75, 1
        %s194 = scalar_lea.vmem [#allocation4], %s193
        // Predicated region
        $region37: #{feedforward_net_gptj.10} parent=31 // pred_check
          %p195 = pneg %p88
        $region38: #{feedforward_net_gptj.10} parent=31 // pred_check_branch
          %197 = sbr.rel (%p195) target = $region40
        $region39: #{feedforward_net_gptj.10} parent=31 // pred_region
          %199 = dma.done %s192, 16
        $region40: #{feedforward_net_gptj.10} parent=31 // pred_fallthru
          _
        %p200 = pneg %p36
        %p201 = pneg %p33
        %s202 = sand.u32 %s49, 1
        %s203 = scalar_lea.sflag [#allocation3], %s202
        %s204 = sand.u32 %s49, 1
        %s205 = smul.addr %s204, 512
        %s206 = scalar_lea.vmem [#allocation2], %s205
        %p207 = pneg %p62
        %p208 = pneg %p59
        %s209 = sand.u32 %s75, 1
        %s210 = scalar_lea.sflag [#allocation5], %s209
        %s211 = sand.u32 %s75, 1
        %s212 = scalar_lea.vmem [#allocation4], %s211
        %p213 = pneg %p88
        %p214 = pneg %p85
        %p215 = pneg %p114
        %p216 = pneg %p111
        %p217 = scmp.lt.s32.totalorder %s20, 1
        %s218 = scalar_select %p217, %s20, 1
        %s219 = smul.addr %s218, 8
        %s220 = scalar_lea.vmem %s3, %s219
        %p221 = scmp.lt.s32.totalorder %s20, 1
        %s222 = scalar_select %p221, %s20, 1
        %s223 = smul.addr %s222, 8
        %s224 = scalar_lea.vmem %s3, %s223
        %v225 = vld [vmem:[%s0] sm:$0xff]
        %v226 = vld [vmem:[%s0 + $0x8] sm:$0xff]
        %v227 = vld [vmem:[%s0 + $0x10] sm:$0xff]
        %v228 = vld [vmem:[%s0 + $0x18] sm:$0xff]
        %v229 = vld [vmem:[%s185] sm:$0xff]
        %v230 = vld [vmem:[%s185 + $0x8] sm:$0xff]
        %v231 = vld [vmem:[%s185 + $0x10] sm:$0xff]
        %v232 = vld [vmem:[%s185 + $0x18] sm:$0xff]
        %v233 = vld [vmem:[%s185 + $0x20] sm:$0xff]
        %v234 = vld [vmem:[%s185 + $0x28] sm:$0xff]
        %v235 = vld [vmem:[%s185 + $0x30] sm:$0xff]
        %v236 = vld [vmem:[%s185 + $0x38] sm:$0xff]
        %v237 = vld [vmem:[%s185 + $0x40] sm:$0xff]
        %v238 = vld [vmem:[%s185 + $0x48] sm:$0xff]
        %v239 = vld [vmem:[%s185 + $0x50] sm:$0xff]
        %v240 = vld [vmem:[%s185 + $0x58] sm:$0xff]
        %v241 = vld [vmem:[%s185 + $0x60] sm:$0xff]
        %v242 = vld [vmem:[%s185 + $0x68] sm:$0xff]
        %v243 = vld [vmem:[%s185 + $0x70] sm:$0xff]
        %v244 = vld [vmem:[%s185 + $0x78] sm:$0xff]
        %v245 = vld [vmem:[%s185 + $0x80] sm:$0xff]
        %v246 = vld [vmem:[%s185 + $0x88] sm:$0xff]
        %v247 = vld [vmem:[%s185 + $0x90] sm:$0xff]
        %v248 = vld [vmem:[%s185 + $0x98] sm:$0xff]
        %v249 = vld [vmem:[%s185 + $0xa0] sm:$0xff]
        %v250 = vld [vmem:[%s185 + $0xa8] sm:$0xff]
        %v251 = vld [vmem:[%s185 + $0xb0] sm:$0xff]
        %v252 = vld [vmem:[%s185 + $0xb8] sm:$0xff]
        %v253 = vld [vmem:[%s185 + $0xc0] sm:$0xff]
        %v254 = vld [vmem:[%s185 + $0xc8] sm:$0xff]
        %v255 = vld [vmem:[%s185 + $0xd0] sm:$0xff]
        %v256 = vld [vmem:[%s185 + $0xd8] sm:$0xff]
        %v257 = vld [vmem:[%s185 + $0xe0] sm:$0xff]
        %v258 = vld [vmem:[%s185 + $0xe8] sm:$0xff]
        %v259 = vld [vmem:[%s185 + $0xf0] sm:$0xff]
        %v260 = vld [vmem:[%s185 + $0xf8] sm:$0xff]
        %v261 = vld [vmem:[%s185 + $0x100] sm:$0xff]
        %v262 = vld [vmem:[%s185 + $0x108] sm:$0xff]
        %v263 = vld [vmem:[%s185 + $0x110] sm:$0xff]
        %v264 = vld [vmem:[%s185 + $0x118] sm:$0xff]
        %v265 = vld [vmem:[%s185 + $0x120] sm:$0xff]
        %v266 = vld [vmem:[%s185 + $0x128] sm:$0xff]
        %v267 = vld [vmem:[%s185 + $0x130] sm:$0xff]
        %v268 = vld [vmem:[%s185 + $0x138] sm:$0xff]
        %v269 = vld [vmem:[%s185 + $0x140] sm:$0xff]
        %v270 = vld [vmem:[%s185 + $0x148] sm:$0xff]
        %v271 = vld [vmem:[%s185 + $0x150] sm:$0xff]
        %v272 = vld [vmem:[%s185 + $0x158] sm:$0xff]
        %v273 = vld [vmem:[%s185 + $0x160] sm:$0xff]
        %v274 = vld [vmem:[%s185 + $0x168] sm:$0xff]
        %v275 = vld [vmem:[%s185 + $0x170] sm:$0xff]
        %v276 = vld [vmem:[%s185 + $0x178] sm:$0xff]
        %v277 = vld [vmem:[%s185 + $0x180] sm:$0xff]
        %v278 = vld [vmem:[%s185 + $0x188] sm:$0xff]
        %v279 = vld [vmem:[%s185 + $0x190] sm:$0xff]
        %v280 = vld [vmem:[%s185 + $0x198] sm:$0xff]
        %v281 = vld [vmem:[%s185 + $0x1a0] sm:$0xff]
        %v282 = vld [vmem:[%s185 + $0x1a8] sm:$0xff]
        %v283 = vld [vmem:[%s185 + $0x1b0] sm:$0xff]
        %v284 = vld [vmem:[%s185 + $0x1b8] sm:$0xff]
        %v285 = vld [vmem:[%s185 + $0x1c0] sm:$0xff]
        %v286 = vld [vmem:[%s185 + $0x1c8] sm:$0xff]
        %v287 = vld [vmem:[%s185 + $0x1d0] sm:$0xff]
        %v288 = vld [vmem:[%s185 + $0x1d8] sm:$0xff]
        %v289 = vld [vmem:[%s185 + $0x1e0] sm:$0xff]
        %v290 = vld [vmem:[%s185 + $0x1e8] sm:$0xff]
        %v291 = vld [vmem:[%s185 + $0x1f0] sm:$0xff]
        %v292 = vld [vmem:[%s185 + $0x1f8] sm:$0xff]
        %v293 = vld [vmem:[%s194] sm:$0x1]
        %v295 = vperm.slane %v293, 0
        %297 = vmatpush.msra.mxu0 %v244
        %298 = vmatpush.msra.mxu0 %v243
        %299 = vmatpush.msra.mxu0 %v242
        %300 = vmatpush.msra.mxu0 %v241
        %301 = vmatpush.msra.mxu0 %v240
        %302 = vmatpush.msra.mxu0 %v239
        %303 = vmatpush.msra.mxu0 %v238
        %304 = vmatpush.msra.mxu0 %v237
        %305 = vmatpush.msra.mxu0 %v236
        %306 = vmatpush.msra.mxu0 %v235
        %307 = vmatpush.msra.mxu0 %v234
        %308 = vmatpush.msra.mxu0 %v233
        %309 = vmatpush.msra.mxu0 %v232
        %310 = vmatpush.msra.mxu0 %v231
        %311 = vmatpush.msra.mxu0 %v230
        %312 = vmatpush.msra.mxu0 %v229
        %313 = vmatmul.f32.gmra.mxu0 %v225
        %v314 = vpop.f32.mrf.mxu0
        %v315 = vadd.f32 %v295, %v314
        %316 = vdwg.mxu0
        %317 = vmatpush.msra.mxu0 %v260
        %318 = vmatpush.msra.mxu0 %v259
        %319 = vmatpush.msra.mxu0 %v258
        %320 = vmatpush.msra.mxu0 %v257
        %321 = vmatpush.msra.mxu0 %v256
        %322 = vmatpush.msra.mxu0 %v255
        %323 = vmatpush.msra.mxu0 %v254
        %324 = vmatpush.msra.mxu0 %v253
        %325 = vmatpush.msra.mxu0 %v252
        %326 = vmatpush.msra.mxu0 %v251
        %327 = vmatpush.msra.mxu0 %v250
        %328 = vmatpush.msra.mxu0 %v249
        %329 = vmatpush.msra.mxu0 %v248
        %330 = vmatpush.msra.mxu0 %v247
        %331 = vmatpush.msra.mxu0 %v246
        %332 = vmatpush.msra.mxu0 %v245
        %333 = vmatmul.f32.gmra.mxu0 %v226
        %v334 = vpop.f32.mrf.mxu0
        %v335 = vadd.f32 %v315, %v334
        %336 = vdwg.mxu0
        %337 = vmatpush.msra.mxu0 %v276
        %338 = vmatpush.msra.mxu0 %v275
        %339 = vmatpush.msra.mxu0 %v274
        %340 = vmatpush.msra.mxu0 %v273
        %341 = vmatpush.msra.mxu0 %v272
        %342 = vmatpush.msra.mxu0 %v271
        %343 = vmatpush.msra.mxu0 %v270
        %344 = vmatpush.msra.mxu0 %v269
        %345 = vmatpush.msra.mxu0 %v268
        %346 = vmatpush.msra.mxu0 %v267
        %347 = vmatpush.msra.mxu0 %v266
        %348 = vmatpush.msra.mxu0 %v265
        %349 = vmatpush.msra.mxu0 %v264
        %350 = vmatpush.msra.mxu0 %v263
        %351 = vmatpush.msra.mxu0 %v262
        %352 = vmatpush.msra.mxu0 %v261
        %353 = vmatmul.f32.gmra.mxu0 %v227
        %v354 = vpop.f32.mrf.mxu0
        %v355 = vadd.f32 %v335, %v354
        %356 = vdwg.mxu0
        %357 = vmatpush.msra.mxu0 %v292
        %358 = vmatpush.msra.mxu0 %v291
        %359 = vmatpush.msra.mxu0 %v290
        %360 = vmatpush.msra.mxu0 %v289
        %361 = vmatpush.msra.mxu0 %v288
        %362 = vmatpush.msra.mxu0 %v287
        %363 = vmatpush.msra.mxu0 %v286
        %364 = vmatpush.msra.mxu0 %v285
        %365 = vmatpush.msra.mxu0 %v284
        %366 = vmatpush.msra.mxu0 %v283
        %367 = vmatpush.msra.mxu0 %v282
        %368 = vmatpush.msra.mxu0 %v281
        %369 = vmatpush.msra.mxu0 %v280
        %370 = vmatpush.msra.mxu0 %v279
        %371 = vmatpush.msra.mxu0 %v278
        %372 = vmatpush.msra.mxu0 %v277
        %373 = vmatmul.f32.gmra.mxu0 %v228
        %v374 = vpop.f32.mrf.mxu0
        %v375 = vadd.f32 %v355, %v374
        %376 = vdwg.mxu0
        %v377 = vmax.f32 %v375, 0.0
        %378 = vst [vmem:[%s224] sm:$0xff] %v377
        %p379 = scmp.lt.s32.totalorder %s20, 1
        %s380 = scalar_select %p379, %s20, 1
        %s381 = smul.addr %s380, 8
        %s382 = scalar_lea.vmem %s3, %s381
        // Predicated region
        $region41: #{feedforward_net_gptj.10} parent=31 // pred_check
          %p383 = pneg %p111
        $region42: #{feedforward_net_gptj.10} parent=31 // pred_check_branch
          %385 = sbr.rel (%p383) target = $region44
        $region43: #{feedforward_net_gptj.10} parent=31 // pred_region
          _
        $region44: #{feedforward_net_gptj.10} parent=31 // pred_fallthru
          _
      $region32: #{feedforward_net_gptj.10} parent=5 // pred_fallthru
        _
      %p386 = scmp.le.s32.totalorder 2, %s15
      // Predicated region
      $region45: #{feedforward_net_gptj.10} parent=5 // pred_check
        %p387 = pneg %p386
      $region46: #{feedforward_net_gptj.10} parent=5 // pred_check_branch
        %389 = sbr.rel (%p387) target = $region48
      $region47: #{feedforward_net_gptj.10} parent=5 // pred_region
        %s390 = ssub.s32 %s15, 2
        // Predicated region
        $region49: #{feedforward_net_gptj.10} parent=47 // pred_check
          %p391 = pneg %p117
        $region50: #{feedforward_net_gptj.10} parent=47 // pred_check_branch
          %393 = sbr.rel (%p391) target = $region52
        $region51: #{feedforward_net_gptj.10} parent=47 // pred_region
          %p394 = scmp.lt.s32.totalorder %s21, 1
          %s395 = scalar_select %p394, %s21, 1
          %s396 = smul.addr %s395, 8
          %s397 = scalar_lea.vmem %s3, %s396
        $region52: #{feedforward_net_gptj.10} parent=47 // pred_fallthru
          _
      $region48: #{feedforward_net_gptj.10} parent=5 // pred_fallthru
        _
    $region6: #{feedforward_net_gptj.10} parent=1 // loop_footer
      %s19 = sadd.s32 1, %s15
    $region7: #{feedforward_net_gptj.10} parent=1 // loop_footer_branch
      %14 = sbr.rel target = $region3
    $region8: #{feedforward_net_gptj.10} parent=1 // loop_exit
      _
    %398 = vsyncpa [#allocation3], 1
    %s399 = scalar_lea.sflag [#allocation3], 1
    %400 = vsyncpa %s399, 1
    %401 = vsyncpa [#allocation5], 1
    %s402 = scalar_lea.sflag [#allocation5], 1
    %403 = vsyncpa %s402, 1

// kernel: feedforward_net_gptj.11
$region0: #{feedforward_net_gptj.11}
  #allocation0 [shape = 'u32[]', space=smem, size = 0x4, offset = 0x4, fixed_abs, tag = 'smem constant byte address 0x4 - core index']
  #allocation1 [shape = 'u32[72,128]{1,0:T(1,128)}', space=vmem, size = 0x9000, scoped, tag = 'internal scratch']
  %s0 = inlined_call_operand.vmem [shape: f32[8,256], index: 0, kind: input, shape index: {}]
  %s1 = inlined_call_operand.vmem [shape: f32[256,16], index: 1, kind: input, shape index: {}]
  %s2 = inlined_call_operand.hbm [shape: f32[1,16], index: 2, kind: input, shape index: {}]
  %s3 = inlined_call_operand.hbm [shape: f32[8,16], index: 3, kind: output, shape index: {}]
  %s4 = sld [smem:[#allocation0]]
  $region26: #{feedforward_net_gptj.11} parent=0
    _
  %s6 = ssub.s32 1, %s4
  %s7 = scalar_select 0, %s6, %s4
  $region1: #{feedforward_net_gptj.11} parent=0
    #allocation2 [shape = 'u8[512]{0}', space=vmem, size = 0x400, scoped, tag = 'input window, operand 2, single buffered']
    #allocation3 [shape = 's32[1]{0}', space=sflag, size = 0x4, scoped, tag = 'scoped memory for feedforward_net_gptj.11']
    #allocation4 [shape = 's32[1]{0}', space=sflag, size = 0x4, scoped, tag = 'scoped memory for feedforward_net_gptj.11']
    #allocation5 [shape = 'u8[4096]{0}', space=vmem, size = 0x1000, scoped, tag = 'output window, operand 0, single buffered']
    %8 = vsyncpa [#allocation3], 0
    %9 = vsyncpa [#allocation4], 0
    // Predicated region
    $region2: #{feedforward_net_gptj.11} parent=1 // pred_check
      _
    $region3: #{feedforward_net_gptj.11} parent=1 // pred_check_branch
      %11 = sbr.rel (0) target = $region5
    $region4: #{feedforward_net_gptj.11} parent=1 // pred_region
      _
    $region5: #{feedforward_net_gptj.11} parent=1 // pred_fallthru
      _
    // Predicated region
    $region6: #{feedforward_net_gptj.11} parent=1 // pred_check
      _
    $region7: #{feedforward_net_gptj.11} parent=1 // pred_check_branch
      %13 = sbr.rel (0) target = $region9
    $region8: #{feedforward_net_gptj.11} parent=1 // pred_region
      _
    $region9: #{feedforward_net_gptj.11} parent=1 // pred_fallthru
      _
    // Predicated region
    $region10: #{feedforward_net_gptj.11} parent=1 // pred_check
      _
    $region11: #{feedforward_net_gptj.11} parent=1 // pred_check_branch
      %15 = sbr.rel (0) target = $region13
    $region12: #{feedforward_net_gptj.11} parent=1 // pred_region
      %17 = vsyncadd [#allocation3], 0
      %s19 = sshll.u32 %s2, 4
      %s20 = int_to_ptr.hbm [resolvable:$true] %s19
      %s21 = sshll.u32 [#allocation2], 4
      %s22 = int_to_ptr.vmem [resolvable:$true] %s21
      %24 = dma.hbm_to_vmem [thread:$0]  %s20, 16, %s22, [#allocation3]
    $region13: #{feedforward_net_gptj.11} parent=1 // pred_fallthru
      _
    // Predicated region
    $region14: #{feedforward_net_gptj.11} parent=1 // pred_check
      _
    $region15: #{feedforward_net_gptj.11} parent=1 // pred_check_branch
      %26 = sbr.rel (0) target = $region17
    $region16: #{feedforward_net_gptj.11} parent=1 // pred_region
      %28 = dma.done [#allocation3], 16
    $region17: #{feedforward_net_gptj.11} parent=1 // pred_fallthru
      _
    %v29 = vld [vmem:[%s0] sm:$0xff]
    %v30 = vld [vmem:[%s0 + $0x8] sm:$0xff]
    %v31 = vld [vmem:[%s1] sm:$0xff]
    %v32 = vld [vmem:[%s1 + $0x8] sm:$0xff]
    %v33 = vld [vmem:[%s1 + $0x10] sm:$0xff]
    %v34 = vld [vmem:[%s1 + $0x18] sm:$0xff]
    %v35 = vld [vmem:[%s1 + $0x20] sm:$0xff]
    %v36 = vld [vmem:[%s1 + $0x28] sm:$0xff]
    %v37 = vld [vmem:[%s1 + $0x30] sm:$0xff]
    %v38 = vld [vmem:[%s1 + $0x38] sm:$0xff]
    %v39 = vld [vmem:[%s1 + $0x40] sm:$0xff]
    %v40 = vld [vmem:[%s1 + $0x48] sm:$0xff]
    %v41 = vld [vmem:[%s1 + $0x50] sm:$0xff]
    %v42 = vld [vmem:[%s1 + $0x58] sm:$0xff]
    %v43 = vld [vmem:[%s1 + $0x60] sm:$0xff]
    %v44 = vld [vmem:[%s1 + $0x68] sm:$0xff]
    %v45 = vld [vmem:[%s1 + $0x70] sm:$0xff]
    %v46 = vld [vmem:[%s1 + $0x78] sm:$0xff]
    %v47 = vld [vmem:[%s1 + $0x80] sm:$0xff]
    %v48 = vld [vmem:[%s1 + $0x88] sm:$0xff]
    %v49 = vld [vmem:[%s1 + $0x90] sm:$0xff]
    %v50 = vld [vmem:[%s1 + $0x98] sm:$0xff]
    %v51 = vld [vmem:[%s1 + $0xa0] sm:$0xff]
    %v52 = vld [vmem:[%s1 + $0xa8] sm:$0xff]
    %v53 = vld [vmem:[%s1 + $0xb0] sm:$0xff]
    %v54 = vld [vmem:[%s1 + $0xb8] sm:$0xff]
    %v55 = vld [vmem:[%s1 + $0xc0] sm:$0xff]
    %v56 = vld [vmem:[%s1 + $0xc8] sm:$0xff]
    %v57 = vld [vmem:[%s1 + $0xd0] sm:$0xff]
    %v58 = vld [vmem:[%s1 + $0xd8] sm:$0xff]
    %v59 = vld [vmem:[%s1 + $0xe0] sm:$0xff]
    %v60 = vld [vmem:[%s1 + $0xe8] sm:$0xff]
    %v61 = vld [vmem:[%s1 + $0xf0] sm:$0xff]
    %v62 = vld [vmem:[%s1 + $0xf8] sm:$0xff]
    %v63 = vld [vmem:[#allocation2] sm:$0x1]
    %v65 = vperm.slane %v63, 0
    %67 = vmatpush.msra.mxu0 %v46
    %68 = vmatpush.msra.mxu0 %v45
    %69 = vmatpush.msra.mxu0 %v44
    %70 = vmatpush.msra.mxu0 %v43
    %71 = vmatpush.msra.mxu0 %v42
    %72 = vmatpush.msra.mxu0 %v41
    %73 = vmatpush.msra.mxu0 %v40
    %74 = vmatpush.msra.mxu0 %v39
    %75 = vmatpush.msra.mxu0 %v38
    %76 = vmatpush.msra.mxu0 %v37
    %77 = vmatpush.msra.mxu0 %v36
    %78 = vmatpush.msra.mxu0 %v35
    %79 = vmatpush.msra.mxu0 %v34
    %80 = vmatpush.msra.mxu0 %v33
    %81 = vmatpush.msra.mxu0 %v32
    %82 = vmatpush.msra.mxu0 %v31
    %83 = vmatmul.f32.gmra.mxu0 %v29
    %v84 = vpop.f32.mrf.mxu0
    %v85 = vadd.f32 %v65, %v84
    %86 = vdwg.mxu0
    %87 = vmatpush.msra.mxu0 %v62
    %88 = vmatpush.msra.mxu0 %v61
    %89 = vmatpush.msra.mxu0 %v60
    %90 = vmatpush.msra.mxu0 %v59
    %91 = vmatpush.msra.mxu0 %v58
    %92 = vmatpush.msra.mxu0 %v57
    %93 = vmatpush.msra.mxu0 %v56
    %94 = vmatpush.msra.mxu0 %v55
    %95 = vmatpush.msra.mxu0 %v54
    %96 = vmatpush.msra.mxu0 %v53
    %97 = vmatpush.msra.mxu0 %v52
    %98 = vmatpush.msra.mxu0 %v51
    %99 = vmatpush.msra.mxu0 %v50
    %100 = vmatpush.msra.mxu0 %v49
    %101 = vmatpush.msra.mxu0 %v48
    %102 = vmatpush.msra.mxu0 %v47
    %103 = vmatmul.f32.gmra.mxu0 %v30
    %v104 = vpop.f32.mrf.mxu0
    %v105 = vadd.f32 %v85, %v104
    %106 = vdwg.mxu0
    %vm107 = vcmask 130048
    %108 = vst.msk [vmem:[#allocation5] sm:$0xff] %vm107, %v105
    // Predicated region
    $region18: #{feedforward_net_gptj.11} parent=1 // pred_check
      _
    $region19: #{feedforward_net_gptj.11} parent=1 // pred_check_branch
      %110 = sbr.rel (0) target = $region21
    $region20: #{feedforward_net_gptj.11} parent=1 // pred_region
      %112 = vsyncadd [#allocation4], 0
      %s114 = sshll.u32 [#allocation5], 4
      %s115 = int_to_ptr.vmem [resolvable:$true] %s114
      %s116 = sshll.u32 %s3, 4
      %s117 = int_to_ptr.hbm [resolvable:$true] %s116
      %119 = dma.vmem_to_hbm [thread:$0]  %s115, 128, %s117, [#allocation4]
    $region21: #{feedforward_net_gptj.11} parent=1 // pred_fallthru
      _
    // Predicated region
    $region22: #{feedforward_net_gptj.11} parent=1 // pred_check
      _
    $region23: #{feedforward_net_gptj.11} parent=1 // pred_check_branch
      %121 = sbr.rel (0) target = $region25
    $region24: #{feedforward_net_gptj.11} parent=1 // pred_region
      %123 = dma.done [#allocation4], 128
    $region25: #{feedforward_net_gptj.11} parent=1 // pred_fallthru
      _
    %124 = vsyncpa [#allocation3], 1
    %125 = vsyncpa [#allocation4], 1

// kernel: feedforward_net_gptj.7
$region0: #{feedforward_net_gptj.7}
  #allocation0 [shape = 'u32[]', space=smem, size = 0x4, offset = 0x4, fixed_abs, tag = 'smem constant byte address 0x4 - core index']
  #allocation1 [shape = 'u32[72,128]{1,0:T(1,128)}', space=vmem, size = 0x9000, scoped, tag = 'internal scratch']
  %s0 = inlined_call_operand.vmem [shape: f32[8,2048], index: 0, kind: input, shape index: {}]
  %s1 = inlined_call_operand.hbm [shape: f32[2048,2048], index: 1, kind: input, shape index: {}]
  %s2 = inlined_call_operand.hbm [shape: f32[1,2048], index: 2, kind: input, shape index: {}]
  %s3 = inlined_call_operand.vmem [shape: f32[8,2048], index: 3, kind: output, shape index: {}]
  %s4 = sld [smem:[#allocation0]]
  $region53: #{feedforward_net_gptj.7} parent=0
    _
  %s6 = ssub.s32 1, %s4
  %s7 = scalar_select 0, %s6, %s4
  $region1: #{feedforward_net_gptj.7} parent=0
    #allocation2 [shape = 'u8[8388608]{0}', space=vmem, size = 0x800000, scoped, tag = 'input window, operand 1']
    #allocation3 [shape = 's32[2]{0}', space=sflag, size = 0x8, scoped, tag = 'scoped memory for feedforward_net_gptj.7']
    #allocation4 [shape = 'u8[4096]{0}', space=vmem, size = 0x1000, scoped, tag = 'input window, operand 2']
    #allocation5 [shape = 's32[2]{0}', space=sflag, size = 0x8, scoped, tag = 'scoped memory for feedforward_net_gptj.7']
    %8 = vsyncpa [#allocation3], 0
    %s9 = scalar_lea.sflag [#allocation3], 1
    %10 = vsyncpa %s9, 0
    %11 = vsyncpa [#allocation5], 0
    %s12 = scalar_lea.sflag [#allocation5], 1
    %13 = vsyncpa %s12, 0
    loop: start=0, step=1, limit=6
    $region2: #{feedforward_net_gptj.7} parent=1 // loop_pre_header
      _
    $region3: #{feedforward_net_gptj.7} parent=1 // loop_header
      %s15 = sphi 0, %s19
      %p16 = scmp.ge.s32.totalorder %s15, 6
      %s23 = sphi 0, %s23
      %s25 = sphi 0, %s23
      %s26 = sphi 0, %s25
      %s40 = sphi 0, %s26
      %s46 = sphi 0, %s48
      %s49 = sphi 0, %s46
      %s50 = sphi 0, %s49
      %s66 = sphi 0, %s50
      %s72 = sphi 0, %s74
      %s75 = sphi 0, %s72
      %s76 = sphi 0, %s75
      %s92 = sphi 0, %s76
      %s98 = sphi 0, %s100
      %s101 = sphi 0, %s98
      %s102 = sphi 0, %s101
      %s118 = sphi 0, %s102
    $region4: #{feedforward_net_gptj.7} parent=1 // loop_header_branch
      %18 = sbr.rel (%p16) target = $region8
    $region5: #{feedforward_net_gptj.7} parent=1 // loop_body
      %s20 = ssub.s32 %s15, 1
      %s21 = ssub.s32 %s15, 2
      %s22 = sadd.s32 %s15, 1
      %s24 = sadd.s32 %s23, 1
      %p27 = scmp.eq.s32.totalorder %s15, 3
      %p28 = scmp.ne.s32.totalorder %s23, %s25
      %p29 = scmp.eq.s32.totalorder %s15, 0
      %p30 = por %p28, %p29
      %p31 = scmp.ne.s32.totalorder %s23, %s25
      %p32 = scmp.eq.s32.totalorder %s20, 3
      %p33 = por %p31, %p32
      %p34 = scmp.ne.s32.totalorder %s25, %s26
      %p35 = scmp.eq.s32.totalorder %s20, 0
      %p36 = por %p34, %p35
      %p37 = scmp.ne.s32.totalorder %s25, %s26
      %p38 = scmp.eq.s32.totalorder %s21, 3
      %p39 = por %p37, %p38
      %p41 = scmp.ne.s32.totalorder %s26, %s40
      %p42 = scmp.eq.s32.totalorder %s21, 0
      %p43 = por %p41, %p42
      %s44 = ssub.s32 %s15, %s22
      %p45 = scmp.eq.s32.totalorder %s44, 0
      %s47 = sadd.s32 %s46, 1
      %s48 = scalar_select %p45, %s46, %s47
      %p51 = pneg %p45
      %p52 = scmp.eq.s32.totalorder %s15, 3
      %p53 = por %p51, %p52
      %p54 = scmp.ne.s32.totalorder %s46, %s49
      %p55 = scmp.eq.s32.totalorder %s15, 0
      %p56 = por %p54, %p55
      %p57 = scmp.ne.s32.totalorder %s46, %s49
      %p58 = scmp.eq.s32.totalorder %s20, 3
      %p59 = por %p57, %p58
      %p60 = scmp.ne.s32.totalorder %s49, %s50
      %p61 = scmp.eq.s32.totalorder %s20, 0
      %p62 = por %p60, %p61
      %p63 = scmp.ne.s32.totalorder %s49, %s50
      %p64 = scmp.eq.s32.totalorder %s21, 3
      %p65 = por %p63, %p64
      %p67 = scmp.ne.s32.totalorder %s50, %s66
      %p68 = scmp.eq.s32.totalorder %s21, 0
      %p69 = por %p67, %p68
      %s70 = ssub.s32 %s15, %s22
      %p71 = scmp.eq.s32.totalorder %s70, 0
      %s73 = sadd.s32 %s72, 1
      %s74 = scalar_select %p71, %s72, %s73
      %p77 = pneg %p71
      %p78 = scmp.eq.s32.totalorder %s15, 3
      %p79 = por %p77, %p78
      %p80 = scmp.ne.s32.totalorder %s72, %s75
      %p81 = scmp.eq.s32.totalorder %s15, 0
      %p82 = por %p80, %p81
      %p83 = scmp.ne.s32.totalorder %s72, %s75
      %p84 = scmp.eq.s32.totalorder %s20, 3
      %p85 = por %p83, %p84
      %p86 = scmp.ne.s32.totalorder %s75, %s76
      %p87 = scmp.eq.s32.totalorder %s20, 0
      %p88 = por %p86, %p87
      %p89 = scmp.ne.s32.totalorder %s75, %s76
      %p90 = scmp.eq.s32.totalorder %s21, 3
      %p91 = por %p89, %p90
      %p93 = scmp.ne.s32.totalorder %s76, %s92
      %p94 = scmp.eq.s32.totalorder %s21, 0
      %p95 = por %p93, %p94
      %s96 = ssub.s32 %s15, %s22
      %p97 = scmp.eq.s32.totalorder %s96, 0
      %s99 = sadd.s32 %s98, 1
      %s100 = scalar_select %p97, %s98, %s99
      %p103 = pneg %p97
      %p104 = scmp.eq.s32.totalorder %s15, 3
      %p105 = por %p103, %p104
      %p106 = scmp.ne.s32.totalorder %s98, %s101
      %p107 = scmp.eq.s32.totalorder %s15, 0
      %p108 = por %p106, %p107
      %p109 = scmp.ne.s32.totalorder %s98, %s101
      %p110 = scmp.eq.s32.totalorder %s20, 3
      %p111 = por %p109, %p110
      %p112 = scmp.ne.s32.totalorder %s101, %s102
      %p113 = scmp.eq.s32.totalorder %s20, 0
      %p114 = por %p112, %p113
      %p115 = scmp.ne.s32.totalorder %s101, %s102
      %p116 = scmp.eq.s32.totalorder %s21, 3
      %p117 = por %p115, %p116
      %p119 = scmp.ne.s32.totalorder %s102, %s118
      %p120 = scmp.eq.s32.totalorder %s21, 0
      %p121 = por %p119, %p120
      %p122 = scmp.le.s32.totalorder 1, %s15
      %p123 = scmp.lt.s32.totalorder %s15, 5
      %p124 = pnand %p122, %p123
      %p125 = pneg %p124
      // Predicated region
      $region9: #{feedforward_net_gptj.7} parent=5 // pred_check
        _
      $region10: #{feedforward_net_gptj.7} parent=5 // pred_check_branch
        %127 = sbr.rel (%p124) target = $region12
      $region11: #{feedforward_net_gptj.7} parent=5 // pred_region
        %s128 = ssub.s32 %s15, 1
        // Predicated region
        $region13: #{feedforward_net_gptj.7} parent=11 // pred_check
          %p129 = pneg %p36
        $region14: #{feedforward_net_gptj.7} parent=11 // pred_check_branch
          %131 = sbr.rel (%p129) target = $region16
        $region15: #{feedforward_net_gptj.7} parent=11 // pred_region
          _
        $region16: #{feedforward_net_gptj.7} parent=11 // pred_fallthru
          _
      $region12: #{feedforward_net_gptj.7} parent=5 // pred_fallthru
        _
      %p132 = scmp.lt.s32.totalorder %s15, 4
      // Predicated region
      $region17: #{feedforward_net_gptj.7} parent=5 // pred_check
        %p133 = pneg %p132
      $region18: #{feedforward_net_gptj.7} parent=5 // pred_check_branch
        %135 = sbr.rel (%p133) target = $region20
      $region19: #{feedforward_net_gptj.7} parent=5 // pred_region
        // Predicated region
        $region21: #{feedforward_net_gptj.7} parent=19 // pred_check
          %p136 = pneg %p56
        $region22: #{feedforward_net_gptj.7} parent=19 // pred_check_branch
          %138 = sbr.rel (%p136) target = $region24
        $region23: #{feedforward_net_gptj.7} parent=19 // pred_region
          %s139 = sand.u32 %s46, 1
          %s140 = scalar_lea.sflag [#allocation3], %s139
          %s141 = sand.u32 %s46, 1
          %s142 = smul.addr %s141, 8192
          %s143 = scalar_lea.vmem [#allocation2], %s142
          %s144 = smul.u32 4, %s15
          %146 = vsyncadd %s140, 0
          %s147 = smul.addr %s144, 8
          %s148 = scalar_lea.hbm %s1, %s147
          %s149 = sshll.u32 %s148, 4
          %s150 = int_to_ptr.hbm [resolvable:$true] %s149
          %s151 = sshll.u32 %s143, 4
          %s152 = int_to_ptr.vmem [resolvable:$true] %s151
          %157 = dma.hbm_to_vmem [thread:$0]  %s150, 131072, %s152, %s140, 2048, 512, 32
        $region24: #{feedforward_net_gptj.7} parent=19 // pred_fallthru
          _
        // Predicated region
        $region25: #{feedforward_net_gptj.7} parent=19 // pred_check
          %p158 = pneg %p82
        $region26: #{feedforward_net_gptj.7} parent=19 // pred_check_branch
          %160 = sbr.rel (%p158) target = $region28
        $region27: #{feedforward_net_gptj.7} parent=19 // pred_region
          %s161 = sand.u32 %s72, 1
          %s162 = scalar_lea.sflag [#allocation5], %s161
          %s163 = sand.u32 %s72, 1
          %s164 = smul.addr %s163, 4
          %s165 = scalar_lea.vmem [#allocation4], %s164
          %s166 = smul.u32 4, %s15
          %168 = vsyncadd %s162, 0
          %s169 = scalar_lea.hbm %s2, %s166
          %s171 = sshll.u32 %s169, 4
          %s172 = int_to_ptr.hbm [resolvable:$true] %s171
          %s173 = sshll.u32 %s165, 4
          %s174 = int_to_ptr.vmem [resolvable:$true] %s173
          %176 = dma.hbm_to_vmem [thread:$0]  %s172, 64, %s174, %s162
        $region28: #{feedforward_net_gptj.7} parent=19 // pred_fallthru
          _
      $region20: #{feedforward_net_gptj.7} parent=5 // pred_fallthru
        _
      %p177 = scmp.le.s32.totalorder 1, %s15
      %p178 = scmp.lt.s32.totalorder %s15, 5
      %p179 = pnand %p177, %p178
      %p180 = pneg %p179
      // Predicated region
      $region29: #{feedforward_net_gptj.7} parent=5 // pred_check
        _
      $region30: #{feedforward_net_gptj.7} parent=5 // pred_check_branch
        %182 = sbr.rel (%p179) target = $region32
      $region31: #{feedforward_net_gptj.7} parent=5 // pred_region
        %s183 = ssub.s32 %s15, 1
        %s184 = sand.u32 %s49, 1
        %s185 = scalar_lea.sflag [#allocation3], %s184
        %s186 = sand.u32 %s49, 1
        %s187 = smul.addr %s186, 8192
        %s188 = scalar_lea.vmem [#allocation2], %s187
        // Predicated region
        $region33: #{feedforward_net_gptj.7} parent=31 // pred_check
          %p189 = pneg %p62
        $region34: #{feedforward_net_gptj.7} parent=31 // pred_check_branch
          %191 = sbr.rel (%p189) target = $region36
        $region35: #{feedforward_net_gptj.7} parent=31 // pred_region
          %193 = dma.done %s185, 131072
        $region36: #{feedforward_net_gptj.7} parent=31 // pred_fallthru
          _
        %s194 = sand.u32 %s75, 1
        %s195 = scalar_lea.sflag [#allocation5], %s194
        %s196 = sand.u32 %s75, 1
        %s197 = smul.addr %s196, 4
        %s198 = scalar_lea.vmem [#allocation4], %s197
        // Predicated region
        $region37: #{feedforward_net_gptj.7} parent=31 // pred_check
          %p199 = pneg %p88
        $region38: #{feedforward_net_gptj.7} parent=31 // pred_check_branch
          %201 = sbr.rel (%p199) target = $region40
        $region39: #{feedforward_net_gptj.7} parent=31 // pred_region
          %203 = dma.done %s195, 64
        $region40: #{feedforward_net_gptj.7} parent=31 // pred_fallthru
          _
        %p204 = pneg %p36
        %p205 = pneg %p33
        %s206 = sand.u32 %s49, 1
        %s207 = scalar_lea.sflag [#allocation3], %s206
        %s208 = sand.u32 %s49, 1
        %s209 = smul.addr %s208, 8192
        %s210 = scalar_lea.vmem [#allocation2], %s209
        %p211 = pneg %p62
        %p212 = pneg %p59
        %s213 = sand.u32 %s75, 1
        %s214 = scalar_lea.sflag [#allocation5], %s213
        %s215 = sand.u32 %s75, 1
        %s216 = smul.addr %s215, 4
        %s217 = scalar_lea.vmem [#allocation4], %s216
        %p218 = pneg %p88
        %p219 = pneg %p85
        %p220 = pneg %p114
        %p221 = pneg %p111
        %s222 = smul.u32 4, %s20
        %p223 = scmp.lt.s32.totalorder %s222, 15
        %s224 = scalar_select %p223, %s222, 15
        %s225 = smul.addr %s224, 8
        %s226 = scalar_lea.vmem %s3, %s225
        %s227 = smul.u32 4, %s20
        %s228 = smul.u32 4, %s20
        %s229 = smul.u32 4, %s20
        %p230 = scmp.lt.s32.totalorder %s229, 15
        %s231 = scalar_select %p230, %s229, 15
        %s232 = smul.addr %s231, 8
        %s233 = scalar_lea.vmem %s3, %s232
        %s234 = smul.u32 4, %s20
        %v235 = vld [vmem:[%s0] sm:$0xff]
        %v236 = vld [vmem:[%s0 + $0x8] sm:$0xff]
        %v237 = vld [vmem:[%s0 + $0x10] sm:$0xff]
        %v238 = vld [vmem:[%s0 + $0x18] sm:$0xff]
        %v239 = vld [vmem:[%s0 + $0x20] sm:$0xff]
        %v240 = vld [vmem:[%s0 + $0x28] sm:$0xff]
        %v241 = vld [vmem:[%s0 + $0x30] sm:$0xff]
        %v242 = vld [vmem:[%s0 + $0x38] sm:$0xff]
        %v243 = vld [vmem:[%s0 + $0x40] sm:$0xff]
        %v244 = vld [vmem:[%s0 + $0x48] sm:$0xff]
        %v245 = vld [vmem:[%s0 + $0x50] sm:$0xff]
        %v246 = vld [vmem:[%s0 + $0x58] sm:$0xff]
        %v247 = vld [vmem:[%s0 + $0x60] sm:$0xff]
        %v248 = vld [vmem:[%s0 + $0x68] sm:$0xff]
        %v249 = vld [vmem:[%s0 + $0x70] sm:$0xff]
        %v250 = vld [vmem:[%s0 + $0x78] sm:$0xff]
        %v251 = vld [vmem:[%s188] sm:$0xff]
        %v252 = vld [vmem:[%s188 + $0x8] sm:$0xff]
        %v253 = vld [vmem:[%s188 + $0x10] sm:$0xff]
        %v254 = vld [vmem:[%s188 + $0x18] sm:$0xff]
        %v255 = vld [vmem:[%s188 + $0x20] sm:$0xff]
        %v256 = vld [vmem:[%s188 + $0x28] sm:$0xff]
        %v257 = vld [vmem:[%s188 + $0x30] sm:$0xff]
        %v258 = vld [vmem:[%s188 + $0x38] sm:$0xff]
        %v259 = vld [vmem:[%s188 + $0x40] sm:$0xff]
        %v260 = vld [vmem:[%s188 + $0x48] sm:$0xff]
        %v261 = vld [vmem:[%s188 + $0x50] sm:$0xff]
        %v262 = vld [vmem:[%s188 + $0x58] sm:$0xff]
        %v263 = vld [vmem:[%s188 + $0x60] sm:$0xff]
        %v264 = vld [vmem:[%s188 + $0x68] sm:$0xff]
        %v265 = vld [vmem:[%s188 + $0x70] sm:$0xff]
        %v266 = vld [vmem:[%s188 + $0x78] sm:$0xff]
        %v267 = vld [vmem:[%s188 + $0x80] sm:$0xff]
        %v268 = vld [vmem:[%s188 + $0x88] sm:$0xff]
        %v269 = vld [vmem:[%s188 + $0x90] sm:$0xff]
        %v270 = vld [vmem:[%s188 + $0x98] sm:$0xff]
        %v271 = vld [vmem:[%s188 + $0xa0] sm:$0xff]
        %v272 = vld [vmem:[%s188 + $0xa8] sm:$0xff]
        %v273 = vld [vmem:[%s188 + $0xb0] sm:$0xff]
        %v274 = vld [vmem:[%s188 + $0xb8] sm:$0xff]
        %v275 = vld [vmem:[%s188 + $0xc0] sm:$0xff]
        %v276 = vld [vmem:[%s188 + $0xc8] sm:$0xff]
        %v277 = vld [vmem:[%s188 + $0xd0] sm:$0xff]
        %v278 = vld [vmem:[%s188 + $0xd8] sm:$0xff]
        %v279 = vld [vmem:[%s188 + $0xe0] sm:$0xff]
        %v280 = vld [vmem:[%s188 + $0xe8] sm:$0xff]
        %v281 = vld [vmem:[%s188 + $0xf0] sm:$0xff]
        %v282 = vld [vmem:[%s188 + $0xf8] sm:$0xff]
        %v283 = vld [vmem:[%s188 + $0x100] sm:$0xff]
        %v284 = vld [vmem:[%s188 + $0x108] sm:$0xff]
        %v285 = vld [vmem:[%s188 + $0x110] sm:$0xff]
        %v286 = vld [vmem:[%s188 + $0x118] sm:$0xff]
        %v287 = vld [vmem:[%s188 + $0x120] sm:$0xff]
        %v288 = vld [vmem:[%s188 + $0x128] sm:$0xff]
        %v289 = vld [vmem:[%s188 + $0x130] sm:$0xff]
        %v290 = vld [vmem:[%s188 + $0x138] sm:$0xff]
        %v291 = vld [vmem:[%s188 + $0x140] sm:$0xff]
        %v292 = vld [vmem:[%s188 + $0x148] sm:$0xff]
        %v293 = vld [vmem:[%s188 + $0x150] sm:$0xff]
        %v294 = vld [vmem:[%s188 + $0x158] sm:$0xff]
        %v295 = vld [vmem:[%s188 + $0x160] sm:$0xff]
        %v296 = vld [vmem:[%s188 + $0x168] sm:$0xff]
        %v297 = vld [vmem:[%s188 + $0x170] sm:$0xff]
        %v298 = vld [vmem:[%s188 + $0x178] sm:$0xff]
        %v299 = vld [vmem:[%s188 + $0x180] sm:$0xff]
        %v300 = vld [vmem:[%s188 + $0x188] sm:$0xff]
        %v301 = vld [vmem:[%s188 + $0x190] sm:$0xff]
        %v302 = vld [vmem:[%s188 + $0x198] sm:$0xff]
        %v303 = vld [vmem:[%s188 + $0x1a0] sm:$0xff]
        %v304 = vld [vmem:[%s188 + $0x1a8] sm:$0xff]
        %v305 = vld [vmem:[%s188 + $0x1b0] sm:$0xff]
        %v306 = vld [vmem:[%s188 + $0x1b8] sm:$0xff]
        %v307 = vld [vmem:[%s188 + $0x1c0] sm:$0xff]
        %v308 = vld [vmem:[%s188 + $0x1c8] sm:$0xff]
        %v309 = vld [vmem:[%s188 + $0x1d0] sm:$0xff]
        %v310 = vld [vmem:[%s188 + $0x1d8] sm:$0xff]
        %v311 = vld [vmem:[%s188 + $0x1e0] sm:$0xff]
        %v312 = vld [vmem:[%s188 + $0x1e8] sm:$0xff]
        %v313 = vld [vmem:[%s188 + $0x1f0] sm:$0xff]
        %v314 = vld [vmem:[%s188 + $0x1f8] sm:$0xff]
        %v315 = vld [vmem:[%s188 + $0x200] sm:$0xff]
        %v316 = vld [vmem:[%s188 + $0x208] sm:$0xff]
        %v317 = vld [vmem:[%s188 + $0x210] sm:$0xff]
        %v318 = vld [vmem:[%s188 + $0x218] sm:$0xff]
        %v319 = vld [vmem:[%s188 + $0x220] sm:$0xff]
        %v320 = vld [vmem:[%s188 + $0x228] sm:$0xff]
        %v321 = vld [vmem:[%s188 + $0x230] sm:$0xff]
        %v322 = vld [vmem:[%s188 + $0x238] sm:$0xff]
        %v323 = vld [vmem:[%s188 + $0x240] sm:$0xff]
        %v324 = vld [vmem:[%s188 + $0x248] sm:$0xff]
        %v325 = vld [vmem:[%s188 + $0x250] sm:$0xff]
        %v326 = vld [vmem:[%s188 + $0x258] sm:$0xff]
        %v327 = vld [vmem:[%s188 + $0x260] sm:$0xff]
        %v328 = vld [vmem:[%s188 + $0x268] sm:$0xff]
        %v329 = vld [vmem:[%s188 + $0x270] sm:$0xff]
        %v330 = vld [vmem:[%s188 + $0x278] sm:$0xff]
        %v331 = vld [vmem:[%s188 + $0x280] sm:$0xff]
        %v332 = vld [vmem:[%s188 + $0x288] sm:$0xff]
        %v333 = vld [vmem:[%s188 + $0x290] sm:$0xff]
        %v334 = vld [vmem:[%s188 + $0x298] sm:$0xff]
        %v335 = vld [vmem:[%s188 + $0x2a0] sm:$0xff]
        %v336 = vld [vmem:[%s188 + $0x2a8] sm:$0xff]
        %v337 = vld [vmem:[%s188 + $0x2b0] sm:$0xff]
        %v338 = vld [vmem:[%s188 + $0x2b8] sm:$0xff]
        %v339 = vld [vmem:[%s188 + $0x2c0] sm:$0xff]
        %v340 = vld [vmem:[%s188 + $0x2c8] sm:$0xff]
        %v341 = vld [vmem:[%s188 + $0x2d0] sm:$0xff]
        %v342 = vld [vmem:[%s188 + $0x2d8] sm:$0xff]
        %v343 = vld [vmem:[%s188 + $0x2e0] sm:$0xff]
        %v344 = vld [vmem:[%s188 + $0x2e8] sm:$0xff]
        %v345 = vld [vmem:[%s188 + $0x2f0] sm:$0xff]
        %v346 = vld [vmem:[%s188 + $0x2f8] sm:$0xff]
        %v347 = vld [vmem:[%s188 + $0x300] sm:$0xff]
        %v348 = vld [vmem:[%s188 + $0x308] sm:$0xff]
        %v349 = vld [vmem:[%s188 + $0x310] sm:$0xff]
        %v350 = vld [vmem:[%s188 + $0x318] sm:$0xff]
        %v351 = vld [vmem:[%s188 + $0x320] sm:$0xff]
        %v352 = vld [vmem:[%s188 + $0x328] sm:$0xff]
        %v353 = vld [vmem:[%s188 + $0x330] sm:$0xff]
        %v354 = vld [vmem:[%s188 + $0x338] sm:$0xff]
        %v355 = vld [vmem:[%s188 + $0x340] sm:$0xff]
        %v356 = vld [vmem:[%s188 + $0x348] sm:$0xff]
        %v357 = vld [vmem:[%s188 + $0x350] sm:$0xff]
        %v358 = vld [vmem:[%s188 + $0x358] sm:$0xff]
        %v359 = vld [vmem:[%s188 + $0x360] sm:$0xff]
        %v360 = vld [vmem:[%s188 + $0x368] sm:$0xff]
        %v361 = vld [vmem:[%s188 + $0x370] sm:$0xff]
        %v362 = vld [vmem:[%s188 + $0x378] sm:$0xff]
        %v363 = vld [vmem:[%s188 + $0x380] sm:$0xff]
        %v364 = vld [vmem:[%s188 + $0x388] sm:$0xff]
        %v365 = vld [vmem:[%s188 + $0x390] sm:$0xff]
        %v366 = vld [vmem:[%s188 + $0x398] sm:$0xff]
        %v367 = vld [vmem:[%s188 + $0x3a0] sm:$0xff]
        %v368 = vld [vmem:[%s188 + $0x3a8] sm:$0xff]
        %v369 = vld [vmem:[%s188 + $0x3b0] sm:$0xff]
        %v370 = vld [vmem:[%s188 + $0x3b8] sm:$0xff]
        %v371 = vld [vmem:[%s188 + $0x3c0] sm:$0xff]
        %v372 = vld [vmem:[%s188 + $0x3c8] sm:$0xff]
        %v373 = vld [vmem:[%s188 + $0x3d0] sm:$0xff]
        %v374 = vld [vmem:[%s188 + $0x3d8] sm:$0xff]
        %v375 = vld [vmem:[%s188 + $0x3e0] sm:$0xff]
        %v376 = vld [vmem:[%s188 + $0x3e8] sm:$0xff]
        %v377 = vld [vmem:[%s188 + $0x3f0] sm:$0xff]
        %v378 = vld [vmem:[%s188 + $0x3f8] sm:$0xff]
        %v379 = vld [vmem:[%s188 + $0x400] sm:$0xff]
        %v380 = vld [vmem:[%s188 + $0x408] sm:$0xff]
        %v381 = vld [vmem:[%s188 + $0x410] sm:$0xff]
        %v382 = vld [vmem:[%s188 + $0x418] sm:$0xff]
        %v383 = vld [vmem:[%s188 + $0x420] sm:$0xff]
        %v384 = vld [vmem:[%s188 + $0x428] sm:$0xff]
        %v385 = vld [vmem:[%s188 + $0x430] sm:$0xff]
        %v386 = vld [vmem:[%s188 + $0x438] sm:$0xff]
        %v387 = vld [vmem:[%s188 + $0x440] sm:$0xff]
        %v388 = vld [vmem:[%s188 + $0x448] sm:$0xff]
        %v389 = vld [vmem:[%s188 + $0x450] sm:$0xff]
        %v390 = vld [vmem:[%s188 + $0x458] sm:$0xff]
        %v391 = vld [vmem:[%s188 + $0x460] sm:$0xff]
        %v392 = vld [vmem:[%s188 + $0x468] sm:$0xff]
        %v393 = vld [vmem:[%s188 + $0x470] sm:$0xff]
        %v394 = vld [vmem:[%s188 + $0x478] sm:$0xff]
        %v395 = vld [vmem:[%s188 + $0x480] sm:$0xff]
        %v396 = vld [vmem:[%s188 + $0x488] sm:$0xff]
        %v397 = vld [vmem:[%s188 + $0x490] sm:$0xff]
        %v398 = vld [vmem:[%s188 + $0x498] sm:$0xff]
        %v399 = vld [vmem:[%s188 + $0x4a0] sm:$0xff]
        %v400 = vld [vmem:[%s188 + $0x4a8] sm:$0xff]
        %v401 = vld [vmem:[%s188 + $0x4b0] sm:$0xff]
        %v402 = vld [vmem:[%s188 + $0x4b8] sm:$0xff]
        %v403 = vld [vmem:[%s188 + $0x4c0] sm:$0xff]
        %v404 = vld [vmem:[%s188 + $0x4c8] sm:$0xff]
        %v405 = vld [vmem:[%s188 + $0x4d0] sm:$0xff]
        %v406 = vld [vmem:[%s188 + $0x4d8] sm:$0xff]
        %v407 = vld [vmem:[%s188 + $0x4e0] sm:$0xff]
        %v408 = vld [vmem:[%s188 + $0x4e8] sm:$0xff]
        %v409 = vld [vmem:[%s188 + $0x4f0] sm:$0xff]
        %v410 = vld [vmem:[%s188 + $0x4f8] sm:$0xff]
        %v411 = vld [vmem:[%s188 + $0x500] sm:$0xff]
        %v412 = vld [vmem:[%s188 + $0x508] sm:$0xff]
        %v413 = vld [vmem:[%s188 + $0x510] sm:$0xff]
        %v414 = vld [vmem:[%s188 + $0x518] sm:$0xff]
        %v415 = vld [vmem:[%s188 + $0x520] sm:$0xff]
        %v416 = vld [vmem:[%s188 + $0x528] sm:$0xff]
        %v417 = vld [vmem:[%s188 + $0x530] sm:$0xff]
        %v418 = vld [vmem:[%s188 + $0x538] sm:$0xff]
        %v419 = vld [vmem:[%s188 + $0x540] sm:$0xff]
        %v420 = vld [vmem:[%s188 + $0x548] sm:$0xff]
        %v421 = vld [vmem:[%s188 + $0x550] sm:$0xff]
        %v422 = vld [vmem:[%s188 + $0x558] sm:$0xff]
        %v423 = vld [vmem:[%s188 + $0x560] sm:$0xff]
        %v424 = vld [vmem:[%s188 + $0x568] sm:$0xff]
        %v425 = vld [vmem:[%s188 + $0x570] sm:$0xff]
        %v426 = vld [vmem:[%s188 + $0x578] sm:$0xff]
        %v427 = vld [vmem:[%s188 + $0x580] sm:$0xff]
        %v428 = vld [vmem:[%s188 + $0x588] sm:$0xff]
        %v429 = vld [vmem:[%s188 + $0x590] sm:$0xff]
        %v430 = vld [vmem:[%s188 + $0x598] sm:$0xff]
        %v431 = vld [vmem:[%s188 + $0x5a0] sm:$0xff]
        %v432 = vld [vmem:[%s188 + $0x5a8] sm:$0xff]
        %v433 = vld [vmem:[%s188 + $0x5b0] sm:$0xff]
        %v434 = vld [vmem:[%s188 + $0x5b8] sm:$0xff]
        %v435 = vld [vmem:[%s188 + $0x5c0] sm:$0xff]
        %v436 = vld [vmem:[%s188 + $0x5c8] sm:$0xff]
        %v437 = vld [vmem:[%s188 + $0x5d0] sm:$0xff]
        %v438 = vld [vmem:[%s188 + $0x5d8] sm:$0xff]
        %v439 = vld [vmem:[%s188 + $0x5e0] sm:$0xff]
        %v440 = vld [vmem:[%s188 + $0x5e8] sm:$0xff]
        %v441 = vld [vmem:[%s188 + $0x5f0] sm:$0xff]
        %v442 = vld [vmem:[%s188 + $0x5f8] sm:$0xff]
        %v443 = vld [vmem:[%s188 + $0x600] sm:$0xff]
        %v444 = vld [vmem:[%s188 + $0x608] sm:$0xff]
        %v445 = vld [vmem:[%s188 + $0x610] sm:$0xff]
        %v446 = vld [vmem:[%s188 + $0x618] sm:$0xff]
        %v447 = vld [vmem:[%s188 + $0x620] sm:$0xff]
        %v448 = vld [vmem:[%s188 + $0x628] sm:$0xff]
        %v449 = vld [vmem:[%s188 + $0x630] sm:$0xff]
        %v450 = vld [vmem:[%s188 + $0x638] sm:$0xff]
        %v451 = vld [vmem:[%s188 + $0x640] sm:$0xff]
        %v452 = vld [vmem:[%s188 + $0x648] sm:$0xff]
        %v453 = vld [vmem:[%s188 + $0x650] sm:$0xff]
        %v454 = vld [vmem:[%s188 + $0x658] sm:$0xff]
        %v455 = vld [vmem:[%s188 + $0x660] sm:$0xff]
        %v456 = vld [vmem:[%s188 + $0x668] sm:$0xff]
        %v457 = vld [vmem:[%s188 + $0x670] sm:$0xff]
        %v458 = vld [vmem:[%s188 + $0x678] sm:$0xff]
        %v459 = vld [vmem:[%s188 + $0x680] sm:$0xff]
        %v460 = vld [vmem:[%s188 + $0x688] sm:$0xff]
        %v461 = vld [vmem:[%s188 + $0x690] sm:$0xff]
        %v462 = vld [vmem:[%s188 + $0x698] sm:$0xff]
        %v463 = vld [vmem:[%s188 + $0x6a0] sm:$0xff]
        %v464 = vld [vmem:[%s188 + $0x6a8] sm:$0xff]
        %v465 = vld [vmem:[%s188 + $0x6b0] sm:$0xff]
        %v466 = vld [vmem:[%s188 + $0x6b8] sm:$0xff]
        %v467 = vld [vmem:[%s188 + $0x6c0] sm:$0xff]
        %v468 = vld [vmem:[%s188 + $0x6c8] sm:$0xff]
        %v469 = vld [vmem:[%s188 + $0x6d0] sm:$0xff]
        %v470 = vld [vmem:[%s188 + $0x6d8] sm:$0xff]
        %v471 = vld [vmem:[%s188 + $0x6e0] sm:$0xff]
        %v472 = vld [vmem:[%s188 + $0x6e8] sm:$0xff]
        %v473 = vld [vmem:[%s188 + $0x6f0] sm:$0xff]
        %v474 = vld [vmem:[%s188 + $0x6f8] sm:$0xff]
        %v475 = vld [vmem:[%s188 + $0x700] sm:$0xff]
        %v476 = vld [vmem:[%s188 + $0x708] sm:$0xff]
        %v477 = vld [vmem:[%s188 + $0x710] sm:$0xff]
        %v478 = vld [vmem:[%s188 + $0x718] sm:$0xff]
        %v479 = vld [vmem:[%s188 + $0x720] sm:$0xff]
        %v480 = vld [vmem:[%s188 + $0x728] sm:$0xff]
        %v481 = vld [vmem:[%s188 + $0x730] sm:$0xff]
        %v482 = vld [vmem:[%s188 + $0x738] sm:$0xff]
        %v483 = vld [vmem:[%s188 + $0x740] sm:$0xff]
        %v484 = vld [vmem:[%s188 + $0x748] sm:$0xff]
        %v485 = vld [vmem:[%s188 + $0x750] sm:$0xff]
        %v486 = vld [vmem:[%s188 + $0x758] sm:$0xff]
        %v487 = vld [vmem:[%s188 + $0x760] sm:$0xff]
        %v488 = vld [vmem:[%s188 + $0x768] sm:$0xff]
        %v489 = vld [vmem:[%s188 + $0x770] sm:$0xff]
        %v490 = vld [vmem:[%s188 + $0x778] sm:$0xff]
        %v491 = vld [vmem:[%s188 + $0x780] sm:$0xff]
        %v492 = vld [vmem:[%s188 + $0x788] sm:$0xff]
        %v493 = vld [vmem:[%s188 + $0x790] sm:$0xff]
        %v494 = vld [vmem:[%s188 + $0x798] sm:$0xff]
        %v495 = vld [vmem:[%s188 + $0x7a0] sm:$0xff]
        %v496 = vld [vmem:[%s188 + $0x7a8] sm:$0xff]
        %v497 = vld [vmem:[%s188 + $0x7b0] sm:$0xff]
        %v498 = vld [vmem:[%s188 + $0x7b8] sm:$0xff]
        %v499 = vld [vmem:[%s188 + $0x7c0] sm:$0xff]
        %v500 = vld [vmem:[%s188 + $0x7c8] sm:$0xff]
        %v501 = vld [vmem:[%s188 + $0x7d0] sm:$0xff]
        %v502 = vld [vmem:[%s188 + $0x7d8] sm:$0xff]
        %v503 = vld [vmem:[%s188 + $0x7e0] sm:$0xff]
        %v504 = vld [vmem:[%s188 + $0x7e8] sm:$0xff]
        %v505 = vld [vmem:[%s188 + $0x7f0] sm:$0xff]
        %v506 = vld [vmem:[%s188 + $0x7f8] sm:$0xff]
        %v507 = vld [vmem:[%s188 + $0x800] sm:$0xff]
        %v508 = vld [vmem:[%s188 + $0x808] sm:$0xff]
        %v509 = vld [vmem:[%s188 + $0x810] sm:$0xff]
        %v510 = vld [vmem:[%s188 + $0x818] sm:$0xff]
        %v511 = vld [vmem:[%s188 + $0x820] sm:$0xff]
        %v512 = vld [vmem:[%s188 + $0x828] sm:$0xff]
        %v513 = vld [vmem:[%s188 + $0x830] sm:$0xff]
        %v514 = vld [vmem:[%s188 + $0x838] sm:$0xff]
        %v515 = vld [vmem:[%s188 + $0x840] sm:$0xff]
        %v516 = vld [vmem:[%s188 + $0x848] sm:$0xff]
        %v517 = vld [vmem:[%s188 + $0x850] sm:$0xff]
        %v518 = vld [vmem:[%s188 + $0x858] sm:$0xff]
        %v519 = vld [vmem:[%s188 + $0x860] sm:$0xff]
        %v520 = vld [vmem:[%s188 + $0x868] sm:$0xff]
        %v521 = vld [vmem:[%s188 + $0x870] sm:$0xff]
        %v522 = vld [vmem:[%s188 + $0x878] sm:$0xff]
        %v523 = vld [vmem:[%s188 + $0x880] sm:$0xff]
        %v524 = vld [vmem:[%s188 + $0x888] sm:$0xff]
        %v525 = vld [vmem:[%s188 + $0x890] sm:$0xff]
        %v526 = vld [vmem:[%s188 + $0x898] sm:$0xff]
        %v527 = vld [vmem:[%s188 + $0x8a0] sm:$0xff]
        %v528 = vld [vmem:[%s188 + $0x8a8] sm:$0xff]
        %v529 = vld [vmem:[%s188 + $0x8b0] sm:$0xff]
        %v530 = vld [vmem:[%s188 + $0x8b8] sm:$0xff]
        %v531 = vld [vmem:[%s188 + $0x8c0] sm:$0xff]
        %v532 = vld [vmem:[%s188 + $0x8c8] sm:$0xff]
        %v533 = vld [vmem:[%s188 + $0x8d0] sm:$0xff]
        %v534 = vld [vmem:[%s188 + $0x8d8] sm:$0xff]
        %v535 = vld [vmem:[%s188 + $0x8e0] sm:$0xff]
        %v536 = vld [vmem:[%s188 + $0x8e8] sm:$0xff]
        %v537 = vld [vmem:[%s188 + $0x8f0] sm:$0xff]
        %v538 = vld [vmem:[%s188 + $0x8f8] sm:$0xff]
        %v539 = vld [vmem:[%s188 + $0x900] sm:$0xff]
        %v540 = vld [vmem:[%s188 + $0x908] sm:$0xff]
        %v541 = vld [vmem:[%s188 + $0x910] sm:$0xff]
        %v542 = vld [vmem:[%s188 + $0x918] sm:$0xff]
        %v543 = vld [vmem:[%s188 + $0x920] sm:$0xff]
        %v544 = vld [vmem:[%s188 + $0x928] sm:$0xff]
        %v545 = vld [vmem:[%s188 + $0x930] sm:$0xff]
        %v546 = vld [vmem:[%s188 + $0x938] sm:$0xff]
        %v547 = vld [vmem:[%s188 + $0x940] sm:$0xff]
        %v548 = vld [vmem:[%s188 + $0x948] sm:$0xff]
        %v549 = vld [vmem:[%s188 + $0x950] sm:$0xff]
        %v550 = vld [vmem:[%s188 + $0x958] sm:$0xff]
        %v551 = vld [vmem:[%s188 + $0x960] sm:$0xff]
        %v552 = vld [vmem:[%s188 + $0x968] sm:$0xff]
        %v553 = vld [vmem:[%s188 + $0x970] sm:$0xff]
        %v554 = vld [vmem:[%s188 + $0x978] sm:$0xff]
        %v555 = vld [vmem:[%s188 + $0x980] sm:$0xff]
        %v556 = vld [vmem:[%s188 + $0x988] sm:$0xff]
        %v557 = vld [vmem:[%s188 + $0x990] sm:$0xff]
        %v558 = vld [vmem:[%s188 + $0x998] sm:$0xff]
        %v559 = vld [vmem:[%s188 + $0x9a0] sm:$0xff]
        %v560 = vld [vmem:[%s188 + $0x9a8] sm:$0xff]
        %v561 = vld [vmem:[%s188 + $0x9b0] sm:$0xff]
        %v562 = vld [vmem:[%s188 + $0x9b8] sm:$0xff]
        %v563 = vld [vmem:[%s188 + $0x9c0] sm:$0xff]
        %v564 = vld [vmem:[%s188 + $0x9c8] sm:$0xff]
        %v565 = vld [vmem:[%s188 + $0x9d0] sm:$0xff]
        %v566 = vld [vmem:[%s188 + $0x9d8] sm:$0xff]
        %v567 = vld [vmem:[%s188 + $0x9e0] sm:$0xff]
        %v568 = vld [vmem:[%s188 + $0x9e8] sm:$0xff]
        %v569 = vld [vmem:[%s188 + $0x9f0] sm:$0xff]
        %v570 = vld [vmem:[%s188 + $0x9f8] sm:$0xff]
        %v571 = vld [vmem:[%s188 + $0xa00] sm:$0xff]
        %v572 = vld [vmem:[%s188 + $0xa08] sm:$0xff]
        %v573 = vld [vmem:[%s188 + $0xa10] sm:$0xff]
        %v574 = vld [vmem:[%s188 + $0xa18] sm:$0xff]
        %v575 = vld [vmem:[%s188 + $0xa20] sm:$0xff]
        %v576 = vld [vmem:[%s188 + $0xa28] sm:$0xff]
        %v577 = vld [vmem:[%s188 + $0xa30] sm:$0xff]
        %v578 = vld [vmem:[%s188 + $0xa38] sm:$0xff]
        %v579 = vld [vmem:[%s188 + $0xa40] sm:$0xff]
        %v580 = vld [vmem:[%s188 + $0xa48] sm:$0xff]
        %v581 = vld [vmem:[%s188 + $0xa50] sm:$0xff]
        %v582 = vld [vmem:[%s188 + $0xa58] sm:$0xff]
        %v583 = vld [vmem:[%s188 + $0xa60] sm:$0xff]
        %v584 = vld [vmem:[%s188 + $0xa68] sm:$0xff]
        %v585 = vld [vmem:[%s188 + $0xa70] sm:$0xff]
        %v586 = vld [vmem:[%s188 + $0xa78] sm:$0xff]
        %v587 = vld [vmem:[%s188 + $0xa80] sm:$0xff]
        %v588 = vld [vmem:[%s188 + $0xa88] sm:$0xff]
        %v589 = vld [vmem:[%s188 + $0xa90] sm:$0xff]
        %v590 = vld [vmem:[%s188 + $0xa98] sm:$0xff]
        %v591 = vld [vmem:[%s188 + $0xaa0] sm:$0xff]
        %v592 = vld [vmem:[%s188 + $0xaa8] sm:$0xff]
        %v593 = vld [vmem:[%s188 + $0xab0] sm:$0xff]
        %v594 = vld [vmem:[%s188 + $0xab8] sm:$0xff]
        %v595 = vld [vmem:[%s188 + $0xac0] sm:$0xff]
        %v596 = vld [vmem:[%s188 + $0xac8] sm:$0xff]
        %v597 = vld [vmem:[%s188 + $0xad0] sm:$0xff]
        %v598 = vld [vmem:[%s188 + $0xad8] sm:$0xff]
        %v599 = vld [vmem:[%s188 + $0xae0] sm:$0xff]
        %v600 = vld [vmem:[%s188 + $0xae8] sm:$0xff]
        %v601 = vld [vmem:[%s188 + $0xaf0] sm:$0xff]
        %v602 = vld [vmem:[%s188 + $0xaf8] sm:$0xff]
        %v603 = vld [vmem:[%s188 + $0xb00] sm:$0xff]
        %v604 = vld [vmem:[%s188 + $0xb08] sm:$0xff]
        %v605 = vld [vmem:[%s188 + $0xb10] sm:$0xff]
        %v606 = vld [vmem:[%s188 + $0xb18] sm:$0xff]
        %v607 = vld [vmem:[%s188 + $0xb20] sm:$0xff]
        %v608 = vld [vmem:[%s188 + $0xb28] sm:$0xff]
        %v609 = vld [vmem:[%s188 + $0xb30] sm:$0xff]
        %v610 = vld [vmem:[%s188 + $0xb38] sm:$0xff]
        %v611 = vld [vmem:[%s188 + $0xb40] sm:$0xff]
        %v612 = vld [vmem:[%s188 + $0xb48] sm:$0xff]
        %v613 = vld [vmem:[%s188 + $0xb50] sm:$0xff]
        %v614 = vld [vmem:[%s188 + $0xb58] sm:$0xff]
        %v615 = vld [vmem:[%s188 + $0xb60] sm:$0xff]
        %v616 = vld [vmem:[%s188 + $0xb68] sm:$0xff]
        %v617 = vld [vmem:[%s188 + $0xb70] sm:$0xff]
        %v618 = vld [vmem:[%s188 + $0xb78] sm:$0xff]
        %v619 = vld [vmem:[%s188 + $0xb80] sm:$0xff]
        %v620 = vld [vmem:[%s188 + $0xb88] sm:$0xff]
        %v621 = vld [vmem:[%s188 + $0xb90] sm:$0xff]
        %v622 = vld [vmem:[%s188 + $0xb98] sm:$0xff]
        %v623 = vld [vmem:[%s188 + $0xba0] sm:$0xff]
        %v624 = vld [vmem:[%s188 + $0xba8] sm:$0xff]
        %v625 = vld [vmem:[%s188 + $0xbb0] sm:$0xff]
        %v626 = vld [vmem:[%s188 + $0xbb8] sm:$0xff]
        %v627 = vld [vmem:[%s188 + $0xbc0] sm:$0xff]
        %v628 = vld [vmem:[%s188 + $0xbc8] sm:$0xff]
        %v629 = vld [vmem:[%s188 + $0xbd0] sm:$0xff]
        %v630 = vld [vmem:[%s188 + $0xbd8] sm:$0xff]
        %v631 = vld [vmem:[%s188 + $0xbe0] sm:$0xff]
        %v632 = vld [vmem:[%s188 + $0xbe8] sm:$0xff]
        %v633 = vld [vmem:[%s188 + $0xbf0] sm:$0xff]
        %v634 = vld [vmem:[%s188 + $0xbf8] sm:$0xff]
        %v635 = vld [vmem:[%s188 + $0xc00] sm:$0xff]
        %v636 = vld [vmem:[%s188 + $0xc08] sm:$0xff]
        %v637 = vld [vmem:[%s188 + $0xc10] sm:$0xff]
        %v638 = vld [vmem:[%s188 + $0xc18] sm:$0xff]
        %v639 = vld [vmem:[%s188 + $0xc20] sm:$0xff]
        %v640 = vld [vmem:[%s188 + $0xc28] sm:$0xff]
        %v641 = vld [vmem:[%s188 + $0xc30] sm:$0xff]
        %v642 = vld [vmem:[%s188 + $0xc38] sm:$0xff]
        %v643 = vld [vmem:[%s188 + $0xc40] sm:$0xff]
        %v644 = vld [vmem:[%s188 + $0xc48] sm:$0xff]
        %v645 = vld [vmem:[%s188 + $0xc50] sm:$0xff]
        %v646 = vld [vmem:[%s188 + $0xc58] sm:$0xff]
        %v647 = vld [vmem:[%s188 + $0xc60] sm:$0xff]
        %v648 = vld [vmem:[%s188 + $0xc68] sm:$0xff]
        %v649 = vld [vmem:[%s188 + $0xc70] sm:$0xff]
        %v650 = vld [vmem:[%s188 + $0xc78] sm:$0xff]
        %v651 = vld [vmem:[%s188 + $0xc80] sm:$0xff]
        %v652 = vld [vmem:[%s188 + $0xc88] sm:$0xff]
        %v653 = vld [vmem:[%s188 + $0xc90] sm:$0xff]
        %v654 = vld [vmem:[%s188 + $0xc98] sm:$0xff]
        %v655 = vld [vmem:[%s188 + $0xca0] sm:$0xff]
        %v656 = vld [vmem:[%s188 + $0xca8] sm:$0xff]
        %v657 = vld [vmem:[%s188 + $0xcb0] sm:$0xff]
        %v658 = vld [vmem:[%s188 + $0xcb8] sm:$0xff]
        %v659 = vld [vmem:[%s188 + $0xcc0] sm:$0xff]
        %v660 = vld [vmem:[%s188 + $0xcc8] sm:$0xff]
        %v661 = vld [vmem:[%s188 + $0xcd0] sm:$0xff]
        %v662 = vld [vmem:[%s188 + $0xcd8] sm:$0xff]
        %v663 = vld [vmem:[%s188 + $0xce0] sm:$0xff]
        %v664 = vld [vmem:[%s188 + $0xce8] sm:$0xff]
        %v665 = vld [vmem:[%s188 + $0xcf0] sm:$0xff]
        %v666 = vld [vmem:[%s188 + $0xcf8] sm:$0xff]
        %v667 = vld [vmem:[%s188 + $0xd00] sm:$0xff]
        %v668 = vld [vmem:[%s188 + $0xd08] sm:$0xff]
        %v669 = vld [vmem:[%s188 + $0xd10] sm:$0xff]
        %v670 = vld [vmem:[%s188 + $0xd18] sm:$0xff]
        %v671 = vld [vmem:[%s188 + $0xd20] sm:$0xff]
        %v672 = vld [vmem:[%s188 + $0xd28] sm:$0xff]
        %v673 = vld [vmem:[%s188 + $0xd30] sm:$0xff]
        %v674 = vld [vmem:[%s188 + $0xd38] sm:$0xff]
        %v675 = vld [vmem:[%s188 + $0xd40] sm:$0xff]
        %v676 = vld [vmem:[%s188 + $0xd48] sm:$0xff]
        %v677 = vld [vmem:[%s188 + $0xd50] sm:$0xff]
        %v678 = vld [vmem:[%s188 + $0xd58] sm:$0xff]
        %v679 = vld [vmem:[%s188 + $0xd60] sm:$0xff]
        %v680 = vld [vmem:[%s188 + $0xd68] sm:$0xff]
        %v681 = vld [vmem:[%s188 + $0xd70] sm:$0xff]
        %v682 = vld [vmem:[%s188 + $0xd78] sm:$0xff]
        %v683 = vld [vmem:[%s188 + $0xd80] sm:$0xff]
        %v684 = vld [vmem:[%s188 + $0xd88] sm:$0xff]
        %v685 = vld [vmem:[%s188 + $0xd90] sm:$0xff]
        %v686 = vld [vmem:[%s188 + $0xd98] sm:$0xff]
        %v687 = vld [vmem:[%s188 + $0xda0] sm:$0xff]
        %v688 = vld [vmem:[%s188 + $0xda8] sm:$0xff]
        %v689 = vld [vmem:[%s188 + $0xdb0] sm:$0xff]
        %v690 = vld [vmem:[%s188 + $0xdb8] sm:$0xff]
        %v691 = vld [vmem:[%s188 + $0xdc0] sm:$0xff]
        %v692 = vld [vmem:[%s188 + $0xdc8] sm:$0xff]
        %v693 = vld [vmem:[%s188 + $0xdd0] sm:$0xff]
        %v694 = vld [vmem:[%s188 + $0xdd8] sm:$0xff]
        %v695 = vld [vmem:[%s188 + $0xde0] sm:$0xff]
        %v696 = vld [vmem:[%s188 + $0xde8] sm:$0xff]
        %v697 = vld [vmem:[%s188 + $0xdf0] sm:$0xff]
        %v698 = vld [vmem:[%s188 + $0xdf8] sm:$0xff]
        %v699 = vld [vmem:[%s188 + $0xe00] sm:$0xff]
        %v700 = vld [vmem:[%s188 + $0xe08] sm:$0xff]
        %v701 = vld [vmem:[%s188 + $0xe10] sm:$0xff]
        %v702 = vld [vmem:[%s188 + $0xe18] sm:$0xff]
        %v703 = vld [vmem:[%s188 + $0xe20] sm:$0xff]
        %v704 = vld [vmem:[%s188 + $0xe28] sm:$0xff]
        %v705 = vld [vmem:[%s188 + $0xe30] sm:$0xff]
        %v706 = vld [vmem:[%s188 + $0xe38] sm:$0xff]
        %v707 = vld [vmem:[%s188 + $0xe40] sm:$0xff]
        %v708 = vld [vmem:[%s188 + $0xe48] sm:$0xff]
        %v709 = vld [vmem:[%s188 + $0xe50] sm:$0xff]
        %v710 = vld [vmem:[%s188 + $0xe58] sm:$0xff]
        %v711 = vld [vmem:[%s188 + $0xe60] sm:$0xff]
        %v712 = vld [vmem:[%s188 + $0xe68] sm:$0xff]
        %v713 = vld [vmem:[%s188 + $0xe70] sm:$0xff]
        %v714 = vld [vmem:[%s188 + $0xe78] sm:$0xff]
        %v715 = vld [vmem:[%s188 + $0xe80] sm:$0xff]
        %v716 = vld [vmem:[%s188 + $0xe88] sm:$0xff]
        %v717 = vld [vmem:[%s188 + $0xe90] sm:$0xff]
        %v718 = vld [vmem:[%s188 + $0xe98] sm:$0xff]
        %v719 = vld [vmem:[%s188 + $0xea0] sm:$0xff]
        %v720 = vld [vmem:[%s188 + $0xea8] sm:$0xff]
        %v721 = vld [vmem:[%s188 + $0xeb0] sm:$0xff]
        %v722 = vld [vmem:[%s188 + $0xeb8] sm:$0xff]
        %v723 = vld [vmem:[%s188 + $0xec0] sm:$0xff]
        %v724 = vld [vmem:[%s188 + $0xec8] sm:$0xff]
        %v725 = vld [vmem:[%s188 + $0xed0] sm:$0xff]
        %v726 = vld [vmem:[%s188 + $0xed8] sm:$0xff]
        %v727 = vld [vmem:[%s188 + $0xee0] sm:$0xff]
        %v728 = vld [vmem:[%s188 + $0xee8] sm:$0xff]
        %v729 = vld [vmem:[%s188 + $0xef0] sm:$0xff]
        %v730 = vld [vmem:[%s188 + $0xef8] sm:$0xff]
        %v731 = vld [vmem:[%s188 + $0xf00] sm:$0xff]
        %v732 = vld [vmem:[%s188 + $0xf08] sm:$0xff]
        %v733 = vld [vmem:[%s188 + $0xf10] sm:$0xff]
        %v734 = vld [vmem:[%s188 + $0xf18] sm:$0xff]
        %v735 = vld [vmem:[%s188 + $0xf20] sm:$0xff]
        %v736 = vld [vmem:[%s188 + $0xf28] sm:$0xff]
        %v737 = vld [vmem:[%s188 + $0xf30] sm:$0xff]
        %v738 = vld [vmem:[%s188 + $0xf38] sm:$0xff]
        %v739 = vld [vmem:[%s188 + $0xf40] sm:$0xff]
        %v740 = vld [vmem:[%s188 + $0xf48] sm:$0xff]
        %v741 = vld [vmem:[%s188 + $0xf50] sm:$0xff]
        %v742 = vld [vmem:[%s188 + $0xf58] sm:$0xff]
        %v743 = vld [vmem:[%s188 + $0xf60] sm:$0xff]
        %v744 = vld [vmem:[%s188 + $0xf68] sm:$0xff]
        %v745 = vld [vmem:[%s188 + $0xf70] sm:$0xff]
        %v746 = vld [vmem:[%s188 + $0xf78] sm:$0xff]
        %v747 = vld [vmem:[%s188 + $0xf80] sm:$0xff]
        %v748 = vld [vmem:[%s188 + $0xf88] sm:$0xff]
        %v749 = vld [vmem:[%s188 + $0xf90] sm:$0xff]
        %v750 = vld [vmem:[%s188 + $0xf98] sm:$0xff]
        %v751 = vld [vmem:[%s188 + $0xfa0] sm:$0xff]
        %v752 = vld [vmem:[%s188 + $0xfa8] sm:$0xff]
        %v753 = vld [vmem:[%s188 + $0xfb0] sm:$0xff]
        %v754 = vld [vmem:[%s188 + $0xfb8] sm:$0xff]
        %v755 = vld [vmem:[%s188 + $0xfc0] sm:$0xff]
        %v756 = vld [vmem:[%s188 + $0xfc8] sm:$0xff]
        %v757 = vld [vmem:[%s188 + $0xfd0] sm:$0xff]
        %v758 = vld [vmem:[%s188 + $0xfd8] sm:$0xff]
        %v759 = vld [vmem:[%s188 + $0xfe0] sm:$0xff]
        %v760 = vld [vmem:[%s188 + $0xfe8] sm:$0xff]
        %v761 = vld [vmem:[%s188 + $0xff0] sm:$0xff]
        %v762 = vld [vmem:[%s188 + $0xff8] sm:$0xff]
        %v763 = vld [vmem:[%s188 + $0x1000] sm:$0xff]
        %v764 = vld [vmem:[%s188 + $0x1008] sm:$0xff]
        %v765 = vld [vmem:[%s188 + $0x1010] sm:$0xff]
        %v766 = vld [vmem:[%s188 + $0x1018] sm:$0xff]
        %v767 = vld [vmem:[%s188 + $0x1020] sm:$0xff]
        %v768 = vld [vmem:[%s188 + $0x1028] sm:$0xff]
        %v769 = vld [vmem:[%s188 + $0x1030] sm:$0xff]
        %v770 = vld [vmem:[%s188 + $0x1038] sm:$0xff]
        %v771 = vld [vmem:[%s188 + $0x1040] sm:$0xff]
        %v772 = vld [vmem:[%s188 + $0x1048] sm:$0xff]
        %v773 = vld [vmem:[%s188 + $0x1050] sm:$0xff]
        %v774 = vld [vmem:[%s188 + $0x1058] sm:$0xff]
        %v775 = vld [vmem:[%s188 + $0x1060] sm:$0xff]
        %v776 = vld [vmem:[%s188 + $0x1068] sm:$0xff]
        %v777 = vld [vmem:[%s188 + $0x1070] sm:$0xff]
        %v778 = vld [vmem:[%s188 + $0x1078] sm:$0xff]
        %v779 = vld [vmem:[%s188 + $0x1080] sm:$0xff]
        %v780 = vld [vmem:[%s188 + $0x1088] sm:$0xff]
        %v781 = vld [vmem:[%s188 + $0x1090] sm:$0xff]
        %v782 = vld [vmem:[%s188 + $0x1098] sm:$0xff]
        %v783 = vld [vmem:[%s188 + $0x10a0] sm:$0xff]
        %v784 = vld [vmem:[%s188 + $0x10a8] sm:$0xff]
        %v785 = vld [vmem:[%s188 + $0x10b0] sm:$0xff]
        %v786 = vld [vmem:[%s188 + $0x10b8] sm:$0xff]
        %v787 = vld [vmem:[%s188 + $0x10c0] sm:$0xff]
        %v788 = vld [vmem:[%s188 + $0x10c8] sm:$0xff]
        %v789 = vld [vmem:[%s188 + $0x10d0] sm:$0xff]
        %v790 = vld [vmem:[%s188 + $0x10d8] sm:$0xff]
        %v791 = vld [vmem:[%s188 + $0x10e0] sm:$0xff]
        %v792 = vld [vmem:[%s188 + $0x10e8] sm:$0xff]
        %v793 = vld [vmem:[%s188 + $0x10f0] sm:$0xff]
        %v794 = vld [vmem:[%s188 + $0x10f8] sm:$0xff]
        %v795 = vld [vmem:[%s188 + $0x1100] sm:$0xff]
        %v796 = vld [vmem:[%s188 + $0x1108] sm:$0xff]
        %v797 = vld [vmem:[%s188 + $0x1110] sm:$0xff]
        %v798 = vld [vmem:[%s188 + $0x1118] sm:$0xff]
        %v799 = vld [vmem:[%s188 + $0x1120] sm:$0xff]
        %v800 = vld [vmem:[%s188 + $0x1128] sm:$0xff]
        %v801 = vld [vmem:[%s188 + $0x1130] sm:$0xff]
        %v802 = vld [vmem:[%s188 + $0x1138] sm:$0xff]
        %v803 = vld [vmem:[%s188 + $0x1140] sm:$0xff]
        %v804 = vld [vmem:[%s188 + $0x1148] sm:$0xff]
        %v805 = vld [vmem:[%s188 + $0x1150] sm:$0xff]
        %v806 = vld [vmem:[%s188 + $0x1158] sm:$0xff]
        %v807 = vld [vmem:[%s188 + $0x1160] sm:$0xff]
        %v808 = vld [vmem:[%s188 + $0x1168] sm:$0xff]
        %v809 = vld [vmem:[%s188 + $0x1170] sm:$0xff]
        %v810 = vld [vmem:[%s188 + $0x1178] sm:$0xff]
        %v811 = vld [vmem:[%s188 + $0x1180] sm:$0xff]
        %v812 = vld [vmem:[%s188 + $0x1188] sm:$0xff]
        %v813 = vld [vmem:[%s188 + $0x1190] sm:$0xff]
        %v814 = vld [vmem:[%s188 + $0x1198] sm:$0xff]
        %v815 = vld [vmem:[%s188 + $0x11a0] sm:$0xff]
        %v816 = vld [vmem:[%s188 + $0x11a8] sm:$0xff]
        %v817 = vld [vmem:[%s188 + $0x11b0] sm:$0xff]
        %v818 = vld [vmem:[%s188 + $0x11b8] sm:$0xff]
        %v819 = vld [vmem:[%s188 + $0x11c0] sm:$0xff]
        %v820 = vld [vmem:[%s188 + $0x11c8] sm:$0xff]
        %v821 = vld [vmem:[%s188 + $0x11d0] sm:$0xff]
        %v822 = vld [vmem:[%s188 + $0x11d8] sm:$0xff]
        %v823 = vld [vmem:[%s188 + $0x11e0] sm:$0xff]
        %v824 = vld [vmem:[%s188 + $0x11e8] sm:$0xff]
        %v825 = vld [vmem:[%s188 + $0x11f0] sm:$0xff]
        %v826 = vld [vmem:[%s188 + $0x11f8] sm:$0xff]
        %v827 = vld [vmem:[%s188 + $0x1200] sm:$0xff]
        %v828 = vld [vmem:[%s188 + $0x1208] sm:$0xff]
        %v829 = vld [vmem:[%s188 + $0x1210] sm:$0xff]
        %v830 = vld [vmem:[%s188 + $0x1218] sm:$0xff]
        %v831 = vld [vmem:[%s188 + $0x1220] sm:$0xff]
        %v832 = vld [vmem:[%s188 + $0x1228] sm:$0xff]
        %v833 = vld [vmem:[%s188 + $0x1230] sm:$0xff]
        %v834 = vld [vmem:[%s188 + $0x1238] sm:$0xff]
        %v835 = vld [vmem:[%s188 + $0x1240] sm:$0xff]
        %v836 = vld [vmem:[%s188 + $0x1248] sm:$0xff]
        %v837 = vld [vmem:[%s188 + $0x1250] sm:$0xff]
        %v838 = vld [vmem:[%s188 + $0x1258] sm:$0xff]
        %v839 = vld [vmem:[%s188 + $0x1260] sm:$0xff]
        %v840 = vld [vmem:[%s188 + $0x1268] sm:$0xff]
        %v841 = vld [vmem:[%s188 + $0x1270] sm:$0xff]
        %v842 = vld [vmem:[%s188 + $0x1278] sm:$0xff]
        %v843 = vld [vmem:[%s188 + $0x1280] sm:$0xff]
        %v844 = vld [vmem:[%s188 + $0x1288] sm:$0xff]
        %v845 = vld [vmem:[%s188 + $0x1290] sm:$0xff]
        %v846 = vld [vmem:[%s188 + $0x1298] sm:$0xff]
        %v847 = vld [vmem:[%s188 + $0x12a0] sm:$0xff]
        %v848 = vld [vmem:[%s188 + $0x12a8] sm:$0xff]
        %v849 = vld [vmem:[%s188 + $0x12b0] sm:$0xff]
        %v850 = vld [vmem:[%s188 + $0x12b8] sm:$0xff]
        %v851 = vld [vmem:[%s188 + $0x12c0] sm:$0xff]
        %v852 = vld [vmem:[%s188 + $0x12c8] sm:$0xff]
        %v853 = vld [vmem:[%s188 + $0x12d0] sm:$0xff]
        %v854 = vld [vmem:[%s188 + $0x12d8] sm:$0xff]
        %v855 = vld [vmem:[%s188 + $0x12e0] sm:$0xff]
        %v856 = vld [vmem:[%s188 + $0x12e8] sm:$0xff]
        %v857 = vld [vmem:[%s188 + $0x12f0] sm:$0xff]
        %v858 = vld [vmem:[%s188 + $0x12f8] sm:$0xff]
        %v859 = vld [vmem:[%s188 + $0x1300] sm:$0xff]
        %v860 = vld [vmem:[%s188 + $0x1308] sm:$0xff]
        %v861 = vld [vmem:[%s188 + $0x1310] sm:$0xff]
        %v862 = vld [vmem:[%s188 + $0x1318] sm:$0xff]
        %v863 = vld [vmem:[%s188 + $0x1320] sm:$0xff]
        %v864 = vld [vmem:[%s188 + $0x1328] sm:$0xff]
        %v865 = vld [vmem:[%s188 + $0x1330] sm:$0xff]
        %v866 = vld [vmem:[%s188 + $0x1338] sm:$0xff]
        %v867 = vld [vmem:[%s188 + $0x1340] sm:$0xff]
        %v868 = vld [vmem:[%s188 + $0x1348] sm:$0xff]
        %v869 = vld [vmem:[%s188 + $0x1350] sm:$0xff]
        %v870 = vld [vmem:[%s188 + $0x1358] sm:$0xff]
        %v871 = vld [vmem:[%s188 + $0x1360] sm:$0xff]
        %v872 = vld [vmem:[%s188 + $0x1368] sm:$0xff]
        %v873 = vld [vmem:[%s188 + $0x1370] sm:$0xff]
        %v874 = vld [vmem:[%s188 + $0x1378] sm:$0xff]
        %v875 = vld [vmem:[%s188 + $0x1380] sm:$0xff]
        %v876 = vld [vmem:[%s188 + $0x1388] sm:$0xff]
        %v877 = vld [vmem:[%s188 + $0x1390] sm:$0xff]
        %v878 = vld [vmem:[%s188 + $0x1398] sm:$0xff]
        %v879 = vld [vmem:[%s188 + $0x13a0] sm:$0xff]
        %v880 = vld [vmem:[%s188 + $0x13a8] sm:$0xff]
        %v881 = vld [vmem:[%s188 + $0x13b0] sm:$0xff]
        %v882 = vld [vmem:[%s188 + $0x13b8] sm:$0xff]
        %v883 = vld [vmem:[%s188 + $0x13c0] sm:$0xff]
        %v884 = vld [vmem:[%s188 + $0x13c8] sm:$0xff]
        %v885 = vld [vmem:[%s188 + $0x13d0] sm:$0xff]
        %v886 = vld [vmem:[%s188 + $0x13d8] sm:$0xff]
        %v887 = vld [vmem:[%s188 + $0x13e0] sm:$0xff]
        %v888 = vld [vmem:[%s188 + $0x13e8] sm:$0xff]
        %v889 = vld [vmem:[%s188 + $0x13f0] sm:$0xff]
        %v890 = vld [vmem:[%s188 + $0x13f8] sm:$0xff]
        %v891 = vld [vmem:[%s188 + $0x1400] sm:$0xff]
        %v892 = vld [vmem:[%s188 + $0x1408] sm:$0xff]
        %v893 = vld [vmem:[%s188 + $0x1410] sm:$0xff]
        %v894 = vld [vmem:[%s188 + $0x1418] sm:$0xff]
        %v895 = vld [vmem:[%s188 + $0x1420] sm:$0xff]
        %v896 = vld [vmem:[%s188 + $0x1428] sm:$0xff]
        %v897 = vld [vmem:[%s188 + $0x1430] sm:$0xff]
        %v898 = vld [vmem:[%s188 + $0x1438] sm:$0xff]
        %v899 = vld [vmem:[%s188 + $0x1440] sm:$0xff]
        %v900 = vld [vmem:[%s188 + $0x1448] sm:$0xff]
        %v901 = vld [vmem:[%s188 + $0x1450] sm:$0xff]
        %v902 = vld [vmem:[%s188 + $0x1458] sm:$0xff]
        %v903 = vld [vmem:[%s188 + $0x1460] sm:$0xff]
        %v904 = vld [vmem:[%s188 + $0x1468] sm:$0xff]
        %v905 = vld [vmem:[%s188 + $0x1470] sm:$0xff]
        %v906 = vld [vmem:[%s188 + $0x1478] sm:$0xff]
        %v907 = vld [vmem:[%s188 + $0x1480] sm:$0xff]
        %v908 = vld [vmem:[%s188 + $0x1488] sm:$0xff]
        %v909 = vld [vmem:[%s188 + $0x1490] sm:$0xff]
        %v910 = vld [vmem:[%s188 + $0x1498] sm:$0xff]
        %v911 = vld [vmem:[%s188 + $0x14a0] sm:$0xff]
        %v912 = vld [vmem:[%s188 + $0x14a8] sm:$0xff]
        %v913 = vld [vmem:[%s188 + $0x14b0] sm:$0xff]
        %v914 = vld [vmem:[%s188 + $0x14b8] sm:$0xff]
        %v915 = vld [vmem:[%s188 + $0x14c0] sm:$0xff]
        %v916 = vld [vmem:[%s188 + $0x14c8] sm:$0xff]
        %v917 = vld [vmem:[%s188 + $0x14d0] sm:$0xff]
        %v918 = vld [vmem:[%s188 + $0x14d8] sm:$0xff]
        %v919 = vld [vmem:[%s188 + $0x14e0] sm:$0xff]
        %v920 = vld [vmem:[%s188 + $0x14e8] sm:$0xff]
        %v921 = vld [vmem:[%s188 + $0x14f0] sm:$0xff]
        %v922 = vld [vmem:[%s188 + $0x14f8] sm:$0xff]
        %v923 = vld [vmem:[%s188 + $0x1500] sm:$0xff]
        %v924 = vld [vmem:[%s188 + $0x1508] sm:$0xff]
        %v925 = vld [vmem:[%s188 + $0x1510] sm:$0xff]
        %v926 = vld [vmem:[%s188 + $0x1518] sm:$0xff]
        %v927 = vld [vmem:[%s188 + $0x1520] sm:$0xff]
        %v928 = vld [vmem:[%s188 + $0x1528] sm:$0xff]
        %v929 = vld [vmem:[%s188 + $0x1530] sm:$0xff]
        %v930 = vld [vmem:[%s188 + $0x1538] sm:$0xff]
        %v931 = vld [vmem:[%s188 + $0x1540] sm:$0xff]
        %v932 = vld [vmem:[%s188 + $0x1548] sm:$0xff]
        %v933 = vld [vmem:[%s188 + $0x1550] sm:$0xff]
        %v934 = vld [vmem:[%s188 + $0x1558] sm:$0xff]
        %v935 = vld [vmem:[%s188 + $0x1560] sm:$0xff]
        %v936 = vld [vmem:[%s188 + $0x1568] sm:$0xff]
        %v937 = vld [vmem:[%s188 + $0x1570] sm:$0xff]
        %v938 = vld [vmem:[%s188 + $0x1578] sm:$0xff]
        %v939 = vld [vmem:[%s188 + $0x1580] sm:$0xff]
        %v940 = vld [vmem:[%s188 + $0x1588] sm:$0xff]
        %v941 = vld [vmem:[%s188 + $0x1590] sm:$0xff]
        %v942 = vld [vmem:[%s188 + $0x1598] sm:$0xff]
        %v943 = vld [vmem:[%s188 + $0x15a0] sm:$0xff]
        %v944 = vld [vmem:[%s188 + $0x15a8] sm:$0xff]
        %v945 = vld [vmem:[%s188 + $0x15b0] sm:$0xff]
        %v946 = vld [vmem:[%s188 + $0x15b8] sm:$0xff]
        %v947 = vld [vmem:[%s188 + $0x15c0] sm:$0xff]
        %v948 = vld [vmem:[%s188 + $0x15c8] sm:$0xff]
        %v949 = vld [vmem:[%s188 + $0x15d0] sm:$0xff]
        %v950 = vld [vmem:[%s188 + $0x15d8] sm:$0xff]
        %v951 = vld [vmem:[%s188 + $0x15e0] sm:$0xff]
        %v952 = vld [vmem:[%s188 + $0x15e8] sm:$0xff]
        %v953 = vld [vmem:[%s188 + $0x15f0] sm:$0xff]
        %v954 = vld [vmem:[%s188 + $0x15f8] sm:$0xff]
        %v955 = vld [vmem:[%s188 + $0x1600] sm:$0xff]
        %v956 = vld [vmem:[%s188 + $0x1608] sm:$0xff]
        %v957 = vld [vmem:[%s188 + $0x1610] sm:$0xff]
        %v958 = vld [vmem:[%s188 + $0x1618] sm:$0xff]
        %v959 = vld [vmem:[%s188 + $0x1620] sm:$0xff]
        %v960 = vld [vmem:[%s188 + $0x1628] sm:$0xff]
        %v961 = vld [vmem:[%s188 + $0x1630] sm:$0xff]
        %v962 = vld [vmem:[%s188 + $0x1638] sm:$0xff]
        %v963 = vld [vmem:[%s188 + $0x1640] sm:$0xff]
        %v964 = vld [vmem:[%s188 + $0x1648] sm:$0xff]
        %v965 = vld [vmem:[%s188 + $0x1650] sm:$0xff]
        %v966 = vld [vmem:[%s188 + $0x1658] sm:$0xff]
        %v967 = vld [vmem:[%s188 + $0x1660] sm:$0xff]
        %v968 = vld [vmem:[%s188 + $0x1668] sm:$0xff]
        %v969 = vld [vmem:[%s188 + $0x1670] sm:$0xff]
        %v970 = vld [vmem:[%s188 + $0x1678] sm:$0xff]
        %v971 = vld [vmem:[%s188 + $0x1680] sm:$0xff]
        %v972 = vld [vmem:[%s188 + $0x1688] sm:$0xff]
        %v973 = vld [vmem:[%s188 + $0x1690] sm:$0xff]
        %v974 = vld [vmem:[%s188 + $0x1698] sm:$0xff]
        %v975 = vld [vmem:[%s188 + $0x16a0] sm:$0xff]
        %v976 = vld [vmem:[%s188 + $0x16a8] sm:$0xff]
        %v977 = vld [vmem:[%s188 + $0x16b0] sm:$0xff]
        %v978 = vld [vmem:[%s188 + $0x16b8] sm:$0xff]
        %v979 = vld [vmem:[%s188 + $0x16c0] sm:$0xff]
        %v980 = vld [vmem:[%s188 + $0x16c8] sm:$0xff]
        %v981 = vld [vmem:[%s188 + $0x16d0] sm:$0xff]
        %v982 = vld [vmem:[%s188 + $0x16d8] sm:$0xff]
        %v983 = vld [vmem:[%s188 + $0x16e0] sm:$0xff]
        %v984 = vld [vmem:[%s188 + $0x16e8] sm:$0xff]
        %v985 = vld [vmem:[%s188 + $0x16f0] sm:$0xff]
        %v986 = vld [vmem:[%s188 + $0x16f8] sm:$0xff]
        %v987 = vld [vmem:[%s188 + $0x1700] sm:$0xff]
        %v988 = vld [vmem:[%s188 + $0x1708] sm:$0xff]
        %v989 = vld [vmem:[%s188 + $0x1710] sm:$0xff]
        %v990 = vld [vmem:[%s188 + $0x1718] sm:$0xff]
        %v991 = vld [vmem:[%s188 + $0x1720] sm:$0xff]
        %v992 = vld [vmem:[%s188 + $0x1728] sm:$0xff]
        %v993 = vld [vmem:[%s188 + $0x1730] sm:$0xff]
        %v994 = vld [vmem:[%s188 + $0x1738] sm:$0xff]
        %v995 = vld [vmem:[%s188 + $0x1740] sm:$0xff]
        %v996 = vld [vmem:[%s188 + $0x1748] sm:$0xff]
        %v997 = vld [vmem:[%s188 + $0x1750] sm:$0xff]
        %v998 = vld [vmem:[%s188 + $0x1758] sm:$0xff]
        %v999 = vld [vmem:[%s188 + $0x1760] sm:$0xff]
        %v1000 = vld [vmem:[%s188 + $0x1768] sm:$0xff]
        %v1001 = vld [vmem:[%s188 + $0x1770] sm:$0xff]
        %v1002 = vld [vmem:[%s188 + $0x1778] sm:$0xff]
        %v1003 = vld [vmem:[%s188 + $0x1780] sm:$0xff]
        %v1004 = vld [vmem:[%s188 + $0x1788] sm:$0xff]
        %v1005 = vld [vmem:[%s188 + $0x1790] sm:$0xff]
        %v1006 = vld [vmem:[%s188 + $0x1798] sm:$0xff]
        %v1007 = vld [vmem:[%s188 + $0x17a0] sm:$0xff]
        %v1008 = vld [vmem:[%s188 + $0x17a8] sm:$0xff]
        %v1009 = vld [vmem:[%s188 + $0x17b0] sm:$0xff]
        %v1010 = vld [vmem:[%s188 + $0x17b8] sm:$0xff]
        %v1011 = vld [vmem:[%s188 + $0x17c0] sm:$0xff]
        %v1012 = vld [vmem:[%s188 + $0x17c8] sm:$0xff]
        %v1013 = vld [vmem:[%s188 + $0x17d0] sm:$0xff]
        %v1014 = vld [vmem:[%s188 + $0x17d8] sm:$0xff]
        %v1015 = vld [vmem:[%s188 + $0x17e0] sm:$0xff]
        %v1016 = vld [vmem:[%s188 + $0x17e8] sm:$0xff]
        %v1017 = vld [vmem:[%s188 + $0x17f0] sm:$0xff]
        %v1018 = vld [vmem:[%s188 + $0x17f8] sm:$0xff]
        %v1019 = vld [vmem:[%s188 + $0x1800] sm:$0xff]
        %v1020 = vld [vmem:[%s188 + $0x1808] sm:$0xff]
        %v1021 = vld [vmem:[%s188 + $0x1810] sm:$0xff]
        %v1022 = vld [vmem:[%s188 + $0x1818] sm:$0xff]
        %v1023 = vld [vmem:[%s188 + $0x1820] sm:$0xff]
        %v1024 = vld [vmem:[%s188 + $0x1828] sm:$0xff]
        %v1025 = vld [vmem:[%s188 + $0x1830] sm:$0xff]
        %v1026 = vld [vmem:[%s188 + $0x1838] sm:$0xff]
        %v1027 = vld [vmem:[%s188 + $0x1840] sm:$0xff]
        %v1028 = vld [vmem:[%s188 + $0x1848] sm:$0xff]
        %v1029 = vld [vmem:[%s188 + $0x1850] sm:$0xff]
        %v1030 = vld [vmem:[%s188 + $0x1858] sm:$0xff]
        %v1031 = vld [vmem:[%s188 + $0x1860] sm:$0xff]
        %v1032 = vld [vmem:[%s188 + $0x1868] sm:$0xff]
        %v1033 = vld [vmem:[%s188 + $0x1870] sm:$0xff]
        %v1034 = vld [vmem:[%s188 + $0x1878] sm:$0xff]
        %v1035 = vld [vmem:[%s188 + $0x1880] sm:$0xff]
        %v1036 = vld [vmem:[%s188 + $0x1888] sm:$0xff]
        %v1037 = vld [vmem:[%s188 + $0x1890] sm:$0xff]
        %v1038 = vld [vmem:[%s188 + $0x1898] sm:$0xff]
        %v1039 = vld [vmem:[%s188 + $0x18a0] sm:$0xff]
        %v1040 = vld [vmem:[%s188 + $0x18a8] sm:$0xff]
        %v1041 = vld [vmem:[%s188 + $0x18b0] sm:$0xff]
        %v1042 = vld [vmem:[%s188 + $0x18b8] sm:$0xff]
        %v1043 = vld [vmem:[%s188 + $0x18c0] sm:$0xff]
        %v1044 = vld [vmem:[%s188 + $0x18c8] sm:$0xff]
        %v1045 = vld [vmem:[%s188 + $0x18d0] sm:$0xff]
        %v1046 = vld [vmem:[%s188 + $0x18d8] sm:$0xff]
        %v1047 = vld [vmem:[%s188 + $0x18e0] sm:$0xff]
        %v1048 = vld [vmem:[%s188 + $0x18e8] sm:$0xff]
        %v1049 = vld [vmem:[%s188 + $0x18f0] sm:$0xff]
        %v1050 = vld [vmem:[%s188 + $0x18f8] sm:$0xff]
        %v1051 = vld [vmem:[%s188 + $0x1900] sm:$0xff]
        %v1052 = vld [vmem:[%s188 + $0x1908] sm:$0xff]
        %v1053 = vld [vmem:[%s188 + $0x1910] sm:$0xff]
        %v1054 = vld [vmem:[%s188 + $0x1918] sm:$0xff]
        %v1055 = vld [vmem:[%s188 + $0x1920] sm:$0xff]
        %v1056 = vld [vmem:[%s188 + $0x1928] sm:$0xff]
        %v1057 = vld [vmem:[%s188 + $0x1930] sm:$0xff]
        %v1058 = vld [vmem:[%s188 + $0x1938] sm:$0xff]
        %v1059 = vld [vmem:[%s188 + $0x1940] sm:$0xff]
        %v1060 = vld [vmem:[%s188 + $0x1948] sm:$0xff]
        %v1061 = vld [vmem:[%s188 + $0x1950] sm:$0xff]
        %v1062 = vld [vmem:[%s188 + $0x1958] sm:$0xff]
        %v1063 = vld [vmem:[%s188 + $0x1960] sm:$0xff]
        %v1064 = vld [vmem:[%s188 + $0x1968] sm:$0xff]
        %v1065 = vld [vmem:[%s188 + $0x1970] sm:$0xff]
        %v1066 = vld [vmem:[%s188 + $0x1978] sm:$0xff]
        %v1067 = vld [vmem:[%s188 + $0x1980] sm:$0xff]
        %v1068 = vld [vmem:[%s188 + $0x1988] sm:$0xff]
        %v1069 = vld [vmem:[%s188 + $0x1990] sm:$0xff]
        %v1070 = vld [vmem:[%s188 + $0x1998] sm:$0xff]
        %v1071 = vld [vmem:[%s188 + $0x19a0] sm:$0xff]
        %v1072 = vld [vmem:[%s188 + $0x19a8] sm:$0xff]
        %v1073 = vld [vmem:[%s188 + $0x19b0] sm:$0xff]
        %v1074 = vld [vmem:[%s188 + $0x19b8] sm:$0xff]
        %v1075 = vld [vmem:[%s188 + $0x19c0] sm:$0xff]
        %v1076 = vld [vmem:[%s188 + $0x19c8] sm:$0xff]
        %v1077 = vld [vmem:[%s188 + $0x19d0] sm:$0xff]
        %v1078 = vld [vmem:[%s188 + $0x19d8] sm:$0xff]
        %v1079 = vld [vmem:[%s188 + $0x19e0] sm:$0xff]
        %v1080 = vld [vmem:[%s188 + $0x19e8] sm:$0xff]
        %v1081 = vld [vmem:[%s188 + $0x19f0] sm:$0xff]
        %v1082 = vld [vmem:[%s188 + $0x19f8] sm:$0xff]
        %v1083 = vld [vmem:[%s188 + $0x1a00] sm:$0xff]
        %v1084 = vld [vmem:[%s188 + $0x1a08] sm:$0xff]
        %v1085 = vld [vmem:[%s188 + $0x1a10] sm:$0xff]
        %v1086 = vld [vmem:[%s188 + $0x1a18] sm:$0xff]
        %v1087 = vld [vmem:[%s188 + $0x1a20] sm:$0xff]
        %v1088 = vld [vmem:[%s188 + $0x1a28] sm:$0xff]
        %v1089 = vld [vmem:[%s188 + $0x1a30] sm:$0xff]
        %v1090 = vld [vmem:[%s188 + $0x1a38] sm:$0xff]
        %v1091 = vld [vmem:[%s188 + $0x1a40] sm:$0xff]
        %v1092 = vld [vmem:[%s188 + $0x1a48] sm:$0xff]
        %v1093 = vld [vmem:[%s188 + $0x1a50] sm:$0xff]
        %v1094 = vld [vmem:[%s188 + $0x1a58] sm:$0xff]
        %v1095 = vld [vmem:[%s188 + $0x1a60] sm:$0xff]
        %v1096 = vld [vmem:[%s188 + $0x1a68] sm:$0xff]
        %v1097 = vld [vmem:[%s188 + $0x1a70] sm:$0xff]
        %v1098 = vld [vmem:[%s188 + $0x1a78] sm:$0xff]
        %v1099 = vld [vmem:[%s188 + $0x1a80] sm:$0xff]
        %v1100 = vld [vmem:[%s188 + $0x1a88] sm:$0xff]
        %v1101 = vld [vmem:[%s188 + $0x1a90] sm:$0xff]
        %v1102 = vld [vmem:[%s188 + $0x1a98] sm:$0xff]
        %v1103 = vld [vmem:[%s188 + $0x1aa0] sm:$0xff]
        %v1104 = vld [vmem:[%s188 + $0x1aa8] sm:$0xff]
        %v1105 = vld [vmem:[%s188 + $0x1ab0] sm:$0xff]
        %v1106 = vld [vmem:[%s188 + $0x1ab8] sm:$0xff]
        %v1107 = vld [vmem:[%s188 + $0x1ac0] sm:$0xff]
        %v1108 = vld [vmem:[%s188 + $0x1ac8] sm:$0xff]
        %v1109 = vld [vmem:[%s188 + $0x1ad0] sm:$0xff]
        %v1110 = vld [vmem:[%s188 + $0x1ad8] sm:$0xff]
        %v1111 = vld [vmem:[%s188 + $0x1ae0] sm:$0xff]
        %v1112 = vld [vmem:[%s188 + $0x1ae8] sm:$0xff]
        %v1113 = vld [vmem:[%s188 + $0x1af0] sm:$0xff]
        %v1114 = vld [vmem:[%s188 + $0x1af8] sm:$0xff]
        %v1115 = vld [vmem:[%s188 + $0x1b00] sm:$0xff]
        %v1116 = vld [vmem:[%s188 + $0x1b08] sm:$0xff]
        %v1117 = vld [vmem:[%s188 + $0x1b10] sm:$0xff]
        %v1118 = vld [vmem:[%s188 + $0x1b18] sm:$0xff]
        %v1119 = vld [vmem:[%s188 + $0x1b20] sm:$0xff]
        %v1120 = vld [vmem:[%s188 + $0x1b28] sm:$0xff]
        %v1121 = vld [vmem:[%s188 + $0x1b30] sm:$0xff]
        %v1122 = vld [vmem:[%s188 + $0x1b38] sm:$0xff]
        %v1123 = vld [vmem:[%s188 + $0x1b40] sm:$0xff]
        %v1124 = vld [vmem:[%s188 + $0x1b48] sm:$0xff]
        %v1125 = vld [vmem:[%s188 + $0x1b50] sm:$0xff]
        %v1126 = vld [vmem:[%s188 + $0x1b58] sm:$0xff]
        %v1127 = vld [vmem:[%s188 + $0x1b60] sm:$0xff]
        %v1128 = vld [vmem:[%s188 + $0x1b68] sm:$0xff]
        %v1129 = vld [vmem:[%s188 + $0x1b70] sm:$0xff]
        %v1130 = vld [vmem:[%s188 + $0x1b78] sm:$0xff]
        %v1131 = vld [vmem:[%s188 + $0x1b80] sm:$0xff]
        %v1132 = vld [vmem:[%s188 + $0x1b88] sm:$0xff]
        %v1133 = vld [vmem:[%s188 + $0x1b90] sm:$0xff]
        %v1134 = vld [vmem:[%s188 + $0x1b98] sm:$0xff]
        %v1135 = vld [vmem:[%s188 + $0x1ba0] sm:$0xff]
        %v1136 = vld [vmem:[%s188 + $0x1ba8] sm:$0xff]
        %v1137 = vld [vmem:[%s188 + $0x1bb0] sm:$0xff]
        %v1138 = vld [vmem:[%s188 + $0x1bb8] sm:$0xff]
        %v1139 = vld [vmem:[%s188 + $0x1bc0] sm:$0xff]
        %v1140 = vld [vmem:[%s188 + $0x1bc8] sm:$0xff]
        %v1141 = vld [vmem:[%s188 + $0x1bd0] sm:$0xff]
        %v1142 = vld [vmem:[%s188 + $0x1bd8] sm:$0xff]
        %v1143 = vld [vmem:[%s188 + $0x1be0] sm:$0xff]
        %v1144 = vld [vmem:[%s188 + $0x1be8] sm:$0xff]
        %v1145 = vld [vmem:[%s188 + $0x1bf0] sm:$0xff]
        %v1146 = vld [vmem:[%s188 + $0x1bf8] sm:$0xff]
        %v1147 = vld [vmem:[%s188 + $0x1c00] sm:$0xff]
        %v1148 = vld [vmem:[%s188 + $0x1c08] sm:$0xff]
        %v1149 = vld [vmem:[%s188 + $0x1c10] sm:$0xff]
        %v1150 = vld [vmem:[%s188 + $0x1c18] sm:$0xff]
        %v1151 = vld [vmem:[%s188 + $0x1c20] sm:$0xff]
        %v1152 = vld [vmem:[%s188 + $0x1c28] sm:$0xff]
        %v1153 = vld [vmem:[%s188 + $0x1c30] sm:$0xff]
        %v1154 = vld [vmem:[%s188 + $0x1c38] sm:$0xff]
        %v1155 = vld [vmem:[%s188 + $0x1c40] sm:$0xff]
        %v1156 = vld [vmem:[%s188 + $0x1c48] sm:$0xff]
        %v1157 = vld [vmem:[%s188 + $0x1c50] sm:$0xff]
        %v1158 = vld [vmem:[%s188 + $0x1c58] sm:$0xff]
        %v1159 = vld [vmem:[%s188 + $0x1c60] sm:$0xff]
        %v1160 = vld [vmem:[%s188 + $0x1c68] sm:$0xff]
        %v1161 = vld [vmem:[%s188 + $0x1c70] sm:$0xff]
        %v1162 = vld [vmem:[%s188 + $0x1c78] sm:$0xff]
        %v1163 = vld [vmem:[%s188 + $0x1c80] sm:$0xff]
        %v1164 = vld [vmem:[%s188 + $0x1c88] sm:$0xff]
        %v1165 = vld [vmem:[%s188 + $0x1c90] sm:$0xff]
        %v1166 = vld [vmem:[%s188 + $0x1c98] sm:$0xff]
        %v1167 = vld [vmem:[%s188 + $0x1ca0] sm:$0xff]
        %v1168 = vld [vmem:[%s188 + $0x1ca8] sm:$0xff]
        %v1169 = vld [vmem:[%s188 + $0x1cb0] sm:$0xff]
        %v1170 = vld [vmem:[%s188 + $0x1cb8] sm:$0xff]
        %v1171 = vld [vmem:[%s188 + $0x1cc0] sm:$0xff]
        %v1172 = vld [vmem:[%s188 + $0x1cc8] sm:$0xff]
        %v1173 = vld [vmem:[%s188 + $0x1cd0] sm:$0xff]
        %v1174 = vld [vmem:[%s188 + $0x1cd8] sm:$0xff]
        %v1175 = vld [vmem:[%s188 + $0x1ce0] sm:$0xff]
        %v1176 = vld [vmem:[%s188 + $0x1ce8] sm:$0xff]
        %v1177 = vld [vmem:[%s188 + $0x1cf0] sm:$0xff]
        %v1178 = vld [vmem:[%s188 + $0x1cf8] sm:$0xff]
        %v1179 = vld [vmem:[%s188 + $0x1d00] sm:$0xff]
        %v1180 = vld [vmem:[%s188 + $0x1d08] sm:$0xff]
        %v1181 = vld [vmem:[%s188 + $0x1d10] sm:$0xff]
        %v1182 = vld [vmem:[%s188 + $0x1d18] sm:$0xff]
        %v1183 = vld [vmem:[%s188 + $0x1d20] sm:$0xff]
        %v1184 = vld [vmem:[%s188 + $0x1d28] sm:$0xff]
        %v1185 = vld [vmem:[%s188 + $0x1d30] sm:$0xff]
        %v1186 = vld [vmem:[%s188 + $0x1d38] sm:$0xff]
        %v1187 = vld [vmem:[%s188 + $0x1d40] sm:$0xff]
        %v1188 = vld [vmem:[%s188 + $0x1d48] sm:$0xff]
        %v1189 = vld [vmem:[%s188 + $0x1d50] sm:$0xff]
        %v1190 = vld [vmem:[%s188 + $0x1d58] sm:$0xff]
        %v1191 = vld [vmem:[%s188 + $0x1d60] sm:$0xff]
        %v1192 = vld [vmem:[%s188 + $0x1d68] sm:$0xff]
        %v1193 = vld [vmem:[%s188 + $0x1d70] sm:$0xff]
        %v1194 = vld [vmem:[%s188 + $0x1d78] sm:$0xff]
        %v1195 = vld [vmem:[%s188 + $0x1d80] sm:$0xff]
        %v1196 = vld [vmem:[%s188 + $0x1d88] sm:$0xff]
        %v1197 = vld [vmem:[%s188 + $0x1d90] sm:$0xff]
        %v1198 = vld [vmem:[%s188 + $0x1d98] sm:$0xff]
        %v1199 = vld [vmem:[%s188 + $0x1da0] sm:$0xff]
        %v1200 = vld [vmem:[%s188 + $0x1da8] sm:$0xff]
        %v1201 = vld [vmem:[%s188 + $0x1db0] sm:$0xff]
        %v1202 = vld [vmem:[%s188 + $0x1db8] sm:$0xff]
        %v1203 = vld [vmem:[%s188 + $0x1dc0] sm:$0xff]
        %v1204 = vld [vmem:[%s188 + $0x1dc8] sm:$0xff]
        %v1205 = vld [vmem:[%s188 + $0x1dd0] sm:$0xff]
        %v1206 = vld [vmem:[%s188 + $0x1dd8] sm:$0xff]
        %v1207 = vld [vmem:[%s188 + $0x1de0] sm:$0xff]
        %v1208 = vld [vmem:[%s188 + $0x1de8] sm:$0xff]
        %v1209 = vld [vmem:[%s188 + $0x1df0] sm:$0xff]
        %v1210 = vld [vmem:[%s188 + $0x1df8] sm:$0xff]
        %v1211 = vld [vmem:[%s188 + $0x1e00] sm:$0xff]
        %v1212 = vld [vmem:[%s188 + $0x1e08] sm:$0xff]
        %v1213 = vld [vmem:[%s188 + $0x1e10] sm:$0xff]
        %v1214 = vld [vmem:[%s188 + $0x1e18] sm:$0xff]
        %v1215 = vld [vmem:[%s188 + $0x1e20] sm:$0xff]
        %v1216 = vld [vmem:[%s188 + $0x1e28] sm:$0xff]
        %v1217 = vld [vmem:[%s188 + $0x1e30] sm:$0xff]
        %v1218 = vld [vmem:[%s188 + $0x1e38] sm:$0xff]
        %v1219 = vld [vmem:[%s188 + $0x1e40] sm:$0xff]
        %v1220 = vld [vmem:[%s188 + $0x1e48] sm:$0xff]
        %v1221 = vld [vmem:[%s188 + $0x1e50] sm:$0xff]
        %v1222 = vld [vmem:[%s188 + $0x1e58] sm:$0xff]
        %v1223 = vld [vmem:[%s188 + $0x1e60] sm:$0xff]
        %v1224 = vld [vmem:[%s188 + $0x1e68] sm:$0xff]
        %v1225 = vld [vmem:[%s188 + $0x1e70] sm:$0xff]
        %v1226 = vld [vmem:[%s188 + $0x1e78] sm:$0xff]
        %v1227 = vld [vmem:[%s188 + $0x1e80] sm:$0xff]
        %v1228 = vld [vmem:[%s188 + $0x1e88] sm:$0xff]
        %v1229 = vld [vmem:[%s188 + $0x1e90] sm:$0xff]
        %v1230 = vld [vmem:[%s188 + $0x1e98] sm:$0xff]
        %v1231 = vld [vmem:[%s188 + $0x1ea0] sm:$0xff]
        %v1232 = vld [vmem:[%s188 + $0x1ea8] sm:$0xff]
        %v1233 = vld [vmem:[%s188 + $0x1eb0] sm:$0xff]
        %v1234 = vld [vmem:[%s188 + $0x1eb8] sm:$0xff]
        %v1235 = vld [vmem:[%s188 + $0x1ec0] sm:$0xff]
        %v1236 = vld [vmem:[%s188 + $0x1ec8] sm:$0xff]
        %v1237 = vld [vmem:[%s188 + $0x1ed0] sm:$0xff]
        %v1238 = vld [vmem:[%s188 + $0x1ed8] sm:$0xff]
        %v1239 = vld [vmem:[%s188 + $0x1ee0] sm:$0xff]
        %v1240 = vld [vmem:[%s188 + $0x1ee8] sm:$0xff]
        %v1241 = vld [vmem:[%s188 + $0x1ef0] sm:$0xff]
        %v1242 = vld [vmem:[%s188 + $0x1ef8] sm:$0xff]
        %v1243 = vld [vmem:[%s188 + $0x1f00] sm:$0xff]
        %v1244 = vld [vmem:[%s188 + $0x1f08] sm:$0xff]
        %v1245 = vld [vmem:[%s188 + $0x1f10] sm:$0xff]
        %v1246 = vld [vmem:[%s188 + $0x1f18] sm:$0xff]
        %v1247 = vld [vmem:[%s188 + $0x1f20] sm:$0xff]
        %v1248 = vld [vmem:[%s188 + $0x1f28] sm:$0xff]
        %v1249 = vld [vmem:[%s188 + $0x1f30] sm:$0xff]
        %v1250 = vld [vmem:[%s188 + $0x1f38] sm:$0xff]
        %v1251 = vld [vmem:[%s188 + $0x1f40] sm:$0xff]
        %v1252 = vld [vmem:[%s188 + $0x1f48] sm:$0xff]
        %v1253 = vld [vmem:[%s188 + $0x1f50] sm:$0xff]
        %v1254 = vld [vmem:[%s188 + $0x1f58] sm:$0xff]
        %v1255 = vld [vmem:[%s188 + $0x1f60] sm:$0xff]
        %v1256 = vld [vmem:[%s188 + $0x1f68] sm:$0xff]
        %v1257 = vld [vmem:[%s188 + $0x1f70] sm:$0xff]
        %v1258 = vld [vmem:[%s188 + $0x1f78] sm:$0xff]
        %v1259 = vld [vmem:[%s188 + $0x1f80] sm:$0xff]
        %v1260 = vld [vmem:[%s188 + $0x1f88] sm:$0xff]
        %v1261 = vld [vmem:[%s188 + $0x1f90] sm:$0xff]
        %v1262 = vld [vmem:[%s188 + $0x1f98] sm:$0xff]
        %v1263 = vld [vmem:[%s188 + $0x1fa0] sm:$0xff]
        %v1264 = vld [vmem:[%s188 + $0x1fa8] sm:$0xff]
        %v1265 = vld [vmem:[%s188 + $0x1fb0] sm:$0xff]
        %v1266 = vld [vmem:[%s188 + $0x1fb8] sm:$0xff]
        %v1267 = vld [vmem:[%s188 + $0x1fc0] sm:$0xff]
        %v1268 = vld [vmem:[%s188 + $0x1fc8] sm:$0xff]
        %v1269 = vld [vmem:[%s188 + $0x1fd0] sm:$0xff]
        %v1270 = vld [vmem:[%s188 + $0x1fd8] sm:$0xff]
        %v1271 = vld [vmem:[%s188 + $0x1fe0] sm:$0xff]
        %v1272 = vld [vmem:[%s188 + $0x1fe8] sm:$0xff]
        %v1273 = vld [vmem:[%s188 + $0x1ff0] sm:$0xff]
        %v1274 = vld [vmem:[%s188 + $0x1ff8] sm:$0xff]
        %v1275 = vld [vmem:[%s198] sm:$0xf]
        %v1277 = vperm.slane %v1275, 0
        %v1278 = vperm.slane %v1275, 1
        %v1279 = vperm.slane %v1275, 2
        %v1280 = vperm.slane %v1275, 3
        %1285 = vmatpush.msra.mxu0 %v311
        %1286 = vmatpush.msra.mxu0 %v307
        %1287 = vmatpush.msra.mxu0 %v303
        %1288 = vmatpush.msra.mxu0 %v299
        %1289 = vmatpush.msra.mxu0 %v295
        %1290 = vmatpush.msra.mxu0 %v291
        %1291 = vmatpush.msra.mxu0 %v287
        %1292 = vmatpush.msra.mxu0 %v283
        %1293 = vmatpush.msra.mxu0 %v279
        %1294 = vmatpush.msra.mxu0 %v275
        %1295 = vmatpush.msra.mxu0 %v271
        %1296 = vmatpush.msra.mxu0 %v267
        %1297 = vmatpush.msra.mxu0 %v263
        %1298 = vmatpush.msra.mxu0 %v259
        %1299 = vmatpush.msra.mxu0 %v255
        %1300 = vmatpush.msra.mxu0 %v251
        %1301 = vmatmul.f32.gmra.mxu0 %v235
        %v1302 = vpop.f32.mrf.mxu0
        %v1303 = vadd.f32 %v1277, %v1302
        %1304 = vdwg.mxu0
        %1305 = vmatpush.msra.mxu0 %v375
        %1306 = vmatpush.msra.mxu0 %v371
        %1307 = vmatpush.msra.mxu0 %v367
        %1308 = vmatpush.msra.mxu0 %v363
        %1309 = vmatpush.msra.mxu0 %v359
        %1310 = vmatpush.msra.mxu0 %v355
        %1311 = vmatpush.msra.mxu0 %v351
        %1312 = vmatpush.msra.mxu0 %v347
        %1313 = vmatpush.msra.mxu0 %v343
        %1314 = vmatpush.msra.mxu0 %v339
        %1315 = vmatpush.msra.mxu0 %v335
        %1316 = vmatpush.msra.mxu0 %v331
        %1317 = vmatpush.msra.mxu0 %v327
        %1318 = vmatpush.msra.mxu0 %v323
        %1319 = vmatpush.msra.mxu0 %v319
        %1320 = vmatpush.msra.mxu0 %v315
        %1321 = vmatmul.f32.gmra.mxu0 %v236
        %v1322 = vpop.f32.mrf.mxu0
        %v1323 = vadd.f32 %v1303, %v1322
        %1324 = vdwg.mxu0
        %1325 = vmatpush.msra.mxu0 %v439
        %1326 = vmatpush.msra.mxu0 %v435
        %1327 = vmatpush.msra.mxu0 %v431
        %1328 = vmatpush.msra.mxu0 %v427
        %1329 = vmatpush.msra.mxu0 %v423
        %1330 = vmatpush.msra.mxu0 %v419
        %1331 = vmatpush.msra.mxu0 %v415
        %1332 = vmatpush.msra.mxu0 %v411
        %1333 = vmatpush.msra.mxu0 %v407
        %1334 = vmatpush.msra.mxu0 %v403
        %1335 = vmatpush.msra.mxu0 %v399
        %1336 = vmatpush.msra.mxu0 %v395
        %1337 = vmatpush.msra.mxu0 %v391
        %1338 = vmatpush.msra.mxu0 %v387
        %1339 = vmatpush.msra.mxu0 %v383
        %1340 = vmatpush.msra.mxu0 %v379
        %1341 = vmatmul.f32.gmra.mxu0 %v237
        %v1342 = vpop.f32.mrf.mxu0
        %v1343 = vadd.f32 %v1323, %v1342
        %1344 = vdwg.mxu0
        %1345 = vmatpush.msra.mxu0 %v503
        %1346 = vmatpush.msra.mxu0 %v499
        %1347 = vmatpush.msra.mxu0 %v495
        %1348 = vmatpush.msra.mxu0 %v491
        %1349 = vmatpush.msra.mxu0 %v487
        %1350 = vmatpush.msra.mxu0 %v483
        %1351 = vmatpush.msra.mxu0 %v479
        %1352 = vmatpush.msra.mxu0 %v475
        %1353 = vmatpush.msra.mxu0 %v471
        %1354 = vmatpush.msra.mxu0 %v467
        %1355 = vmatpush.msra.mxu0 %v463
        %1356 = vmatpush.msra.mxu0 %v459
        %1357 = vmatpush.msra.mxu0 %v455
        %1358 = vmatpush.msra.mxu0 %v451
        %1359 = vmatpush.msra.mxu0 %v447
        %1360 = vmatpush.msra.mxu0 %v443
        %1361 = vmatmul.f32.gmra.mxu0 %v238
        %v1362 = vpop.f32.mrf.mxu0
        %v1363 = vadd.f32 %v1343, %v1362
        %1364 = vdwg.mxu0
        %1365 = vmatpush.msra.mxu0 %v567
        %1366 = vmatpush.msra.mxu0 %v563
        %1367 = vmatpush.msra.mxu0 %v559
        %1368 = vmatpush.msra.mxu0 %v555
        %1369 = vmatpush.msra.mxu0 %v551
        %1370 = vmatpush.msra.mxu0 %v547
        %1371 = vmatpush.msra.mxu0 %v543
        %1372 = vmatpush.msra.mxu0 %v539
        %1373 = vmatpush.msra.mxu0 %v535
        %1374 = vmatpush.msra.mxu0 %v531
        %1375 = vmatpush.msra.mxu0 %v527
        %1376 = vmatpush.msra.mxu0 %v523
        %1377 = vmatpush.msra.mxu0 %v519
        %1378 = vmatpush.msra.mxu0 %v515
        %1379 = vmatpush.msra.mxu0 %v511
        %1380 = vmatpush.msra.mxu0 %v507
        %1381 = vmatmul.f32.gmra.mxu0 %v239
        %v1382 = vpop.f32.mrf.mxu0
        %v1383 = vadd.f32 %v1363, %v1382
        %1384 = vdwg.mxu0
        %1385 = vmatpush.msra.mxu0 %v631
        %1386 = vmatpush.msra.mxu0 %v627
        %1387 = vmatpush.msra.mxu0 %v623
        %1388 = vmatpush.msra.mxu0 %v619
        %1389 = vmatpush.msra.mxu0 %v615
        %1390 = vmatpush.msra.mxu0 %v611
        %1391 = vmatpush.msra.mxu0 %v607
        %1392 = vmatpush.msra.mxu0 %v603
        %1393 = vmatpush.msra.mxu0 %v599
        %1394 = vmatpush.msra.mxu0 %v595
        %1395 = vmatpush.msra.mxu0 %v591
        %1396 = vmatpush.msra.mxu0 %v587
        %1397 = vmatpush.msra.mxu0 %v583
        %1398 = vmatpush.msra.mxu0 %v579
        %1399 = vmatpush.msra.mxu0 %v575
        %1400 = vmatpush.msra.mxu0 %v571
        %1401 = vmatmul.f32.gmra.mxu0 %v240
        %v1402 = vpop.f32.mrf.mxu0
        %v1403 = vadd.f32 %v1383, %v1402
        %1404 = vdwg.mxu0
        %1405 = vmatpush.msra.mxu0 %v695
        %1406 = vmatpush.msra.mxu0 %v691
        %1407 = vmatpush.msra.mxu0 %v687
        %1408 = vmatpush.msra.mxu0 %v683
        %1409 = vmatpush.msra.mxu0 %v679
        %1410 = vmatpush.msra.mxu0 %v675
        %1411 = vmatpush.msra.mxu0 %v671
        %1412 = vmatpush.msra.mxu0 %v667
        %1413 = vmatpush.msra.mxu0 %v663
        %1414 = vmatpush.msra.mxu0 %v659
        %1415 = vmatpush.msra.mxu0 %v655
        %1416 = vmatpush.msra.mxu0 %v651
        %1417 = vmatpush.msra.mxu0 %v647
        %1418 = vmatpush.msra.mxu0 %v643
        %1419 = vmatpush.msra.mxu0 %v639
        %1420 = vmatpush.msra.mxu0 %v635
        %1421 = vmatmul.f32.gmra.mxu0 %v241
        %v1422 = vpop.f32.mrf.mxu0
        %v1423 = vadd.f32 %v1403, %v1422
        %1424 = vdwg.mxu0
        %1425 = vmatpush.msra.mxu0 %v759
        %1426 = vmatpush.msra.mxu0 %v755
        %1427 = vmatpush.msra.mxu0 %v751
        %1428 = vmatpush.msra.mxu0 %v747
        %1429 = vmatpush.msra.mxu0 %v743
        %1430 = vmatpush.msra.mxu0 %v739
        %1431 = vmatpush.msra.mxu0 %v735
        %1432 = vmatpush.msra.mxu0 %v731
        %1433 = vmatpush.msra.mxu0 %v727
        %1434 = vmatpush.msra.mxu0 %v723
        %1435 = vmatpush.msra.mxu0 %v719
        %1436 = vmatpush.msra.mxu0 %v715
        %1437 = vmatpush.msra.mxu0 %v711
        %1438 = vmatpush.msra.mxu0 %v707
        %1439 = vmatpush.msra.mxu0 %v703
        %1440 = vmatpush.msra.mxu0 %v699
        %1441 = vmatmul.f32.gmra.mxu0 %v242
        %v1442 = vpop.f32.mrf.mxu0
        %v1443 = vadd.f32 %v1423, %v1442
        %1444 = vdwg.mxu0
        %1445 = vmatpush.msra.mxu0 %v823
        %1446 = vmatpush.msra.mxu0 %v819
        %1447 = vmatpush.msra.mxu0 %v815
        %1448 = vmatpush.msra.mxu0 %v811
        %1449 = vmatpush.msra.mxu0 %v807
        %1450 = vmatpush.msra.mxu0 %v803
        %1451 = vmatpush.msra.mxu0 %v799
        %1452 = vmatpush.msra.mxu0 %v795
        %1453 = vmatpush.msra.mxu0 %v791
        %1454 = vmatpush.msra.mxu0 %v787
        %1455 = vmatpush.msra.mxu0 %v783
        %1456 = vmatpush.msra.mxu0 %v779
        %1457 = vmatpush.msra.mxu0 %v775
        %1458 = vmatpush.msra.mxu0 %v771
        %1459 = vmatpush.msra.mxu0 %v767
        %1460 = vmatpush.msra.mxu0 %v763
        %1461 = vmatmul.f32.gmra.mxu0 %v243
        %v1462 = vpop.f32.mrf.mxu0
        %v1463 = vadd.f32 %v1443, %v1462
        %1464 = vdwg.mxu0
        %1465 = vmatpush.msra.mxu0 %v887
        %1466 = vmatpush.msra.mxu0 %v883
        %1467 = vmatpush.msra.mxu0 %v879
        %1468 = vmatpush.msra.mxu0 %v875
        %1469 = vmatpush.msra.mxu0 %v871
        %1470 = vmatpush.msra.mxu0 %v867
        %1471 = vmatpush.msra.mxu0 %v863
        %1472 = vmatpush.msra.mxu0 %v859
        %1473 = vmatpush.msra.mxu0 %v855
        %1474 = vmatpush.msra.mxu0 %v851
        %1475 = vmatpush.msra.mxu0 %v847
        %1476 = vmatpush.msra.mxu0 %v843
        %1477 = vmatpush.msra.mxu0 %v839
        %1478 = vmatpush.msra.mxu0 %v835
        %1479 = vmatpush.msra.mxu0 %v831
        %1480 = vmatpush.msra.mxu0 %v827
        %1481 = vmatmul.f32.gmra.mxu0 %v244
        %v1482 = vpop.f32.mrf.mxu0
        %v1483 = vadd.f32 %v1463, %v1482
        %1484 = vdwg.mxu0
        %1485 = vmatpush.msra.mxu0 %v951
        %1486 = vmatpush.msra.mxu0 %v947
        %1487 = vmatpush.msra.mxu0 %v943
        %1488 = vmatpush.msra.mxu0 %v939
        %1489 = vmatpush.msra.mxu0 %v935
        %1490 = vmatpush.msra.mxu0 %v931
        %1491 = vmatpush.msra.mxu0 %v927
        %1492 = vmatpush.msra.mxu0 %v923
        %1493 = vmatpush.msra.mxu0 %v919
        %1494 = vmatpush.msra.mxu0 %v915
        %1495 = vmatpush.msra.mxu0 %v911
        %1496 = vmatpush.msra.mxu0 %v907
        %1497 = vmatpush.msra.mxu0 %v903
        %1498 = vmatpush.msra.mxu0 %v899
        %1499 = vmatpush.msra.mxu0 %v895
        %1500 = vmatpush.msra.mxu0 %v891
        %1501 = vmatmul.f32.gmra.mxu0 %v245
        %v1502 = vpop.f32.mrf.mxu0
        %v1503 = vadd.f32 %v1483, %v1502
        %1504 = vdwg.mxu0
        %1505 = vmatpush.msra.mxu0 %v1015
        %1506 = vmatpush.msra.mxu0 %v1011
        %1507 = vmatpush.msra.mxu0 %v1007
        %1508 = vmatpush.msra.mxu0 %v1003
        %1509 = vmatpush.msra.mxu0 %v999
        %1510 = vmatpush.msra.mxu0 %v995
        %1511 = vmatpush.msra.mxu0 %v991
        %1512 = vmatpush.msra.mxu0 %v987
        %1513 = vmatpush.msra.mxu0 %v983
        %1514 = vmatpush.msra.mxu0 %v979
        %1515 = vmatpush.msra.mxu0 %v975
        %1516 = vmatpush.msra.mxu0 %v971
        %1517 = vmatpush.msra.mxu0 %v967
        %1518 = vmatpush.msra.mxu0 %v963
        %1519 = vmatpush.msra.mxu0 %v959
        %1520 = vmatpush.msra.mxu0 %v955
        %1521 = vmatmul.f32.gmra.mxu0 %v246
        %v1522 = vpop.f32.mrf.mxu0
        %v1523 = vadd.f32 %v1503, %v1522
        %1524 = vdwg.mxu0
        %1525 = vmatpush.msra.mxu0 %v1079
        %1526 = vmatpush.msra.mxu0 %v1075
        %1527 = vmatpush.msra.mxu0 %v1071
        %1528 = vmatpush.msra.mxu0 %v1067
        %1529 = vmatpush.msra.mxu0 %v1063
        %1530 = vmatpush.msra.mxu0 %v1059
        %1531 = vmatpush.msra.mxu0 %v1055
        %1532 = vmatpush.msra.mxu0 %v1051
        %1533 = vmatpush.msra.mxu0 %v1047
        %1534 = vmatpush.msra.mxu0 %v1043
        %1535 = vmatpush.msra.mxu0 %v1039
        %1536 = vmatpush.msra.mxu0 %v1035
        %1537 = vmatpush.msra.mxu0 %v1031
        %1538 = vmatpush.msra.mxu0 %v1027
        %1539 = vmatpush.msra.mxu0 %v1023
        %1540 = vmatpush.msra.mxu0 %v1019
        %1541 = vmatmul.f32.gmra.mxu0 %v247
        %v1542 = vpop.f32.mrf.mxu0
        %v1543 = vadd.f32 %v1523, %v1542
        %1544 = vdwg.mxu0
        %1545 = vmatpush.msra.mxu0 %v1143
        %1546 = vmatpush.msra.mxu0 %v1139
        %1547 = vmatpush.msra.mxu0 %v1135
        %1548 = vmatpush.msra.mxu0 %v1131
        %1549 = vmatpush.msra.mxu0 %v1127
        %1550 = vmatpush.msra.mxu0 %v1123
        %1551 = vmatpush.msra.mxu0 %v1119
        %1552 = vmatpush.msra.mxu0 %v1115
        %1553 = vmatpush.msra.mxu0 %v1111
        %1554 = vmatpush.msra.mxu0 %v1107
        %1555 = vmatpush.msra.mxu0 %v1103
        %1556 = vmatpush.msra.mxu0 %v1099
        %1557 = vmatpush.msra.mxu0 %v1095
        %1558 = vmatpush.msra.mxu0 %v1091
        %1559 = vmatpush.msra.mxu0 %v1087
        %1560 = vmatpush.msra.mxu0 %v1083
        %1561 = vmatmul.f32.gmra.mxu0 %v248
        %v1562 = vpop.f32.mrf.mxu0
        %v1563 = vadd.f32 %v1543, %v1562
        %1564 = vdwg.mxu0
        %1565 = vmatpush.msra.mxu0 %v1207
        %1566 = vmatpush.msra.mxu0 %v1203
        %1567 = vmatpush.msra.mxu0 %v1199
        %1568 = vmatpush.msra.mxu0 %v1195
        %1569 = vmatpush.msra.mxu0 %v1191
        %1570 = vmatpush.msra.mxu0 %v1187
        %1571 = vmatpush.msra.mxu0 %v1183
        %1572 = vmatpush.msra.mxu0 %v1179
        %1573 = vmatpush.msra.mxu0 %v1175
        %1574 = vmatpush.msra.mxu0 %v1171
        %1575 = vmatpush.msra.mxu0 %v1167
        %1576 = vmatpush.msra.mxu0 %v1163
        %1577 = vmatpush.msra.mxu0 %v1159
        %1578 = vmatpush.msra.mxu0 %v1155
        %1579 = vmatpush.msra.mxu0 %v1151
        %1580 = vmatpush.msra.mxu0 %v1147
        %1581 = vmatmul.f32.gmra.mxu0 %v249
        %v1582 = vpop.f32.mrf.mxu0
        %v1583 = vadd.f32 %v1563, %v1582
        %1584 = vdwg.mxu0
        %1585 = vmatpush.msra.mxu0 %v1271
        %1586 = vmatpush.msra.mxu0 %v1267
        %1587 = vmatpush.msra.mxu0 %v1263
        %1588 = vmatpush.msra.mxu0 %v1259
        %1589 = vmatpush.msra.mxu0 %v1255
        %1590 = vmatpush.msra.mxu0 %v1251
        %1591 = vmatpush.msra.mxu0 %v1247
        %1592 = vmatpush.msra.mxu0 %v1243
        %1593 = vmatpush.msra.mxu0 %v1239
        %1594 = vmatpush.msra.mxu0 %v1235
        %1595 = vmatpush.msra.mxu0 %v1231
        %1596 = vmatpush.msra.mxu0 %v1227
        %1597 = vmatpush.msra.mxu0 %v1223
        %1598 = vmatpush.msra.mxu0 %v1219
        %1599 = vmatpush.msra.mxu0 %v1215
        %1600 = vmatpush.msra.mxu0 %v1211
        %1601 = vmatmul.f32.gmra.mxu0 %v250
        %v1602 = vpop.f32.mrf.mxu0
        %v1603 = vadd.f32 %v1583, %v1602
        %1604 = vdwg.mxu0
        %1605 = vmatpush.msra.mxu0 %v312
        %1606 = vmatpush.msra.mxu0 %v308
        %1607 = vmatpush.msra.mxu0 %v304
        %1608 = vmatpush.msra.mxu0 %v300
        %1609 = vmatpush.msra.mxu0 %v296
        %1610 = vmatpush.msra.mxu0 %v292
        %1611 = vmatpush.msra.mxu0 %v288
        %1612 = vmatpush.msra.mxu0 %v284
        %1613 = vmatpush.msra.mxu0 %v280
        %1614 = vmatpush.msra.mxu0 %v276
        %1615 = vmatpush.msra.mxu0 %v272
        %1616 = vmatpush.msra.mxu0 %v268
        %1617 = vmatpush.msra.mxu0 %v264
        %1618 = vmatpush.msra.mxu0 %v260
        %1619 = vmatpush.msra.mxu0 %v256
        %1620 = vmatpush.msra.mxu0 %v252
        %1621 = vmatmul.f32.gmra.mxu0 %v235
        %v1622 = vpop.f32.mrf.mxu0
        %v1623 = vadd.f32 %v1278, %v1622
        %1624 = vdwg.mxu0
        %1625 = vmatpush.msra.mxu0 %v376
        %1626 = vmatpush.msra.mxu0 %v372
        %1627 = vmatpush.msra.mxu0 %v368
        %1628 = vmatpush.msra.mxu0 %v364
        %1629 = vmatpush.msra.mxu0 %v360
        %1630 = vmatpush.msra.mxu0 %v356
        %1631 = vmatpush.msra.mxu0 %v352
        %1632 = vmatpush.msra.mxu0 %v348
        %1633 = vmatpush.msra.mxu0 %v344
        %1634 = vmatpush.msra.mxu0 %v340
        %1635 = vmatpush.msra.mxu0 %v336
        %1636 = vmatpush.msra.mxu0 %v332
        %1637 = vmatpush.msra.mxu0 %v328
        %1638 = vmatpush.msra.mxu0 %v324
        %1639 = vmatpush.msra.mxu0 %v320
        %1640 = vmatpush.msra.mxu0 %v316
        %1641 = vmatmul.f32.gmra.mxu0 %v236
        %v1642 = vpop.f32.mrf.mxu0
        %v1643 = vadd.f32 %v1623, %v1642
        %1644 = vdwg.mxu0
        %1645 = vmatpush.msra.mxu0 %v440
        %1646 = vmatpush.msra.mxu0 %v436
        %1647 = vmatpush.msra.mxu0 %v432
        %1648 = vmatpush.msra.mxu0 %v428
        %1649 = vmatpush.msra.mxu0 %v424
        %1650 = vmatpush.msra.mxu0 %v420
        %1651 = vmatpush.msra.mxu0 %v416
        %1652 = vmatpush.msra.mxu0 %v412
        %1653 = vmatpush.msra.mxu0 %v408
        %1654 = vmatpush.msra.mxu0 %v404
        %1655 = vmatpush.msra.mxu0 %v400
        %1656 = vmatpush.msra.mxu0 %v396
        %1657 = vmatpush.msra.mxu0 %v392
        %1658 = vmatpush.msra.mxu0 %v388
        %1659 = vmatpush.msra.mxu0 %v384
        %1660 = vmatpush.msra.mxu0 %v380
        %1661 = vmatmul.f32.gmra.mxu0 %v237
        %v1662 = vpop.f32.mrf.mxu0
        %v1663 = vadd.f32 %v1643, %v1662
        %1664 = vdwg.mxu0
        %1665 = vmatpush.msra.mxu0 %v504
        %1666 = vmatpush.msra.mxu0 %v500
        %1667 = vmatpush.msra.mxu0 %v496
        %1668 = vmatpush.msra.mxu0 %v492
        %1669 = vmatpush.msra.mxu0 %v488
        %1670 = vmatpush.msra.mxu0 %v484
        %1671 = vmatpush.msra.mxu0 %v480
        %1672 = vmatpush.msra.mxu0 %v476
        %1673 = vmatpush.msra.mxu0 %v472
        %1674 = vmatpush.msra.mxu0 %v468
        %1675 = vmatpush.msra.mxu0 %v464
        %1676 = vmatpush.msra.mxu0 %v460
        %1677 = vmatpush.msra.mxu0 %v456
        %1678 = vmatpush.msra.mxu0 %v452
        %1679 = vmatpush.msra.mxu0 %v448
        %1680 = vmatpush.msra.mxu0 %v444
        %1681 = vmatmul.f32.gmra.mxu0 %v238
        %v1682 = vpop.f32.mrf.mxu0
        %v1683 = vadd.f32 %v1663, %v1682
        %1684 = vdwg.mxu0
        %1685 = vmatpush.msra.mxu0 %v568
        %1686 = vmatpush.msra.mxu0 %v564
        %1687 = vmatpush.msra.mxu0 %v560
        %1688 = vmatpush.msra.mxu0 %v556
        %1689 = vmatpush.msra.mxu0 %v552
        %1690 = vmatpush.msra.mxu0 %v548
        %1691 = vmatpush.msra.mxu0 %v544
        %1692 = vmatpush.msra.mxu0 %v540
        %1693 = vmatpush.msra.mxu0 %v536
        %1694 = vmatpush.msra.mxu0 %v532
        %1695 = vmatpush.msra.mxu0 %v528
        %1696 = vmatpush.msra.mxu0 %v524
        %1697 = vmatpush.msra.mxu0 %v520
        %1698 = vmatpush.msra.mxu0 %v516
        %1699 = vmatpush.msra.mxu0 %v512
        %1700 = vmatpush.msra.mxu0 %v508
        %1701 = vmatmul.f32.gmra.mxu0 %v239
        %v1702 = vpop.f32.mrf.mxu0
        %v1703 = vadd.f32 %v1683, %v1702
        %1704 = vdwg.mxu0
        %1705 = vmatpush.msra.mxu0 %v632
        %1706 = vmatpush.msra.mxu0 %v628
        %1707 = vmatpush.msra.mxu0 %v624
        %1708 = vmatpush.msra.mxu0 %v620
        %1709 = vmatpush.msra.mxu0 %v616
        %1710 = vmatpush.msra.mxu0 %v612
        %1711 = vmatpush.msra.mxu0 %v608
        %1712 = vmatpush.msra.mxu0 %v604
        %1713 = vmatpush.msra.mxu0 %v600
        %1714 = vmatpush.msra.mxu0 %v596
        %1715 = vmatpush.msra.mxu0 %v592
        %1716 = vmatpush.msra.mxu0 %v588
        %1717 = vmatpush.msra.mxu0 %v584
        %1718 = vmatpush.msra.mxu0 %v580
        %1719 = vmatpush.msra.mxu0 %v576
        %1720 = vmatpush.msra.mxu0 %v572
        %1721 = vmatmul.f32.gmra.mxu0 %v240
        %v1722 = vpop.f32.mrf.mxu0
        %v1723 = vadd.f32 %v1703, %v1722
        %1724 = vdwg.mxu0
        %1725 = vmatpush.msra.mxu0 %v696
        %1726 = vmatpush.msra.mxu0 %v692
        %1727 = vmatpush.msra.mxu0 %v688
        %1728 = vmatpush.msra.mxu0 %v684
        %1729 = vmatpush.msra.mxu0 %v680
        %1730 = vmatpush.msra.mxu0 %v676
        %1731 = vmatpush.msra.mxu0 %v672
        %1732 = vmatpush.msra.mxu0 %v668
        %1733 = vmatpush.msra.mxu0 %v664
        %1734 = vmatpush.msra.mxu0 %v660
        %1735 = vmatpush.msra.mxu0 %v656
        %1736 = vmatpush.msra.mxu0 %v652
        %1737 = vmatpush.msra.mxu0 %v648
        %1738 = vmatpush.msra.mxu0 %v644
        %1739 = vmatpush.msra.mxu0 %v640
        %1740 = vmatpush.msra.mxu0 %v636
        %1741 = vmatmul.f32.gmra.mxu0 %v241
        %v1742 = vpop.f32.mrf.mxu0
        %v1743 = vadd.f32 %v1723, %v1742
        %1744 = vdwg.mxu0
        %1745 = vmatpush.msra.mxu0 %v760
        %1746 = vmatpush.msra.mxu0 %v756
        %1747 = vmatpush.msra.mxu0 %v752
        %1748 = vmatpush.msra.mxu0 %v748
        %1749 = vmatpush.msra.mxu0 %v744
        %1750 = vmatpush.msra.mxu0 %v740
        %1751 = vmatpush.msra.mxu0 %v736
        %1752 = vmatpush.msra.mxu0 %v732
        %1753 = vmatpush.msra.mxu0 %v728
        %1754 = vmatpush.msra.mxu0 %v724
        %1755 = vmatpush.msra.mxu0 %v720
        %1756 = vmatpush.msra.mxu0 %v716
        %1757 = vmatpush.msra.mxu0 %v712
        %1758 = vmatpush.msra.mxu0 %v708
        %1759 = vmatpush.msra.mxu0 %v704
        %1760 = vmatpush.msra.mxu0 %v700
        %1761 = vmatmul.f32.gmra.mxu0 %v242
        %v1762 = vpop.f32.mrf.mxu0
        %v1763 = vadd.f32 %v1743, %v1762
        %1764 = vdwg.mxu0
        %1765 = vmatpush.msra.mxu0 %v824
        %1766 = vmatpush.msra.mxu0 %v820
        %1767 = vmatpush.msra.mxu0 %v816
        %1768 = vmatpush.msra.mxu0 %v812
        %1769 = vmatpush.msra.mxu0 %v808
        %1770 = vmatpush.msra.mxu0 %v804
        %1771 = vmatpush.msra.mxu0 %v800
        %1772 = vmatpush.msra.mxu0 %v796
        %1773 = vmatpush.msra.mxu0 %v792
        %1774 = vmatpush.msra.mxu0 %v788
        %1775 = vmatpush.msra.mxu0 %v784
        %1776 = vmatpush.msra.mxu0 %v780
        %1777 = vmatpush.msra.mxu0 %v776
        %1778 = vmatpush.msra.mxu0 %v772
        %1779 = vmatpush.msra.mxu0 %v768
        %1780 = vmatpush.msra.mxu0 %v764
        %1781 = vmatmul.f32.gmra.mxu0 %v243
        %v1782 = vpop.f32.mrf.mxu0
        %v1783 = vadd.f32 %v1763, %v1782
        %1784 = vdwg.mxu0
        %1785 = vmatpush.msra.mxu0 %v888
        %1786 = vmatpush.msra.mxu0 %v884
        %1787 = vmatpush.msra.mxu0 %v880
        %1788 = vmatpush.msra.mxu0 %v876
        %1789 = vmatpush.msra.mxu0 %v872
        %1790 = vmatpush.msra.mxu0 %v868
        %1791 = vmatpush.msra.mxu0 %v864
        %1792 = vmatpush.msra.mxu0 %v860
        %1793 = vmatpush.msra.mxu0 %v856
        %1794 = vmatpush.msra.mxu0 %v852
        %1795 = vmatpush.msra.mxu0 %v848
        %1796 = vmatpush.msra.mxu0 %v844
        %1797 = vmatpush.msra.mxu0 %v840
        %1798 = vmatpush.msra.mxu0 %v836
        %1799 = vmatpush.msra.mxu0 %v832
        %1800 = vmatpush.msra.mxu0 %v828
        %1801 = vmatmul.f32.gmra.mxu0 %v244
        %v1802 = vpop.f32.mrf.mxu0
        %v1803 = vadd.f32 %v1783, %v1802
        %1804 = vdwg.mxu0
        %1805 = vmatpush.msra.mxu0 %v952
        %1806 = vmatpush.msra.mxu0 %v948
        %1807 = vmatpush.msra.mxu0 %v944
        %1808 = vmatpush.msra.mxu0 %v940
        %1809 = vmatpush.msra.mxu0 %v936
        %1810 = vmatpush.msra.mxu0 %v932
        %1811 = vmatpush.msra.mxu0 %v928
        %1812 = vmatpush.msra.mxu0 %v924
        %1813 = vmatpush.msra.mxu0 %v920
        %1814 = vmatpush.msra.mxu0 %v916
        %1815 = vmatpush.msra.mxu0 %v912
        %1816 = vmatpush.msra.mxu0 %v908
        %1817 = vmatpush.msra.mxu0 %v904
        %1818 = vmatpush.msra.mxu0 %v900
        %1819 = vmatpush.msra.mxu0 %v896
        %1820 = vmatpush.msra.mxu0 %v892
        %1821 = vmatmul.f32.gmra.mxu0 %v245
        %v1822 = vpop.f32.mrf.mxu0
        %v1823 = vadd.f32 %v1803, %v1822
        %1824 = vdwg.mxu0
        %1825 = vmatpush.msra.mxu0 %v1016
        %1826 = vmatpush.msra.mxu0 %v1012
        %1827 = vmatpush.msra.mxu0 %v1008
        %1828 = vmatpush.msra.mxu0 %v1004
        %1829 = vmatpush.msra.mxu0 %v1000
        %1830 = vmatpush.msra.mxu0 %v996
        %1831 = vmatpush.msra.mxu0 %v992
        %1832 = vmatpush.msra.mxu0 %v988
        %1833 = vmatpush.msra.mxu0 %v984
        %1834 = vmatpush.msra.mxu0 %v980
        %1835 = vmatpush.msra.mxu0 %v976
        %1836 = vmatpush.msra.mxu0 %v972
        %1837 = vmatpush.msra.mxu0 %v968
        %1838 = vmatpush.msra.mxu0 %v964
        %1839 = vmatpush.msra.mxu0 %v960
        %1840 = vmatpush.msra.mxu0 %v956
        %1841 = vmatmul.f32.gmra.mxu0 %v246
        %v1842 = vpop.f32.mrf.mxu0
        %v1843 = vadd.f32 %v1823, %v1842
        %1844 = vdwg.mxu0
        %1845 = vmatpush.msra.mxu0 %v1080
        %1846 = vmatpush.msra.mxu0 %v1076
        %1847 = vmatpush.msra.mxu0 %v1072
        %1848 = vmatpush.msra.mxu0 %v1068
        %1849 = vmatpush.msra.mxu0 %v1064
        %1850 = vmatpush.msra.mxu0 %v1060
        %1851 = vmatpush.msra.mxu0 %v1056
        %1852 = vmatpush.msra.mxu0 %v1052
        %1853 = vmatpush.msra.mxu0 %v1048
        %1854 = vmatpush.msra.mxu0 %v1044
        %1855 = vmatpush.msra.mxu0 %v1040
        %1856 = vmatpush.msra.mxu0 %v1036
        %1857 = vmatpush.msra.mxu0 %v1032
        %1858 = vmatpush.msra.mxu0 %v1028
        %1859 = vmatpush.msra.mxu0 %v1024
        %1860 = vmatpush.msra.mxu0 %v1020
        %1861 = vmatmul.f32.gmra.mxu0 %v247
        %v1862 = vpop.f32.mrf.mxu0
        %v1863 = vadd.f32 %v1843, %v1862
        %1864 = vdwg.mxu0
        %1865 = vmatpush.msra.mxu0 %v1144
        %1866 = vmatpush.msra.mxu0 %v1140
        %1867 = vmatpush.msra.mxu0 %v1136
        %1868 = vmatpush.msra.mxu0 %v1132
        %1869 = vmatpush.msra.mxu0 %v1128
        %1870 = vmatpush.msra.mxu0 %v1124
        %1871 = vmatpush.msra.mxu0 %v1120
        %1872 = vmatpush.msra.mxu0 %v1116
        %1873 = vmatpush.msra.mxu0 %v1112
        %1874 = vmatpush.msra.mxu0 %v1108
        %1875 = vmatpush.msra.mxu0 %v1104
        %1876 = vmatpush.msra.mxu0 %v1100
        %1877 = vmatpush.msra.mxu0 %v1096
        %1878 = vmatpush.msra.mxu0 %v1092
        %1879 = vmatpush.msra.mxu0 %v1088
        %1880 = vmatpush.msra.mxu0 %v1084
        %1881 = vmatmul.f32.gmra.mxu0 %v248
        %v1882 = vpop.f32.mrf.mxu0
        %v1883 = vadd.f32 %v1863, %v1882
        %1884 = vdwg.mxu0
        %1885 = vmatpush.msra.mxu0 %v1208
        %1886 = vmatpush.msra.mxu0 %v1204
        %1887 = vmatpush.msra.mxu0 %v1200
        %1888 = vmatpush.msra.mxu0 %v1196
        %1889 = vmatpush.msra.mxu0 %v1192
        %1890 = vmatpush.msra.mxu0 %v1188
        %1891 = vmatpush.msra.mxu0 %v1184
        %1892 = vmatpush.msra.mxu0 %v1180
        %1893 = vmatpush.msra.mxu0 %v1176
        %1894 = vmatpush.msra.mxu0 %v1172
        %1895 = vmatpush.msra.mxu0 %v1168
        %1896 = vmatpush.msra.mxu0 %v1164
        %1897 = vmatpush.msra.mxu0 %v1160
        %1898 = vmatpush.msra.mxu0 %v1156
        %1899 = vmatpush.msra.mxu0 %v1152
        %1900 = vmatpush.msra.mxu0 %v1148
        %1901 = vmatmul.f32.gmra.mxu0 %v249
        %v1902 = vpop.f32.mrf.mxu0
        %v1903 = vadd.f32 %v1883, %v1902
        %1904 = vdwg.mxu0
        %1905 = vmatpush.msra.mxu0 %v1272
        %1906 = vmatpush.msra.mxu0 %v1268
        %1907 = vmatpush.msra.mxu0 %v1264
        %1908 = vmatpush.msra.mxu0 %v1260
        %1909 = vmatpush.msra.mxu0 %v1256
        %1910 = vmatpush.msra.mxu0 %v1252
        %1911 = vmatpush.msra.mxu0 %v1248
        %1912 = vmatpush.msra.mxu0 %v1244
        %1913 = vmatpush.msra.mxu0 %v1240
        %1914 = vmatpush.msra.mxu0 %v1236
        %1915 = vmatpush.msra.mxu0 %v1232
        %1916 = vmatpush.msra.mxu0 %v1228
        %1917 = vmatpush.msra.mxu0 %v1224
        %1918 = vmatpush.msra.mxu0 %v1220
        %1919 = vmatpush.msra.mxu0 %v1216
        %1920 = vmatpush.msra.mxu0 %v1212
        %1921 = vmatmul.f32.gmra.mxu0 %v250
        %v1922 = vpop.f32.mrf.mxu0
        %v1923 = vadd.f32 %v1903, %v1922
        %1924 = vdwg.mxu0
        %1925 = vmatpush.msra.mxu0 %v313
        %1926 = vmatpush.msra.mxu0 %v309
        %1927 = vmatpush.msra.mxu0 %v305
        %1928 = vmatpush.msra.mxu0 %v301
        %1929 = vmatpush.msra.mxu0 %v297
        %1930 = vmatpush.msra.mxu0 %v293
        %1931 = vmatpush.msra.mxu0 %v289
        %1932 = vmatpush.msra.mxu0 %v285
        %1933 = vmatpush.msra.mxu0 %v281
        %1934 = vmatpush.msra.mxu0 %v277
        %1935 = vmatpush.msra.mxu0 %v273
        %1936 = vmatpush.msra.mxu0 %v269
        %1937 = vmatpush.msra.mxu0 %v265
        %1938 = vmatpush.msra.mxu0 %v261
        %1939 = vmatpush.msra.mxu0 %v257
        %1940 = vmatpush.msra.mxu0 %v253
        %1941 = vmatmul.f32.gmra.mxu0 %v235
        %v1942 = vpop.f32.mrf.mxu0
        %v1943 = vadd.f32 %v1279, %v1942
        %1944 = vdwg.mxu0
        %1945 = vmatpush.msra.mxu0 %v377
        %1946 = vmatpush.msra.mxu0 %v373
        %1947 = vmatpush.msra.mxu0 %v369
        %1948 = vmatpush.msra.mxu0 %v365
        %1949 = vmatpush.msra.mxu0 %v361
        %1950 = vmatpush.msra.mxu0 %v357
        %1951 = vmatpush.msra.mxu0 %v353
        %1952 = vmatpush.msra.mxu0 %v349
        %1953 = vmatpush.msra.mxu0 %v345
        %1954 = vmatpush.msra.mxu0 %v341
        %1955 = vmatpush.msra.mxu0 %v337
        %1956 = vmatpush.msra.mxu0 %v333
        %1957 = vmatpush.msra.mxu0 %v329
        %1958 = vmatpush.msra.mxu0 %v325
        %1959 = vmatpush.msra.mxu0 %v321
        %1960 = vmatpush.msra.mxu0 %v317
        %1961 = vmatmul.f32.gmra.mxu0 %v236
        %v1962 = vpop.f32.mrf.mxu0
        %v1963 = vadd.f32 %v1943, %v1962
        %1964 = vdwg.mxu0
        %1965 = vmatpush.msra.mxu0 %v441
        %1966 = vmatpush.msra.mxu0 %v437
        %1967 = vmatpush.msra.mxu0 %v433
        %1968 = vmatpush.msra.mxu0 %v429
        %1969 = vmatpush.msra.mxu0 %v425
        %1970 = vmatpush.msra.mxu0 %v421
        %1971 = vmatpush.msra.mxu0 %v417
        %1972 = vmatpush.msra.mxu0 %v413
        %1973 = vmatpush.msra.mxu0 %v409
        %1974 = vmatpush.msra.mxu0 %v405
        %1975 = vmatpush.msra.mxu0 %v401
        %1976 = vmatpush.msra.mxu0 %v397
        %1977 = vmatpush.msra.mxu0 %v393
        %1978 = vmatpush.msra.mxu0 %v389
        %1979 = vmatpush.msra.mxu0 %v385
        %1980 = vmatpush.msra.mxu0 %v381
        %1981 = vmatmul.f32.gmra.mxu0 %v237
        %v1982 = vpop.f32.mrf.mxu0
        %v1983 = vadd.f32 %v1963, %v1982
        %1984 = vdwg.mxu0
        %1985 = vmatpush.msra.mxu0 %v505
        %1986 = vmatpush.msra.mxu0 %v501
        %1987 = vmatpush.msra.mxu0 %v497
        %1988 = vmatpush.msra.mxu0 %v493
        %1989 = vmatpush.msra.mxu0 %v489
        %1990 = vmatpush.msra.mxu0 %v485
        %1991 = vmatpush.msra.mxu0 %v481
        %1992 = vmatpush.msra.mxu0 %v477
        %1993 = vmatpush.msra.mxu0 %v473
        %1994 = vmatpush.msra.mxu0 %v469
        %1995 = vmatpush.msra.mxu0 %v465
        %1996 = vmatpush.msra.mxu0 %v461
        %1997 = vmatpush.msra.mxu0 %v457
        %1998 = vmatpush.msra.mxu0 %v453
        %1999 = vmatpush.msra.mxu0 %v449
        %2000 = vmatpush.msra.mxu0 %v445
        %2001 = vmatmul.f32.gmra.mxu0 %v238
        %v2002 = vpop.f32.mrf.mxu0
        %v2003 = vadd.f32 %v1983, %v2002
        %2004 = vdwg.mxu0
        %2005 = vmatpush.msra.mxu0 %v569
        %2006 = vmatpush.msra.mxu0 %v565
        %2007 = vmatpush.msra.mxu0 %v561
        %2008 = vmatpush.msra.mxu0 %v557
        %2009 = vmatpush.msra.mxu0 %v553
        %2010 = vmatpush.msra.mxu0 %v549
        %2011 = vmatpush.msra.mxu0 %v545
        %2012 = vmatpush.msra.mxu0 %v541
        %2013 = vmatpush.msra.mxu0 %v537
        %2014 = vmatpush.msra.mxu0 %v533
        %2015 = vmatpush.msra.mxu0 %v529
        %2016 = vmatpush.msra.mxu0 %v525
        %2017 = vmatpush.msra.mxu0 %v521
        %2018 = vmatpush.msra.mxu0 %v517
        %2019 = vmatpush.msra.mxu0 %v513
        %2020 = vmatpush.msra.mxu0 %v509
        %2021 = vmatmul.f32.gmra.mxu0 %v239
        %v2022 = vpop.f32.mrf.mxu0
        %v2023 = vadd.f32 %v2003, %v2022
        %2024 = vdwg.mxu0
        %2025 = vmatpush.msra.mxu0 %v633
        %2026 = vmatpush.msra.mxu0 %v629
        %2027 = vmatpush.msra.mxu0 %v625
        %2028 = vmatpush.msra.mxu0 %v621
        %2029 = vmatpush.msra.mxu0 %v617
        %2030 = vmatpush.msra.mxu0 %v613
        %2031 = vmatpush.msra.mxu0 %v609
        %2032 = vmatpush.msra.mxu0 %v605
        %2033 = vmatpush.msra.mxu0 %v601
        %2034 = vmatpush.msra.mxu0 %v597
        %2035 = vmatpush.msra.mxu0 %v593
        %2036 = vmatpush.msra.mxu0 %v589
        %2037 = vmatpush.msra.mxu0 %v585
        %2038 = vmatpush.msra.mxu0 %v581
        %2039 = vmatpush.msra.mxu0 %v577
        %2040 = vmatpush.msra.mxu0 %v573
        %2041 = vmatmul.f32.gmra.mxu0 %v240
        %v2042 = vpop.f32.mrf.mxu0
        %v2043 = vadd.f32 %v2023, %v2042
        %2044 = vdwg.mxu0
        %2045 = vmatpush.msra.mxu0 %v697
        %2046 = vmatpush.msra.mxu0 %v693
        %2047 = vmatpush.msra.mxu0 %v689
        %2048 = vmatpush.msra.mxu0 %v685
        %2049 = vmatpush.msra.mxu0 %v681
        %2050 = vmatpush.msra.mxu0 %v677
        %2051 = vmatpush.msra.mxu0 %v673
        %2052 = vmatpush.msra.mxu0 %v669
        %2053 = vmatpush.msra.mxu0 %v665
        %2054 = vmatpush.msra.mxu0 %v661
        %2055 = vmatpush.msra.mxu0 %v657
        %2056 = vmatpush.msra.mxu0 %v653
        %2057 = vmatpush.msra.mxu0 %v649
        %2058 = vmatpush.msra.mxu0 %v645
        %2059 = vmatpush.msra.mxu0 %v641
        %2060 = vmatpush.msra.mxu0 %v637
        %2061 = vmatmul.f32.gmra.mxu0 %v241
        %v2062 = vpop.f32.mrf.mxu0
        %v2063 = vadd.f32 %v2043, %v2062
        %2064 = vdwg.mxu0
        %2065 = vmatpush.msra.mxu0 %v761
        %2066 = vmatpush.msra.mxu0 %v757
        %2067 = vmatpush.msra.mxu0 %v753
        %2068 = vmatpush.msra.mxu0 %v749
        %2069 = vmatpush.msra.mxu0 %v745
        %2070 = vmatpush.msra.mxu0 %v741
        %2071 = vmatpush.msra.mxu0 %v737
        %2072 = vmatpush.msra.mxu0 %v733
        %2073 = vmatpush.msra.mxu0 %v729
        %2074 = vmatpush.msra.mxu0 %v725
        %2075 = vmatpush.msra.mxu0 %v721
        %2076 = vmatpush.msra.mxu0 %v717
        %2077 = vmatpush.msra.mxu0 %v713
        %2078 = vmatpush.msra.mxu0 %v709
        %2079 = vmatpush.msra.mxu0 %v705
        %2080 = vmatpush.msra.mxu0 %v701
        %2081 = vmatmul.f32.gmra.mxu0 %v242
        %v2082 = vpop.f32.mrf.mxu0
        %v2083 = vadd.f32 %v2063, %v2082
        %2084 = vdwg.mxu0
        %2085 = vmatpush.msra.mxu0 %v825
        %2086 = vmatpush.msra.mxu0 %v821
        %2087 = vmatpush.msra.mxu0 %v817
        %2088 = vmatpush.msra.mxu0 %v813
        %2089 = vmatpush.msra.mxu0 %v809
        %2090 = vmatpush.msra.mxu0 %v805
        %2091 = vmatpush.msra.mxu0 %v801
        %2092 = vmatpush.msra.mxu0 %v797
        %2093 = vmatpush.msra.mxu0 %v793
        %2094 = vmatpush.msra.mxu0 %v789
        %2095 = vmatpush.msra.mxu0 %v785
        %2096 = vmatpush.msra.mxu0 %v781
        %2097 = vmatpush.msra.mxu0 %v777
        %2098 = vmatpush.msra.mxu0 %v773
        %2099 = vmatpush.msra.mxu0 %v769
        %2100 = vmatpush.msra.mxu0 %v765
        %2101 = vmatmul.f32.gmra.mxu0 %v243
        %v2102 = vpop.f32.mrf.mxu0
        %v2103 = vadd.f32 %v2083, %v2102
        %2104 = vdwg.mxu0
        %2105 = vmatpush.msra.mxu0 %v889
        %2106 = vmatpush.msra.mxu0 %v885
        %2107 = vmatpush.msra.mxu0 %v881
        %2108 = vmatpush.msra.mxu0 %v877
        %2109 = vmatpush.msra.mxu0 %v873
        %2110 = vmatpush.msra.mxu0 %v869
        %2111 = vmatpush.msra.mxu0 %v865
        %2112 = vmatpush.msra.mxu0 %v861
        %2113 = vmatpush.msra.mxu0 %v857
        %2114 = vmatpush.msra.mxu0 %v853
        %2115 = vmatpush.msra.mxu0 %v849
        %2116 = vmatpush.msra.mxu0 %v845
        %2117 = vmatpush.msra.mxu0 %v841
        %2118 = vmatpush.msra.mxu0 %v837
        %2119 = vmatpush.msra.mxu0 %v833
        %2120 = vmatpush.msra.mxu0 %v829
        %2121 = vmatmul.f32.gmra.mxu0 %v244
        %v2122 = vpop.f32.mrf.mxu0
        %v2123 = vadd.f32 %v2103, %v2122
        %2124 = vdwg.mxu0
        %2125 = vmatpush.msra.mxu0 %v953
        %2126 = vmatpush.msra.mxu0 %v949
        %2127 = vmatpush.msra.mxu0 %v945
        %2128 = vmatpush.msra.mxu0 %v941
        %2129 = vmatpush.msra.mxu0 %v937
        %2130 = vmatpush.msra.mxu0 %v933
        %2131 = vmatpush.msra.mxu0 %v929
        %2132 = vmatpush.msra.mxu0 %v925
        %2133 = vmatpush.msra.mxu0 %v921
        %2134 = vmatpush.msra.mxu0 %v917
        %2135 = vmatpush.msra.mxu0 %v913
        %2136 = vmatpush.msra.mxu0 %v909
        %2137 = vmatpush.msra.mxu0 %v905
        %2138 = vmatpush.msra.mxu0 %v901
        %2139 = vmatpush.msra.mxu0 %v897
        %2140 = vmatpush.msra.mxu0 %v893
        %2141 = vmatmul.f32.gmra.mxu0 %v245
        %v2142 = vpop.f32.mrf.mxu0
        %v2143 = vadd.f32 %v2123, %v2142
        %2144 = vdwg.mxu0
        %2145 = vmatpush.msra.mxu0 %v1017
        %2146 = vmatpush.msra.mxu0 %v1013
        %2147 = vmatpush.msra.mxu0 %v1009
        %2148 = vmatpush.msra.mxu0 %v1005
        %2149 = vmatpush.msra.mxu0 %v1001
        %2150 = vmatpush.msra.mxu0 %v997
        %2151 = vmatpush.msra.mxu0 %v993
        %2152 = vmatpush.msra.mxu0 %v989
        %2153 = vmatpush.msra.mxu0 %v985
        %2154 = vmatpush.msra.mxu0 %v981
        %2155 = vmatpush.msra.mxu0 %v977
        %2156 = vmatpush.msra.mxu0 %v973
        %2157 = vmatpush.msra.mxu0 %v969
        %2158 = vmatpush.msra.mxu0 %v965
        %2159 = vmatpush.msra.mxu0 %v961
        %2160 = vmatpush.msra.mxu0 %v957
        %2161 = vmatmul.f32.gmra.mxu0 %v246
        %v2162 = vpop.f32.mrf.mxu0
        %v2163 = vadd.f32 %v2143, %v2162
        %2164 = vdwg.mxu0
        %2165 = vmatpush.msra.mxu0 %v1081
        %2166 = vmatpush.msra.mxu0 %v1077
        %2167 = vmatpush.msra.mxu0 %v1073
        %2168 = vmatpush.msra.mxu0 %v1069
        %2169 = vmatpush.msra.mxu0 %v1065
        %2170 = vmatpush.msra.mxu0 %v1061
        %2171 = vmatpush.msra.mxu0 %v1057
        %2172 = vmatpush.msra.mxu0 %v1053
        %2173 = vmatpush.msra.mxu0 %v1049
        %2174 = vmatpush.msra.mxu0 %v1045
        %2175 = vmatpush.msra.mxu0 %v1041
        %2176 = vmatpush.msra.mxu0 %v1037
        %2177 = vmatpush.msra.mxu0 %v1033
        %2178 = vmatpush.msra.mxu0 %v1029
        %2179 = vmatpush.msra.mxu0 %v1025
        %2180 = vmatpush.msra.mxu0 %v1021
        %2181 = vmatmul.f32.gmra.mxu0 %v247
        %v2182 = vpop.f32.mrf.mxu0
        %v2183 = vadd.f32 %v2163, %v2182
        %2184 = vdwg.mxu0
        %2185 = vmatpush.msra.mxu0 %v1145
        %2186 = vmatpush.msra.mxu0 %v1141
        %2187 = vmatpush.msra.mxu0 %v1137
        %2188 = vmatpush.msra.mxu0 %v1133
        %2189 = vmatpush.msra.mxu0 %v1129
        %2190 = vmatpush.msra.mxu0 %v1125
        %2191 = vmatpush.msra.mxu0 %v1121
        %2192 = vmatpush.msra.mxu0 %v1117
        %2193 = vmatpush.msra.mxu0 %v1113
        %2194 = vmatpush.msra.mxu0 %v1109
        %2195 = vmatpush.msra.mxu0 %v1105
        %2196 = vmatpush.msra.mxu0 %v1101
        %2197 = vmatpush.msra.mxu0 %v1097
        %2198 = vmatpush.msra.mxu0 %v1093
        %2199 = vmatpush.msra.mxu0 %v1089
        %2200 = vmatpush.msra.mxu0 %v1085
        %2201 = vmatmul.f32.gmra.mxu0 %v248
        %v2202 = vpop.f32.mrf.mxu0
        %v2203 = vadd.f32 %v2183, %v2202
        %2204 = vdwg.mxu0
        %2205 = vmatpush.msra.mxu0 %v1209
        %2206 = vmatpush.msra.mxu0 %v1205
        %2207 = vmatpush.msra.mxu0 %v1201
        %2208 = vmatpush.msra.mxu0 %v1197
        %2209 = vmatpush.msra.mxu0 %v1193
        %2210 = vmatpush.msra.mxu0 %v1189
        %2211 = vmatpush.msra.mxu0 %v1185
        %2212 = vmatpush.msra.mxu0 %v1181
        %2213 = vmatpush.msra.mxu0 %v1177
        %2214 = vmatpush.msra.mxu0 %v1173
        %2215 = vmatpush.msra.mxu0 %v1169
        %2216 = vmatpush.msra.mxu0 %v1165
        %2217 = vmatpush.msra.mxu0 %v1161
        %2218 = vmatpush.msra.mxu0 %v1157
        %2219 = vmatpush.msra.mxu0 %v1153
        %2220 = vmatpush.msra.mxu0 %v1149
        %2221 = vmatmul.f32.gmra.mxu0 %v249
        %v2222 = vpop.f32.mrf.mxu0
        %v2223 = vadd.f32 %v2203, %v2222
        %2224 = vdwg.mxu0
        %2225 = vmatpush.msra.mxu0 %v1273
        %2226 = vmatpush.msra.mxu0 %v1269
        %2227 = vmatpush.msra.mxu0 %v1265
        %2228 = vmatpush.msra.mxu0 %v1261
        %2229 = vmatpush.msra.mxu0 %v1257
        %2230 = vmatpush.msra.mxu0 %v1253
        %2231 = vmatpush.msra.mxu0 %v1249
        %2232 = vmatpush.msra.mxu0 %v1245
        %2233 = vmatpush.msra.mxu0 %v1241
        %2234 = vmatpush.msra.mxu0 %v1237
        %2235 = vmatpush.msra.mxu0 %v1233
        %2236 = vmatpush.msra.mxu0 %v1229
        %2237 = vmatpush.msra.mxu0 %v1225
        %2238 = vmatpush.msra.mxu0 %v1221
        %2239 = vmatpush.msra.mxu0 %v1217
        %2240 = vmatpush.msra.mxu0 %v1213
        %2241 = vmatmul.f32.gmra.mxu0 %v250
        %v2242 = vpop.f32.mrf.mxu0
        %v2243 = vadd.f32 %v2223, %v2242
        %2244 = vdwg.mxu0
        %2245 = vmatpush.msra.mxu0 %v314
        %2246 = vmatpush.msra.mxu0 %v310
        %2247 = vmatpush.msra.mxu0 %v306
        %2248 = vmatpush.msra.mxu0 %v302
        %2249 = vmatpush.msra.mxu0 %v298
        %2250 = vmatpush.msra.mxu0 %v294
        %2251 = vmatpush.msra.mxu0 %v290
        %2252 = vmatpush.msra.mxu0 %v286
        %2253 = vmatpush.msra.mxu0 %v282
        %2254 = vmatpush.msra.mxu0 %v278
        %2255 = vmatpush.msra.mxu0 %v274
        %2256 = vmatpush.msra.mxu0 %v270
        %2257 = vmatpush.msra.mxu0 %v266
        %2258 = vmatpush.msra.mxu0 %v262
        %2259 = vmatpush.msra.mxu0 %v258
        %2260 = vmatpush.msra.mxu0 %v254
        %2261 = vmatmul.f32.gmra.mxu0 %v235
        %v2262 = vpop.f32.mrf.mxu0
        %v2263 = vadd.f32 %v1280, %v2262
        %2264 = vdwg.mxu0
        %2265 = vmatpush.msra.mxu0 %v378
        %2266 = vmatpush.msra.mxu0 %v374
        %2267 = vmatpush.msra.mxu0 %v370
        %2268 = vmatpush.msra.mxu0 %v366
        %2269 = vmatpush.msra.mxu0 %v362
        %2270 = vmatpush.msra.mxu0 %v358
        %2271 = vmatpush.msra.mxu0 %v354
        %2272 = vmatpush.msra.mxu0 %v350
        %2273 = vmatpush.msra.mxu0 %v346
        %2274 = vmatpush.msra.mxu0 %v342
        %2275 = vmatpush.msra.mxu0 %v338
        %2276 = vmatpush.msra.mxu0 %v334
        %2277 = vmatpush.msra.mxu0 %v330
        %2278 = vmatpush.msra.mxu0 %v326
        %2279 = vmatpush.msra.mxu0 %v322
        %2280 = vmatpush.msra.mxu0 %v318
        %2281 = vmatmul.f32.gmra.mxu0 %v236
        %v2282 = vpop.f32.mrf.mxu0
        %v2283 = vadd.f32 %v2263, %v2282
        %2284 = vdwg.mxu0
        %2285 = vmatpush.msra.mxu0 %v442
        %2286 = vmatpush.msra.mxu0 %v438
        %2287 = vmatpush.msra.mxu0 %v434
        %2288 = vmatpush.msra.mxu0 %v430
        %2289 = vmatpush.msra.mxu0 %v426
        %2290 = vmatpush.msra.mxu0 %v422
        %2291 = vmatpush.msra.mxu0 %v418
        %2292 = vmatpush.msra.mxu0 %v414
        %2293 = vmatpush.msra.mxu0 %v410
        %2294 = vmatpush.msra.mxu0 %v406
        %2295 = vmatpush.msra.mxu0 %v402
        %2296 = vmatpush.msra.mxu0 %v398
        %2297 = vmatpush.msra.mxu0 %v394
        %2298 = vmatpush.msra.mxu0 %v390
        %2299 = vmatpush.msra.mxu0 %v386
        %2300 = vmatpush.msra.mxu0 %v382
        %2301 = vmatmul.f32.gmra.mxu0 %v237
        %v2302 = vpop.f32.mrf.mxu0
        %v2303 = vadd.f32 %v2283, %v2302
        %2304 = vdwg.mxu0
        %2305 = vmatpush.msra.mxu0 %v506
        %2306 = vmatpush.msra.mxu0 %v502
        %2307 = vmatpush.msra.mxu0 %v498
        %2308 = vmatpush.msra.mxu0 %v494
        %2309 = vmatpush.msra.mxu0 %v490
        %2310 = vmatpush.msra.mxu0 %v486
        %2311 = vmatpush.msra.mxu0 %v482
        %2312 = vmatpush.msra.mxu0 %v478
        %2313 = vmatpush.msra.mxu0 %v474
        %2314 = vmatpush.msra.mxu0 %v470
        %2315 = vmatpush.msra.mxu0 %v466
        %2316 = vmatpush.msra.mxu0 %v462
        %2317 = vmatpush.msra.mxu0 %v458
        %2318 = vmatpush.msra.mxu0 %v454
        %2319 = vmatpush.msra.mxu0 %v450
        %2320 = vmatpush.msra.mxu0 %v446
        %2321 = vmatmul.f32.gmra.mxu0 %v238
        %v2322 = vpop.f32.mrf.mxu0
        %v2323 = vadd.f32 %v2303, %v2322
        %2324 = vdwg.mxu0
        %2325 = vmatpush.msra.mxu0 %v570
        %2326 = vmatpush.msra.mxu0 %v566
        %2327 = vmatpush.msra.mxu0 %v562
        %2328 = vmatpush.msra.mxu0 %v558
        %2329 = vmatpush.msra.mxu0 %v554
        %2330 = vmatpush.msra.mxu0 %v550
        %2331 = vmatpush.msra.mxu0 %v546
        %2332 = vmatpush.msra.mxu0 %v542
        %2333 = vmatpush.msra.mxu0 %v538
        %2334 = vmatpush.msra.mxu0 %v534
        %2335 = vmatpush.msra.mxu0 %v530
        %2336 = vmatpush.msra.mxu0 %v526
        %2337 = vmatpush.msra.mxu0 %v522
        %2338 = vmatpush.msra.mxu0 %v518
        %2339 = vmatpush.msra.mxu0 %v514
        %2340 = vmatpush.msra.mxu0 %v510
        %2341 = vmatmul.f32.gmra.mxu0 %v239
        %v2342 = vpop.f32.mrf.mxu0
        %v2343 = vadd.f32 %v2323, %v2342
        %2344 = vdwg.mxu0
        %2345 = vmatpush.msra.mxu0 %v634
        %2346 = vmatpush.msra.mxu0 %v630
        %2347 = vmatpush.msra.mxu0 %v626
        %2348 = vmatpush.msra.mxu0 %v622
        %2349 = vmatpush.msra.mxu0 %v618
        %2350 = vmatpush.msra.mxu0 %v614
        %2351 = vmatpush.msra.mxu0 %v610
        %2352 = vmatpush.msra.mxu0 %v606
        %2353 = vmatpush.msra.mxu0 %v602
        %2354 = vmatpush.msra.mxu0 %v598
        %2355 = vmatpush.msra.mxu0 %v594
        %2356 = vmatpush.msra.mxu0 %v590
        %2357 = vmatpush.msra.mxu0 %v586
        %2358 = vmatpush.msra.mxu0 %v582
        %2359 = vmatpush.msra.mxu0 %v578
        %2360 = vmatpush.msra.mxu0 %v574
        %2361 = vmatmul.f32.gmra.mxu0 %v240
        %v2362 = vpop.f32.mrf.mxu0
        %v2363 = vadd.f32 %v2343, %v2362
        %2364 = vdwg.mxu0
        %2365 = vmatpush.msra.mxu0 %v698
        %2366 = vmatpush.msra.mxu0 %v694
        %2367 = vmatpush.msra.mxu0 %v690
        %2368 = vmatpush.msra.mxu0 %v686
        %2369 = vmatpush.msra.mxu0 %v682
        %2370 = vmatpush.msra.mxu0 %v678
        %2371 = vmatpush.msra.mxu0 %v674
        %2372 = vmatpush.msra.mxu0 %v670
        %2373 = vmatpush.msra.mxu0 %v666
        %2374 = vmatpush.msra.mxu0 %v662
        %2375 = vmatpush.msra.mxu0 %v658
        %2376 = vmatpush.msra.mxu0 %v654
        %2377 = vmatpush.msra.mxu0 %v650
        %2378 = vmatpush.msra.mxu0 %v646
        %2379 = vmatpush.msra.mxu0 %v642
        %2380 = vmatpush.msra.mxu0 %v638
        %2381 = vmatmul.f32.gmra.mxu0 %v241
        %v2382 = vpop.f32.mrf.mxu0
        %v2383 = vadd.f32 %v2363, %v2382
        %2384 = vdwg.mxu0
        %2385 = vmatpush.msra.mxu0 %v762
        %2386 = vmatpush.msra.mxu0 %v758
        %2387 = vmatpush.msra.mxu0 %v754
        %2388 = vmatpush.msra.mxu0 %v750
        %2389 = vmatpush.msra.mxu0 %v746
        %2390 = vmatpush.msra.mxu0 %v742
        %2391 = vmatpush.msra.mxu0 %v738
        %2392 = vmatpush.msra.mxu0 %v734
        %2393 = vmatpush.msra.mxu0 %v730
        %2394 = vmatpush.msra.mxu0 %v726
        %2395 = vmatpush.msra.mxu0 %v722
        %2396 = vmatpush.msra.mxu0 %v718
        %2397 = vmatpush.msra.mxu0 %v714
        %2398 = vmatpush.msra.mxu0 %v710
        %2399 = vmatpush.msra.mxu0 %v706
        %2400 = vmatpush.msra.mxu0 %v702
        %2401 = vmatmul.f32.gmra.mxu0 %v242
        %v2402 = vpop.f32.mrf.mxu0
        %v2403 = vadd.f32 %v2383, %v2402
        %2404 = vdwg.mxu0
        %2405 = vmatpush.msra.mxu0 %v826
        %2406 = vmatpush.msra.mxu0 %v822
        %2407 = vmatpush.msra.mxu0 %v818
        %2408 = vmatpush.msra.mxu0 %v814
        %2409 = vmatpush.msra.mxu0 %v810
        %2410 = vmatpush.msra.mxu0 %v806
        %2411 = vmatpush.msra.mxu0 %v802
        %2412 = vmatpush.msra.mxu0 %v798
        %2413 = vmatpush.msra.mxu0 %v794
        %2414 = vmatpush.msra.mxu0 %v790
        %2415 = vmatpush.msra.mxu0 %v786
        %2416 = vmatpush.msra.mxu0 %v782
        %2417 = vmatpush.msra.mxu0 %v778
        %2418 = vmatpush.msra.mxu0 %v774
        %2419 = vmatpush.msra.mxu0 %v770
        %2420 = vmatpush.msra.mxu0 %v766
        %2421 = vmatmul.f32.gmra.mxu0 %v243
        %v2422 = vpop.f32.mrf.mxu0
        %v2423 = vadd.f32 %v2403, %v2422
        %2424 = vdwg.mxu0
        %2425 = vmatpush.msra.mxu0 %v890
        %2426 = vmatpush.msra.mxu0 %v886
        %2427 = vmatpush.msra.mxu0 %v882
        %2428 = vmatpush.msra.mxu0 %v878
        %2429 = vmatpush.msra.mxu0 %v874
        %2430 = vmatpush.msra.mxu0 %v870
        %2431 = vmatpush.msra.mxu0 %v866
        %2432 = vmatpush.msra.mxu0 %v862
        %2433 = vmatpush.msra.mxu0 %v858
        %2434 = vmatpush.msra.mxu0 %v854
        %2435 = vmatpush.msra.mxu0 %v850
        %2436 = vmatpush.msra.mxu0 %v846
        %2437 = vmatpush.msra.mxu0 %v842
        %2438 = vmatpush.msra.mxu0 %v838
        %2439 = vmatpush.msra.mxu0 %v834
        %2440 = vmatpush.msra.mxu0 %v830
        %2441 = vmatmul.f32.gmra.mxu0 %v244
        %v2442 = vpop.f32.mrf.mxu0
        %v2443 = vadd.f32 %v2423, %v2442
        %2444 = vdwg.mxu0
        %2445 = vmatpush.msra.mxu0 %v954
        %2446 = vmatpush.msra.mxu0 %v950
        %2447 = vmatpush.msra.mxu0 %v946
        %2448 = vmatpush.msra.mxu0 %v942
        %2449 = vmatpush.msra.mxu0 %v938
        %2450 = vmatpush.msra.mxu0 %v934
        %2451 = vmatpush.msra.mxu0 %v930
        %2452 = vmatpush.msra.mxu0 %v926
        %2453 = vmatpush.msra.mxu0 %v922
        %2454 = vmatpush.msra.mxu0 %v918
        %2455 = vmatpush.msra.mxu0 %v914
        %2456 = vmatpush.msra.mxu0 %v910
        %2457 = vmatpush.msra.mxu0 %v906
        %2458 = vmatpush.msra.mxu0 %v902
        %2459 = vmatpush.msra.mxu0 %v898
        %2460 = vmatpush.msra.mxu0 %v894
        %2461 = vmatmul.f32.gmra.mxu0 %v245
        %v2462 = vpop.f32.mrf.mxu0
        %v2463 = vadd.f32 %v2443, %v2462
        %2464 = vdwg.mxu0
        %2465 = vmatpush.msra.mxu0 %v1018
        %2466 = vmatpush.msra.mxu0 %v1014
        %2467 = vmatpush.msra.mxu0 %v1010
        %2468 = vmatpush.msra.mxu0 %v1006
        %2469 = vmatpush.msra.mxu0 %v1002
        %2470 = vmatpush.msra.mxu0 %v998
        %2471 = vmatpush.msra.mxu0 %v994
        %2472 = vmatpush.msra.mxu0 %v990
        %2473 = vmatpush.msra.mxu0 %v986
        %2474 = vmatpush.msra.mxu0 %v982
        %2475 = vmatpush.msra.mxu0 %v978
        %2476 = vmatpush.msra.mxu0 %v974
        %2477 = vmatpush.msra.mxu0 %v970
        %2478 = vmatpush.msra.mxu0 %v966
        %2479 = vmatpush.msra.mxu0 %v962
        %2480 = vmatpush.msra.mxu0 %v958
        %2481 = vmatmul.f32.gmra.mxu0 %v246
        %v2482 = vpop.f32.mrf.mxu0
        %v2483 = vadd.f32 %v2463, %v2482
        %2484 = vdwg.mxu0
        %2485 = vmatpush.msra.mxu0 %v1082
        %2486 = vmatpush.msra.mxu0 %v1078
        %2487 = vmatpush.msra.mxu0 %v1074
        %2488 = vmatpush.msra.mxu0 %v1070
        %2489 = vmatpush.msra.mxu0 %v1066
        %2490 = vmatpush.msra.mxu0 %v1062
        %2491 = vmatpush.msra.mxu0 %v1058
        %2492 = vmatpush.msra.mxu0 %v1054
        %2493 = vmatpush.msra.mxu0 %v1050
        %2494 = vmatpush.msra.mxu0 %v1046
        %2495 = vmatpush.msra.mxu0 %v1042
        %2496 = vmatpush.msra.mxu0 %v1038
        %2497 = vmatpush.msra.mxu0 %v1034
        %2498 = vmatpush.msra.mxu0 %v1030
        %2499 = vmatpush.msra.mxu0 %v1026
        %2500 = vmatpush.msra.mxu0 %v1022
        %2501 = vmatmul.f32.gmra.mxu0 %v247
        %v2502 = vpop.f32.mrf.mxu0
        %v2503 = vadd.f32 %v2483, %v2502
        %2504 = vdwg.mxu0
        %2505 = vmatpush.msra.mxu0 %v1146
        %2506 = vmatpush.msra.mxu0 %v1142
        %2507 = vmatpush.msra.mxu0 %v1138
        %2508 = vmatpush.msra.mxu0 %v1134
        %2509 = vmatpush.msra.mxu0 %v1130
        %2510 = vmatpush.msra.mxu0 %v1126
        %2511 = vmatpush.msra.mxu0 %v1122
        %2512 = vmatpush.msra.mxu0 %v1118
        %2513 = vmatpush.msra.mxu0 %v1114
        %2514 = vmatpush.msra.mxu0 %v1110
        %2515 = vmatpush.msra.mxu0 %v1106
        %2516 = vmatpush.msra.mxu0 %v1102
        %2517 = vmatpush.msra.mxu0 %v1098
        %2518 = vmatpush.msra.mxu0 %v1094
        %2519 = vmatpush.msra.mxu0 %v1090
        %2520 = vmatpush.msra.mxu0 %v1086
        %2521 = vmatmul.f32.gmra.mxu0 %v248
        %v2522 = vpop.f32.mrf.mxu0
        %v2523 = vadd.f32 %v2503, %v2522
        %2524 = vdwg.mxu0
        %2525 = vmatpush.msra.mxu0 %v1210
        %2526 = vmatpush.msra.mxu0 %v1206
        %2527 = vmatpush.msra.mxu0 %v1202
        %2528 = vmatpush.msra.mxu0 %v1198
        %2529 = vmatpush.msra.mxu0 %v1194
        %2530 = vmatpush.msra.mxu0 %v1190
        %2531 = vmatpush.msra.mxu0 %v1186
        %2532 = vmatpush.msra.mxu0 %v1182
        %2533 = vmatpush.msra.mxu0 %v1178
        %2534 = vmatpush.msra.mxu0 %v1174
        %2535 = vmatpush.msra.mxu0 %v1170
        %2536 = vmatpush.msra.mxu0 %v1166
        %2537 = vmatpush.msra.mxu0 %v1162
        %2538 = vmatpush.msra.mxu0 %v1158
        %2539 = vmatpush.msra.mxu0 %v1154
        %2540 = vmatpush.msra.mxu0 %v1150
        %2541 = vmatmul.f32.gmra.mxu0 %v249
        %v2542 = vpop.f32.mrf.mxu0
        %v2543 = vadd.f32 %v2523, %v2542
        %2544 = vdwg.mxu0
        %2545 = vmatpush.msra.mxu0 %v1274
        %2546 = vmatpush.msra.mxu0 %v1270
        %2547 = vmatpush.msra.mxu0 %v1266
        %2548 = vmatpush.msra.mxu0 %v1262
        %2549 = vmatpush.msra.mxu0 %v1258
        %2550 = vmatpush.msra.mxu0 %v1254
        %2551 = vmatpush.msra.mxu0 %v1250
        %2552 = vmatpush.msra.mxu0 %v1246
        %2553 = vmatpush.msra.mxu0 %v1242
        %2554 = vmatpush.msra.mxu0 %v1238
        %2555 = vmatpush.msra.mxu0 %v1234
        %2556 = vmatpush.msra.mxu0 %v1230
        %2557 = vmatpush.msra.mxu0 %v1226
        %2558 = vmatpush.msra.mxu0 %v1222
        %2559 = vmatpush.msra.mxu0 %v1218
        %2560 = vmatpush.msra.mxu0 %v1214
        %2561 = vmatmul.f32.gmra.mxu0 %v250
        %v2562 = vpop.f32.mrf.mxu0
        %v2563 = vadd.f32 %v2543, %v2562
        %2564 = vdwg.mxu0
        %v2565 = vmax.f32 %v1603, 0.0
        %v2566 = vmax.f32 %v1923, 0.0
        %v2567 = vmax.f32 %v2243, 0.0
        %v2568 = vmax.f32 %v2563, 0.0
        %2569 = vst [vmem:[%s233] sm:$0xff] %v2565
        %2570 = vst [vmem:[%s233 + $0x8] sm:$0xff] %v2566
        %2571 = vst [vmem:[%s233 + $0x10] sm:$0xff] %v2567
        %2572 = vst [vmem:[%s233 + $0x18] sm:$0xff] %v2568
        %s2573 = smul.u32 4, %s20
        %p2574 = scmp.lt.s32.totalorder %s2573, 15
        %s2575 = scalar_select %p2574, %s2573, 15
        %s2576 = smul.addr %s2575, 8
        %s2577 = scalar_lea.vmem %s3, %s2576
        // Predicated region
        $region41: #{feedforward_net_gptj.7} parent=31 // pred_check
          %p2578 = pneg %p111
        $region42: #{feedforward_net_gptj.7} parent=31 // pred_check_branch
          %2580 = sbr.rel (%p2578) target = $region44
        $region43: #{feedforward_net_gptj.7} parent=31 // pred_region
          %s2581 = smul.u32 4, %s20
        $region44: #{feedforward_net_gptj.7} parent=31 // pred_fallthru
          _
      $region32: #{feedforward_net_gptj.7} parent=5 // pred_fallthru
        _
      %p2582 = scmp.le.s32.totalorder 2, %s15
      // Predicated region
      $region45: #{feedforward_net_gptj.7} parent=5 // pred_check
        %p2583 = pneg %p2582
      $region46: #{feedforward_net_gptj.7} parent=5 // pred_check_branch
        %2585 = sbr.rel (%p2583) target = $region48
      $region47: #{feedforward_net_gptj.7} parent=5 // pred_region
        %s2586 = ssub.s32 %s15, 2
        // Predicated region
        $region49: #{feedforward_net_gptj.7} parent=47 // pred_check
          %p2587 = pneg %p117
        $region50: #{feedforward_net_gptj.7} parent=47 // pred_check_branch
          %2589 = sbr.rel (%p2587) target = $region52
        $region51: #{feedforward_net_gptj.7} parent=47 // pred_region
          %s2590 = smul.u32 4, %s21
          %p2591 = scmp.lt.s32.totalorder %s2590, 15
          %s2592 = scalar_select %p2591, %s2590, 15
          %s2593 = smul.addr %s2592, 8
          %s2594 = scalar_lea.vmem %s3, %s2593
        $region52: #{feedforward_net_gptj.7} parent=47 // pred_fallthru
          _
      $region48: #{feedforward_net_gptj.7} parent=5 // pred_fallthru
        _
    $region6: #{feedforward_net_gptj.7} parent=1 // loop_footer
      %s19 = sadd.s32 1, %s15
    $region7: #{feedforward_net_gptj.7} parent=1 // loop_footer_branch
      %14 = sbr.rel target = $region3
    $region8: #{feedforward_net_gptj.7} parent=1 // loop_exit
      _
    %2595 = vsyncpa [#allocation3], 1
    %s2596 = scalar_lea.sflag [#allocation3], 1
    %2597 = vsyncpa %s2596, 1
    %2598 = vsyncpa [#allocation5], 1
    %s2599 = scalar_lea.sflag [#allocation5], 1
    %2600 = vsyncpa %s2599, 1

// kernel: feedforward_net_gptj.8
$region0: #{feedforward_net_gptj.8}
  #allocation0 [shape = 'u32[]', space=smem, size = 0x4, offset = 0x4, fixed_abs, tag = 'smem constant byte address 0x4 - core index']
  #allocation1 [shape = 'u32[72,128]{1,0:T(1,128)}', space=vmem, size = 0x9000, scoped, tag = 'internal scratch']
  %s0 = inlined_call_operand.vmem [shape: f32[8,2048], index: 0, kind: input, shape index: {}]
  %s1 = inlined_call_operand.hbm [shape: f32[2048,1024], index: 1, kind: input, shape index: {}]
  %s2 = inlined_call_operand.hbm [shape: f32[1,1024], index: 2, kind: input, shape index: {}]
  %s3 = inlined_call_operand.vmem [shape: f32[8,1024], index: 3, kind: output, shape index: {}]
  %s4 = sld [smem:[#allocation0]]
  $region53: #{feedforward_net_gptj.8} parent=0
    _
  %s6 = ssub.s32 1, %s4
  %s7 = scalar_select 0, %s6, %s4
  $region1: #{feedforward_net_gptj.8} parent=0
    #allocation2 [shape = 'u8[8388608]{0}', space=vmem, size = 0x800000, scoped, tag = 'input window, operand 1']
    #allocation3 [shape = 's32[2]{0}', space=sflag, size = 0x8, scoped, tag = 'scoped memory for feedforward_net_gptj.8']
    #allocation4 [shape = 'u8[4096]{0}', space=vmem, size = 0x1000, scoped, tag = 'input window, operand 2']
    #allocation5 [shape = 's32[2]{0}', space=sflag, size = 0x8, scoped, tag = 'scoped memory for feedforward_net_gptj.8']
    %8 = vsyncpa [#allocation3], 0
    %s9 = scalar_lea.sflag [#allocation3], 1
    %10 = vsyncpa %s9, 0
    %11 = vsyncpa [#allocation5], 0
    %s12 = scalar_lea.sflag [#allocation5], 1
    %13 = vsyncpa %s12, 0
    loop: start=0, step=1, limit=4
    $region2: #{feedforward_net_gptj.8} parent=1 // loop_pre_header
      _
    $region3: #{feedforward_net_gptj.8} parent=1 // loop_header
      %s15 = sphi 0, %s19
      %p16 = scmp.ge.s32.totalorder %s15, 4
      %s23 = sphi 0, %s23
      %s25 = sphi 0, %s23
      %s26 = sphi 0, %s25
      %s40 = sphi 0, %s26
      %s46 = sphi 0, %s48
      %s49 = sphi 0, %s46
      %s50 = sphi 0, %s49
      %s66 = sphi 0, %s50
      %s72 = sphi 0, %s74
      %s75 = sphi 0, %s72
      %s76 = sphi 0, %s75
      %s92 = sphi 0, %s76
      %s98 = sphi 0, %s100
      %s101 = sphi 0, %s98
      %s102 = sphi 0, %s101
      %s118 = sphi 0, %s102
    $region4: #{feedforward_net_gptj.8} parent=1 // loop_header_branch
      %18 = sbr.rel (%p16) target = $region8
    $region5: #{feedforward_net_gptj.8} parent=1 // loop_body
      %s20 = ssub.s32 %s15, 1
      %s21 = ssub.s32 %s15, 2
      %s22 = sadd.s32 %s15, 1
      %s24 = sadd.s32 %s23, 1
      %p27 = scmp.eq.s32.totalorder %s15, 1
      %p28 = scmp.ne.s32.totalorder %s23, %s25
      %p29 = scmp.eq.s32.totalorder %s15, 0
      %p30 = por %p28, %p29
      %p31 = scmp.ne.s32.totalorder %s23, %s25
      %p32 = scmp.eq.s32.totalorder %s20, 1
      %p33 = por %p31, %p32
      %p34 = scmp.ne.s32.totalorder %s25, %s26
      %p35 = scmp.eq.s32.totalorder %s20, 0
      %p36 = por %p34, %p35
      %p37 = scmp.ne.s32.totalorder %s25, %s26
      %p38 = scmp.eq.s32.totalorder %s21, 1
      %p39 = por %p37, %p38
      %p41 = scmp.ne.s32.totalorder %s26, %s40
      %p42 = scmp.eq.s32.totalorder %s21, 0
      %p43 = por %p41, %p42
      %s44 = ssub.s32 %s15, %s22
      %p45 = scmp.eq.s32.totalorder %s44, 0
      %s47 = sadd.s32 %s46, 1
      %s48 = scalar_select %p45, %s46, %s47
      %p51 = pneg %p45
      %p52 = scmp.eq.s32.totalorder %s15, 1
      %p53 = por %p51, %p52
      %p54 = scmp.ne.s32.totalorder %s46, %s49
      %p55 = scmp.eq.s32.totalorder %s15, 0
      %p56 = por %p54, %p55
      %p57 = scmp.ne.s32.totalorder %s46, %s49
      %p58 = scmp.eq.s32.totalorder %s20, 1
      %p59 = por %p57, %p58
      %p60 = scmp.ne.s32.totalorder %s49, %s50
      %p61 = scmp.eq.s32.totalorder %s20, 0
      %p62 = por %p60, %p61
      %p63 = scmp.ne.s32.totalorder %s49, %s50
      %p64 = scmp.eq.s32.totalorder %s21, 1
      %p65 = por %p63, %p64
      %p67 = scmp.ne.s32.totalorder %s50, %s66
      %p68 = scmp.eq.s32.totalorder %s21, 0
      %p69 = por %p67, %p68
      %s70 = ssub.s32 %s15, %s22
      %p71 = scmp.eq.s32.totalorder %s70, 0
      %s73 = sadd.s32 %s72, 1
      %s74 = scalar_select %p71, %s72, %s73
      %p77 = pneg %p71
      %p78 = scmp.eq.s32.totalorder %s15, 1
      %p79 = por %p77, %p78
      %p80 = scmp.ne.s32.totalorder %s72, %s75
      %p81 = scmp.eq.s32.totalorder %s15, 0
      %p82 = por %p80, %p81
      %p83 = scmp.ne.s32.totalorder %s72, %s75
      %p84 = scmp.eq.s32.totalorder %s20, 1
      %p85 = por %p83, %p84
      %p86 = scmp.ne.s32.totalorder %s75, %s76
      %p87 = scmp.eq.s32.totalorder %s20, 0
      %p88 = por %p86, %p87
      %p89 = scmp.ne.s32.totalorder %s75, %s76
      %p90 = scmp.eq.s32.totalorder %s21, 1
      %p91 = por %p89, %p90
      %p93 = scmp.ne.s32.totalorder %s76, %s92
      %p94 = scmp.eq.s32.totalorder %s21, 0
      %p95 = por %p93, %p94
      %s96 = ssub.s32 %s15, %s22
      %p97 = scmp.eq.s32.totalorder %s96, 0
      %s99 = sadd.s32 %s98, 1
      %s100 = scalar_select %p97, %s98, %s99
      %p103 = pneg %p97
      %p104 = scmp.eq.s32.totalorder %s15, 1
      %p105 = por %p103, %p104
      %p106 = scmp.ne.s32.totalorder %s98, %s101
      %p107 = scmp.eq.s32.totalorder %s15, 0
      %p108 = por %p106, %p107
      %p109 = scmp.ne.s32.totalorder %s98, %s101
      %p110 = scmp.eq.s32.totalorder %s20, 1
      %p111 = por %p109, %p110
      %p112 = scmp.ne.s32.totalorder %s101, %s102
      %p113 = scmp.eq.s32.totalorder %s20, 0
      %p114 = por %p112, %p113
      %p115 = scmp.ne.s32.totalorder %s101, %s102
      %p116 = scmp.eq.s32.totalorder %s21, 1
      %p117 = por %p115, %p116
      %p119 = scmp.ne.s32.totalorder %s102, %s118
      %p120 = scmp.eq.s32.totalorder %s21, 0
      %p121 = por %p119, %p120
      %p122 = scmp.le.s32.totalorder 1, %s15
      %p123 = scmp.lt.s32.totalorder %s15, 3
      %p124 = pnand %p122, %p123
      %p125 = pneg %p124
      // Predicated region
      $region9: #{feedforward_net_gptj.8} parent=5 // pred_check
        _
      $region10: #{feedforward_net_gptj.8} parent=5 // pred_check_branch
        %127 = sbr.rel (%p124) target = $region12
      $region11: #{feedforward_net_gptj.8} parent=5 // pred_region
        %s128 = ssub.s32 %s15, 1
        // Predicated region
        $region13: #{feedforward_net_gptj.8} parent=11 // pred_check
          %p129 = pneg %p36
        $region14: #{feedforward_net_gptj.8} parent=11 // pred_check_branch
          %131 = sbr.rel (%p129) target = $region16
        $region15: #{feedforward_net_gptj.8} parent=11 // pred_region
          _
        $region16: #{feedforward_net_gptj.8} parent=11 // pred_fallthru
          _
      $region12: #{feedforward_net_gptj.8} parent=5 // pred_fallthru
        _
      %p132 = scmp.lt.s32.totalorder %s15, 2
      // Predicated region
      $region17: #{feedforward_net_gptj.8} parent=5 // pred_check
        %p133 = pneg %p132
      $region18: #{feedforward_net_gptj.8} parent=5 // pred_check_branch
        %135 = sbr.rel (%p133) target = $region20
      $region19: #{feedforward_net_gptj.8} parent=5 // pred_region
        // Predicated region
        $region21: #{feedforward_net_gptj.8} parent=19 // pred_check
          %p136 = pneg %p56
        $region22: #{feedforward_net_gptj.8} parent=19 // pred_check_branch
          %138 = sbr.rel (%p136) target = $region24
        $region23: #{feedforward_net_gptj.8} parent=19 // pred_region
          %s139 = sand.u32 %s46, 1
          %s140 = scalar_lea.sflag [#allocation3], %s139
          %s141 = sand.u32 %s46, 1
          %s142 = smul.addr %s141, 8192
          %s143 = scalar_lea.vmem [#allocation2], %s142
          %s144 = smul.u32 4, %s15
          %146 = vsyncadd %s140, 0
          %s147 = smul.addr %s144, 8
          %s148 = scalar_lea.hbm %s1, %s147
          %s149 = sshll.u32 %s148, 4
          %s150 = int_to_ptr.hbm [resolvable:$true] %s149
          %s151 = sshll.u32 %s143, 4
          %s152 = int_to_ptr.vmem [resolvable:$true] %s151
          %157 = dma.hbm_to_vmem [thread:$0]  %s150, 131072, %s152, %s140, 1024, 512, 32
        $region24: #{feedforward_net_gptj.8} parent=19 // pred_fallthru
          _
        // Predicated region
        $region25: #{feedforward_net_gptj.8} parent=19 // pred_check
          %p158 = pneg %p82
        $region26: #{feedforward_net_gptj.8} parent=19 // pred_check_branch
          %160 = sbr.rel (%p158) target = $region28
        $region27: #{feedforward_net_gptj.8} parent=19 // pred_region
          %s161 = sand.u32 %s72, 1
          %s162 = scalar_lea.sflag [#allocation5], %s161
          %s163 = sand.u32 %s72, 1
          %s164 = smul.addr %s163, 4
          %s165 = scalar_lea.vmem [#allocation4], %s164
          %s166 = smul.u32 4, %s15
          %168 = vsyncadd %s162, 0
          %s169 = scalar_lea.hbm %s2, %s166
          %s171 = sshll.u32 %s169, 4
          %s172 = int_to_ptr.hbm [resolvable:$true] %s171
          %s173 = sshll.u32 %s165, 4
          %s174 = int_to_ptr.vmem [resolvable:$true] %s173
          %176 = dma.hbm_to_vmem [thread:$0]  %s172, 64, %s174, %s162
        $region28: #{feedforward_net_gptj.8} parent=19 // pred_fallthru
          _
      $region20: #{feedforward_net_gptj.8} parent=5 // pred_fallthru
        _
      %p177 = scmp.le.s32.totalorder 1, %s15
      %p178 = scmp.lt.s32.totalorder %s15, 3
      %p179 = pnand %p177, %p178
      %p180 = pneg %p179
      // Predicated region
      $region29: #{feedforward_net_gptj.8} parent=5 // pred_check
        _
      $region30: #{feedforward_net_gptj.8} parent=5 // pred_check_branch
        %182 = sbr.rel (%p179) target = $region32
      $region31: #{feedforward_net_gptj.8} parent=5 // pred_region
        %s183 = ssub.s32 %s15, 1
        %s184 = sand.u32 %s49, 1
        %s185 = scalar_lea.sflag [#allocation3], %s184
        %s186 = sand.u32 %s49, 1
        %s187 = smul.addr %s186, 8192
        %s188 = scalar_lea.vmem [#allocation2], %s187
        // Predicated region
        $region33: #{feedforward_net_gptj.8} parent=31 // pred_check
          %p189 = pneg %p62
        $region34: #{feedforward_net_gptj.8} parent=31 // pred_check_branch
          %191 = sbr.rel (%p189) target = $region36
        $region35: #{feedforward_net_gptj.8} parent=31 // pred_region
          %193 = dma.done %s185, 131072
        $region36: #{feedforward_net_gptj.8} parent=31 // pred_fallthru
          _
        %s194 = sand.u32 %s75, 1
        %s195 = scalar_lea.sflag [#allocation5], %s194
        %s196 = sand.u32 %s75, 1
        %s197 = smul.addr %s196, 4
        %s198 = scalar_lea.vmem [#allocation4], %s197
        // Predicated region
        $region37: #{feedforward_net_gptj.8} parent=31 // pred_check
          %p199 = pneg %p88
        $region38: #{feedforward_net_gptj.8} parent=31 // pred_check_branch
          %201 = sbr.rel (%p199) target = $region40
        $region39: #{feedforward_net_gptj.8} parent=31 // pred_region
          %203 = dma.done %s195, 64
        $region40: #{feedforward_net_gptj.8} parent=31 // pred_fallthru
          _
        %p204 = pneg %p36
        %p205 = pneg %p33
        %s206 = sand.u32 %s49, 1
        %s207 = scalar_lea.sflag [#allocation3], %s206
        %s208 = sand.u32 %s49, 1
        %s209 = smul.addr %s208, 8192
        %s210 = scalar_lea.vmem [#allocation2], %s209
        %p211 = pneg %p62
        %p212 = pneg %p59
        %s213 = sand.u32 %s75, 1
        %s214 = scalar_lea.sflag [#allocation5], %s213
        %s215 = sand.u32 %s75, 1
        %s216 = smul.addr %s215, 4
        %s217 = scalar_lea.vmem [#allocation4], %s216
        %p218 = pneg %p88
        %p219 = pneg %p85
        %p220 = pneg %p114
        %p221 = pneg %p111
        %s222 = smul.u32 4, %s20
        %p223 = scmp.lt.s32.totalorder %s222, 7
        %s224 = scalar_select %p223, %s222, 7
        %s225 = smul.addr %s224, 8
        %s226 = scalar_lea.vmem %s3, %s225
        %s227 = smul.u32 4, %s20
        %s228 = smul.u32 4, %s20
        %s229 = smul.u32 4, %s20
        %p230 = scmp.lt.s32.totalorder %s229, 7
        %s231 = scalar_select %p230, %s229, 7
        %s232 = smul.addr %s231, 8
        %s233 = scalar_lea.vmem %s3, %s232
        %s234 = smul.u32 4, %s20
        %v235 = vld [vmem:[%s0] sm:$0xff]
        %v236 = vld [vmem:[%s0 + $0x8] sm:$0xff]
        %v237 = vld [vmem:[%s0 + $0x10] sm:$0xff]
        %v238 = vld [vmem:[%s0 + $0x18] sm:$0xff]
        %v239 = vld [vmem:[%s0 + $0x20] sm:$0xff]
        %v240 = vld [vmem:[%s0 + $0x28] sm:$0xff]
        %v241 = vld [vmem:[%s0 + $0x30] sm:$0xff]
        %v242 = vld [vmem:[%s0 + $0x38] sm:$0xff]
        %v243 = vld [vmem:[%s0 + $0x40] sm:$0xff]
        %v244 = vld [vmem:[%s0 + $0x48] sm:$0xff]
        %v245 = vld [vmem:[%s0 + $0x50] sm:$0xff]
        %v246 = vld [vmem:[%s0 + $0x58] sm:$0xff]
        %v247 = vld [vmem:[%s0 + $0x60] sm:$0xff]
        %v248 = vld [vmem:[%s0 + $0x68] sm:$0xff]
        %v249 = vld [vmem:[%s0 + $0x70] sm:$0xff]
        %v250 = vld [vmem:[%s0 + $0x78] sm:$0xff]
        %v251 = vld [vmem:[%s188] sm:$0xff]
        %v252 = vld [vmem:[%s188 + $0x8] sm:$0xff]
        %v253 = vld [vmem:[%s188 + $0x10] sm:$0xff]
        %v254 = vld [vmem:[%s188 + $0x18] sm:$0xff]
        %v255 = vld [vmem:[%s188 + $0x20] sm:$0xff]
        %v256 = vld [vmem:[%s188 + $0x28] sm:$0xff]
        %v257 = vld [vmem:[%s188 + $0x30] sm:$0xff]
        %v258 = vld [vmem:[%s188 + $0x38] sm:$0xff]
        %v259 = vld [vmem:[%s188 + $0x40] sm:$0xff]
        %v260 = vld [vmem:[%s188 + $0x48] sm:$0xff]
        %v261 = vld [vmem:[%s188 + $0x50] sm:$0xff]
        %v262 = vld [vmem:[%s188 + $0x58] sm:$0xff]
        %v263 = vld [vmem:[%s188 + $0x60] sm:$0xff]
        %v264 = vld [vmem:[%s188 + $0x68] sm:$0xff]
        %v265 = vld [vmem:[%s188 + $0x70] sm:$0xff]
        %v266 = vld [vmem:[%s188 + $0x78] sm:$0xff]
        %v267 = vld [vmem:[%s188 + $0x80] sm:$0xff]
        %v268 = vld [vmem:[%s188 + $0x88] sm:$0xff]
        %v269 = vld [vmem:[%s188 + $0x90] sm:$0xff]
        %v270 = vld [vmem:[%s188 + $0x98] sm:$0xff]
        %v271 = vld [vmem:[%s188 + $0xa0] sm:$0xff]
        %v272 = vld [vmem:[%s188 + $0xa8] sm:$0xff]
        %v273 = vld [vmem:[%s188 + $0xb0] sm:$0xff]
        %v274 = vld [vmem:[%s188 + $0xb8] sm:$0xff]
        %v275 = vld [vmem:[%s188 + $0xc0] sm:$0xff]
        %v276 = vld [vmem:[%s188 + $0xc8] sm:$0xff]
        %v277 = vld [vmem:[%s188 + $0xd0] sm:$0xff]
        %v278 = vld [vmem:[%s188 + $0xd8] sm:$0xff]
        %v279 = vld [vmem:[%s188 + $0xe0] sm:$0xff]
        %v280 = vld [vmem:[%s188 + $0xe8] sm:$0xff]
        %v281 = vld [vmem:[%s188 + $0xf0] sm:$0xff]
        %v282 = vld [vmem:[%s188 + $0xf8] sm:$0xff]
        %v283 = vld [vmem:[%s188 + $0x100] sm:$0xff]
        %v284 = vld [vmem:[%s188 + $0x108] sm:$0xff]
        %v285 = vld [vmem:[%s188 + $0x110] sm:$0xff]
        %v286 = vld [vmem:[%s188 + $0x118] sm:$0xff]
        %v287 = vld [vmem:[%s188 + $0x120] sm:$0xff]
        %v288 = vld [vmem:[%s188 + $0x128] sm:$0xff]
        %v289 = vld [vmem:[%s188 + $0x130] sm:$0xff]
        %v290 = vld [vmem:[%s188 + $0x138] sm:$0xff]
        %v291 = vld [vmem:[%s188 + $0x140] sm:$0xff]
        %v292 = vld [vmem:[%s188 + $0x148] sm:$0xff]
        %v293 = vld [vmem:[%s188 + $0x150] sm:$0xff]
        %v294 = vld [vmem:[%s188 + $0x158] sm:$0xff]
        %v295 = vld [vmem:[%s188 + $0x160] sm:$0xff]
        %v296 = vld [vmem:[%s188 + $0x168] sm:$0xff]
        %v297 = vld [vmem:[%s188 + $0x170] sm:$0xff]
        %v298 = vld [vmem:[%s188 + $0x178] sm:$0xff]
        %v299 = vld [vmem:[%s188 + $0x180] sm:$0xff]
        %v300 = vld [vmem:[%s188 + $0x188] sm:$0xff]
        %v301 = vld [vmem:[%s188 + $0x190] sm:$0xff]
        %v302 = vld [vmem:[%s188 + $0x198] sm:$0xff]
        %v303 = vld [vmem:[%s188 + $0x1a0] sm:$0xff]
        %v304 = vld [vmem:[%s188 + $0x1a8] sm:$0xff]
        %v305 = vld [vmem:[%s188 + $0x1b0] sm:$0xff]
        %v306 = vld [vmem:[%s188 + $0x1b8] sm:$0xff]
        %v307 = vld [vmem:[%s188 + $0x1c0] sm:$0xff]
        %v308 = vld [vmem:[%s188 + $0x1c8] sm:$0xff]
        %v309 = vld [vmem:[%s188 + $0x1d0] sm:$0xff]
        %v310 = vld [vmem:[%s188 + $0x1d8] sm:$0xff]
        %v311 = vld [vmem:[%s188 + $0x1e0] sm:$0xff]
        %v312 = vld [vmem:[%s188 + $0x1e8] sm:$0xff]
        %v313 = vld [vmem:[%s188 + $0x1f0] sm:$0xff]
        %v314 = vld [vmem:[%s188 + $0x1f8] sm:$0xff]
        %v315 = vld [vmem:[%s188 + $0x200] sm:$0xff]
        %v316 = vld [vmem:[%s188 + $0x208] sm:$0xff]
        %v317 = vld [vmem:[%s188 + $0x210] sm:$0xff]
        %v318 = vld [vmem:[%s188 + $0x218] sm:$0xff]
        %v319 = vld [vmem:[%s188 + $0x220] sm:$0xff]
        %v320 = vld [vmem:[%s188 + $0x228] sm:$0xff]
        %v321 = vld [vmem:[%s188 + $0x230] sm:$0xff]
        %v322 = vld [vmem:[%s188 + $0x238] sm:$0xff]
        %v323 = vld [vmem:[%s188 + $0x240] sm:$0xff]
        %v324 = vld [vmem:[%s188 + $0x248] sm:$0xff]
        %v325 = vld [vmem:[%s188 + $0x250] sm:$0xff]
        %v326 = vld [vmem:[%s188 + $0x258] sm:$0xff]
        %v327 = vld [vmem:[%s188 + $0x260] sm:$0xff]
        %v328 = vld [vmem:[%s188 + $0x268] sm:$0xff]
        %v329 = vld [vmem:[%s188 + $0x270] sm:$0xff]
        %v330 = vld [vmem:[%s188 + $0x278] sm:$0xff]
        %v331 = vld [vmem:[%s188 + $0x280] sm:$0xff]
        %v332 = vld [vmem:[%s188 + $0x288] sm:$0xff]
        %v333 = vld [vmem:[%s188 + $0x290] sm:$0xff]
        %v334 = vld [vmem:[%s188 + $0x298] sm:$0xff]
        %v335 = vld [vmem:[%s188 + $0x2a0] sm:$0xff]
        %v336 = vld [vmem:[%s188 + $0x2a8] sm:$0xff]
        %v337 = vld [vmem:[%s188 + $0x2b0] sm:$0xff]
        %v338 = vld [vmem:[%s188 + $0x2b8] sm:$0xff]
        %v339 = vld [vmem:[%s188 + $0x2c0] sm:$0xff]
        %v340 = vld [vmem:[%s188 + $0x2c8] sm:$0xff]
        %v341 = vld [vmem:[%s188 + $0x2d0] sm:$0xff]
        %v342 = vld [vmem:[%s188 + $0x2d8] sm:$0xff]
        %v343 = vld [vmem:[%s188 + $0x2e0] sm:$0xff]
        %v344 = vld [vmem:[%s188 + $0x2e8] sm:$0xff]
        %v345 = vld [vmem:[%s188 + $0x2f0] sm:$0xff]
        %v346 = vld [vmem:[%s188 + $0x2f8] sm:$0xff]
        %v347 = vld [vmem:[%s188 + $0x300] sm:$0xff]
        %v348 = vld [vmem:[%s188 + $0x308] sm:$0xff]
        %v349 = vld [vmem:[%s188 + $0x310] sm:$0xff]
        %v350 = vld [vmem:[%s188 + $0x318] sm:$0xff]
        %v351 = vld [vmem:[%s188 + $0x320] sm:$0xff]
        %v352 = vld [vmem:[%s188 + $0x328] sm:$0xff]
        %v353 = vld [vmem:[%s188 + $0x330] sm:$0xff]
        %v354 = vld [vmem:[%s188 + $0x338] sm:$0xff]
        %v355 = vld [vmem:[%s188 + $0x340] sm:$0xff]
        %v356 = vld [vmem:[%s188 + $0x348] sm:$0xff]
        %v357 = vld [vmem:[%s188 + $0x350] sm:$0xff]
        %v358 = vld [vmem:[%s188 + $0x358] sm:$0xff]
        %v359 = vld [vmem:[%s188 + $0x360] sm:$0xff]
        %v360 = vld [vmem:[%s188 + $0x368] sm:$0xff]
        %v361 = vld [vmem:[%s188 + $0x370] sm:$0xff]
        %v362 = vld [vmem:[%s188 + $0x378] sm:$0xff]
        %v363 = vld [vmem:[%s188 + $0x380] sm:$0xff]
        %v364 = vld [vmem:[%s188 + $0x388] sm:$0xff]
        %v365 = vld [vmem:[%s188 + $0x390] sm:$0xff]
        %v366 = vld [vmem:[%s188 + $0x398] sm:$0xff]
        %v367 = vld [vmem:[%s188 + $0x3a0] sm:$0xff]
        %v368 = vld [vmem:[%s188 + $0x3a8] sm:$0xff]
        %v369 = vld [vmem:[%s188 + $0x3b0] sm:$0xff]
        %v370 = vld [vmem:[%s188 + $0x3b8] sm:$0xff]
        %v371 = vld [vmem:[%s188 + $0x3c0] sm:$0xff]
        %v372 = vld [vmem:[%s188 + $0x3c8] sm:$0xff]
        %v373 = vld [vmem:[%s188 + $0x3d0] sm:$0xff]
        %v374 = vld [vmem:[%s188 + $0x3d8] sm:$0xff]
        %v375 = vld [vmem:[%s188 + $0x3e0] sm:$0xff]
        %v376 = vld [vmem:[%s188 + $0x3e8] sm:$0xff]
        %v377 = vld [vmem:[%s188 + $0x3f0] sm:$0xff]
        %v378 = vld [vmem:[%s188 + $0x3f8] sm:$0xff]
        %v379 = vld [vmem:[%s188 + $0x400] sm:$0xff]
        %v380 = vld [vmem:[%s188 + $0x408] sm:$0xff]
        %v381 = vld [vmem:[%s188 + $0x410] sm:$0xff]
        %v382 = vld [vmem:[%s188 + $0x418] sm:$0xff]
        %v383 = vld [vmem:[%s188 + $0x420] sm:$0xff]
        %v384 = vld [vmem:[%s188 + $0x428] sm:$0xff]
        %v385 = vld [vmem:[%s188 + $0x430] sm:$0xff]
        %v386 = vld [vmem:[%s188 + $0x438] sm:$0xff]
        %v387 = vld [vmem:[%s188 + $0x440] sm:$0xff]
        %v388 = vld [vmem:[%s188 + $0x448] sm:$0xff]
        %v389 = vld [vmem:[%s188 + $0x450] sm:$0xff]
        %v390 = vld [vmem:[%s188 + $0x458] sm:$0xff]
        %v391 = vld [vmem:[%s188 + $0x460] sm:$0xff]
        %v392 = vld [vmem:[%s188 + $0x468] sm:$0xff]
        %v393 = vld [vmem:[%s188 + $0x470] sm:$0xff]
        %v394 = vld [vmem:[%s188 + $0x478] sm:$0xff]
        %v395 = vld [vmem:[%s188 + $0x480] sm:$0xff]
        %v396 = vld [vmem:[%s188 + $0x488] sm:$0xff]
        %v397 = vld [vmem:[%s188 + $0x490] sm:$0xff]
        %v398 = vld [vmem:[%s188 + $0x498] sm:$0xff]
        %v399 = vld [vmem:[%s188 + $0x4a0] sm:$0xff]
        %v400 = vld [vmem:[%s188 + $0x4a8] sm:$0xff]
        %v401 = vld [vmem:[%s188 + $0x4b0] sm:$0xff]
        %v402 = vld [vmem:[%s188 + $0x4b8] sm:$0xff]
        %v403 = vld [vmem:[%s188 + $0x4c0] sm:$0xff]
        %v404 = vld [vmem:[%s188 + $0x4c8] sm:$0xff]
        %v405 = vld [vmem:[%s188 + $0x4d0] sm:$0xff]
        %v406 = vld [vmem:[%s188 + $0x4d8] sm:$0xff]
        %v407 = vld [vmem:[%s188 + $0x4e0] sm:$0xff]
        %v408 = vld [vmem:[%s188 + $0x4e8] sm:$0xff]
        %v409 = vld [vmem:[%s188 + $0x4f0] sm:$0xff]
        %v410 = vld [vmem:[%s188 + $0x4f8] sm:$0xff]
        %v411 = vld [vmem:[%s188 + $0x500] sm:$0xff]
        %v412 = vld [vmem:[%s188 + $0x508] sm:$0xff]
        %v413 = vld [vmem:[%s188 + $0x510] sm:$0xff]
        %v414 = vld [vmem:[%s188 + $0x518] sm:$0xff]
        %v415 = vld [vmem:[%s188 + $0x520] sm:$0xff]
        %v416 = vld [vmem:[%s188 + $0x528] sm:$0xff]
        %v417 = vld [vmem:[%s188 + $0x530] sm:$0xff]
        %v418 = vld [vmem:[%s188 + $0x538] sm:$0xff]
        %v419 = vld [vmem:[%s188 + $0x540] sm:$0xff]
        %v420 = vld [vmem:[%s188 + $0x548] sm:$0xff]
        %v421 = vld [vmem:[%s188 + $0x550] sm:$0xff]
        %v422 = vld [vmem:[%s188 + $0x558] sm:$0xff]
        %v423 = vld [vmem:[%s188 + $0x560] sm:$0xff]
        %v424 = vld [vmem:[%s188 + $0x568] sm:$0xff]
        %v425 = vld [vmem:[%s188 + $0x570] sm:$0xff]
        %v426 = vld [vmem:[%s188 + $0x578] sm:$0xff]
        %v427 = vld [vmem:[%s188 + $0x580] sm:$0xff]
        %v428 = vld [vmem:[%s188 + $0x588] sm:$0xff]
        %v429 = vld [vmem:[%s188 + $0x590] sm:$0xff]
        %v430 = vld [vmem:[%s188 + $0x598] sm:$0xff]
        %v431 = vld [vmem:[%s188 + $0x5a0] sm:$0xff]
        %v432 = vld [vmem:[%s188 + $0x5a8] sm:$0xff]
        %v433 = vld [vmem:[%s188 + $0x5b0] sm:$0xff]
        %v434 = vld [vmem:[%s188 + $0x5b8] sm:$0xff]
        %v435 = vld [vmem:[%s188 + $0x5c0] sm:$0xff]
        %v436 = vld [vmem:[%s188 + $0x5c8] sm:$0xff]
        %v437 = vld [vmem:[%s188 + $0x5d0] sm:$0xff]
        %v438 = vld [vmem:[%s188 + $0x5d8] sm:$0xff]
        %v439 = vld [vmem:[%s188 + $0x5e0] sm:$0xff]
        %v440 = vld [vmem:[%s188 + $0x5e8] sm:$0xff]
        %v441 = vld [vmem:[%s188 + $0x5f0] sm:$0xff]
        %v442 = vld [vmem:[%s188 + $0x5f8] sm:$0xff]
        %v443 = vld [vmem:[%s188 + $0x600] sm:$0xff]
        %v444 = vld [vmem:[%s188 + $0x608] sm:$0xff]
        %v445 = vld [vmem:[%s188 + $0x610] sm:$0xff]
        %v446 = vld [vmem:[%s188 + $0x618] sm:$0xff]
        %v447 = vld [vmem:[%s188 + $0x620] sm:$0xff]
        %v448 = vld [vmem:[%s188 + $0x628] sm:$0xff]
        %v449 = vld [vmem:[%s188 + $0x630] sm:$0xff]
        %v450 = vld [vmem:[%s188 + $0x638] sm:$0xff]
        %v451 = vld [vmem:[%s188 + $0x640] sm:$0xff]
        %v452 = vld [vmem:[%s188 + $0x648] sm:$0xff]
        %v453 = vld [vmem:[%s188 + $0x650] sm:$0xff]
        %v454 = vld [vmem:[%s188 + $0x658] sm:$0xff]
        %v455 = vld [vmem:[%s188 + $0x660] sm:$0xff]
        %v456 = vld [vmem:[%s188 + $0x668] sm:$0xff]
        %v457 = vld [vmem:[%s188 + $0x670] sm:$0xff]
        %v458 = vld [vmem:[%s188 + $0x678] sm:$0xff]
        %v459 = vld [vmem:[%s188 + $0x680] sm:$0xff]
        %v460 = vld [vmem:[%s188 + $0x688] sm:$0xff]
        %v461 = vld [vmem:[%s188 + $0x690] sm:$0xff]
        %v462 = vld [vmem:[%s188 + $0x698] sm:$0xff]
        %v463 = vld [vmem:[%s188 + $0x6a0] sm:$0xff]
        %v464 = vld [vmem:[%s188 + $0x6a8] sm:$0xff]
        %v465 = vld [vmem:[%s188 + $0x6b0] sm:$0xff]
        %v466 = vld [vmem:[%s188 + $0x6b8] sm:$0xff]
        %v467 = vld [vmem:[%s188 + $0x6c0] sm:$0xff]
        %v468 = vld [vmem:[%s188 + $0x6c8] sm:$0xff]
        %v469 = vld [vmem:[%s188 + $0x6d0] sm:$0xff]
        %v470 = vld [vmem:[%s188 + $0x6d8] sm:$0xff]
        %v471 = vld [vmem:[%s188 + $0x6e0] sm:$0xff]
        %v472 = vld [vmem:[%s188 + $0x6e8] sm:$0xff]
        %v473 = vld [vmem:[%s188 + $0x6f0] sm:$0xff]
        %v474 = vld [vmem:[%s188 + $0x6f8] sm:$0xff]
        %v475 = vld [vmem:[%s188 + $0x700] sm:$0xff]
        %v476 = vld [vmem:[%s188 + $0x708] sm:$0xff]
        %v477 = vld [vmem:[%s188 + $0x710] sm:$0xff]
        %v478 = vld [vmem:[%s188 + $0x718] sm:$0xff]
        %v479 = vld [vmem:[%s188 + $0x720] sm:$0xff]
        %v480 = vld [vmem:[%s188 + $0x728] sm:$0xff]
        %v481 = vld [vmem:[%s188 + $0x730] sm:$0xff]
        %v482 = vld [vmem:[%s188 + $0x738] sm:$0xff]
        %v483 = vld [vmem:[%s188 + $0x740] sm:$0xff]
        %v484 = vld [vmem:[%s188 + $0x748] sm:$0xff]
        %v485 = vld [vmem:[%s188 + $0x750] sm:$0xff]
        %v486 = vld [vmem:[%s188 + $0x758] sm:$0xff]
        %v487 = vld [vmem:[%s188 + $0x760] sm:$0xff]
        %v488 = vld [vmem:[%s188 + $0x768] sm:$0xff]
        %v489 = vld [vmem:[%s188 + $0x770] sm:$0xff]
        %v490 = vld [vmem:[%s188 + $0x778] sm:$0xff]
        %v491 = vld [vmem:[%s188 + $0x780] sm:$0xff]
        %v492 = vld [vmem:[%s188 + $0x788] sm:$0xff]
        %v493 = vld [vmem:[%s188 + $0x790] sm:$0xff]
        %v494 = vld [vmem:[%s188 + $0x798] sm:$0xff]
        %v495 = vld [vmem:[%s188 + $0x7a0] sm:$0xff]
        %v496 = vld [vmem:[%s188 + $0x7a8] sm:$0xff]
        %v497 = vld [vmem:[%s188 + $0x7b0] sm:$0xff]
        %v498 = vld [vmem:[%s188 + $0x7b8] sm:$0xff]
        %v499 = vld [vmem:[%s188 + $0x7c0] sm:$0xff]
        %v500 = vld [vmem:[%s188 + $0x7c8] sm:$0xff]
        %v501 = vld [vmem:[%s188 + $0x7d0] sm:$0xff]
        %v502 = vld [vmem:[%s188 + $0x7d8] sm:$0xff]
        %v503 = vld [vmem:[%s188 + $0x7e0] sm:$0xff]
        %v504 = vld [vmem:[%s188 + $0x7e8] sm:$0xff]
        %v505 = vld [vmem:[%s188 + $0x7f0] sm:$0xff]
        %v506 = vld [vmem:[%s188 + $0x7f8] sm:$0xff]
        %v507 = vld [vmem:[%s188 + $0x800] sm:$0xff]
        %v508 = vld [vmem:[%s188 + $0x808] sm:$0xff]
        %v509 = vld [vmem:[%s188 + $0x810] sm:$0xff]
        %v510 = vld [vmem:[%s188 + $0x818] sm:$0xff]
        %v511 = vld [vmem:[%s188 + $0x820] sm:$0xff]
        %v512 = vld [vmem:[%s188 + $0x828] sm:$0xff]
        %v513 = vld [vmem:[%s188 + $0x830] sm:$0xff]
        %v514 = vld [vmem:[%s188 + $0x838] sm:$0xff]
        %v515 = vld [vmem:[%s188 + $0x840] sm:$0xff]
        %v516 = vld [vmem:[%s188 + $0x848] sm:$0xff]
        %v517 = vld [vmem:[%s188 + $0x850] sm:$0xff]
        %v518 = vld [vmem:[%s188 + $0x858] sm:$0xff]
        %v519 = vld [vmem:[%s188 + $0x860] sm:$0xff]
        %v520 = vld [vmem:[%s188 + $0x868] sm:$0xff]
        %v521 = vld [vmem:[%s188 + $0x870] sm:$0xff]
        %v522 = vld [vmem:[%s188 + $0x878] sm:$0xff]
        %v523 = vld [vmem:[%s188 + $0x880] sm:$0xff]
        %v524 = vld [vmem:[%s188 + $0x888] sm:$0xff]
        %v525 = vld [vmem:[%s188 + $0x890] sm:$0xff]
        %v526 = vld [vmem:[%s188 + $0x898] sm:$0xff]
        %v527 = vld [vmem:[%s188 + $0x8a0] sm:$0xff]
        %v528 = vld [vmem:[%s188 + $0x8a8] sm:$0xff]
        %v529 = vld [vmem:[%s188 + $0x8b0] sm:$0xff]
        %v530 = vld [vmem:[%s188 + $0x8b8] sm:$0xff]
        %v531 = vld [vmem:[%s188 + $0x8c0] sm:$0xff]
        %v532 = vld [vmem:[%s188 + $0x8c8] sm:$0xff]
        %v533 = vld [vmem:[%s188 + $0x8d0] sm:$0xff]
        %v534 = vld [vmem:[%s188 + $0x8d8] sm:$0xff]
        %v535 = vld [vmem:[%s188 + $0x8e0] sm:$0xff]
        %v536 = vld [vmem:[%s188 + $0x8e8] sm:$0xff]
        %v537 = vld [vmem:[%s188 + $0x8f0] sm:$0xff]
        %v538 = vld [vmem:[%s188 + $0x8f8] sm:$0xff]
        %v539 = vld [vmem:[%s188 + $0x900] sm:$0xff]
        %v540 = vld [vmem:[%s188 + $0x908] sm:$0xff]
        %v541 = vld [vmem:[%s188 + $0x910] sm:$0xff]
        %v542 = vld [vmem:[%s188 + $0x918] sm:$0xff]
        %v543 = vld [vmem:[%s188 + $0x920] sm:$0xff]
        %v544 = vld [vmem:[%s188 + $0x928] sm:$0xff]
        %v545 = vld [vmem:[%s188 + $0x930] sm:$0xff]
        %v546 = vld [vmem:[%s188 + $0x938] sm:$0xff]
        %v547 = vld [vmem:[%s188 + $0x940] sm:$0xff]
        %v548 = vld [vmem:[%s188 + $0x948] sm:$0xff]
        %v549 = vld [vmem:[%s188 + $0x950] sm:$0xff]
        %v550 = vld [vmem:[%s188 + $0x958] sm:$0xff]
        %v551 = vld [vmem:[%s188 + $0x960] sm:$0xff]
        %v552 = vld [vmem:[%s188 + $0x968] sm:$0xff]
        %v553 = vld [vmem:[%s188 + $0x970] sm:$0xff]
        %v554 = vld [vmem:[%s188 + $0x978] sm:$0xff]
        %v555 = vld [vmem:[%s188 + $0x980] sm:$0xff]
        %v556 = vld [vmem:[%s188 + $0x988] sm:$0xff]
        %v557 = vld [vmem:[%s188 + $0x990] sm:$0xff]
        %v558 = vld [vmem:[%s188 + $0x998] sm:$0xff]
        %v559 = vld [vmem:[%s188 + $0x9a0] sm:$0xff]
        %v560 = vld [vmem:[%s188 + $0x9a8] sm:$0xff]
        %v561 = vld [vmem:[%s188 + $0x9b0] sm:$0xff]
        %v562 = vld [vmem:[%s188 + $0x9b8] sm:$0xff]
        %v563 = vld [vmem:[%s188 + $0x9c0] sm:$0xff]
        %v564 = vld [vmem:[%s188 + $0x9c8] sm:$0xff]
        %v565 = vld [vmem:[%s188 + $0x9d0] sm:$0xff]
        %v566 = vld [vmem:[%s188 + $0x9d8] sm:$0xff]
        %v567 = vld [vmem:[%s188 + $0x9e0] sm:$0xff]
        %v568 = vld [vmem:[%s188 + $0x9e8] sm:$0xff]
        %v569 = vld [vmem:[%s188 + $0x9f0] sm:$0xff]
        %v570 = vld [vmem:[%s188 + $0x9f8] sm:$0xff]
        %v571 = vld [vmem:[%s188 + $0xa00] sm:$0xff]
        %v572 = vld [vmem:[%s188 + $0xa08] sm:$0xff]
        %v573 = vld [vmem:[%s188 + $0xa10] sm:$0xff]
        %v574 = vld [vmem:[%s188 + $0xa18] sm:$0xff]
        %v575 = vld [vmem:[%s188 + $0xa20] sm:$0xff]
        %v576 = vld [vmem:[%s188 + $0xa28] sm:$0xff]
        %v577 = vld [vmem:[%s188 + $0xa30] sm:$0xff]
        %v578 = vld [vmem:[%s188 + $0xa38] sm:$0xff]
        %v579 = vld [vmem:[%s188 + $0xa40] sm:$0xff]
        %v580 = vld [vmem:[%s188 + $0xa48] sm:$0xff]
        %v581 = vld [vmem:[%s188 + $0xa50] sm:$0xff]
        %v582 = vld [vmem:[%s188 + $0xa58] sm:$0xff]
        %v583 = vld [vmem:[%s188 + $0xa60] sm:$0xff]
        %v584 = vld [vmem:[%s188 + $0xa68] sm:$0xff]
        %v585 = vld [vmem:[%s188 + $0xa70] sm:$0xff]
        %v586 = vld [vmem:[%s188 + $0xa78] sm:$0xff]
        %v587 = vld [vmem:[%s188 + $0xa80] sm:$0xff]
        %v588 = vld [vmem:[%s188 + $0xa88] sm:$0xff]
        %v589 = vld [vmem:[%s188 + $0xa90] sm:$0xff]
        %v590 = vld [vmem:[%s188 + $0xa98] sm:$0xff]
        %v591 = vld [vmem:[%s188 + $0xaa0] sm:$0xff]
        %v592 = vld [vmem:[%s188 + $0xaa8] sm:$0xff]
        %v593 = vld [vmem:[%s188 + $0xab0] sm:$0xff]
        %v594 = vld [vmem:[%s188 + $0xab8] sm:$0xff]
        %v595 = vld [vmem:[%s188 + $0xac0] sm:$0xff]
        %v596 = vld [vmem:[%s188 + $0xac8] sm:$0xff]
        %v597 = vld [vmem:[%s188 + $0xad0] sm:$0xff]
        %v598 = vld [vmem:[%s188 + $0xad8] sm:$0xff]
        %v599 = vld [vmem:[%s188 + $0xae0] sm:$0xff]
        %v600 = vld [vmem:[%s188 + $0xae8] sm:$0xff]
        %v601 = vld [vmem:[%s188 + $0xaf0] sm:$0xff]
        %v602 = vld [vmem:[%s188 + $0xaf8] sm:$0xff]
        %v603 = vld [vmem:[%s188 + $0xb00] sm:$0xff]
        %v604 = vld [vmem:[%s188 + $0xb08] sm:$0xff]
        %v605 = vld [vmem:[%s188 + $0xb10] sm:$0xff]
        %v606 = vld [vmem:[%s188 + $0xb18] sm:$0xff]
        %v607 = vld [vmem:[%s188 + $0xb20] sm:$0xff]
        %v608 = vld [vmem:[%s188 + $0xb28] sm:$0xff]
        %v609 = vld [vmem:[%s188 + $0xb30] sm:$0xff]
        %v610 = vld [vmem:[%s188 + $0xb38] sm:$0xff]
        %v611 = vld [vmem:[%s188 + $0xb40] sm:$0xff]
        %v612 = vld [vmem:[%s188 + $0xb48] sm:$0xff]
        %v613 = vld [vmem:[%s188 + $0xb50] sm:$0xff]
        %v614 = vld [vmem:[%s188 + $0xb58] sm:$0xff]
        %v615 = vld [vmem:[%s188 + $0xb60] sm:$0xff]
        %v616 = vld [vmem:[%s188 + $0xb68] sm:$0xff]
        %v617 = vld [vmem:[%s188 + $0xb70] sm:$0xff]
        %v618 = vld [vmem:[%s188 + $0xb78] sm:$0xff]
        %v619 = vld [vmem:[%s188 + $0xb80] sm:$0xff]
        %v620 = vld [vmem:[%s188 + $0xb88] sm:$0xff]
        %v621 = vld [vmem:[%s188 + $0xb90] sm:$0xff]
        %v622 = vld [vmem:[%s188 + $0xb98] sm:$0xff]
        %v623 = vld [vmem:[%s188 + $0xba0] sm:$0xff]
        %v624 = vld [vmem:[%s188 + $0xba8] sm:$0xff]
        %v625 = vld [vmem:[%s188 + $0xbb0] sm:$0xff]
        %v626 = vld [vmem:[%s188 + $0xbb8] sm:$0xff]
        %v627 = vld [vmem:[%s188 + $0xbc0] sm:$0xff]
        %v628 = vld [vmem:[%s188 + $0xbc8] sm:$0xff]
        %v629 = vld [vmem:[%s188 + $0xbd0] sm:$0xff]
        %v630 = vld [vmem:[%s188 + $0xbd8] sm:$0xff]
        %v631 = vld [vmem:[%s188 + $0xbe0] sm:$0xff]
        %v632 = vld [vmem:[%s188 + $0xbe8] sm:$0xff]
        %v633 = vld [vmem:[%s188 + $0xbf0] sm:$0xff]
        %v634 = vld [vmem:[%s188 + $0xbf8] sm:$0xff]
        %v635 = vld [vmem:[%s188 + $0xc00] sm:$0xff]
        %v636 = vld [vmem:[%s188 + $0xc08] sm:$0xff]
        %v637 = vld [vmem:[%s188 + $0xc10] sm:$0xff]
        %v638 = vld [vmem:[%s188 + $0xc18] sm:$0xff]
        %v639 = vld [vmem:[%s188 + $0xc20] sm:$0xff]
        %v640 = vld [vmem:[%s188 + $0xc28] sm:$0xff]
        %v641 = vld [vmem:[%s188 + $0xc30] sm:$0xff]
        %v642 = vld [vmem:[%s188 + $0xc38] sm:$0xff]
        %v643 = vld [vmem:[%s188 + $0xc40] sm:$0xff]
        %v644 = vld [vmem:[%s188 + $0xc48] sm:$0xff]
        %v645 = vld [vmem:[%s188 + $0xc50] sm:$0xff]
        %v646 = vld [vmem:[%s188 + $0xc58] sm:$0xff]
        %v647 = vld [vmem:[%s188 + $0xc60] sm:$0xff]
        %v648 = vld [vmem:[%s188 + $0xc68] sm:$0xff]
        %v649 = vld [vmem:[%s188 + $0xc70] sm:$0xff]
        %v650 = vld [vmem:[%s188 + $0xc78] sm:$0xff]
        %v651 = vld [vmem:[%s188 + $0xc80] sm:$0xff]
        %v652 = vld [vmem:[%s188 + $0xc88] sm:$0xff]
        %v653 = vld [vmem:[%s188 + $0xc90] sm:$0xff]
        %v654 = vld [vmem:[%s188 + $0xc98] sm:$0xff]
        %v655 = vld [vmem:[%s188 + $0xca0] sm:$0xff]
        %v656 = vld [vmem:[%s188 + $0xca8] sm:$0xff]
        %v657 = vld [vmem:[%s188 + $0xcb0] sm:$0xff]
        %v658 = vld [vmem:[%s188 + $0xcb8] sm:$0xff]
        %v659 = vld [vmem:[%s188 + $0xcc0] sm:$0xff]
        %v660 = vld [vmem:[%s188 + $0xcc8] sm:$0xff]
        %v661 = vld [vmem:[%s188 + $0xcd0] sm:$0xff]
        %v662 = vld [vmem:[%s188 + $0xcd8] sm:$0xff]
        %v663 = vld [vmem:[%s188 + $0xce0] sm:$0xff]
        %v664 = vld [vmem:[%s188 + $0xce8] sm:$0xff]
        %v665 = vld [vmem:[%s188 + $0xcf0] sm:$0xff]
        %v666 = vld [vmem:[%s188 + $0xcf8] sm:$0xff]
        %v667 = vld [vmem:[%s188 + $0xd00] sm:$0xff]
        %v668 = vld [vmem:[%s188 + $0xd08] sm:$0xff]
        %v669 = vld [vmem:[%s188 + $0xd10] sm:$0xff]
        %v670 = vld [vmem:[%s188 + $0xd18] sm:$0xff]
        %v671 = vld [vmem:[%s188 + $0xd20] sm:$0xff]
        %v672 = vld [vmem:[%s188 + $0xd28] sm:$0xff]
        %v673 = vld [vmem:[%s188 + $0xd30] sm:$0xff]
        %v674 = vld [vmem:[%s188 + $0xd38] sm:$0xff]
        %v675 = vld [vmem:[%s188 + $0xd40] sm:$0xff]
        %v676 = vld [vmem:[%s188 + $0xd48] sm:$0xff]
        %v677 = vld [vmem:[%s188 + $0xd50] sm:$0xff]
        %v678 = vld [vmem:[%s188 + $0xd58] sm:$0xff]
        %v679 = vld [vmem:[%s188 + $0xd60] sm:$0xff]
        %v680 = vld [vmem:[%s188 + $0xd68] sm:$0xff]
        %v681 = vld [vmem:[%s188 + $0xd70] sm:$0xff]
        %v682 = vld [vmem:[%s188 + $0xd78] sm:$0xff]
        %v683 = vld [vmem:[%s188 + $0xd80] sm:$0xff]
        %v684 = vld [vmem:[%s188 + $0xd88] sm:$0xff]
        %v685 = vld [vmem:[%s188 + $0xd90] sm:$0xff]
        %v686 = vld [vmem:[%s188 + $0xd98] sm:$0xff]
        %v687 = vld [vmem:[%s188 + $0xda0] sm:$0xff]
        %v688 = vld [vmem:[%s188 + $0xda8] sm:$0xff]
        %v689 = vld [vmem:[%s188 + $0xdb0] sm:$0xff]
        %v690 = vld [vmem:[%s188 + $0xdb8] sm:$0xff]
        %v691 = vld [vmem:[%s188 + $0xdc0] sm:$0xff]
        %v692 = vld [vmem:[%s188 + $0xdc8] sm:$0xff]
        %v693 = vld [vmem:[%s188 + $0xdd0] sm:$0xff]
        %v694 = vld [vmem:[%s188 + $0xdd8] sm:$0xff]
        %v695 = vld [vmem:[%s188 + $0xde0] sm:$0xff]
        %v696 = vld [vmem:[%s188 + $0xde8] sm:$0xff]
        %v697 = vld [vmem:[%s188 + $0xdf0] sm:$0xff]
        %v698 = vld [vmem:[%s188 + $0xdf8] sm:$0xff]
        %v699 = vld [vmem:[%s188 + $0xe00] sm:$0xff]
        %v700 = vld [vmem:[%s188 + $0xe08] sm:$0xff]
        %v701 = vld [vmem:[%s188 + $0xe10] sm:$0xff]
        %v702 = vld [vmem:[%s188 + $0xe18] sm:$0xff]
        %v703 = vld [vmem:[%s188 + $0xe20] sm:$0xff]
        %v704 = vld [vmem:[%s188 + $0xe28] sm:$0xff]
        %v705 = vld [vmem:[%s188 + $0xe30] sm:$0xff]
        %v706 = vld [vmem:[%s188 + $0xe38] sm:$0xff]
        %v707 = vld [vmem:[%s188 + $0xe40] sm:$0xff]
        %v708 = vld [vmem:[%s188 + $0xe48] sm:$0xff]
        %v709 = vld [vmem:[%s188 + $0xe50] sm:$0xff]
        %v710 = vld [vmem:[%s188 + $0xe58] sm:$0xff]
        %v711 = vld [vmem:[%s188 + $0xe60] sm:$0xff]
        %v712 = vld [vmem:[%s188 + $0xe68] sm:$0xff]
        %v713 = vld [vmem:[%s188 + $0xe70] sm:$0xff]
        %v714 = vld [vmem:[%s188 + $0xe78] sm:$0xff]
        %v715 = vld [vmem:[%s188 + $0xe80] sm:$0xff]
        %v716 = vld [vmem:[%s188 + $0xe88] sm:$0xff]
        %v717 = vld [vmem:[%s188 + $0xe90] sm:$0xff]
        %v718 = vld [vmem:[%s188 + $0xe98] sm:$0xff]
        %v719 = vld [vmem:[%s188 + $0xea0] sm:$0xff]
        %v720 = vld [vmem:[%s188 + $0xea8] sm:$0xff]
        %v721 = vld [vmem:[%s188 + $0xeb0] sm:$0xff]
        %v722 = vld [vmem:[%s188 + $0xeb8] sm:$0xff]
        %v723 = vld [vmem:[%s188 + $0xec0] sm:$0xff]
        %v724 = vld [vmem:[%s188 + $0xec8] sm:$0xff]
        %v725 = vld [vmem:[%s188 + $0xed0] sm:$0xff]
        %v726 = vld [vmem:[%s188 + $0xed8] sm:$0xff]
        %v727 = vld [vmem:[%s188 + $0xee0] sm:$0xff]
        %v728 = vld [vmem:[%s188 + $0xee8] sm:$0xff]
        %v729 = vld [vmem:[%s188 + $0xef0] sm:$0xff]
        %v730 = vld [vmem:[%s188 + $0xef8] sm:$0xff]
        %v731 = vld [vmem:[%s188 + $0xf00] sm:$0xff]
        %v732 = vld [vmem:[%s188 + $0xf08] sm:$0xff]
        %v733 = vld [vmem:[%s188 + $0xf10] sm:$0xff]
        %v734 = vld [vmem:[%s188 + $0xf18] sm:$0xff]
        %v735 = vld [vmem:[%s188 + $0xf20] sm:$0xff]
        %v736 = vld [vmem:[%s188 + $0xf28] sm:$0xff]
        %v737 = vld [vmem:[%s188 + $0xf30] sm:$0xff]
        %v738 = vld [vmem:[%s188 + $0xf38] sm:$0xff]
        %v739 = vld [vmem:[%s188 + $0xf40] sm:$0xff]
        %v740 = vld [vmem:[%s188 + $0xf48] sm:$0xff]
        %v741 = vld [vmem:[%s188 + $0xf50] sm:$0xff]
        %v742 = vld [vmem:[%s188 + $0xf58] sm:$0xff]
        %v743 = vld [vmem:[%s188 + $0xf60] sm:$0xff]
        %v744 = vld [vmem:[%s188 + $0xf68] sm:$0xff]
        %v745 = vld [vmem:[%s188 + $0xf70] sm:$0xff]
        %v746 = vld [vmem:[%s188 + $0xf78] sm:$0xff]
        %v747 = vld [vmem:[%s188 + $0xf80] sm:$0xff]
        %v748 = vld [vmem:[%s188 + $0xf88] sm:$0xff]
        %v749 = vld [vmem:[%s188 + $0xf90] sm:$0xff]
        %v750 = vld [vmem:[%s188 + $0xf98] sm:$0xff]
        %v751 = vld [vmem:[%s188 + $0xfa0] sm:$0xff]
        %v752 = vld [vmem:[%s188 + $0xfa8] sm:$0xff]
        %v753 = vld [vmem:[%s188 + $0xfb0] sm:$0xff]
        %v754 = vld [vmem:[%s188 + $0xfb8] sm:$0xff]
        %v755 = vld [vmem:[%s188 + $0xfc0] sm:$0xff]
        %v756 = vld [vmem:[%s188 + $0xfc8] sm:$0xff]
        %v757 = vld [vmem:[%s188 + $0xfd0] sm:$0xff]
        %v758 = vld [vmem:[%s188 + $0xfd8] sm:$0xff]
        %v759 = vld [vmem:[%s188 + $0xfe0] sm:$0xff]
        %v760 = vld [vmem:[%s188 + $0xfe8] sm:$0xff]
        %v761 = vld [vmem:[%s188 + $0xff0] sm:$0xff]
        %v762 = vld [vmem:[%s188 + $0xff8] sm:$0xff]
        %v763 = vld [vmem:[%s188 + $0x1000] sm:$0xff]
        %v764 = vld [vmem:[%s188 + $0x1008] sm:$0xff]
        %v765 = vld [vmem:[%s188 + $0x1010] sm:$0xff]
        %v766 = vld [vmem:[%s188 + $0x1018] sm:$0xff]
        %v767 = vld [vmem:[%s188 + $0x1020] sm:$0xff]
        %v768 = vld [vmem:[%s188 + $0x1028] sm:$0xff]
        %v769 = vld [vmem:[%s188 + $0x1030] sm:$0xff]
        %v770 = vld [vmem:[%s188 + $0x1038] sm:$0xff]
        %v771 = vld [vmem:[%s188 + $0x1040] sm:$0xff]
        %v772 = vld [vmem:[%s188 + $0x1048] sm:$0xff]
        %v773 = vld [vmem:[%s188 + $0x1050] sm:$0xff]
        %v774 = vld [vmem:[%s188 + $0x1058] sm:$0xff]
        %v775 = vld [vmem:[%s188 + $0x1060] sm:$0xff]
        %v776 = vld [vmem:[%s188 + $0x1068] sm:$0xff]
        %v777 = vld [vmem:[%s188 + $0x1070] sm:$0xff]
        %v778 = vld [vmem:[%s188 + $0x1078] sm:$0xff]
        %v779 = vld [vmem:[%s188 + $0x1080] sm:$0xff]
        %v780 = vld [vmem:[%s188 + $0x1088] sm:$0xff]
        %v781 = vld [vmem:[%s188 + $0x1090] sm:$0xff]
        %v782 = vld [vmem:[%s188 + $0x1098] sm:$0xff]
        %v783 = vld [vmem:[%s188 + $0x10a0] sm:$0xff]
        %v784 = vld [vmem:[%s188 + $0x10a8] sm:$0xff]
        %v785 = vld [vmem:[%s188 + $0x10b0] sm:$0xff]
        %v786 = vld [vmem:[%s188 + $0x10b8] sm:$0xff]
        %v787 = vld [vmem:[%s188 + $0x10c0] sm:$0xff]
        %v788 = vld [vmem:[%s188 + $0x10c8] sm:$0xff]
        %v789 = vld [vmem:[%s188 + $0x10d0] sm:$0xff]
        %v790 = vld [vmem:[%s188 + $0x10d8] sm:$0xff]
        %v791 = vld [vmem:[%s188 + $0x10e0] sm:$0xff]
        %v792 = vld [vmem:[%s188 + $0x10e8] sm:$0xff]
        %v793 = vld [vmem:[%s188 + $0x10f0] sm:$0xff]
        %v794 = vld [vmem:[%s188 + $0x10f8] sm:$0xff]
        %v795 = vld [vmem:[%s188 + $0x1100] sm:$0xff]
        %v796 = vld [vmem:[%s188 + $0x1108] sm:$0xff]
        %v797 = vld [vmem:[%s188 + $0x1110] sm:$0xff]
        %v798 = vld [vmem:[%s188 + $0x1118] sm:$0xff]
        %v799 = vld [vmem:[%s188 + $0x1120] sm:$0xff]
        %v800 = vld [vmem:[%s188 + $0x1128] sm:$0xff]
        %v801 = vld [vmem:[%s188 + $0x1130] sm:$0xff]
        %v802 = vld [vmem:[%s188 + $0x1138] sm:$0xff]
        %v803 = vld [vmem:[%s188 + $0x1140] sm:$0xff]
        %v804 = vld [vmem:[%s188 + $0x1148] sm:$0xff]
        %v805 = vld [vmem:[%s188 + $0x1150] sm:$0xff]
        %v806 = vld [vmem:[%s188 + $0x1158] sm:$0xff]
        %v807 = vld [vmem:[%s188 + $0x1160] sm:$0xff]
        %v808 = vld [vmem:[%s188 + $0x1168] sm:$0xff]
        %v809 = vld [vmem:[%s188 + $0x1170] sm:$0xff]
        %v810 = vld [vmem:[%s188 + $0x1178] sm:$0xff]
        %v811 = vld [vmem:[%s188 + $0x1180] sm:$0xff]
        %v812 = vld [vmem:[%s188 + $0x1188] sm:$0xff]
        %v813 = vld [vmem:[%s188 + $0x1190] sm:$0xff]
        %v814 = vld [vmem:[%s188 + $0x1198] sm:$0xff]
        %v815 = vld [vmem:[%s188 + $0x11a0] sm:$0xff]
        %v816 = vld [vmem:[%s188 + $0x11a8] sm:$0xff]
        %v817 = vld [vmem:[%s188 + $0x11b0] sm:$0xff]
        %v818 = vld [vmem:[%s188 + $0x11b8] sm:$0xff]
        %v819 = vld [vmem:[%s188 + $0x11c0] sm:$0xff]
        %v820 = vld [vmem:[%s188 + $0x11c8] sm:$0xff]
        %v821 = vld [vmem:[%s188 + $0x11d0] sm:$0xff]
        %v822 = vld [vmem:[%s188 + $0x11d8] sm:$0xff]
        %v823 = vld [vmem:[%s188 + $0x11e0] sm:$0xff]
        %v824 = vld [vmem:[%s188 + $0x11e8] sm:$0xff]
        %v825 = vld [vmem:[%s188 + $0x11f0] sm:$0xff]
        %v826 = vld [vmem:[%s188 + $0x11f8] sm:$0xff]
        %v827 = vld [vmem:[%s188 + $0x1200] sm:$0xff]
        %v828 = vld [vmem:[%s188 + $0x1208] sm:$0xff]
        %v829 = vld [vmem:[%s188 + $0x1210] sm:$0xff]
        %v830 = vld [vmem:[%s188 + $0x1218] sm:$0xff]
        %v831 = vld [vmem:[%s188 + $0x1220] sm:$0xff]
        %v832 = vld [vmem:[%s188 + $0x1228] sm:$0xff]
        %v833 = vld [vmem:[%s188 + $0x1230] sm:$0xff]
        %v834 = vld [vmem:[%s188 + $0x1238] sm:$0xff]
        %v835 = vld [vmem:[%s188 + $0x1240] sm:$0xff]
        %v836 = vld [vmem:[%s188 + $0x1248] sm:$0xff]
        %v837 = vld [vmem:[%s188 + $0x1250] sm:$0xff]
        %v838 = vld [vmem:[%s188 + $0x1258] sm:$0xff]
        %v839 = vld [vmem:[%s188 + $0x1260] sm:$0xff]
        %v840 = vld [vmem:[%s188 + $0x1268] sm:$0xff]
        %v841 = vld [vmem:[%s188 + $0x1270] sm:$0xff]
        %v842 = vld [vmem:[%s188 + $0x1278] sm:$0xff]
        %v843 = vld [vmem:[%s188 + $0x1280] sm:$0xff]
        %v844 = vld [vmem:[%s188 + $0x1288] sm:$0xff]
        %v845 = vld [vmem:[%s188 + $0x1290] sm:$0xff]
        %v846 = vld [vmem:[%s188 + $0x1298] sm:$0xff]
        %v847 = vld [vmem:[%s188 + $0x12a0] sm:$0xff]
        %v848 = vld [vmem:[%s188 + $0x12a8] sm:$0xff]
        %v849 = vld [vmem:[%s188 + $0x12b0] sm:$0xff]
        %v850 = vld [vmem:[%s188 + $0x12b8] sm:$0xff]
        %v851 = vld [vmem:[%s188 + $0x12c0] sm:$0xff]
        %v852 = vld [vmem:[%s188 + $0x12c8] sm:$0xff]
        %v853 = vld [vmem:[%s188 + $0x12d0] sm:$0xff]
        %v854 = vld [vmem:[%s188 + $0x12d8] sm:$0xff]
        %v855 = vld [vmem:[%s188 + $0x12e0] sm:$0xff]
        %v856 = vld [vmem:[%s188 + $0x12e8] sm:$0xff]
        %v857 = vld [vmem:[%s188 + $0x12f0] sm:$0xff]
        %v858 = vld [vmem:[%s188 + $0x12f8] sm:$0xff]
        %v859 = vld [vmem:[%s188 + $0x1300] sm:$0xff]
        %v860 = vld [vmem:[%s188 + $0x1308] sm:$0xff]
        %v861 = vld [vmem:[%s188 + $0x1310] sm:$0xff]
        %v862 = vld [vmem:[%s188 + $0x1318] sm:$0xff]
        %v863 = vld [vmem:[%s188 + $0x1320] sm:$0xff]
        %v864 = vld [vmem:[%s188 + $0x1328] sm:$0xff]
        %v865 = vld [vmem:[%s188 + $0x1330] sm:$0xff]
        %v866 = vld [vmem:[%s188 + $0x1338] sm:$0xff]
        %v867 = vld [vmem:[%s188 + $0x1340] sm:$0xff]
        %v868 = vld [vmem:[%s188 + $0x1348] sm:$0xff]
        %v869 = vld [vmem:[%s188 + $0x1350] sm:$0xff]
        %v870 = vld [vmem:[%s188 + $0x1358] sm:$0xff]
        %v871 = vld [vmem:[%s188 + $0x1360] sm:$0xff]
        %v872 = vld [vmem:[%s188 + $0x1368] sm:$0xff]
        %v873 = vld [vmem:[%s188 + $0x1370] sm:$0xff]
        %v874 = vld [vmem:[%s188 + $0x1378] sm:$0xff]
        %v875 = vld [vmem:[%s188 + $0x1380] sm:$0xff]
        %v876 = vld [vmem:[%s188 + $0x1388] sm:$0xff]
        %v877 = vld [vmem:[%s188 + $0x1390] sm:$0xff]
        %v878 = vld [vmem:[%s188 + $0x1398] sm:$0xff]
        %v879 = vld [vmem:[%s188 + $0x13a0] sm:$0xff]
        %v880 = vld [vmem:[%s188 + $0x13a8] sm:$0xff]
        %v881 = vld [vmem:[%s188 + $0x13b0] sm:$0xff]
        %v882 = vld [vmem:[%s188 + $0x13b8] sm:$0xff]
        %v883 = vld [vmem:[%s188 + $0x13c0] sm:$0xff]
        %v884 = vld [vmem:[%s188 + $0x13c8] sm:$0xff]
        %v885 = vld [vmem:[%s188 + $0x13d0] sm:$0xff]
        %v886 = vld [vmem:[%s188 + $0x13d8] sm:$0xff]
        %v887 = vld [vmem:[%s188 + $0x13e0] sm:$0xff]
        %v888 = vld [vmem:[%s188 + $0x13e8] sm:$0xff]
        %v889 = vld [vmem:[%s188 + $0x13f0] sm:$0xff]
        %v890 = vld [vmem:[%s188 + $0x13f8] sm:$0xff]
        %v891 = vld [vmem:[%s188 + $0x1400] sm:$0xff]
        %v892 = vld [vmem:[%s188 + $0x1408] sm:$0xff]
        %v893 = vld [vmem:[%s188 + $0x1410] sm:$0xff]
        %v894 = vld [vmem:[%s188 + $0x1418] sm:$0xff]
        %v895 = vld [vmem:[%s188 + $0x1420] sm:$0xff]
        %v896 = vld [vmem:[%s188 + $0x1428] sm:$0xff]
        %v897 = vld [vmem:[%s188 + $0x1430] sm:$0xff]
        %v898 = vld [vmem:[%s188 + $0x1438] sm:$0xff]
        %v899 = vld [vmem:[%s188 + $0x1440] sm:$0xff]
        %v900 = vld [vmem:[%s188 + $0x1448] sm:$0xff]
        %v901 = vld [vmem:[%s188 + $0x1450] sm:$0xff]
        %v902 = vld [vmem:[%s188 + $0x1458] sm:$0xff]
        %v903 = vld [vmem:[%s188 + $0x1460] sm:$0xff]
        %v904 = vld [vmem:[%s188 + $0x1468] sm:$0xff]
        %v905 = vld [vmem:[%s188 + $0x1470] sm:$0xff]
        %v906 = vld [vmem:[%s188 + $0x1478] sm:$0xff]
        %v907 = vld [vmem:[%s188 + $0x1480] sm:$0xff]
        %v908 = vld [vmem:[%s188 + $0x1488] sm:$0xff]
        %v909 = vld [vmem:[%s188 + $0x1490] sm:$0xff]
        %v910 = vld [vmem:[%s188 + $0x1498] sm:$0xff]
        %v911 = vld [vmem:[%s188 + $0x14a0] sm:$0xff]
        %v912 = vld [vmem:[%s188 + $0x14a8] sm:$0xff]
        %v913 = vld [vmem:[%s188 + $0x14b0] sm:$0xff]
        %v914 = vld [vmem:[%s188 + $0x14b8] sm:$0xff]
        %v915 = vld [vmem:[%s188 + $0x14c0] sm:$0xff]
        %v916 = vld [vmem:[%s188 + $0x14c8] sm:$0xff]
        %v917 = vld [vmem:[%s188 + $0x14d0] sm:$0xff]
        %v918 = vld [vmem:[%s188 + $0x14d8] sm:$0xff]
        %v919 = vld [vmem:[%s188 + $0x14e0] sm:$0xff]
        %v920 = vld [vmem:[%s188 + $0x14e8] sm:$0xff]
        %v921 = vld [vmem:[%s188 + $0x14f0] sm:$0xff]
        %v922 = vld [vmem:[%s188 + $0x14f8] sm:$0xff]
        %v923 = vld [vmem:[%s188 + $0x1500] sm:$0xff]
        %v924 = vld [vmem:[%s188 + $0x1508] sm:$0xff]
        %v925 = vld [vmem:[%s188 + $0x1510] sm:$0xff]
        %v926 = vld [vmem:[%s188 + $0x1518] sm:$0xff]
        %v927 = vld [vmem:[%s188 + $0x1520] sm:$0xff]
        %v928 = vld [vmem:[%s188 + $0x1528] sm:$0xff]
        %v929 = vld [vmem:[%s188 + $0x1530] sm:$0xff]
        %v930 = vld [vmem:[%s188 + $0x1538] sm:$0xff]
        %v931 = vld [vmem:[%s188 + $0x1540] sm:$0xff]
        %v932 = vld [vmem:[%s188 + $0x1548] sm:$0xff]
        %v933 = vld [vmem:[%s188 + $0x1550] sm:$0xff]
        %v934 = vld [vmem:[%s188 + $0x1558] sm:$0xff]
        %v935 = vld [vmem:[%s188 + $0x1560] sm:$0xff]
        %v936 = vld [vmem:[%s188 + $0x1568] sm:$0xff]
        %v937 = vld [vmem:[%s188 + $0x1570] sm:$0xff]
        %v938 = vld [vmem:[%s188 + $0x1578] sm:$0xff]
        %v939 = vld [vmem:[%s188 + $0x1580] sm:$0xff]
        %v940 = vld [vmem:[%s188 + $0x1588] sm:$0xff]
        %v941 = vld [vmem:[%s188 + $0x1590] sm:$0xff]
        %v942 = vld [vmem:[%s188 + $0x1598] sm:$0xff]
        %v943 = vld [vmem:[%s188 + $0x15a0] sm:$0xff]
        %v944 = vld [vmem:[%s188 + $0x15a8] sm:$0xff]
        %v945 = vld [vmem:[%s188 + $0x15b0] sm:$0xff]
        %v946 = vld [vmem:[%s188 + $0x15b8] sm:$0xff]
        %v947 = vld [vmem:[%s188 + $0x15c0] sm:$0xff]
        %v948 = vld [vmem:[%s188 + $0x15c8] sm:$0xff]
        %v949 = vld [vmem:[%s188 + $0x15d0] sm:$0xff]
        %v950 = vld [vmem:[%s188 + $0x15d8] sm:$0xff]
        %v951 = vld [vmem:[%s188 + $0x15e0] sm:$0xff]
        %v952 = vld [vmem:[%s188 + $0x15e8] sm:$0xff]
        %v953 = vld [vmem:[%s188 + $0x15f0] sm:$0xff]
        %v954 = vld [vmem:[%s188 + $0x15f8] sm:$0xff]
        %v955 = vld [vmem:[%s188 + $0x1600] sm:$0xff]
        %v956 = vld [vmem:[%s188 + $0x1608] sm:$0xff]
        %v957 = vld [vmem:[%s188 + $0x1610] sm:$0xff]
        %v958 = vld [vmem:[%s188 + $0x1618] sm:$0xff]
        %v959 = vld [vmem:[%s188 + $0x1620] sm:$0xff]
        %v960 = vld [vmem:[%s188 + $0x1628] sm:$0xff]
        %v961 = vld [vmem:[%s188 + $0x1630] sm:$0xff]
        %v962 = vld [vmem:[%s188 + $0x1638] sm:$0xff]
        %v963 = vld [vmem:[%s188 + $0x1640] sm:$0xff]
        %v964 = vld [vmem:[%s188 + $0x1648] sm:$0xff]
        %v965 = vld [vmem:[%s188 + $0x1650] sm:$0xff]
        %v966 = vld [vmem:[%s188 + $0x1658] sm:$0xff]
        %v967 = vld [vmem:[%s188 + $0x1660] sm:$0xff]
        %v968 = vld [vmem:[%s188 + $0x1668] sm:$0xff]
        %v969 = vld [vmem:[%s188 + $0x1670] sm:$0xff]
        %v970 = vld [vmem:[%s188 + $0x1678] sm:$0xff]
        %v971 = vld [vmem:[%s188 + $0x1680] sm:$0xff]
        %v972 = vld [vmem:[%s188 + $0x1688] sm:$0xff]
        %v973 = vld [vmem:[%s188 + $0x1690] sm:$0xff]
        %v974 = vld [vmem:[%s188 + $0x1698] sm:$0xff]
        %v975 = vld [vmem:[%s188 + $0x16a0] sm:$0xff]
        %v976 = vld [vmem:[%s188 + $0x16a8] sm:$0xff]
        %v977 = vld [vmem:[%s188 + $0x16b0] sm:$0xff]
        %v978 = vld [vmem:[%s188 + $0x16b8] sm:$0xff]
        %v979 = vld [vmem:[%s188 + $0x16c0] sm:$0xff]
        %v980 = vld [vmem:[%s188 + $0x16c8] sm:$0xff]
        %v981 = vld [vmem:[%s188 + $0x16d0] sm:$0xff]
        %v982 = vld [vmem:[%s188 + $0x16d8] sm:$0xff]
        %v983 = vld [vmem:[%s188 + $0x16e0] sm:$0xff]
        %v984 = vld [vmem:[%s188 + $0x16e8] sm:$0xff]
        %v985 = vld [vmem:[%s188 + $0x16f0] sm:$0xff]
        %v986 = vld [vmem:[%s188 + $0x16f8] sm:$0xff]
        %v987 = vld [vmem:[%s188 + $0x1700] sm:$0xff]
        %v988 = vld [vmem:[%s188 + $0x1708] sm:$0xff]
        %v989 = vld [vmem:[%s188 + $0x1710] sm:$0xff]
        %v990 = vld [vmem:[%s188 + $0x1718] sm:$0xff]
        %v991 = vld [vmem:[%s188 + $0x1720] sm:$0xff]
        %v992 = vld [vmem:[%s188 + $0x1728] sm:$0xff]
        %v993 = vld [vmem:[%s188 + $0x1730] sm:$0xff]
        %v994 = vld [vmem:[%s188 + $0x1738] sm:$0xff]
        %v995 = vld [vmem:[%s188 + $0x1740] sm:$0xff]
        %v996 = vld [vmem:[%s188 + $0x1748] sm:$0xff]
        %v997 = vld [vmem:[%s188 + $0x1750] sm:$0xff]
        %v998 = vld [vmem:[%s188 + $0x1758] sm:$0xff]
        %v999 = vld [vmem:[%s188 + $0x1760] sm:$0xff]
        %v1000 = vld [vmem:[%s188 + $0x1768] sm:$0xff]
        %v1001 = vld [vmem:[%s188 + $0x1770] sm:$0xff]
        %v1002 = vld [vmem:[%s188 + $0x1778] sm:$0xff]
        %v1003 = vld [vmem:[%s188 + $0x1780] sm:$0xff]
        %v1004 = vld [vmem:[%s188 + $0x1788] sm:$0xff]
        %v1005 = vld [vmem:[%s188 + $0x1790] sm:$0xff]
        %v1006 = vld [vmem:[%s188 + $0x1798] sm:$0xff]
        %v1007 = vld [vmem:[%s188 + $0x17a0] sm:$0xff]
        %v1008 = vld [vmem:[%s188 + $0x17a8] sm:$0xff]
        %v1009 = vld [vmem:[%s188 + $0x17b0] sm:$0xff]
        %v1010 = vld [vmem:[%s188 + $0x17b8] sm:$0xff]
        %v1011 = vld [vmem:[%s188 + $0x17c0] sm:$0xff]
        %v1012 = vld [vmem:[%s188 + $0x17c8] sm:$0xff]
        %v1013 = vld [vmem:[%s188 + $0x17d0] sm:$0xff]
        %v1014 = vld [vmem:[%s188 + $0x17d8] sm:$0xff]
        %v1015 = vld [vmem:[%s188 + $0x17e0] sm:$0xff]
        %v1016 = vld [vmem:[%s188 + $0x17e8] sm:$0xff]
        %v1017 = vld [vmem:[%s188 + $0x17f0] sm:$0xff]
        %v1018 = vld [vmem:[%s188 + $0x17f8] sm:$0xff]
        %v1019 = vld [vmem:[%s188 + $0x1800] sm:$0xff]
        %v1020 = vld [vmem:[%s188 + $0x1808] sm:$0xff]
        %v1021 = vld [vmem:[%s188 + $0x1810] sm:$0xff]
        %v1022 = vld [vmem:[%s188 + $0x1818] sm:$0xff]
        %v1023 = vld [vmem:[%s188 + $0x1820] sm:$0xff]
        %v1024 = vld [vmem:[%s188 + $0x1828] sm:$0xff]
        %v1025 = vld [vmem:[%s188 + $0x1830] sm:$0xff]
        %v1026 = vld [vmem:[%s188 + $0x1838] sm:$0xff]
        %v1027 = vld [vmem:[%s188 + $0x1840] sm:$0xff]
        %v1028 = vld [vmem:[%s188 + $0x1848] sm:$0xff]
        %v1029 = vld [vmem:[%s188 + $0x1850] sm:$0xff]
        %v1030 = vld [vmem:[%s188 + $0x1858] sm:$0xff]
        %v1031 = vld [vmem:[%s188 + $0x1860] sm:$0xff]
        %v1032 = vld [vmem:[%s188 + $0x1868] sm:$0xff]
        %v1033 = vld [vmem:[%s188 + $0x1870] sm:$0xff]
        %v1034 = vld [vmem:[%s188 + $0x1878] sm:$0xff]
        %v1035 = vld [vmem:[%s188 + $0x1880] sm:$0xff]
        %v1036 = vld [vmem:[%s188 + $0x1888] sm:$0xff]
        %v1037 = vld [vmem:[%s188 + $0x1890] sm:$0xff]
        %v1038 = vld [vmem:[%s188 + $0x1898] sm:$0xff]
        %v1039 = vld [vmem:[%s188 + $0x18a0] sm:$0xff]
        %v1040 = vld [vmem:[%s188 + $0x18a8] sm:$0xff]
        %v1041 = vld [vmem:[%s188 + $0x18b0] sm:$0xff]
        %v1042 = vld [vmem:[%s188 + $0x18b8] sm:$0xff]
        %v1043 = vld [vmem:[%s188 + $0x18c0] sm:$0xff]
        %v1044 = vld [vmem:[%s188 + $0x18c8] sm:$0xff]
        %v1045 = vld [vmem:[%s188 + $0x18d0] sm:$0xff]
        %v1046 = vld [vmem:[%s188 + $0x18d8] sm:$0xff]
        %v1047 = vld [vmem:[%s188 + $0x18e0] sm:$0xff]
        %v1048 = vld [vmem:[%s188 + $0x18e8] sm:$0xff]
        %v1049 = vld [vmem:[%s188 + $0x18f0] sm:$0xff]
        %v1050 = vld [vmem:[%s188 + $0x18f8] sm:$0xff]
        %v1051 = vld [vmem:[%s188 + $0x1900] sm:$0xff]
        %v1052 = vld [vmem:[%s188 + $0x1908] sm:$0xff]
        %v1053 = vld [vmem:[%s188 + $0x1910] sm:$0xff]
        %v1054 = vld [vmem:[%s188 + $0x1918] sm:$0xff]
        %v1055 = vld [vmem:[%s188 + $0x1920] sm:$0xff]
        %v1056 = vld [vmem:[%s188 + $0x1928] sm:$0xff]
        %v1057 = vld [vmem:[%s188 + $0x1930] sm:$0xff]
        %v1058 = vld [vmem:[%s188 + $0x1938] sm:$0xff]
        %v1059 = vld [vmem:[%s188 + $0x1940] sm:$0xff]
        %v1060 = vld [vmem:[%s188 + $0x1948] sm:$0xff]
        %v1061 = vld [vmem:[%s188 + $0x1950] sm:$0xff]
        %v1062 = vld [vmem:[%s188 + $0x1958] sm:$0xff]
        %v1063 = vld [vmem:[%s188 + $0x1960] sm:$0xff]
        %v1064 = vld [vmem:[%s188 + $0x1968] sm:$0xff]
        %v1065 = vld [vmem:[%s188 + $0x1970] sm:$0xff]
        %v1066 = vld [vmem:[%s188 + $0x1978] sm:$0xff]
        %v1067 = vld [vmem:[%s188 + $0x1980] sm:$0xff]
        %v1068 = vld [vmem:[%s188 + $0x1988] sm:$0xff]
        %v1069 = vld [vmem:[%s188 + $0x1990] sm:$0xff]
        %v1070 = vld [vmem:[%s188 + $0x1998] sm:$0xff]
        %v1071 = vld [vmem:[%s188 + $0x19a0] sm:$0xff]
        %v1072 = vld [vmem:[%s188 + $0x19a8] sm:$0xff]
        %v1073 = vld [vmem:[%s188 + $0x19b0] sm:$0xff]
        %v1074 = vld [vmem:[%s188 + $0x19b8] sm:$0xff]
        %v1075 = vld [vmem:[%s188 + $0x19c0] sm:$0xff]
        %v1076 = vld [vmem:[%s188 + $0x19c8] sm:$0xff]
        %v1077 = vld [vmem:[%s188 + $0x19d0] sm:$0xff]
        %v1078 = vld [vmem:[%s188 + $0x19d8] sm:$0xff]
        %v1079 = vld [vmem:[%s188 + $0x19e0] sm:$0xff]
        %v1080 = vld [vmem:[%s188 + $0x19e8] sm:$0xff]
        %v1081 = vld [vmem:[%s188 + $0x19f0] sm:$0xff]
        %v1082 = vld [vmem:[%s188 + $0x19f8] sm:$0xff]
        %v1083 = vld [vmem:[%s188 + $0x1a00] sm:$0xff]
        %v1084 = vld [vmem:[%s188 + $0x1a08] sm:$0xff]
        %v1085 = vld [vmem:[%s188 + $0x1a10] sm:$0xff]
        %v1086 = vld [vmem:[%s188 + $0x1a18] sm:$0xff]
        %v1087 = vld [vmem:[%s188 + $0x1a20] sm:$0xff]
        %v1088 = vld [vmem:[%s188 + $0x1a28] sm:$0xff]
        %v1089 = vld [vmem:[%s188 + $0x1a30] sm:$0xff]
        %v1090 = vld [vmem:[%s188 + $0x1a38] sm:$0xff]
        %v1091 = vld [vmem:[%s188 + $0x1a40] sm:$0xff]
        %v1092 = vld [vmem:[%s188 + $0x1a48] sm:$0xff]
        %v1093 = vld [vmem:[%s188 + $0x1a50] sm:$0xff]
        %v1094 = vld [vmem:[%s188 + $0x1a58] sm:$0xff]
        %v1095 = vld [vmem:[%s188 + $0x1a60] sm:$0xff]
        %v1096 = vld [vmem:[%s188 + $0x1a68] sm:$0xff]
        %v1097 = vld [vmem:[%s188 + $0x1a70] sm:$0xff]
        %v1098 = vld [vmem:[%s188 + $0x1a78] sm:$0xff]
        %v1099 = vld [vmem:[%s188 + $0x1a80] sm:$0xff]
        %v1100 = vld [vmem:[%s188 + $0x1a88] sm:$0xff]
        %v1101 = vld [vmem:[%s188 + $0x1a90] sm:$0xff]
        %v1102 = vld [vmem:[%s188 + $0x1a98] sm:$0xff]
        %v1103 = vld [vmem:[%s188 + $0x1aa0] sm:$0xff]
        %v1104 = vld [vmem:[%s188 + $0x1aa8] sm:$0xff]
        %v1105 = vld [vmem:[%s188 + $0x1ab0] sm:$0xff]
        %v1106 = vld [vmem:[%s188 + $0x1ab8] sm:$0xff]
        %v1107 = vld [vmem:[%s188 + $0x1ac0] sm:$0xff]
        %v1108 = vld [vmem:[%s188 + $0x1ac8] sm:$0xff]
        %v1109 = vld [vmem:[%s188 + $0x1ad0] sm:$0xff]
        %v1110 = vld [vmem:[%s188 + $0x1ad8] sm:$0xff]
        %v1111 = vld [vmem:[%s188 + $0x1ae0] sm:$0xff]
        %v1112 = vld [vmem:[%s188 + $0x1ae8] sm:$0xff]
        %v1113 = vld [vmem:[%s188 + $0x1af0] sm:$0xff]
        %v1114 = vld [vmem:[%s188 + $0x1af8] sm:$0xff]
        %v1115 = vld [vmem:[%s188 + $0x1b00] sm:$0xff]
        %v1116 = vld [vmem:[%s188 + $0x1b08] sm:$0xff]
        %v1117 = vld [vmem:[%s188 + $0x1b10] sm:$0xff]
        %v1118 = vld [vmem:[%s188 + $0x1b18] sm:$0xff]
        %v1119 = vld [vmem:[%s188 + $0x1b20] sm:$0xff]
        %v1120 = vld [vmem:[%s188 + $0x1b28] sm:$0xff]
        %v1121 = vld [vmem:[%s188 + $0x1b30] sm:$0xff]
        %v1122 = vld [vmem:[%s188 + $0x1b38] sm:$0xff]
        %v1123 = vld [vmem:[%s188 + $0x1b40] sm:$0xff]
        %v1124 = vld [vmem:[%s188 + $0x1b48] sm:$0xff]
        %v1125 = vld [vmem:[%s188 + $0x1b50] sm:$0xff]
        %v1126 = vld [vmem:[%s188 + $0x1b58] sm:$0xff]
        %v1127 = vld [vmem:[%s188 + $0x1b60] sm:$0xff]
        %v1128 = vld [vmem:[%s188 + $0x1b68] sm:$0xff]
        %v1129 = vld [vmem:[%s188 + $0x1b70] sm:$0xff]
        %v1130 = vld [vmem:[%s188 + $0x1b78] sm:$0xff]
        %v1131 = vld [vmem:[%s188 + $0x1b80] sm:$0xff]
        %v1132 = vld [vmem:[%s188 + $0x1b88] sm:$0xff]
        %v1133 = vld [vmem:[%s188 + $0x1b90] sm:$0xff]
        %v1134 = vld [vmem:[%s188 + $0x1b98] sm:$0xff]
        %v1135 = vld [vmem:[%s188 + $0x1ba0] sm:$0xff]
        %v1136 = vld [vmem:[%s188 + $0x1ba8] sm:$0xff]
        %v1137 = vld [vmem:[%s188 + $0x1bb0] sm:$0xff]
        %v1138 = vld [vmem:[%s188 + $0x1bb8] sm:$0xff]
        %v1139 = vld [vmem:[%s188 + $0x1bc0] sm:$0xff]
        %v1140 = vld [vmem:[%s188 + $0x1bc8] sm:$0xff]
        %v1141 = vld [vmem:[%s188 + $0x1bd0] sm:$0xff]
        %v1142 = vld [vmem:[%s188 + $0x1bd8] sm:$0xff]
        %v1143 = vld [vmem:[%s188 + $0x1be0] sm:$0xff]
        %v1144 = vld [vmem:[%s188 + $0x1be8] sm:$0xff]
        %v1145 = vld [vmem:[%s188 + $0x1bf0] sm:$0xff]
        %v1146 = vld [vmem:[%s188 + $0x1bf8] sm:$0xff]
        %v1147 = vld [vmem:[%s188 + $0x1c00] sm:$0xff]
        %v1148 = vld [vmem:[%s188 + $0x1c08] sm:$0xff]
        %v1149 = vld [vmem:[%s188 + $0x1c10] sm:$0xff]
        %v1150 = vld [vmem:[%s188 + $0x1c18] sm:$0xff]
        %v1151 = vld [vmem:[%s188 + $0x1c20] sm:$0xff]
        %v1152 = vld [vmem:[%s188 + $0x1c28] sm:$0xff]
        %v1153 = vld [vmem:[%s188 + $0x1c30] sm:$0xff]
        %v1154 = vld [vmem:[%s188 + $0x1c38] sm:$0xff]
        %v1155 = vld [vmem:[%s188 + $0x1c40] sm:$0xff]
        %v1156 = vld [vmem:[%s188 + $0x1c48] sm:$0xff]
        %v1157 = vld [vmem:[%s188 + $0x1c50] sm:$0xff]
        %v1158 = vld [vmem:[%s188 + $0x1c58] sm:$0xff]
        %v1159 = vld [vmem:[%s188 + $0x1c60] sm:$0xff]
        %v1160 = vld [vmem:[%s188 + $0x1c68] sm:$0xff]
        %v1161 = vld [vmem:[%s188 + $0x1c70] sm:$0xff]
        %v1162 = vld [vmem:[%s188 + $0x1c78] sm:$0xff]
        %v1163 = vld [vmem:[%s188 + $0x1c80] sm:$0xff]
        %v1164 = vld [vmem:[%s188 + $0x1c88] sm:$0xff]
        %v1165 = vld [vmem:[%s188 + $0x1c90] sm:$0xff]
        %v1166 = vld [vmem:[%s188 + $0x1c98] sm:$0xff]
        %v1167 = vld [vmem:[%s188 + $0x1ca0] sm:$0xff]
        %v1168 = vld [vmem:[%s188 + $0x1ca8] sm:$0xff]
        %v1169 = vld [vmem:[%s188 + $0x1cb0] sm:$0xff]
        %v1170 = vld [vmem:[%s188 + $0x1cb8] sm:$0xff]
        %v1171 = vld [vmem:[%s188 + $0x1cc0] sm:$0xff]
        %v1172 = vld [vmem:[%s188 + $0x1cc8] sm:$0xff]
        %v1173 = vld [vmem:[%s188 + $0x1cd0] sm:$0xff]
        %v1174 = vld [vmem:[%s188 + $0x1cd8] sm:$0xff]
        %v1175 = vld [vmem:[%s188 + $0x1ce0] sm:$0xff]
        %v1176 = vld [vmem:[%s188 + $0x1ce8] sm:$0xff]
        %v1177 = vld [vmem:[%s188 + $0x1cf0] sm:$0xff]
        %v1178 = vld [vmem:[%s188 + $0x1cf8] sm:$0xff]
        %v1179 = vld [vmem:[%s188 + $0x1d00] sm:$0xff]
        %v1180 = vld [vmem:[%s188 + $0x1d08] sm:$0xff]
        %v1181 = vld [vmem:[%s188 + $0x1d10] sm:$0xff]
        %v1182 = vld [vmem:[%s188 + $0x1d18] sm:$0xff]
        %v1183 = vld [vmem:[%s188 + $0x1d20] sm:$0xff]
        %v1184 = vld [vmem:[%s188 + $0x1d28] sm:$0xff]
        %v1185 = vld [vmem:[%s188 + $0x1d30] sm:$0xff]
        %v1186 = vld [vmem:[%s188 + $0x1d38] sm:$0xff]
        %v1187 = vld [vmem:[%s188 + $0x1d40] sm:$0xff]
        %v1188 = vld [vmem:[%s188 + $0x1d48] sm:$0xff]
        %v1189 = vld [vmem:[%s188 + $0x1d50] sm:$0xff]
        %v1190 = vld [vmem:[%s188 + $0x1d58] sm:$0xff]
        %v1191 = vld [vmem:[%s188 + $0x1d60] sm:$0xff]
        %v1192 = vld [vmem:[%s188 + $0x1d68] sm:$0xff]
        %v1193 = vld [vmem:[%s188 + $0x1d70] sm:$0xff]
        %v1194 = vld [vmem:[%s188 + $0x1d78] sm:$0xff]
        %v1195 = vld [vmem:[%s188 + $0x1d80] sm:$0xff]
        %v1196 = vld [vmem:[%s188 + $0x1d88] sm:$0xff]
        %v1197 = vld [vmem:[%s188 + $0x1d90] sm:$0xff]
        %v1198 = vld [vmem:[%s188 + $0x1d98] sm:$0xff]
        %v1199 = vld [vmem:[%s188 + $0x1da0] sm:$0xff]
        %v1200 = vld [vmem:[%s188 + $0x1da8] sm:$0xff]
        %v1201 = vld [vmem:[%s188 + $0x1db0] sm:$0xff]
        %v1202 = vld [vmem:[%s188 + $0x1db8] sm:$0xff]
        %v1203 = vld [vmem:[%s188 + $0x1dc0] sm:$0xff]
        %v1204 = vld [vmem:[%s188 + $0x1dc8] sm:$0xff]
        %v1205 = vld [vmem:[%s188 + $0x1dd0] sm:$0xff]
        %v1206 = vld [vmem:[%s188 + $0x1dd8] sm:$0xff]
        %v1207 = vld [vmem:[%s188 + $0x1de0] sm:$0xff]
        %v1208 = vld [vmem:[%s188 + $0x1de8] sm:$0xff]
        %v1209 = vld [vmem:[%s188 + $0x1df0] sm:$0xff]
        %v1210 = vld [vmem:[%s188 + $0x1df8] sm:$0xff]
        %v1211 = vld [vmem:[%s188 + $0x1e00] sm:$0xff]
        %v1212 = vld [vmem:[%s188 + $0x1e08] sm:$0xff]
        %v1213 = vld [vmem:[%s188 + $0x1e10] sm:$0xff]
        %v1214 = vld [vmem:[%s188 + $0x1e18] sm:$0xff]
        %v1215 = vld [vmem:[%s188 + $0x1e20] sm:$0xff]
        %v1216 = vld [vmem:[%s188 + $0x1e28] sm:$0xff]
        %v1217 = vld [vmem:[%s188 + $0x1e30] sm:$0xff]
        %v1218 = vld [vmem:[%s188 + $0x1e38] sm:$0xff]
        %v1219 = vld [vmem:[%s188 + $0x1e40] sm:$0xff]
        %v1220 = vld [vmem:[%s188 + $0x1e48] sm:$0xff]
        %v1221 = vld [vmem:[%s188 + $0x1e50] sm:$0xff]
        %v1222 = vld [vmem:[%s188 + $0x1e58] sm:$0xff]
        %v1223 = vld [vmem:[%s188 + $0x1e60] sm:$0xff]
        %v1224 = vld [vmem:[%s188 + $0x1e68] sm:$0xff]
        %v1225 = vld [vmem:[%s188 + $0x1e70] sm:$0xff]
        %v1226 = vld [vmem:[%s188 + $0x1e78] sm:$0xff]
        %v1227 = vld [vmem:[%s188 + $0x1e80] sm:$0xff]
        %v1228 = vld [vmem:[%s188 + $0x1e88] sm:$0xff]
        %v1229 = vld [vmem:[%s188 + $0x1e90] sm:$0xff]
        %v1230 = vld [vmem:[%s188 + $0x1e98] sm:$0xff]
        %v1231 = vld [vmem:[%s188 + $0x1ea0] sm:$0xff]
        %v1232 = vld [vmem:[%s188 + $0x1ea8] sm:$0xff]
        %v1233 = vld [vmem:[%s188 + $0x1eb0] sm:$0xff]
        %v1234 = vld [vmem:[%s188 + $0x1eb8] sm:$0xff]
        %v1235 = vld [vmem:[%s188 + $0x1ec0] sm:$0xff]
        %v1236 = vld [vmem:[%s188 + $0x1ec8] sm:$0xff]
        %v1237 = vld [vmem:[%s188 + $0x1ed0] sm:$0xff]
        %v1238 = vld [vmem:[%s188 + $0x1ed8] sm:$0xff]
        %v1239 = vld [vmem:[%s188 + $0x1ee0] sm:$0xff]
        %v1240 = vld [vmem:[%s188 + $0x1ee8] sm:$0xff]
        %v1241 = vld [vmem:[%s188 + $0x1ef0] sm:$0xff]
        %v1242 = vld [vmem:[%s188 + $0x1ef8] sm:$0xff]
        %v1243 = vld [vmem:[%s188 + $0x1f00] sm:$0xff]
        %v1244 = vld [vmem:[%s188 + $0x1f08] sm:$0xff]
        %v1245 = vld [vmem:[%s188 + $0x1f10] sm:$0xff]
        %v1246 = vld [vmem:[%s188 + $0x1f18] sm:$0xff]
        %v1247 = vld [vmem:[%s188 + $0x1f20] sm:$0xff]
        %v1248 = vld [vmem:[%s188 + $0x1f28] sm:$0xff]
        %v1249 = vld [vmem:[%s188 + $0x1f30] sm:$0xff]
        %v1250 = vld [vmem:[%s188 + $0x1f38] sm:$0xff]
        %v1251 = vld [vmem:[%s188 + $0x1f40] sm:$0xff]
        %v1252 = vld [vmem:[%s188 + $0x1f48] sm:$0xff]
        %v1253 = vld [vmem:[%s188 + $0x1f50] sm:$0xff]
        %v1254 = vld [vmem:[%s188 + $0x1f58] sm:$0xff]
        %v1255 = vld [vmem:[%s188 + $0x1f60] sm:$0xff]
        %v1256 = vld [vmem:[%s188 + $0x1f68] sm:$0xff]
        %v1257 = vld [vmem:[%s188 + $0x1f70] sm:$0xff]
        %v1258 = vld [vmem:[%s188 + $0x1f78] sm:$0xff]
        %v1259 = vld [vmem:[%s188 + $0x1f80] sm:$0xff]
        %v1260 = vld [vmem:[%s188 + $0x1f88] sm:$0xff]
        %v1261 = vld [vmem:[%s188 + $0x1f90] sm:$0xff]
        %v1262 = vld [vmem:[%s188 + $0x1f98] sm:$0xff]
        %v1263 = vld [vmem:[%s188 + $0x1fa0] sm:$0xff]
        %v1264 = vld [vmem:[%s188 + $0x1fa8] sm:$0xff]
        %v1265 = vld [vmem:[%s188 + $0x1fb0] sm:$0xff]
        %v1266 = vld [vmem:[%s188 + $0x1fb8] sm:$0xff]
        %v1267 = vld [vmem:[%s188 + $0x1fc0] sm:$0xff]
        %v1268 = vld [vmem:[%s188 + $0x1fc8] sm:$0xff]
        %v1269 = vld [vmem:[%s188 + $0x1fd0] sm:$0xff]
        %v1270 = vld [vmem:[%s188 + $0x1fd8] sm:$0xff]
        %v1271 = vld [vmem:[%s188 + $0x1fe0] sm:$0xff]
        %v1272 = vld [vmem:[%s188 + $0x1fe8] sm:$0xff]
        %v1273 = vld [vmem:[%s188 + $0x1ff0] sm:$0xff]
        %v1274 = vld [vmem:[%s188 + $0x1ff8] sm:$0xff]
        %v1275 = vld [vmem:[%s198] sm:$0xf]
        %v1277 = vperm.slane %v1275, 0
        %v1278 = vperm.slane %v1275, 1
        %v1279 = vperm.slane %v1275, 2
        %v1280 = vperm.slane %v1275, 3
        %1285 = vmatpush.msra.mxu0 %v311
        %1286 = vmatpush.msra.mxu0 %v307
        %1287 = vmatpush.msra.mxu0 %v303
        %1288 = vmatpush.msra.mxu0 %v299
        %1289 = vmatpush.msra.mxu0 %v295
        %1290 = vmatpush.msra.mxu0 %v291
        %1291 = vmatpush.msra.mxu0 %v287
        %1292 = vmatpush.msra.mxu0 %v283
        %1293 = vmatpush.msra.mxu0 %v279
        %1294 = vmatpush.msra.mxu0 %v275
        %1295 = vmatpush.msra.mxu0 %v271
        %1296 = vmatpush.msra.mxu0 %v267
        %1297 = vmatpush.msra.mxu0 %v263
        %1298 = vmatpush.msra.mxu0 %v259
        %1299 = vmatpush.msra.mxu0 %v255
        %1300 = vmatpush.msra.mxu0 %v251
        %1301 = vmatmul.f32.gmra.mxu0 %v235
        %v1302 = vpop.f32.mrf.mxu0
        %v1303 = vadd.f32 %v1277, %v1302
        %1304 = vdwg.mxu0
        %1305 = vmatpush.msra.mxu0 %v375
        %1306 = vmatpush.msra.mxu0 %v371
        %1307 = vmatpush.msra.mxu0 %v367
        %1308 = vmatpush.msra.mxu0 %v363
        %1309 = vmatpush.msra.mxu0 %v359
        %1310 = vmatpush.msra.mxu0 %v355
        %1311 = vmatpush.msra.mxu0 %v351
        %1312 = vmatpush.msra.mxu0 %v347
        %1313 = vmatpush.msra.mxu0 %v343
        %1314 = vmatpush.msra.mxu0 %v339
        %1315 = vmatpush.msra.mxu0 %v335
        %1316 = vmatpush.msra.mxu0 %v331
        %1317 = vmatpush.msra.mxu0 %v327
        %1318 = vmatpush.msra.mxu0 %v323
        %1319 = vmatpush.msra.mxu0 %v319
        %1320 = vmatpush.msra.mxu0 %v315
        %1321 = vmatmul.f32.gmra.mxu0 %v236
        %v1322 = vpop.f32.mrf.mxu0
        %v1323 = vadd.f32 %v1303, %v1322
        %1324 = vdwg.mxu0
        %1325 = vmatpush.msra.mxu0 %v439
        %1326 = vmatpush.msra.mxu0 %v435
        %1327 = vmatpush.msra.mxu0 %v431
        %1328 = vmatpush.msra.mxu0 %v427
        %1329 = vmatpush.msra.mxu0 %v423
        %1330 = vmatpush.msra.mxu0 %v419
        %1331 = vmatpush.msra.mxu0 %v415
        %1332 = vmatpush.msra.mxu0 %v411
        %1333 = vmatpush.msra.mxu0 %v407
        %1334 = vmatpush.msra.mxu0 %v403
        %1335 = vmatpush.msra.mxu0 %v399
        %1336 = vmatpush.msra.mxu0 %v395
        %1337 = vmatpush.msra.mxu0 %v391
        %1338 = vmatpush.msra.mxu0 %v387
        %1339 = vmatpush.msra.mxu0 %v383
        %1340 = vmatpush.msra.mxu0 %v379
        %1341 = vmatmul.f32.gmra.mxu0 %v237
        %v1342 = vpop.f32.mrf.mxu0
        %v1343 = vadd.f32 %v1323, %v1342
        %1344 = vdwg.mxu0
        %1345 = vmatpush.msra.mxu0 %v503
        %1346 = vmatpush.msra.mxu0 %v499
        %1347 = vmatpush.msra.mxu0 %v495
        %1348 = vmatpush.msra.mxu0 %v491
        %1349 = vmatpush.msra.mxu0 %v487
        %1350 = vmatpush.msra.mxu0 %v483
        %1351 = vmatpush.msra.mxu0 %v479
        %1352 = vmatpush.msra.mxu0 %v475
        %1353 = vmatpush.msra.mxu0 %v471
        %1354 = vmatpush.msra.mxu0 %v467
        %1355 = vmatpush.msra.mxu0 %v463
        %1356 = vmatpush.msra.mxu0 %v459
        %1357 = vmatpush.msra.mxu0 %v455
        %1358 = vmatpush.msra.mxu0 %v451
        %1359 = vmatpush.msra.mxu0 %v447
        %1360 = vmatpush.msra.mxu0 %v443
        %1361 = vmatmul.f32.gmra.mxu0 %v238
        %v1362 = vpop.f32.mrf.mxu0
        %v1363 = vadd.f32 %v1343, %v1362
        %1364 = vdwg.mxu0
        %1365 = vmatpush.msra.mxu0 %v567
        %1366 = vmatpush.msra.mxu0 %v563
        %1367 = vmatpush.msra.mxu0 %v559
        %1368 = vmatpush.msra.mxu0 %v555
        %1369 = vmatpush.msra.mxu0 %v551
        %1370 = vmatpush.msra.mxu0 %v547
        %1371 = vmatpush.msra.mxu0 %v543
        %1372 = vmatpush.msra.mxu0 %v539
        %1373 = vmatpush.msra.mxu0 %v535
        %1374 = vmatpush.msra.mxu0 %v531
        %1375 = vmatpush.msra.mxu0 %v527
        %1376 = vmatpush.msra.mxu0 %v523
        %1377 = vmatpush.msra.mxu0 %v519
        %1378 = vmatpush.msra.mxu0 %v515
        %1379 = vmatpush.msra.mxu0 %v511
        %1380 = vmatpush.msra.mxu0 %v507
        %1381 = vmatmul.f32.gmra.mxu0 %v239
        %v1382 = vpop.f32.mrf.mxu0
        %v1383 = vadd.f32 %v1363, %v1382
        %1384 = vdwg.mxu0
        %1385 = vmatpush.msra.mxu0 %v631
        %1386 = vmatpush.msra.mxu0 %v627
        %1387 = vmatpush.msra.mxu0 %v623
        %1388 = vmatpush.msra.mxu0 %v619
        %1389 = vmatpush.msra.mxu0 %v615
        %1390 = vmatpush.msra.mxu0 %v611
        %1391 = vmatpush.msra.mxu0 %v607
        %1392 = vmatpush.msra.mxu0 %v603
        %1393 = vmatpush.msra.mxu0 %v599
        %1394 = vmatpush.msra.mxu0 %v595
        %1395 = vmatpush.msra.mxu0 %v591
        %1396 = vmatpush.msra.mxu0 %v587
        %1397 = vmatpush.msra.mxu0 %v583
        %1398 = vmatpush.msra.mxu0 %v579
        %1399 = vmatpush.msra.mxu0 %v575
        %1400 = vmatpush.msra.mxu0 %v571
        %1401 = vmatmul.f32.gmra.mxu0 %v240
        %v1402 = vpop.f32.mrf.mxu0
        %v1403 = vadd.f32 %v1383, %v1402
        %1404 = vdwg.mxu0
        %1405 = vmatpush.msra.mxu0 %v695
        %1406 = vmatpush.msra.mxu0 %v691
        %1407 = vmatpush.msra.mxu0 %v687
        %1408 = vmatpush.msra.mxu0 %v683
        %1409 = vmatpush.msra.mxu0 %v679
        %1410 = vmatpush.msra.mxu0 %v675
        %1411 = vmatpush.msra.mxu0 %v671
        %1412 = vmatpush.msra.mxu0 %v667
        %1413 = vmatpush.msra.mxu0 %v663
        %1414 = vmatpush.msra.mxu0 %v659
        %1415 = vmatpush.msra.mxu0 %v655
        %1416 = vmatpush.msra.mxu0 %v651
        %1417 = vmatpush.msra.mxu0 %v647
        %1418 = vmatpush.msra.mxu0 %v643
        %1419 = vmatpush.msra.mxu0 %v639
        %1420 = vmatpush.msra.mxu0 %v635
        %1421 = vmatmul.f32.gmra.mxu0 %v241
        %v1422 = vpop.f32.mrf.mxu0
        %v1423 = vadd.f32 %v1403, %v1422
        %1424 = vdwg.mxu0
        %1425 = vmatpush.msra.mxu0 %v759
        %1426 = vmatpush.msra.mxu0 %v755
        %1427 = vmatpush.msra.mxu0 %v751
        %1428 = vmatpush.msra.mxu0 %v747
        %1429 = vmatpush.msra.mxu0 %v743
        %1430 = vmatpush.msra.mxu0 %v739
        %1431 = vmatpush.msra.mxu0 %v735
        %1432 = vmatpush.msra.mxu0 %v731
        %1433 = vmatpush.msra.mxu0 %v727
        %1434 = vmatpush.msra.mxu0 %v723
        %1435 = vmatpush.msra.mxu0 %v719
        %1436 = vmatpush.msra.mxu0 %v715
        %1437 = vmatpush.msra.mxu0 %v711
        %1438 = vmatpush.msra.mxu0 %v707
        %1439 = vmatpush.msra.mxu0 %v703
        %1440 = vmatpush.msra.mxu0 %v699
        %1441 = vmatmul.f32.gmra.mxu0 %v242
        %v1442 = vpop.f32.mrf.mxu0
        %v1443 = vadd.f32 %v1423, %v1442
        %1444 = vdwg.mxu0
        %1445 = vmatpush.msra.mxu0 %v823
        %1446 = vmatpush.msra.mxu0 %v819
        %1447 = vmatpush.msra.mxu0 %v815
        %1448 = vmatpush.msra.mxu0 %v811
        %1449 = vmatpush.msra.mxu0 %v807
        %1450 = vmatpush.msra.mxu0 %v803
        %1451 = vmatpush.msra.mxu0 %v799
        %1452 = vmatpush.msra.mxu0 %v795
        %1453 = vmatpush.msra.mxu0 %v791
        %1454 = vmatpush.msra.mxu0 %v787
        %1455 = vmatpush.msra.mxu0 %v783
        %1456 = vmatpush.msra.mxu0 %v779
        %1457 = vmatpush.msra.mxu0 %v775
        %1458 = vmatpush.msra.mxu0 %v771
        %1459 = vmatpush.msra.mxu0 %v767
        %1460 = vmatpush.msra.mxu0 %v763
        %1461 = vmatmul.f32.gmra.mxu0 %v243
        %v1462 = vpop.f32.mrf.mxu0
        %v1463 = vadd.f32 %v1443, %v1462
        %1464 = vdwg.mxu0
        %1465 = vmatpush.msra.mxu0 %v887
        %1466 = vmatpush.msra.mxu0 %v883
        %1467 = vmatpush.msra.mxu0 %v879
        %1468 = vmatpush.msra.mxu0 %v875
        %1469 = vmatpush.msra.mxu0 %v871
        %1470 = vmatpush.msra.mxu0 %v867
        %1471 = vmatpush.msra.mxu0 %v863
        %1472 = vmatpush.msra.mxu0 %v859
        %1473 = vmatpush.msra.mxu0 %v855
        %1474 = vmatpush.msra.mxu0 %v851
        %1475 = vmatpush.msra.mxu0 %v847
        %1476 = vmatpush.msra.mxu0 %v843
        %1477 = vmatpush.msra.mxu0 %v839
        %1478 = vmatpush.msra.mxu0 %v835
        %1479 = vmatpush.msra.mxu0 %v831
        %1480 = vmatpush.msra.mxu0 %v827
        %1481 = vmatmul.f32.gmra.mxu0 %v244
        %v1482 = vpop.f32.mrf.mxu0
        %v1483 = vadd.f32 %v1463, %v1482
        %1484 = vdwg.mxu0
        %1485 = vmatpush.msra.mxu0 %v951
        %1486 = vmatpush.msra.mxu0 %v947
        %1487 = vmatpush.msra.mxu0 %v943
        %1488 = vmatpush.msra.mxu0 %v939
        %1489 = vmatpush.msra.mxu0 %v935
        %1490 = vmatpush.msra.mxu0 %v931
        %1491 = vmatpush.msra.mxu0 %v927
        %1492 = vmatpush.msra.mxu0 %v923
        %1493 = vmatpush.msra.mxu0 %v919
        %1494 = vmatpush.msra.mxu0 %v915
        %1495 = vmatpush.msra.mxu0 %v911
        %1496 = vmatpush.msra.mxu0 %v907
        %1497 = vmatpush.msra.mxu0 %v903
        %1498 = vmatpush.msra.mxu0 %v899
        %1499 = vmatpush.msra.mxu0 %v895
        %1500 = vmatpush.msra.mxu0 %v891
        %1501 = vmatmul.f32.gmra.mxu0 %v245
        %v1502 = vpop.f32.mrf.mxu0
        %v1503 = vadd.f32 %v1483, %v1502
        %1504 = vdwg.mxu0
        %1505 = vmatpush.msra.mxu0 %v1015
        %1506 = vmatpush.msra.mxu0 %v1011
        %1507 = vmatpush.msra.mxu0 %v1007
        %1508 = vmatpush.msra.mxu0 %v1003
        %1509 = vmatpush.msra.mxu0 %v999
        %1510 = vmatpush.msra.mxu0 %v995
        %1511 = vmatpush.msra.mxu0 %v991
        %1512 = vmatpush.msra.mxu0 %v987
        %1513 = vmatpush.msra.mxu0 %v983
        %1514 = vmatpush.msra.mxu0 %v979
        %1515 = vmatpush.msra.mxu0 %v975
        %1516 = vmatpush.msra.mxu0 %v971
        %1517 = vmatpush.msra.mxu0 %v967
        %1518 = vmatpush.msra.mxu0 %v963
        %1519 = vmatpush.msra.mxu0 %v959
        %1520 = vmatpush.msra.mxu0 %v955
        %1521 = vmatmul.f32.gmra.mxu0 %v246
        %v1522 = vpop.f32.mrf.mxu0
        %v1523 = vadd.f32 %v1503, %v1522
        %1524 = vdwg.mxu0
        %1525 = vmatpush.msra.mxu0 %v1079
        %1526 = vmatpush.msra.mxu0 %v1075
        %1527 = vmatpush.msra.mxu0 %v1071
        %1528 = vmatpush.msra.mxu0 %v1067
        %1529 = vmatpush.msra.mxu0 %v1063
        %1530 = vmatpush.msra.mxu0 %v1059
        %1531 = vmatpush.msra.mxu0 %v1055
        %1532 = vmatpush.msra.mxu0 %v1051
        %1533 = vmatpush.msra.mxu0 %v1047
        %1534 = vmatpush.msra.mxu0 %v1043
        %1535 = vmatpush.msra.mxu0 %v1039
        %1536 = vmatpush.msra.mxu0 %v1035
        %1537 = vmatpush.msra.mxu0 %v1031
        %1538 = vmatpush.msra.mxu0 %v1027
        %1539 = vmatpush.msra.mxu0 %v1023
        %1540 = vmatpush.msra.mxu0 %v1019
        %1541 = vmatmul.f32.gmra.mxu0 %v247
        %v1542 = vpop.f32.mrf.mxu0
        %v1543 = vadd.f32 %v1523, %v1542
        %1544 = vdwg.mxu0
        %1545 = vmatpush.msra.mxu0 %v1143
        %1546 = vmatpush.msra.mxu0 %v1139
        %1547 = vmatpush.msra.mxu0 %v1135
        %1548 = vmatpush.msra.mxu0 %v1131
        %1549 = vmatpush.msra.mxu0 %v1127
        %1550 = vmatpush.msra.mxu0 %v1123
        %1551 = vmatpush.msra.mxu0 %v1119
        %1552 = vmatpush.msra.mxu0 %v1115
        %1553 = vmatpush.msra.mxu0 %v1111
        %1554 = vmatpush.msra.mxu0 %v1107
        %1555 = vmatpush.msra.mxu0 %v1103
        %1556 = vmatpush.msra.mxu0 %v1099
        %1557 = vmatpush.msra.mxu0 %v1095
        %1558 = vmatpush.msra.mxu0 %v1091
        %1559 = vmatpush.msra.mxu0 %v1087
        %1560 = vmatpush.msra.mxu0 %v1083
        %1561 = vmatmul.f32.gmra.mxu0 %v248
        %v1562 = vpop.f32.mrf.mxu0
        %v1563 = vadd.f32 %v1543, %v1562
        %1564 = vdwg.mxu0
        %1565 = vmatpush.msra.mxu0 %v1207
        %1566 = vmatpush.msra.mxu0 %v1203
        %1567 = vmatpush.msra.mxu0 %v1199
        %1568 = vmatpush.msra.mxu0 %v1195
        %1569 = vmatpush.msra.mxu0 %v1191
        %1570 = vmatpush.msra.mxu0 %v1187
        %1571 = vmatpush.msra.mxu0 %v1183
        %1572 = vmatpush.msra.mxu0 %v1179
        %1573 = vmatpush.msra.mxu0 %v1175
        %1574 = vmatpush.msra.mxu0 %v1171
        %1575 = vmatpush.msra.mxu0 %v1167
        %1576 = vmatpush.msra.mxu0 %v1163
        %1577 = vmatpush.msra.mxu0 %v1159
        %1578 = vmatpush.msra.mxu0 %v1155
        %1579 = vmatpush.msra.mxu0 %v1151
        %1580 = vmatpush.msra.mxu0 %v1147
        %1581 = vmatmul.f32.gmra.mxu0 %v249
        %v1582 = vpop.f32.mrf.mxu0
        %v1583 = vadd.f32 %v1563, %v1582
        %1584 = vdwg.mxu0
        %1585 = vmatpush.msra.mxu0 %v1271
        %1586 = vmatpush.msra.mxu0 %v1267
        %1587 = vmatpush.msra.mxu0 %v1263
        %1588 = vmatpush.msra.mxu0 %v1259
        %1589 = vmatpush.msra.mxu0 %v1255
        %1590 = vmatpush.msra.mxu0 %v1251
        %1591 = vmatpush.msra.mxu0 %v1247
        %1592 = vmatpush.msra.mxu0 %v1243
        %1593 = vmatpush.msra.mxu0 %v1239
        %1594 = vmatpush.msra.mxu0 %v1235
        %1595 = vmatpush.msra.mxu0 %v1231
        %1596 = vmatpush.msra.mxu0 %v1227
        %1597 = vmatpush.msra.mxu0 %v1223
        %1598 = vmatpush.msra.mxu0 %v1219
        %1599 = vmatpush.msra.mxu0 %v1215
        %1600 = vmatpush.msra.mxu0 %v1211
        %1601 = vmatmul.f32.gmra.mxu0 %v250
        %v1602 = vpop.f32.mrf.mxu0
        %v1603 = vadd.f32 %v1583, %v1602
        %1604 = vdwg.mxu0
        %1605 = vmatpush.msra.mxu0 %v312
        %1606 = vmatpush.msra.mxu0 %v308
        %1607 = vmatpush.msra.mxu0 %v304
        %1608 = vmatpush.msra.mxu0 %v300
        %1609 = vmatpush.msra.mxu0 %v296
        %1610 = vmatpush.msra.mxu0 %v292
        %1611 = vmatpush.msra.mxu0 %v288
        %1612 = vmatpush.msra.mxu0 %v284
        %1613 = vmatpush.msra.mxu0 %v280
        %1614 = vmatpush.msra.mxu0 %v276
        %1615 = vmatpush.msra.mxu0 %v272
        %1616 = vmatpush.msra.mxu0 %v268
        %1617 = vmatpush.msra.mxu0 %v264
        %1618 = vmatpush.msra.mxu0 %v260
        %1619 = vmatpush.msra.mxu0 %v256
        %1620 = vmatpush.msra.mxu0 %v252
        %1621 = vmatmul.f32.gmra.mxu0 %v235
        %v1622 = vpop.f32.mrf.mxu0
        %v1623 = vadd.f32 %v1278, %v1622
        %1624 = vdwg.mxu0
        %1625 = vmatpush.msra.mxu0 %v376
        %1626 = vmatpush.msra.mxu0 %v372
        %1627 = vmatpush.msra.mxu0 %v368
        %1628 = vmatpush.msra.mxu0 %v364
        %1629 = vmatpush.msra.mxu0 %v360
        %1630 = vmatpush.msra.mxu0 %v356
        %1631 = vmatpush.msra.mxu0 %v352
        %1632 = vmatpush.msra.mxu0 %v348
        %1633 = vmatpush.msra.mxu0 %v344
        %1634 = vmatpush.msra.mxu0 %v340
        %1635 = vmatpush.msra.mxu0 %v336
        %1636 = vmatpush.msra.mxu0 %v332
        %1637 = vmatpush.msra.mxu0 %v328
        %1638 = vmatpush.msra.mxu0 %v324
        %1639 = vmatpush.msra.mxu0 %v320
        %1640 = vmatpush.msra.mxu0 %v316
        %1641 = vmatmul.f32.gmra.mxu0 %v236
        %v1642 = vpop.f32.mrf.mxu0
        %v1643 = vadd.f32 %v1623, %v1642
        %1644 = vdwg.mxu0
        %1645 = vmatpush.msra.mxu0 %v440
        %1646 = vmatpush.msra.mxu0 %v436
        %1647 = vmatpush.msra.mxu0 %v432
        %1648 = vmatpush.msra.mxu0 %v428
        %1649 = vmatpush.msra.mxu0 %v424
        %1650 = vmatpush.msra.mxu0 %v420
        %1651 = vmatpush.msra.mxu0 %v416
        %1652 = vmatpush.msra.mxu0 %v412
        %1653 = vmatpush.msra.mxu0 %v408
        %1654 = vmatpush.msra.mxu0 %v404
        %1655 = vmatpush.msra.mxu0 %v400
        %1656 = vmatpush.msra.mxu0 %v396
        %1657 = vmatpush.msra.mxu0 %v392
        %1658 = vmatpush.msra.mxu0 %v388
        %1659 = vmatpush.msra.mxu0 %v384
        %1660 = vmatpush.msra.mxu0 %v380
        %1661 = vmatmul.f32.gmra.mxu0 %v237
        %v1662 = vpop.f32.mrf.mxu0
        %v1663 = vadd.f32 %v1643, %v1662
        %1664 = vdwg.mxu0
        %1665 = vmatpush.msra.mxu0 %v504
        %1666 = vmatpush.msra.mxu0 %v500
        %1667 = vmatpush.msra.mxu0 %v496
        %1668 = vmatpush.msra.mxu0 %v492
        %1669 = vmatpush.msra.mxu0 %v488
        %1670 = vmatpush.msra.mxu0 %v484
        %1671 = vmatpush.msra.mxu0 %v480
        %1672 = vmatpush.msra.mxu0 %v476
        %1673 = vmatpush.msra.mxu0 %v472
        %1674 = vmatpush.msra.mxu0 %v468
        %1675 = vmatpush.msra.mxu0 %v464
        %1676 = vmatpush.msra.mxu0 %v460
        %1677 = vmatpush.msra.mxu0 %v456
        %1678 = vmatpush.msra.mxu0 %v452
        %1679 = vmatpush.msra.mxu0 %v448
        %1680 = vmatpush.msra.mxu0 %v444
        %1681 = vmatmul.f32.gmra.mxu0 %v238
        %v1682 = vpop.f32.mrf.mxu0
        %v1683 = vadd.f32 %v1663, %v1682
        %1684 = vdwg.mxu0
        %1685 = vmatpush.msra.mxu0 %v568
        %1686 = vmatpush.msra.mxu0 %v564
        %1687 = vmatpush.msra.mxu0 %v560
        %1688 = vmatpush.msra.mxu0 %v556
        %1689 = vmatpush.msra.mxu0 %v552
        %1690 = vmatpush.msra.mxu0 %v548
        %1691 = vmatpush.msra.mxu0 %v544
        %1692 = vmatpush.msra.mxu0 %v540
        %1693 = vmatpush.msra.mxu0 %v536
        %1694 = vmatpush.msra.mxu0 %v532
        %1695 = vmatpush.msra.mxu0 %v528
        %1696 = vmatpush.msra.mxu0 %v524
        %1697 = vmatpush.msra.mxu0 %v520
        %1698 = vmatpush.msra.mxu0 %v516
        %1699 = vmatpush.msra.mxu0 %v512
        %1700 = vmatpush.msra.mxu0 %v508
        %1701 = vmatmul.f32.gmra.mxu0 %v239
        %v1702 = vpop.f32.mrf.mxu0
        %v1703 = vadd.f32 %v1683, %v1702
        %1704 = vdwg.mxu0
        %1705 = vmatpush.msra.mxu0 %v632
        %1706 = vmatpush.msra.mxu0 %v628
        %1707 = vmatpush.msra.mxu0 %v624
        %1708 = vmatpush.msra.mxu0 %v620
        %1709 = vmatpush.msra.mxu0 %v616
        %1710 = vmatpush.msra.mxu0 %v612
        %1711 = vmatpush.msra.mxu0 %v608
        %1712 = vmatpush.msra.mxu0 %v604
        %1713 = vmatpush.msra.mxu0 %v600
        %1714 = vmatpush.msra.mxu0 %v596
        %1715 = vmatpush.msra.mxu0 %v592
        %1716 = vmatpush.msra.mxu0 %v588
        %1717 = vmatpush.msra.mxu0 %v584
        %1718 = vmatpush.msra.mxu0 %v580
        %1719 = vmatpush.msra.mxu0 %v576
        %1720 = vmatpush.msra.mxu0 %v572
        %1721 = vmatmul.f32.gmra.mxu0 %v240
        %v1722 = vpop.f32.mrf.mxu0
        %v1723 = vadd.f32 %v1703, %v1722
        %1724 = vdwg.mxu0
        %1725 = vmatpush.msra.mxu0 %v696
        %1726 = vmatpush.msra.mxu0 %v692
        %1727 = vmatpush.msra.mxu0 %v688
        %1728 = vmatpush.msra.mxu0 %v684
        %1729 = vmatpush.msra.mxu0 %v680
        %1730 = vmatpush.msra.mxu0 %v676
        %1731 = vmatpush.msra.mxu0 %v672
        %1732 = vmatpush.msra.mxu0 %v668
        %1733 = vmatpush.msra.mxu0 %v664
        %1734 = vmatpush.msra.mxu0 %v660
        %1735 = vmatpush.msra.mxu0 %v656
        %1736 = vmatpush.msra.mxu0 %v652
        %1737 = vmatpush.msra.mxu0 %v648
        %1738 = vmatpush.msra.mxu0 %v644
        %1739 = vmatpush.msra.mxu0 %v640
        %1740 = vmatpush.msra.mxu0 %v636
        %1741 = vmatmul.f32.gmra.mxu0 %v241
        %v1742 = vpop.f32.mrf.mxu0
        %v1743 = vadd.f32 %v1723, %v1742
        %1744 = vdwg.mxu0
        %1745 = vmatpush.msra.mxu0 %v760
        %1746 = vmatpush.msra.mxu0 %v756
        %1747 = vmatpush.msra.mxu0 %v752
        %1748 = vmatpush.msra.mxu0 %v748
        %1749 = vmatpush.msra.mxu0 %v744
        %1750 = vmatpush.msra.mxu0 %v740
        %1751 = vmatpush.msra.mxu0 %v736
        %1752 = vmatpush.msra.mxu0 %v732
        %1753 = vmatpush.msra.mxu0 %v728
        %1754 = vmatpush.msra.mxu0 %v724
        %1755 = vmatpush.msra.mxu0 %v720
        %1756 = vmatpush.msra.mxu0 %v716
        %1757 = vmatpush.msra.mxu0 %v712
        %1758 = vmatpush.msra.mxu0 %v708
        %1759 = vmatpush.msra.mxu0 %v704
        %1760 = vmatpush.msra.mxu0 %v700
        %1761 = vmatmul.f32.gmra.mxu0 %v242
        %v1762 = vpop.f32.mrf.mxu0
        %v1763 = vadd.f32 %v1743, %v1762
        %1764 = vdwg.mxu0
        %1765 = vmatpush.msra.mxu0 %v824
        %1766 = vmatpush.msra.mxu0 %v820
        %1767 = vmatpush.msra.mxu0 %v816
        %1768 = vmatpush.msra.mxu0 %v812
        %1769 = vmatpush.msra.mxu0 %v808
        %1770 = vmatpush.msra.mxu0 %v804
        %1771 = vmatpush.msra.mxu0 %v800
        %1772 = vmatpush.msra.mxu0 %v796
        %1773 = vmatpush.msra.mxu0 %v792
        %1774 = vmatpush.msra.mxu0 %v788
        %1775 = vmatpush.msra.mxu0 %v784
        %1776 = vmatpush.msra.mxu0 %v780
        %1777 = vmatpush.msra.mxu0 %v776
        %1778 = vmatpush.msra.mxu0 %v772
        %1779 = vmatpush.msra.mxu0 %v768
        %1780 = vmatpush.msra.mxu0 %v764
        %1781 = vmatmul.f32.gmra.mxu0 %v243
        %v1782 = vpop.f32.mrf.mxu0
        %v1783 = vadd.f32 %v1763, %v1782
        %1784 = vdwg.mxu0
        %1785 = vmatpush.msra.mxu0 %v888
        %1786 = vmatpush.msra.mxu0 %v884
        %1787 = vmatpush.msra.mxu0 %v880
        %1788 = vmatpush.msra.mxu0 %v876
        %1789 = vmatpush.msra.mxu0 %v872
        %1790 = vmatpush.msra.mxu0 %v868
        %1791 = vmatpush.msra.mxu0 %v864
        %1792 = vmatpush.msra.mxu0 %v860
        %1793 = vmatpush.msra.mxu0 %v856
        %1794 = vmatpush.msra.mxu0 %v852
        %1795 = vmatpush.msra.mxu0 %v848
        %1796 = vmatpush.msra.mxu0 %v844
        %1797 = vmatpush.msra.mxu0 %v840
        %1798 = vmatpush.msra.mxu0 %v836
        %1799 = vmatpush.msra.mxu0 %v832
        %1800 = vmatpush.msra.mxu0 %v828
        %1801 = vmatmul.f32.gmra.mxu0 %v244
        %v1802 = vpop.f32.mrf.mxu0
        %v1803 = vadd.f32 %v1783, %v1802
        %1804 = vdwg.mxu0
        %1805 = vmatpush.msra.mxu0 %v952
        %1806 = vmatpush.msra.mxu0 %v948
        %1807 = vmatpush.msra.mxu0 %v944
        %1808 = vmatpush.msra.mxu0 %v940
        %1809 = vmatpush.msra.mxu0 %v936
        %1810 = vmatpush.msra.mxu0 %v932
        %1811 = vmatpush.msra.mxu0 %v928
        %1812 = vmatpush.msra.mxu0 %v924
        %1813 = vmatpush.msra.mxu0 %v920
        %1814 = vmatpush.msra.mxu0 %v916
        %1815 = vmatpush.msra.mxu0 %v912
        %1816 = vmatpush.msra.mxu0 %v908
        %1817 = vmatpush.msra.mxu0 %v904
        %1818 = vmatpush.msra.mxu0 %v900
        %1819 = vmatpush.msra.mxu0 %v896
        %1820 = vmatpush.msra.mxu0 %v892
        %1821 = vmatmul.f32.gmra.mxu0 %v245
        %v1822 = vpop.f32.mrf.mxu0
        %v1823 = vadd.f32 %v1803, %v1822
        %1824 = vdwg.mxu0
        %1825 = vmatpush.msra.mxu0 %v1016
        %1826 = vmatpush.msra.mxu0 %v1012
        %1827 = vmatpush.msra.mxu0 %v1008
        %1828 = vmatpush.msra.mxu0 %v1004
        %1829 = vmatpush.msra.mxu0 %v1000
        %1830 = vmatpush.msra.mxu0 %v996
        %1831 = vmatpush.msra.mxu0 %v992
        %1832 = vmatpush.msra.mxu0 %v988
        %1833 = vmatpush.msra.mxu0 %v984
        %1834 = vmatpush.msra.mxu0 %v980
        %1835 = vmatpush.msra.mxu0 %v976
        %1836 = vmatpush.msra.mxu0 %v972
        %1837 = vmatpush.msra.mxu0 %v968
        %1838 = vmatpush.msra.mxu0 %v964
        %1839 = vmatpush.msra.mxu0 %v960
        %1840 = vmatpush.msra.mxu0 %v956
        %1841 = vmatmul.f32.gmra.mxu0 %v246
        %v1842 = vpop.f32.mrf.mxu0
        %v1843 = vadd.f32 %v1823, %v1842
        %1844 = vdwg.mxu0
        %1845 = vmatpush.msra.mxu0 %v1080
        %1846 = vmatpush.msra.mxu0 %v1076
        %1847 = vmatpush.msra.mxu0 %v1072
        %1848 = vmatpush.msra.mxu0 %v1068
        %1849 = vmatpush.msra.mxu0 %v1064
        %1850 = vmatpush.msra.mxu0 %v1060
        %1851 = vmatpush.msra.mxu0 %v1056
        %1852 = vmatpush.msra.mxu0 %v1052
        %1853 = vmatpush.msra.mxu0 %v1048
        %1854 = vmatpush.msra.mxu0 %v1044
        %1855 = vmatpush.msra.mxu0 %v1040
        %1856 = vmatpush.msra.mxu0 %v1036
        %1857 = vmatpush.msra.mxu0 %v1032
        %1858 = vmatpush.msra.mxu0 %v1028
        %1859 = vmatpush.msra.mxu0 %v1024
        %1860 = vmatpush.msra.mxu0 %v1020
        %1861 = vmatmul.f32.gmra.mxu0 %v247
        %v1862 = vpop.f32.mrf.mxu0
        %v1863 = vadd.f32 %v1843, %v1862
        %1864 = vdwg.mxu0
        %1865 = vmatpush.msra.mxu0 %v1144
        %1866 = vmatpush.msra.mxu0 %v1140
        %1867 = vmatpush.msra.mxu0 %v1136
        %1868 = vmatpush.msra.mxu0 %v1132
        %1869 = vmatpush.msra.mxu0 %v1128
        %1870 = vmatpush.msra.mxu0 %v1124
        %1871 = vmatpush.msra.mxu0 %v1120
        %1872 = vmatpush.msra.mxu0 %v1116
        %1873 = vmatpush.msra.mxu0 %v1112
        %1874 = vmatpush.msra.mxu0 %v1108
        %1875 = vmatpush.msra.mxu0 %v1104
        %1876 = vmatpush.msra.mxu0 %v1100
        %1877 = vmatpush.msra.mxu0 %v1096
        %1878 = vmatpush.msra.mxu0 %v1092
        %1879 = vmatpush.msra.mxu0 %v1088
        %1880 = vmatpush.msra.mxu0 %v1084
        %1881 = vmatmul.f32.gmra.mxu0 %v248
        %v1882 = vpop.f32.mrf.mxu0
        %v1883 = vadd.f32 %v1863, %v1882
        %1884 = vdwg.mxu0
        %1885 = vmatpush.msra.mxu0 %v1208
        %1886 = vmatpush.msra.mxu0 %v1204
        %1887 = vmatpush.msra.mxu0 %v1200
        %1888 = vmatpush.msra.mxu0 %v1196
        %1889 = vmatpush.msra.mxu0 %v1192
        %1890 = vmatpush.msra.mxu0 %v1188
        %1891 = vmatpush.msra.mxu0 %v1184
        %1892 = vmatpush.msra.mxu0 %v1180
        %1893 = vmatpush.msra.mxu0 %v1176
        %1894 = vmatpush.msra.mxu0 %v1172
        %1895 = vmatpush.msra.mxu0 %v1168
        %1896 = vmatpush.msra.mxu0 %v1164
        %1897 = vmatpush.msra.mxu0 %v1160
        %1898 = vmatpush.msra.mxu0 %v1156
        %1899 = vmatpush.msra.mxu0 %v1152
        %1900 = vmatpush.msra.mxu0 %v1148
        %1901 = vmatmul.f32.gmra.mxu0 %v249
        %v1902 = vpop.f32.mrf.mxu0
        %v1903 = vadd.f32 %v1883, %v1902
        %1904 = vdwg.mxu0
        %1905 = vmatpush.msra.mxu0 %v1272
        %1906 = vmatpush.msra.mxu0 %v1268
        %1907 = vmatpush.msra.mxu0 %v1264
        %1908 = vmatpush.msra.mxu0 %v1260
        %1909 = vmatpush.msra.mxu0 %v1256
        %1910 = vmatpush.msra.mxu0 %v1252
        %1911 = vmatpush.msra.mxu0 %v1248
        %1912 = vmatpush.msra.mxu0 %v1244
        %1913 = vmatpush.msra.mxu0 %v1240
        %1914 = vmatpush.msra.mxu0 %v1236
        %1915 = vmatpush.msra.mxu0 %v1232
        %1916 = vmatpush.msra.mxu0 %v1228
        %1917 = vmatpush.msra.mxu0 %v1224
        %1918 = vmatpush.msra.mxu0 %v1220
        %1919 = vmatpush.msra.mxu0 %v1216
        %1920 = vmatpush.msra.mxu0 %v1212
        %1921 = vmatmul.f32.gmra.mxu0 %v250
        %v1922 = vpop.f32.mrf.mxu0
        %v1923 = vadd.f32 %v1903, %v1922
        %1924 = vdwg.mxu0
        %1925 = vmatpush.msra.mxu0 %v313
        %1926 = vmatpush.msra.mxu0 %v309
        %1927 = vmatpush.msra.mxu0 %v305
        %1928 = vmatpush.msra.mxu0 %v301
        %1929 = vmatpush.msra.mxu0 %v297
        %1930 = vmatpush.msra.mxu0 %v293
        %1931 = vmatpush.msra.mxu0 %v289
        %1932 = vmatpush.msra.mxu0 %v285
        %1933 = vmatpush.msra.mxu0 %v281
        %1934 = vmatpush.msra.mxu0 %v277
        %1935 = vmatpush.msra.mxu0 %v273
        %1936 = vmatpush.msra.mxu0 %v269
        %1937 = vmatpush.msra.mxu0 %v265
        %1938 = vmatpush.msra.mxu0 %v261
        %1939 = vmatpush.msra.mxu0 %v257
        %1940 = vmatpush.msra.mxu0 %v253
        %1941 = vmatmul.f32.gmra.mxu0 %v235
        %v1942 = vpop.f32.mrf.mxu0
        %v1943 = vadd.f32 %v1279, %v1942
        %1944 = vdwg.mxu0
        %1945 = vmatpush.msra.mxu0 %v377
        %1946 = vmatpush.msra.mxu0 %v373
        %1947 = vmatpush.msra.mxu0 %v369
        %1948 = vmatpush.msra.mxu0 %v365
        %1949 = vmatpush.msra.mxu0 %v361
        %1950 = vmatpush.msra.mxu0 %v357
        %1951 = vmatpush.msra.mxu0 %v353
        %1952 = vmatpush.msra.mxu0 %v349
        %1953 = vmatpush.msra.mxu0 %v345
        %1954 = vmatpush.msra.mxu0 %v341
        %1955 = vmatpush.msra.mxu0 %v337
        %1956 = vmatpush.msra.mxu0 %v333
        %1957 = vmatpush.msra.mxu0 %v329
        %1958 = vmatpush.msra.mxu0 %v325
        %1959 = vmatpush.msra.mxu0 %v321
        %1960 = vmatpush.msra.mxu0 %v317
        %1961 = vmatmul.f32.gmra.mxu0 %v236
        %v1962 = vpop.f32.mrf.mxu0
        %v1963 = vadd.f32 %v1943, %v1962
        %1964 = vdwg.mxu0
        %1965 = vmatpush.msra.mxu0 %v441
        %1966 = vmatpush.msra.mxu0 %v437
        %1967 = vmatpush.msra.mxu0 %v433
        %1968 = vmatpush.msra.mxu0 %v429
        %1969 = vmatpush.msra.mxu0 %v425
        %1970 = vmatpush.msra.mxu0 %v421
        %1971 = vmatpush.msra.mxu0 %v417
        %1972 = vmatpush.msra.mxu0 %v413
        %1973 = vmatpush.msra.mxu0 %v409
        %1974 = vmatpush.msra.mxu0 %v405
        %1975 = vmatpush.msra.mxu0 %v401
        %1976 = vmatpush.msra.mxu0 %v397
        %1977 = vmatpush.msra.mxu0 %v393
        %1978 = vmatpush.msra.mxu0 %v389
        %1979 = vmatpush.msra.mxu0 %v385
        %1980 = vmatpush.msra.mxu0 %v381
        %1981 = vmatmul.f32.gmra.mxu0 %v237
        %v1982 = vpop.f32.mrf.mxu0
        %v1983 = vadd.f32 %v1963, %v1982
        %1984 = vdwg.mxu0
        %1985 = vmatpush.msra.mxu0 %v505
        %1986 = vmatpush.msra.mxu0 %v501
        %1987 = vmatpush.msra.mxu0 %v497
        %1988 = vmatpush.msra.mxu0 %v493
        %1989 = vmatpush.msra.mxu0 %v489
        %1990 = vmatpush.msra.mxu0 %v485
        %1991 = vmatpush.msra.mxu0 %v481
        %1992 = vmatpush.msra.mxu0 %v477
        %1993 = vmatpush.msra.mxu0 %v473
        %1994 = vmatpush.msra.mxu0 %v469
        %1995 = vmatpush.msra.mxu0 %v465
        %1996 = vmatpush.msra.mxu0 %v461
        %1997 = vmatpush.msra.mxu0 %v457
        %1998 = vmatpush.msra.mxu0 %v453
        %1999 = vmatpush.msra.mxu0 %v449
        %2000 = vmatpush.msra.mxu0 %v445
        %2001 = vmatmul.f32.gmra.mxu0 %v238
        %v2002 = vpop.f32.mrf.mxu0
        %v2003 = vadd.f32 %v1983, %v2002
        %2004 = vdwg.mxu0
        %2005 = vmatpush.msra.mxu0 %v569
        %2006 = vmatpush.msra.mxu0 %v565
        %2007 = vmatpush.msra.mxu0 %v561
        %2008 = vmatpush.msra.mxu0 %v557
        %2009 = vmatpush.msra.mxu0 %v553
        %2010 = vmatpush.msra.mxu0 %v549
        %2011 = vmatpush.msra.mxu0 %v545
        %2012 = vmatpush.msra.mxu0 %v541
        %2013 = vmatpush.msra.mxu0 %v537
        %2014 = vmatpush.msra.mxu0 %v533
        %2015 = vmatpush.msra.mxu0 %v529
        %2016 = vmatpush.msra.mxu0 %v525
        %2017 = vmatpush.msra.mxu0 %v521
        %2018 = vmatpush.msra.mxu0 %v517
        %2019 = vmatpush.msra.mxu0 %v513
        %2020 = vmatpush.msra.mxu0 %v509
        %2021 = vmatmul.f32.gmra.mxu0 %v239
        %v2022 = vpop.f32.mrf.mxu0
        %v2023 = vadd.f32 %v2003, %v2022
        %2024 = vdwg.mxu0
        %2025 = vmatpush.msra.mxu0 %v633
        %2026 = vmatpush.msra.mxu0 %v629
        %2027 = vmatpush.msra.mxu0 %v625
        %2028 = vmatpush.msra.mxu0 %v621
        %2029 = vmatpush.msra.mxu0 %v617
        %2030 = vmatpush.msra.mxu0 %v613
        %2031 = vmatpush.msra.mxu0 %v609
        %2032 = vmatpush.msra.mxu0 %v605
        %2033 = vmatpush.msra.mxu0 %v601
        %2034 = vmatpush.msra.mxu0 %v597
        %2035 = vmatpush.msra.mxu0 %v593
        %2036 = vmatpush.msra.mxu0 %v589
        %2037 = vmatpush.msra.mxu0 %v585
        %2038 = vmatpush.msra.mxu0 %v581
        %2039 = vmatpush.msra.mxu0 %v577
        %2040 = vmatpush.msra.mxu0 %v573
        %2041 = vmatmul.f32.gmra.mxu0 %v240
        %v2042 = vpop.f32.mrf.mxu0
        %v2043 = vadd.f32 %v2023, %v2042
        %2044 = vdwg.mxu0
        %2045 = vmatpush.msra.mxu0 %v697
        %2046 = vmatpush.msra.mxu0 %v693
        %2047 = vmatpush.msra.mxu0 %v689
        %2048 = vmatpush.msra.mxu0 %v685
        %2049 = vmatpush.msra.mxu0 %v681
        %2050 = vmatpush.msra.mxu0 %v677
        %2051 = vmatpush.msra.mxu0 %v673
        %2052 = vmatpush.msra.mxu0 %v669
        %2053 = vmatpush.msra.mxu0 %v665
        %2054 = vmatpush.msra.mxu0 %v661
        %2055 = vmatpush.msra.mxu0 %v657
        %2056 = vmatpush.msra.mxu0 %v653
        %2057 = vmatpush.msra.mxu0 %v649
        %2058 = vmatpush.msra.mxu0 %v645
        %2059 = vmatpush.msra.mxu0 %v641
        %2060 = vmatpush.msra.mxu0 %v637
        %2061 = vmatmul.f32.gmra.mxu0 %v241
        %v2062 = vpop.f32.mrf.mxu0
        %v2063 = vadd.f32 %v2043, %v2062
        %2064 = vdwg.mxu0
        %2065 = vmatpush.msra.mxu0 %v761
        %2066 = vmatpush.msra.mxu0 %v757
        %2067 = vmatpush.msra.mxu0 %v753
        %2068 = vmatpush.msra.mxu0 %v749
        %2069 = vmatpush.msra.mxu0 %v745
        %2070 = vmatpush.msra.mxu0 %v741
        %2071 = vmatpush.msra.mxu0 %v737
        %2072 = vmatpush.msra.mxu0 %v733
        %2073 = vmatpush.msra.mxu0 %v729
        %2074 = vmatpush.msra.mxu0 %v725
        %2075 = vmatpush.msra.mxu0 %v721
        %2076 = vmatpush.msra.mxu0 %v717
        %2077 = vmatpush.msra.mxu0 %v713
        %2078 = vmatpush.msra.mxu0 %v709
        %2079 = vmatpush.msra.mxu0 %v705
        %2080 = vmatpush.msra.mxu0 %v701
        %2081 = vmatmul.f32.gmra.mxu0 %v242
        %v2082 = vpop.f32.mrf.mxu0
        %v2083 = vadd.f32 %v2063, %v2082
        %2084 = vdwg.mxu0
        %2085 = vmatpush.msra.mxu0 %v825
        %2086 = vmatpush.msra.mxu0 %v821
        %2087 = vmatpush.msra.mxu0 %v817
        %2088 = vmatpush.msra.mxu0 %v813
        %2089 = vmatpush.msra.mxu0 %v809
        %2090 = vmatpush.msra.mxu0 %v805
        %2091 = vmatpush.msra.mxu0 %v801
        %2092 = vmatpush.msra.mxu0 %v797
        %2093 = vmatpush.msra.mxu0 %v793
        %2094 = vmatpush.msra.mxu0 %v789
        %2095 = vmatpush.msra.mxu0 %v785
        %2096 = vmatpush.msra.mxu0 %v781
        %2097 = vmatpush.msra.mxu0 %v777
        %2098 = vmatpush.msra.mxu0 %v773
        %2099 = vmatpush.msra.mxu0 %v769
        %2100 = vmatpush.msra.mxu0 %v765
        %2101 = vmatmul.f32.gmra.mxu0 %v243
        %v2102 = vpop.f32.mrf.mxu0
        %v2103 = vadd.f32 %v2083, %v2102
        %2104 = vdwg.mxu0
        %2105 = vmatpush.msra.mxu0 %v889
        %2106 = vmatpush.msra.mxu0 %v885
        %2107 = vmatpush.msra.mxu0 %v881
        %2108 = vmatpush.msra.mxu0 %v877
        %2109 = vmatpush.msra.mxu0 %v873
        %2110 = vmatpush.msra.mxu0 %v869
        %2111 = vmatpush.msra.mxu0 %v865
        %2112 = vmatpush.msra.mxu0 %v861
        %2113 = vmatpush.msra.mxu0 %v857
        %2114 = vmatpush.msra.mxu0 %v853
        %2115 = vmatpush.msra.mxu0 %v849
        %2116 = vmatpush.msra.mxu0 %v845
        %2117 = vmatpush.msra.mxu0 %v841
        %2118 = vmatpush.msra.mxu0 %v837
        %2119 = vmatpush.msra.mxu0 %v833
        %2120 = vmatpush.msra.mxu0 %v829
        %2121 = vmatmul.f32.gmra.mxu0 %v244
        %v2122 = vpop.f32.mrf.mxu0
        %v2123 = vadd.f32 %v2103, %v2122
        %2124 = vdwg.mxu0
        %2125 = vmatpush.msra.mxu0 %v953
        %2126 = vmatpush.msra.mxu0 %v949
        %2127 = vmatpush.msra.mxu0 %v945
        %2128 = vmatpush.msra.mxu0 %v941
        %2129 = vmatpush.msra.mxu0 %v937
        %2130 = vmatpush.msra.mxu0 %v933
        %2131 = vmatpush.msra.mxu0 %v929
        %2132 = vmatpush.msra.mxu0 %v925
        %2133 = vmatpush.msra.mxu0 %v921
        %2134 = vmatpush.msra.mxu0 %v917
        %2135 = vmatpush.msra.mxu0 %v913
        %2136 = vmatpush.msra.mxu0 %v909
        %2137 = vmatpush.msra.mxu0 %v905
        %2138 = vmatpush.msra.mxu0 %v901
        %2139 = vmatpush.msra.mxu0 %v897
        %2140 = vmatpush.msra.mxu0 %v893
        %2141 = vmatmul.f32.gmra.mxu0 %v245
        %v2142 = vpop.f32.mrf.mxu0
        %v2143 = vadd.f32 %v2123, %v2142
        %2144 = vdwg.mxu0
        %2145 = vmatpush.msra.mxu0 %v1017
        %2146 = vmatpush.msra.mxu0 %v1013
        %2147 = vmatpush.msra.mxu0 %v1009
        %2148 = vmatpush.msra.mxu0 %v1005
        %2149 = vmatpush.msra.mxu0 %v1001
        %2150 = vmatpush.msra.mxu0 %v997
        %2151 = vmatpush.msra.mxu0 %v993
        %2152 = vmatpush.msra.mxu0 %v989
        %2153 = vmatpush.msra.mxu0 %v985
        %2154 = vmatpush.msra.mxu0 %v981
        %2155 = vmatpush.msra.mxu0 %v977
        %2156 = vmatpush.msra.mxu0 %v973
        %2157 = vmatpush.msra.mxu0 %v969
        %2158 = vmatpush.msra.mxu0 %v965
        %2159 = vmatpush.msra.mxu0 %v961
        %2160 = vmatpush.msra.mxu0 %v957
        %2161 = vmatmul.f32.gmra.mxu0 %v246
        %v2162 = vpop.f32.mrf.mxu0
        %v2163 = vadd.f32 %v2143, %v2162
        %2164 = vdwg.mxu0
        %2165 = vmatpush.msra.mxu0 %v1081
        %2166 = vmatpush.msra.mxu0 %v1077
        %2167 = vmatpush.msra.mxu0 %v1073
        %2168 = vmatpush.msra.mxu0 %v1069
        %2169 = vmatpush.msra.mxu0 %v1065
        %2170 = vmatpush.msra.mxu0 %v1061
        %2171 = vmatpush.msra.mxu0 %v1057
        %2172 = vmatpush.msra.mxu0 %v1053
        %2173 = vmatpush.msra.mxu0 %v1049
        %2174 = vmatpush.msra.mxu0 %v1045
        %2175 = vmatpush.msra.mxu0 %v1041
        %2176 = vmatpush.msra.mxu0 %v1037
        %2177 = vmatpush.msra.mxu0 %v1033
        %2178 = vmatpush.msra.mxu0 %v1029
        %2179 = vmatpush.msra.mxu0 %v1025
        %2180 = vmatpush.msra.mxu0 %v1021
        %2181 = vmatmul.f32.gmra.mxu0 %v247
        %v2182 = vpop.f32.mrf.mxu0
        %v2183 = vadd.f32 %v2163, %v2182
        %2184 = vdwg.mxu0
        %2185 = vmatpush.msra.mxu0 %v1145
        %2186 = vmatpush.msra.mxu0 %v1141
        %2187 = vmatpush.msra.mxu0 %v1137
        %2188 = vmatpush.msra.mxu0 %v1133
        %2189 = vmatpush.msra.mxu0 %v1129
        %2190 = vmatpush.msra.mxu0 %v1125
        %2191 = vmatpush.msra.mxu0 %v1121
        %2192 = vmatpush.msra.mxu0 %v1117
        %2193 = vmatpush.msra.mxu0 %v1113
        %2194 = vmatpush.msra.mxu0 %v1109
        %2195 = vmatpush.msra.mxu0 %v1105
        %2196 = vmatpush.msra.mxu0 %v1101
        %2197 = vmatpush.msra.mxu0 %v1097
        %2198 = vmatpush.msra.mxu0 %v1093
        %2199 = vmatpush.msra.mxu0 %v1089
        %2200 = vmatpush.msra.mxu0 %v1085
        %2201 = vmatmul.f32.gmra.mxu0 %v248
        %v2202 = vpop.f32.mrf.mxu0
        %v2203 = vadd.f32 %v2183, %v2202
        %2204 = vdwg.mxu0
        %2205 = vmatpush.msra.mxu0 %v1209
        %2206 = vmatpush.msra.mxu0 %v1205
        %2207 = vmatpush.msra.mxu0 %v1201
        %2208 = vmatpush.msra.mxu0 %v1197
        %2209 = vmatpush.msra.mxu0 %v1193
        %2210 = vmatpush.msra.mxu0 %v1189
        %2211 = vmatpush.msra.mxu0 %v1185
        %2212 = vmatpush.msra.mxu0 %v1181
        %2213 = vmatpush.msra.mxu0 %v1177
        %2214 = vmatpush.msra.mxu0 %v1173
        %2215 = vmatpush.msra.mxu0 %v1169
        %2216 = vmatpush.msra.mxu0 %v1165
        %2217 = vmatpush.msra.mxu0 %v1161
        %2218 = vmatpush.msra.mxu0 %v1157
        %2219 = vmatpush.msra.mxu0 %v1153
        %2220 = vmatpush.msra.mxu0 %v1149
        %2221 = vmatmul.f32.gmra.mxu0 %v249
        %v2222 = vpop.f32.mrf.mxu0
        %v2223 = vadd.f32 %v2203, %v2222
        %2224 = vdwg.mxu0
        %2225 = vmatpush.msra.mxu0 %v1273
        %2226 = vmatpush.msra.mxu0 %v1269
        %2227 = vmatpush.msra.mxu0 %v1265
        %2228 = vmatpush.msra.mxu0 %v1261
        %2229 = vmatpush.msra.mxu0 %v1257
        %2230 = vmatpush.msra.mxu0 %v1253
        %2231 = vmatpush.msra.mxu0 %v1249
        %2232 = vmatpush.msra.mxu0 %v1245
        %2233 = vmatpush.msra.mxu0 %v1241
        %2234 = vmatpush.msra.mxu0 %v1237
        %2235 = vmatpush.msra.mxu0 %v1233
        %2236 = vmatpush.msra.mxu0 %v1229
        %2237 = vmatpush.msra.mxu0 %v1225
        %2238 = vmatpush.msra.mxu0 %v1221
        %2239 = vmatpush.msra.mxu0 %v1217
        %2240 = vmatpush.msra.mxu0 %v1213
        %2241 = vmatmul.f32.gmra.mxu0 %v250
        %v2242 = vpop.f32.mrf.mxu0
        %v2243 = vadd.f32 %v2223, %v2242
        %2244 = vdwg.mxu0
        %2245 = vmatpush.msra.mxu0 %v314
        %2246 = vmatpush.msra.mxu0 %v310
        %2247 = vmatpush.msra.mxu0 %v306
        %2248 = vmatpush.msra.mxu0 %v302
        %2249 = vmatpush.msra.mxu0 %v298
        %2250 = vmatpush.msra.mxu0 %v294
        %2251 = vmatpush.msra.mxu0 %v290
        %2252 = vmatpush.msra.mxu0 %v286
        %2253 = vmatpush.msra.mxu0 %v282
        %2254 = vmatpush.msra.mxu0 %v278
        %2255 = vmatpush.msra.mxu0 %v274
        %2256 = vmatpush.msra.mxu0 %v270
        %2257 = vmatpush.msra.mxu0 %v266
        %2258 = vmatpush.msra.mxu0 %v262
        %2259 = vmatpush.msra.mxu0 %v258
        %2260 = vmatpush.msra.mxu0 %v254
        %2261 = vmatmul.f32.gmra.mxu0 %v235
        %v2262 = vpop.f32.mrf.mxu0
        %v2263 = vadd.f32 %v1280, %v2262
        %2264 = vdwg.mxu0
        %2265 = vmatpush.msra.mxu0 %v378
        %2266 = vmatpush.msra.mxu0 %v374
        %2267 = vmatpush.msra.mxu0 %v370
        %2268 = vmatpush.msra.mxu0 %v366
        %2269 = vmatpush.msra.mxu0 %v362
        %2270 = vmatpush.msra.mxu0 %v358
        %2271 = vmatpush.msra.mxu0 %v354
        %2272 = vmatpush.msra.mxu0 %v350
        %2273 = vmatpush.msra.mxu0 %v346
        %2274 = vmatpush.msra.mxu0 %v342
        %2275 = vmatpush.msra.mxu0 %v338
        %2276 = vmatpush.msra.mxu0 %v334
        %2277 = vmatpush.msra.mxu0 %v330
        %2278 = vmatpush.msra.mxu0 %v326
        %2279 = vmatpush.msra.mxu0 %v322
        %2280 = vmatpush.msra.mxu0 %v318
        %2281 = vmatmul.f32.gmra.mxu0 %v236
        %v2282 = vpop.f32.mrf.mxu0
        %v2283 = vadd.f32 %v2263, %v2282
        %2284 = vdwg.mxu0
        %2285 = vmatpush.msra.mxu0 %v442
        %2286 = vmatpush.msra.mxu0 %v438
        %2287 = vmatpush.msra.mxu0 %v434
        %2288 = vmatpush.msra.mxu0 %v430
        %2289 = vmatpush.msra.mxu0 %v426
        %2290 = vmatpush.msra.mxu0 %v422
        %2291 = vmatpush.msra.mxu0 %v418
        %2292 = vmatpush.msra.mxu0 %v414
        %2293 = vmatpush.msra.mxu0 %v410
        %2294 = vmatpush.msra.mxu0 %v406
        %2295 = vmatpush.msra.mxu0 %v402
        %2296 = vmatpush.msra.mxu0 %v398
        %2297 = vmatpush.msra.mxu0 %v394
        %2298 = vmatpush.msra.mxu0 %v390
        %2299 = vmatpush.msra.mxu0 %v386
        %2300 = vmatpush.msra.mxu0 %v382
        %2301 = vmatmul.f32.gmra.mxu0 %v237
        %v2302 = vpop.f32.mrf.mxu0
        %v2303 = vadd.f32 %v2283, %v2302
        %2304 = vdwg.mxu0
        %2305 = vmatpush.msra.mxu0 %v506
        %2306 = vmatpush.msra.mxu0 %v502
        %2307 = vmatpush.msra.mxu0 %v498
        %2308 = vmatpush.msra.mxu0 %v494
        %2309 = vmatpush.msra.mxu0 %v490
        %2310 = vmatpush.msra.mxu0 %v486
        %2311 = vmatpush.msra.mxu0 %v482
        %2312 = vmatpush.msra.mxu0 %v478
        %2313 = vmatpush.msra.mxu0 %v474
        %2314 = vmatpush.msra.mxu0 %v470
        %2315 = vmatpush.msra.mxu0 %v466
        %2316 = vmatpush.msra.mxu0 %v462
        %2317 = vmatpush.msra.mxu0 %v458
        %2318 = vmatpush.msra.mxu0 %v454
        %2319 = vmatpush.msra.mxu0 %v450
        %2320 = vmatpush.msra.mxu0 %v446
        %2321 = vmatmul.f32.gmra.mxu0 %v238
        %v2322 = vpop.f32.mrf.mxu0
        %v2323 = vadd.f32 %v2303, %v2322
        %2324 = vdwg.mxu0
        %2325 = vmatpush.msra.mxu0 %v570
        %2326 = vmatpush.msra.mxu0 %v566
        %2327 = vmatpush.msra.mxu0 %v562
        %2328 = vmatpush.msra.mxu0 %v558
        %2329 = vmatpush.msra.mxu0 %v554
        %2330 = vmatpush.msra.mxu0 %v550
        %2331 = vmatpush.msra.mxu0 %v546
        %2332 = vmatpush.msra.mxu0 %v542
        %2333 = vmatpush.msra.mxu0 %v538
        %2334 = vmatpush.msra.mxu0 %v534
        %2335 = vmatpush.msra.mxu0 %v530
        %2336 = vmatpush.msra.mxu0 %v526
        %2337 = vmatpush.msra.mxu0 %v522
        %2338 = vmatpush.msra.mxu0 %v518
        %2339 = vmatpush.msra.mxu0 %v514
        %2340 = vmatpush.msra.mxu0 %v510
        %2341 = vmatmul.f32.gmra.mxu0 %v239
        %v2342 = vpop.f32.mrf.mxu0
        %v2343 = vadd.f32 %v2323, %v2342
        %2344 = vdwg.mxu0
        %2345 = vmatpush.msra.mxu0 %v634
        %2346 = vmatpush.msra.mxu0 %v630
        %2347 = vmatpush.msra.mxu0 %v626
        %2348 = vmatpush.msra.mxu0 %v622
        %2349 = vmatpush.msra.mxu0 %v618
        %2350 = vmatpush.msra.mxu0 %v614
        %2351 = vmatpush.msra.mxu0 %v610
        %2352 = vmatpush.msra.mxu0 %v606
        %2353 = vmatpush.msra.mxu0 %v602
        %2354 = vmatpush.msra.mxu0 %v598
        %2355 = vmatpush.msra.mxu0 %v594
        %2356 = vmatpush.msra.mxu0 %v590
        %2357 = vmatpush.msra.mxu0 %v586
        %2358 = vmatpush.msra.mxu0 %v582
        %2359 = vmatpush.msra.mxu0 %v578
        %2360 = vmatpush.msra.mxu0 %v574
        %2361 = vmatmul.f32.gmra.mxu0 %v240
        %v2362 = vpop.f32.mrf.mxu0
        %v2363 = vadd.f32 %v2343, %v2362
        %2364 = vdwg.mxu0
        %2365 = vmatpush.msra.mxu0 %v698
        %2366 = vmatpush.msra.mxu0 %v694
        %2367 = vmatpush.msra.mxu0 %v690
        %2368 = vmatpush.msra.mxu0 %v686
        %2369 = vmatpush.msra.mxu0 %v682
        %2370 = vmatpush.msra.mxu0 %v678
        %2371 = vmatpush.msra.mxu0 %v674
        %2372 = vmatpush.msra.mxu0 %v670
        %2373 = vmatpush.msra.mxu0 %v666
        %2374 = vmatpush.msra.mxu0 %v662
        %2375 = vmatpush.msra.mxu0 %v658
        %2376 = vmatpush.msra.mxu0 %v654
        %2377 = vmatpush.msra.mxu0 %v650
        %2378 = vmatpush.msra.mxu0 %v646
        %2379 = vmatpush.msra.mxu0 %v642
        %2380 = vmatpush.msra.mxu0 %v638
        %2381 = vmatmul.f32.gmra.mxu0 %v241
        %v2382 = vpop.f32.mrf.mxu0
        %v2383 = vadd.f32 %v2363, %v2382
        %2384 = vdwg.mxu0
        %2385 = vmatpush.msra.mxu0 %v762
        %2386 = vmatpush.msra.mxu0 %v758
        %2387 = vmatpush.msra.mxu0 %v754
        %2388 = vmatpush.msra.mxu0 %v750
        %2389 = vmatpush.msra.mxu0 %v746
        %2390 = vmatpush.msra.mxu0 %v742
        %2391 = vmatpush.msra.mxu0 %v738
        %2392 = vmatpush.msra.mxu0 %v734
        %2393 = vmatpush.msra.mxu0 %v730
        %2394 = vmatpush.msra.mxu0 %v726
        %2395 = vmatpush.msra.mxu0 %v722
        %2396 = vmatpush.msra.mxu0 %v718
        %2397 = vmatpush.msra.mxu0 %v714
        %2398 = vmatpush.msra.mxu0 %v710
        %2399 = vmatpush.msra.mxu0 %v706
        %2400 = vmatpush.msra.mxu0 %v702
        %2401 = vmatmul.f32.gmra.mxu0 %v242
        %v2402 = vpop.f32.mrf.mxu0
        %v2403 = vadd.f32 %v2383, %v2402
        %2404 = vdwg.mxu0
        %2405 = vmatpush.msra.mxu0 %v826
        %2406 = vmatpush.msra.mxu0 %v822
        %2407 = vmatpush.msra.mxu0 %v818
        %2408 = vmatpush.msra.mxu0 %v814
        %2409 = vmatpush.msra.mxu0 %v810
        %2410 = vmatpush.msra.mxu0 %v806
        %2411 = vmatpush.msra.mxu0 %v802
        %2412 = vmatpush.msra.mxu0 %v798
        %2413 = vmatpush.msra.mxu0 %v794
        %2414 = vmatpush.msra.mxu0 %v790
        %2415 = vmatpush.msra.mxu0 %v786
        %2416 = vmatpush.msra.mxu0 %v782
        %2417 = vmatpush.msra.mxu0 %v778
        %2418 = vmatpush.msra.mxu0 %v774
        %2419 = vmatpush.msra.mxu0 %v770
        %2420 = vmatpush.msra.mxu0 %v766
        %2421 = vmatmul.f32.gmra.mxu0 %v243
        %v2422 = vpop.f32.mrf.mxu0
        %v2423 = vadd.f32 %v2403, %v2422
        %2424 = vdwg.mxu0
        %2425 = vmatpush.msra.mxu0 %v890
        %2426 = vmatpush.msra.mxu0 %v886
        %2427 = vmatpush.msra.mxu0 %v882
        %2428 = vmatpush.msra.mxu0 %v878
        %2429 = vmatpush.msra.mxu0 %v874
        %2430 = vmatpush.msra.mxu0 %v870
        %2431 = vmatpush.msra.mxu0 %v866
        %2432 = vmatpush.msra.mxu0 %v862
        %2433 = vmatpush.msra.mxu0 %v858
        %2434 = vmatpush.msra.mxu0 %v854
        %2435 = vmatpush.msra.mxu0 %v850
        %2436 = vmatpush.msra.mxu0 %v846
        %2437 = vmatpush.msra.mxu0 %v842
        %2438 = vmatpush.msra.mxu0 %v838
        %2439 = vmatpush.msra.mxu0 %v834
        %2440 = vmatpush.msra.mxu0 %v830
        %2441 = vmatmul.f32.gmra.mxu0 %v244
        %v2442 = vpop.f32.mrf.mxu0
        %v2443 = vadd.f32 %v2423, %v2442
        %2444 = vdwg.mxu0
        %2445 = vmatpush.msra.mxu0 %v954
        %2446 = vmatpush.msra.mxu0 %v950
        %2447 = vmatpush.msra.mxu0 %v946
        %2448 = vmatpush.msra.mxu0 %v942
        %2449 = vmatpush.msra.mxu0 %v938
        %2450 = vmatpush.msra.mxu0 %v934
        %2451 = vmatpush.msra.mxu0 %v930
        %2452 = vmatpush.msra.mxu0 %v926
        %2453 = vmatpush.msra.mxu0 %v922
        %2454 = vmatpush.msra.mxu0 %v918
        %2455 = vmatpush.msra.mxu0 %v914
        %2456 = vmatpush.msra.mxu0 %v910
        %2457 = vmatpush.msra.mxu0 %v906
        %2458 = vmatpush.msra.mxu0 %v902
        %2459 = vmatpush.msra.mxu0 %v898
        %2460 = vmatpush.msra.mxu0 %v894
        %2461 = vmatmul.f32.gmra.mxu0 %v245
        %v2462 = vpop.f32.mrf.mxu0
        %v2463 = vadd.f32 %v2443, %v2462
        %2464 = vdwg.mxu0
        %2465 = vmatpush.msra.mxu0 %v1018
        %2466 = vmatpush.msra.mxu0 %v1014
        %2467 = vmatpush.msra.mxu0 %v1010
        %2468 = vmatpush.msra.mxu0 %v1006
        %2469 = vmatpush.msra.mxu0 %v1002
        %2470 = vmatpush.msra.mxu0 %v998
        %2471 = vmatpush.msra.mxu0 %v994
        %2472 = vmatpush.msra.mxu0 %v990
        %2473 = vmatpush.msra.mxu0 %v986
        %2474 = vmatpush.msra.mxu0 %v982
        %2475 = vmatpush.msra.mxu0 %v978
        %2476 = vmatpush.msra.mxu0 %v974
        %2477 = vmatpush.msra.mxu0 %v970
        %2478 = vmatpush.msra.mxu0 %v966
        %2479 = vmatpush.msra.mxu0 %v962
        %2480 = vmatpush.msra.mxu0 %v958
        %2481 = vmatmul.f32.gmra.mxu0 %v246
        %v2482 = vpop.f32.mrf.mxu0
        %v2483 = vadd.f32 %v2463, %v2482
        %2484 = vdwg.mxu0
        %2485 = vmatpush.msra.mxu0 %v1082
        %2486 = vmatpush.msra.mxu0 %v1078
        %2487 = vmatpush.msra.mxu0 %v1074
        %2488 = vmatpush.msra.mxu0 %v1070
        %2489 = vmatpush.msra.mxu0 %v1066
        %2490 = vmatpush.msra.mxu0 %v1062
        %2491 = vmatpush.msra.mxu0 %v1058
        %2492 = vmatpush.msra.mxu0 %v1054
        %2493 = vmatpush.msra.mxu0 %v1050
        %2494 = vmatpush.msra.mxu0 %v1046
        %2495 = vmatpush.msra.mxu0 %v1042
        %2496 = vmatpush.msra.mxu0 %v1038
        %2497 = vmatpush.msra.mxu0 %v1034
        %2498 = vmatpush.msra.mxu0 %v1030
        %2499 = vmatpush.msra.mxu0 %v1026
        %2500 = vmatpush.msra.mxu0 %v1022
        %2501 = vmatmul.f32.gmra.mxu0 %v247
        %v2502 = vpop.f32.mrf.mxu0
        %v2503 = vadd.f32 %v2483, %v2502
        %2504 = vdwg.mxu0
        %2505 = vmatpush.msra.mxu0 %v1146
        %2506 = vmatpush.msra.mxu0 %v1142
        %2507 = vmatpush.msra.mxu0 %v1138
        %2508 = vmatpush.msra.mxu0 %v1134
        %2509 = vmatpush.msra.mxu0 %v1130
        %2510 = vmatpush.msra.mxu0 %v1126
        %2511 = vmatpush.msra.mxu0 %v1122
        %2512 = vmatpush.msra.mxu0 %v1118
        %2513 = vmatpush.msra.mxu0 %v1114
        %2514 = vmatpush.msra.mxu0 %v1110
        %2515 = vmatpush.msra.mxu0 %v1106
        %2516 = vmatpush.msra.mxu0 %v1102
        %2517 = vmatpush.msra.mxu0 %v1098
        %2518 = vmatpush.msra.mxu0 %v1094
        %2519 = vmatpush.msra.mxu0 %v1090
        %2520 = vmatpush.msra.mxu0 %v1086
        %2521 = vmatmul.f32.gmra.mxu0 %v248
        %v2522 = vpop.f32.mrf.mxu0
        %v2523 = vadd.f32 %v2503, %v2522
        %2524 = vdwg.mxu0
        %2525 = vmatpush.msra.mxu0 %v1210
        %2526 = vmatpush.msra.mxu0 %v1206
        %2527 = vmatpush.msra.mxu0 %v1202
        %2528 = vmatpush.msra.mxu0 %v1198
        %2529 = vmatpush.msra.mxu0 %v1194
        %2530 = vmatpush.msra.mxu0 %v1190
        %2531 = vmatpush.msra.mxu0 %v1186
        %2532 = vmatpush.msra.mxu0 %v1182
        %2533 = vmatpush.msra.mxu0 %v1178
        %2534 = vmatpush.msra.mxu0 %v1174
        %2535 = vmatpush.msra.mxu0 %v1170
        %2536 = vmatpush.msra.mxu0 %v1166
        %2537 = vmatpush.msra.mxu0 %v1162
        %2538 = vmatpush.msra.mxu0 %v1158
        %2539 = vmatpush.msra.mxu0 %v1154
        %2540 = vmatpush.msra.mxu0 %v1150
        %2541 = vmatmul.f32.gmra.mxu0 %v249
        %v2542 = vpop.f32.mrf.mxu0
        %v2543 = vadd.f32 %v2523, %v2542
        %2544 = vdwg.mxu0
        %2545 = vmatpush.msra.mxu0 %v1274
        %2546 = vmatpush.msra.mxu0 %v1270
        %2547 = vmatpush.msra.mxu0 %v1266
        %2548 = vmatpush.msra.mxu0 %v1262
        %2549 = vmatpush.msra.mxu0 %v1258
        %2550 = vmatpush.msra.mxu0 %v1254
        %2551 = vmatpush.msra.mxu0 %v1250
        %2552 = vmatpush.msra.mxu0 %v1246
        %2553 = vmatpush.msra.mxu0 %v1242
        %2554 = vmatpush.msra.mxu0 %v1238
        %2555 = vmatpush.msra.mxu0 %v1234
        %2556 = vmatpush.msra.mxu0 %v1230
        %2557 = vmatpush.msra.mxu0 %v1226
        %2558 = vmatpush.msra.mxu0 %v1222
        %2559 = vmatpush.msra.mxu0 %v1218
        %2560 = vmatpush.msra.mxu0 %v1214
        %2561 = vmatmul.f32.gmra.mxu0 %v250
        %v2562 = vpop.f32.mrf.mxu0
        %v2563 = vadd.f32 %v2543, %v2562
        %2564 = vdwg.mxu0
        %v2565 = vmax.f32 %v1603, 0.0
        %v2566 = vmax.f32 %v1923, 0.0
        %v2567 = vmax.f32 %v2243, 0.0
        %v2568 = vmax.f32 %v2563, 0.0
        %2569 = vst [vmem:[%s233] sm:$0xff] %v2565
        %2570 = vst [vmem:[%s233 + $0x8] sm:$0xff] %v2566
        %2571 = vst [vmem:[%s233 + $0x10] sm:$0xff] %v2567
        %2572 = vst [vmem:[%s233 + $0x18] sm:$0xff] %v2568
        %s2573 = smul.u32 4, %s20
        %p2574 = scmp.lt.s32.totalorder %s2573, 7
        %s2575 = scalar_select %p2574, %s2573, 7
        %s2576 = smul.addr %s2575, 8
        %s2577 = scalar_lea.vmem %s3, %s2576
        // Predicated region
        $region41: #{feedforward_net_gptj.8} parent=31 // pred_check
          %p2578 = pneg %p111
        $region42: #{feedforward_net_gptj.8} parent=31 // pred_check_branch
          %2580 = sbr.rel (%p2578) target = $region44
        $region43: #{feedforward_net_gptj.8} parent=31 // pred_region
          %s2581 = smul.u32 4, %s20
        $region44: #{feedforward_net_gptj.8} parent=31 // pred_fallthru
          _
      $region32: #{feedforward_net_gptj.8} parent=5 // pred_fallthru
        _
      %p2582 = scmp.le.s32.totalorder 2, %s15
      // Predicated region
      $region45: #{feedforward_net_gptj.8} parent=5 // pred_check
        %p2583 = pneg %p2582
      $region46: #{feedforward_net_gptj.8} parent=5 // pred_check_branch
        %2585 = sbr.rel (%p2583) target = $region48
      $region47: #{feedforward_net_gptj.8} parent=5 // pred_region
        %s2586 = ssub.s32 %s15, 2
        // Predicated region
        $region49: #{feedforward_net_gptj.8} parent=47 // pred_check
          %p2587 = pneg %p117
        $region50: #{feedforward_net_gptj.8} parent=47 // pred_check_branch
          %2589 = sbr.rel (%p2587) target = $region52
        $region51: #{feedforward_net_gptj.8} parent=47 // pred_region
          %s2590 = smul.u32 4, %s21
          %p2591 = scmp.lt.s32.totalorder %s2590, 7
          %s2592 = scalar_select %p2591, %s2590, 7
          %s2593 = smul.addr %s2592, 8
          %s2594 = scalar_lea.vmem %s3, %s2593
        $region52: #{feedforward_net_gptj.8} parent=47 // pred_fallthru
          _
      $region48: #{feedforward_net_gptj.8} parent=5 // pred_fallthru
        _
    $region6: #{feedforward_net_gptj.8} parent=1 // loop_footer
      %s19 = sadd.s32 1, %s15
    $region7: #{feedforward_net_gptj.8} parent=1 // loop_footer_branch
      %14 = sbr.rel target = $region3
    $region8: #{feedforward_net_gptj.8} parent=1 // loop_exit
      _
    %2595 = vsyncpa [#allocation3], 1
    %s2596 = scalar_lea.sflag [#allocation3], 1
    %2597 = vsyncpa %s2596, 1
    %2598 = vsyncpa [#allocation5], 1
    %s2599 = scalar_lea.sflag [#allocation5], 1
    %2600 = vsyncpa %s2599, 1

</llo_original>
